<compile_context>
chip_gen: v6e
topology: v6e:2x2x1
jax: 0.10.0
libtpu: 0.0.40
codegen_flags: <defaults>
</compile_context>

<pallas_src>
import functools

import jax
import jax.numpy as jnp
import numpy as np
from jax.experimental import pallas as pl
from jax.experimental.pallas import tpu as pltpu

EPS = 1e-5                      # nn.LayerNorm default
_INV_SQRT2 = 0.7071067811865476
_VMEM_LIMIT = 32 * 1024 * 1024  # raise scoped VMEM above the 16MiB v5e default


# ---------------------------------------------------------------------------
# small helpers
# ---------------------------------------------------------------------------
def _largest_divisor(n, candidates):
    for c in candidates:
        if c <= n and n % c == 0:
            return c
    return n


def _row_tile(n):
    # larger row tiles amortize the ~0.35us per-grid-step overhead
    # TODO(synk): ragged N would need cdiv + masking; all shapes here divide evenly.
    return _largest_divisor(n, (1024, 512, 256, 128, 64, 32, 16, 8))


def _hidden_tile(h):
    return _largest_divisor(h, (512, 256, 128))


def _gelu_exact(x):
    # matches torch F.gelu default (erf based)
    return 0.5 * x * (1.0 + jax.lax.erf(x * _INV_SQRT2))


def _layernorm_f32(x, g_ref, b_ref):
    xf = x.astype(jnp.float32)
    mu = jnp.mean(xf, axis=-1, keepdims=True)
    var = jnp.mean((xf - mu) ** 2, axis=-1, keepdims=True)
    n = (xf - mu) * jax.lax.rsqrt(var + EPS)
    return n * g_ref[...].astype(jnp.float32) + b_ref[...].astype(jnp.float32), xf


def _dot_nt(a, b):
    # (m, k) x (n, k) -> (m, n) without an explicit transpose op
    return jax.lax.dot_general(a, b, (((1,), (1,)), ((), ())),
                               preferred_element_type=jnp.float32)


# ---------------------------------------------------------------------------
# Kernel 1: fused norm1 + Q/K/V projections
# ---------------------------------------------------------------------------
def _norm_qkv_kernel(x_ref, g_ref, b_ref, wq_ref, wk_ref, wv_ref,
                     q_ref, k_ref, v_ref):
    n, _ = _layernorm_f32(x_ref[...], g_ref, b_ref)
    nc = n.astype(wq_ref.dtype)        # bf16 MXU path when weights are bf16
    q_ref[...] = jnp.dot(nc, wq_ref[...],
                         preferred_element_type=jnp.float32).astype(q_ref.dtype)
    k_ref[...] = jnp.dot(nc, wk_ref[...],
                         preferred_element_type=jnp.float32).astype(k_ref.dtype)
    v_ref[...] = jnp.dot(nc, wv_ref[...],
                         preferred_element_type=jnp.float32).astype(v_ref.dtype)


def norm1_qkv(x2d, gamma, beta, wq, wk, wv):
    n, c = x2d.shape
    inner = wq.shape[1]
    tr = _row_tile(n)
    return pl.pallas_call(
        _norm_qkv_kernel,
        grid=(n // tr,),
        in_specs=[
            pl.BlockSpec((tr, c), lambda i: (i, 0)),
            pl.BlockSpec((1, c), lambda i: (0, 0)),
            pl.BlockSpec((1, c), lambda i: (0, 0)),
            pl.BlockSpec((c, inner), lambda i: (0, 0)),
            pl.BlockSpec((c, inner), lambda i: (0, 0)),
            pl.BlockSpec((c, inner), lambda i: (0, 0)),
        ],
        out_specs=[
            pl.BlockSpec((tr, inner), lambda i: (i, 0)),
            pl.BlockSpec((tr, inner), lambda i: (i, 0)),
            pl.BlockSpec((tr, inner), lambda i: (i, 0)),
        ],
        out_shape=[
            jax.ShapeDtypeStruct((n, inner), x2d.dtype),
            jax.ShapeDtypeStruct((n, inner), x2d.dtype),
            jax.ShapeDtypeStruct((n, inner), x2d.dtype),
        ],
        compiler_params=pltpu.CompilerParams(
            dimension_semantics=("parallel",),
            vmem_limit_bytes=_VMEM_LIMIT,
        ),
    )(x2d, gamma.reshape(1, c), beta.reshape(1, c), wq, wk, wv)


# ---------------------------------------------------------------------------
# Kernel 2: sparse-causal attention core
#   grid = (batch, frame, head_block); BlockSpec index maps gather
#   KV chunks [frame 0] and [frame i-1] straight from the (B, D, inner) K/V
#   tensors (no concat, no head transposes).
# ---------------------------------------------------------------------------
def _attn_kernel(q_ref, k0_ref, k1_ref, v0_ref, v1_ref, o_ref, *,
                 scale, heads_per_block, dim_head):
    q_all = q_ref[0]
    k0 = k0_ref[0]
    k1 = k1_ref[0]
    v0 = v0_ref[0]
    v1 = v1_ref[0]
    outs = []
    for h in range(heads_per_block):          # static, unrolled (1 iter when lane-dense)
        sl = slice(h * dim_head, (h + 1) * dim_head)
        q = q_all[:, sl] * scale              # pre-scale q (O(Sq*hd) not O(Sq*Skv))
        s0 = _dot_nt(q, k0[:, sl])            # f32 scores
        s1 = _dot_nt(q, k1[:, sl])
        m = jnp.maximum(jnp.max(s0, axis=-1, keepdims=True),
                        jnp.max(s1, axis=-1, keepdims=True))
        e0 = jnp.exp(s0 - m)
        e1 = jnp.exp(s1 - m)
        denom = (jnp.sum(e0, axis=-1, keepdims=True)
                 + jnp.sum(e1, axis=-1, keepdims=True))
        acc = jnp.dot(e0.astype(v0.dtype), v0[:, sl],
                      preferred_element_type=jnp.float32)
        acc = acc + jnp.dot(e1.astype(v1.dtype), v1[:, sl],
                            preferred_element_type=jnp.float32)
        # pl.reciprocal(..., approx=True) is an option when a looser tolerance is OK
        outs.append(acc * pl.reciprocal(denom))
    out = outs[0] if heads_per_block == 1 else jnp.concatenate(outs, axis=-1)
    o_ref[0] = out.astype(o_ref.dtype)


def sparse_causal_attention(q, k, v, *, video_length, heads, dim_head, scale):
    B, D, inner = q.shape
    b = B // video_length
    F = video_length

    # pick heads-per-block so that the channel block is lane-dense (mult of 128)
    # or covers the full inner dim (keeps the BlockSpec (8,128) rule satisfied).
    hpb = heads
    for cand in range(1, heads + 1):
        if heads % cand == 0 and (cand * dim_head) % 128 == 0:
            hpb = cand
            break
    nhb = heads // hpb
    hb = hpb * dim_head

    def q_map(bb, ff, hh):
        return (bb * F + ff, 0, hh)

    def kv0_map(bb, ff, hh):        # frame 0 of this batch element
        return (bb * F, 0, hh)

    def kv1_map(bb, ff, hh):        # former frame (clamped at 0)
        return (bb * F + jnp.maximum(ff - 1, 0), 0, hh)

    def spec(imap):
        return pl.BlockSpec((1, D, hb), imap)

    kernel = functools.partial(_attn_kernel, scale=scale,
                               heads_per_block=hpb, dim_head=dim_head)
    # TODO(synk): for very large token counts D, switch to a KV-tiled online-softmax
    # (flash-style) inner grid axis; the full (D, 2D) score block is fine at these sizes.
    return pl.pallas_call(
        kernel,
        grid=(b, F, nhb),
        in_specs=[spec(q_map), spec(kv0_map), spec(kv1_map),
                  spec(kv0_map), spec(kv1_map)],
        out_specs=spec(q_map),
        out_shape=jax.ShapeDtypeStruct((B, D, inner), q.dtype),
        compiler_params=pltpu.CompilerParams(
            dimension_semantics=("parallel", "parallel", "parallel")),
    )(q, k, k, v, v)


# ---------------------------------------------------------------------------
# Kernel 3: to_out projection + residual add
# ---------------------------------------------------------------------------
def _out_residual_kernel(o_ref, x_ref, w_ref, b_ref, h_ref):
    acc = jnp.dot(o_ref[...].astype(w_ref.dtype), w_ref[...],
                  preferred_element_type=jnp.float32)
    acc = acc + b_ref[...].astype(jnp.float32) + x_ref[...].astype(jnp.float32)
    h_ref[...] = acc.astype(h_ref.dtype)


def attn_out_residual(o2d, x2d, w, bias):
    n, inner = o2d.shape
    c = w.shape[1]
    tr = _row_tile(n)
    return pl.pallas_call(
        _out_residual_kernel,
        grid=(n // tr,),
        in_specs=[
            pl.BlockSpec((tr, inner), lambda i: (i, 0)),
            pl.BlockSpec((tr, c), lambda i: (i, 0)),
            pl.BlockSpec((inner, c), lambda i: (0, 0)),
            pl.BlockSpec((1, c), lambda i: (0, 0)),
        ],
        out_specs=pl.BlockSpec((tr, c), lambda i: (i, 0)),
        out_shape=jax.ShapeDtypeStruct((n, c), x2d.dtype),
        compiler_params=pltpu.CompilerParams(dimension_semantics=("parallel",)),
    )(o2d, x2d, w, bias.reshape(1, c))


# ---------------------------------------------------------------------------
# Kernel 4: fused norm3 + GEGLU FeedForward + residual, hidden-dim (K) tiled
# ---------------------------------------------------------------------------
def _ff_kernel(h_ref, g_ref, b_ref, w1x_ref, b1x_ref, w1g_ref, b1g_ref,
               w2_ref, b2_ref, o_ref, acc_ref):
    j = pl.program_id(1)
    n, hf = _layernorm_f32(h_ref[...], g_ref, b_ref)
    nc = n.astype(w1x_ref.dtype)
    tx = jnp.dot(nc, w1x_ref[...], preferred_element_type=jnp.float32) \
        + b1x_ref[...].astype(jnp.float32)
    tg = jnp.dot(nc, w1g_ref[...], preferred_element_type=jnp.float32) \
        + b1g_ref[...].astype(jnp.float32)
    act = tx * _gelu_exact(tg)                  # GEGLU, elementwise per hidden unit
    part = jnp.dot(act.astype(w2_ref.dtype), w2_ref[...],
                   preferred_element_type=jnp.float32)

    @pl.when(j == 0)
    def _():
        acc_ref[...] = jnp.zeros_like(acc_ref)

    acc_ref[...] += part

    @pl.when(j == pl.num_programs(1) - 1)
    def _():
        out = hf + acc_ref[...] + b2_ref[...].astype(jnp.float32)
        o_ref[...] = out.astype(o_ref.dtype)


def fused_norm3_ff_residual(h2d, gamma, beta, w1, b1, w2, b2):
    n, c = h2d.shape
    hidden = w2.shape[0]                       # 4 * C
    # split the GEGLU projection once (value / gate halves); one-time prep cost.
    w1x, w1g = w1[:, :hidden], w1[:, hidden:]
    b1x, b1g = b1[:hidden], b1[hidden:]
    tr = _row_tile(n)
    th = _hidden_tile(hidden)
    return pl.pallas_call(
        _ff_kernel,
        grid=(n // tr, hidden // th),
        in_specs=[
            pl.BlockSpec((tr, c), lambda i, j: (i, 0)),
            pl.BlockSpec((1, c), lambda i, j: (0, 0)),
            pl.BlockSpec((1, c), lambda i, j: (0, 0)),
            pl.BlockSpec((c, th), lambda i, j: (0, j)),
            pl.BlockSpec((1, th), lambda i, j: (0, j)),
            pl.BlockSpec((c, th), lambda i, j: (0, j)),
            pl.BlockSpec((1, th), lambda i, j: (0, j)),
            pl.BlockSpec((th, c), lambda i, j: (j, 0)),
            pl.BlockSpec((1, c), lambda i, j: (0, 0)),
        ],
        out_specs=pl.BlockSpec((tr, c), lambda i, j: (i, 0)),
        out_shape=jax.ShapeDtypeStruct((n, c), h2d.dtype),
        scratch_shapes=[pltpu.VMEM((tr, c), jnp.float32)],
        compiler_params=pltpu.CompilerParams(
            dimension_semantics=("parallel", "arbitrary"),
            vmem_limit_bytes=_VMEM_LIMIT,
        ),
    )(h2d, gamma.reshape(1, c), beta.reshape(1, c),
      w1x, b1x.reshape(1, hidden), w1g, b1g.reshape(1, hidden),
      w2, b2.reshape(1, c))


# ---------------------------------------------------------------------------
# Forward pass (BasicTransformerBlock)
# ---------------------------------------------------------------------------
def basic_transformer_block(x, params, *, video_length, heads, dim_head):
    B, D, C = x.shape                  # B = batch * video_length
    inner = heads * dim_head
    N = B * D
    scale = float(dim_head) ** -0.5

    x2d = x.reshape(N, C)

    # ---- fused norm1 + Q/K/V projections (LN computed once, no n1 HBM writeback) ----
    q2d, k2d, v2d = norm1_qkv(x2d, params["norm1_g"], params["norm1_b"],
                              params["to_q_w"], params["to_k_w"], params["to_v_w"])
    q = q2d.reshape(B, D, inner)       # free reshapes
    k = k2d.reshape(B, D, inner)
    v = v2d.reshape(B, D, inner)

    # ---- SparseCausalAttention core: KV(frame i) = [frame 0 ; frame i-1]
    #      gathered by BlockSpec index maps, heads sliced by BlockSpec. ----
    o = sparse_causal_attention(q, k, v, video_length=video_length,
                                heads=heads, dim_head=dim_head, scale=scale)

    # ---- to_out projection + residual add (fused, residual kept in f32) ----
    h2d = attn_out_residual(o.reshape(N, inner), x2d,
                            params["to_out_w"], params["to_out_b"])

    # attn2 is None (cross_attention_dim=None) -> skipped.
    # spatial_attn / temp_attn branches: zero_module(to_out) makes their additive
    # contribution exactly zero for video_length > 1, so hidden_states is unchanged.
    # TODO(synk): SpatialAttention class body is not provided; its zeroed to_out makes
    # that branch a no-op, so it is omitted rather than faked.

    # ---- norm3 + GEGLU FeedForward + residual, hidden-dim tiled ----
    out2d = fused_norm3_ff_residual(h2d, params["norm3_g"], params["norm3_b"],
                                    params["ff1_w"], params["ff1_b"],
                                    params["ff2_w"], params["ff2_b"])
    return out2d.reshape(B, D, C)


# ---------------------------------------------------------------------------
# Pure-JAX reference (for correctness check)
# ---------------------------------------------------------------------------
def reference_block(x, params, *, video_length, heads, dim_head):
    B, D, C = x.shape
    b = B // video_length
    f = video_length
    inner = heads * dim_head
    scale = float(dim_head) ** -0.5

    def ln(t, g, bb):
        mu = jnp.mean(t, -1, keepdims=True)
        var = jnp.mean((t - mu) ** 2, -1, keepdims=True)
        return (t - mu) * jax.lax.rsqrt(var + EPS) * g + bb

    n1 = ln(x, params["norm1_g"], params["norm1_b"])
    q = n1 @ params["to_q_w"]
    k = n1 @ params["to_k_w"]
    v = n1 @ params["to_v_w"]
    k4 = k.reshape(b, f, D, inner)
    v4 = v.reshape(b, f, D, inner)
    if f > 1:
        former = jnp.maximum(jnp.arange(f) - 1, 0)
        k4 = jnp.concatenate(
            [jnp.broadcast_to(k4[:, 0:1], (b, f, D, inner)), k4[:, former]], axis=2)
        v4 = jnp.concatenate(
            [jnp.broadcast_to(v4[:, 0:1], (b, f, D, inner)), v4[:, former]], axis=2)
    skv = k4.shape[2]
    kc = k4.reshape(B, skv, inner)
    vc = v4.reshape(B, skv, inner)

    def h2b(t):
        bt, st, _ = t.shape
        return (t.reshape(bt, st, heads, dim_head)
                .transpose(0, 2, 1, 3)
                .reshape(bt * heads, st, dim_head))

    qh, kh, vh = h2b(q), h2b(kc), h2b(vc)
    s = jnp.einsum("bqd,bkd->bqk", qh, kh) * scale
    p = jax.nn.softmax(s, axis=-1)
    oh = jnp.einsum("bqk,bkd->bqd", p, vh)
    o = (oh.reshape(B, heads, D, dim_head)
         .transpose(0, 2, 1, 3)
         .reshape(B, D, inner))
    attn_out = o @ params["to_out_w"] + params["to_out_b"]
    h = attn_out + x

    n3 = ln(h, params["norm3_g"], params["norm3_b"])
    t = n3 @ params["ff1_w"] + params["ff1_b"]
    hid = params["ff2_w"].shape[0]
    xp, gate = t[..., :hid], t[..., hid:]
    act = xp * (0.5 * gate * (1.0 + jax.lax.erf(gate * _INV_SQRT2)))
    ff = act @ params["ff2_w"] + params["ff2_b"]
    return ff + h


# ---------------------------------------------------------------------------
# Main
# ---------------------------------------------------------------------------
if __name__ == "__main__":
    # small config: dim=256, heads=2, head_dim=128 (lane-dense head blocks),
    # batch=2, frames=4, spatial tokens=16
    C = 256
    heads = 2
    dim_head = 128
    inner = heads * dim_head
    b = 2
    f = 4
    D = 16
    B = b * f
    ff_hidden = 4 * C

    key = jax.random.PRNGKey(0)
    ks = jax.random.split(key, 10)

    params = {
        "norm1_g": jnp.ones((C,), jnp.float32),
        "norm1_b": jnp.zeros((C,), jnp.float32),
        "to_q_w": 0.02 * jax.random.normal(ks[0], (C, inner), jnp.float32),
        "to_k_w": 0.02 * jax.random.normal(ks[1], (C, inner), jnp.float32),
        "to_v_w": 0.02 * jax.random.normal(ks[2], (C, inner), jnp.float32),
        "to_out_w": 0.02 * jax.random.normal(ks[3], (inner, C), jnp.float32),
        "to_out_b": 0.01 * jax.random.normal(ks[4], (C,), jnp.float32),
        "norm3_g": jnp.ones((C,), jnp.float32),
        "norm3_b": jnp.zeros((C,), jnp.float32),
        "ff1_w": 0.02 * jax.random.normal(ks[5], (C, 2 * ff_hidden), jnp.float32),
        "ff1_b": 0.01 * jax.random.normal(ks[6], (2 * ff_hidden,), jnp.float32),
        "ff2_w": 0.02 * jax.random.normal(ks[7], (ff_hidden, C), jnp.float32),
        "ff2_b": 0.01 * jax.random.normal(ks[8], (C,), jnp.float32),
    }

    x = jax.random.normal(ks[9], (B, D, C), jnp.float32)

    fwd = jax.jit(functools.partial(basic_transformer_block,
                                    video_length=f, heads=heads, dim_head=dim_head))
    out = jax.block_until_ready(fwd(x, params))

    with jax.default_matmul_precision("float32"):
        ref = jax.block_until_ready(
            reference_block(x, params, video_length=f, heads=heads, dim_head=dim_head))

    np.testing.assert_allclose(np.array(out), np.array(ref), rtol=2e-4, atol=2e-5)
    print("KERNEL_OK")
</pallas_src>

<mosaic_0001>
module attributes {stable_mosaic.version = 11 : i64} {
  func.func @_norm_qkv_kernel(%arg0: i32, %arg1: memref<128x256xf32, #tpu.memory_space<vmem>>, %arg2: memref<1x256xf32, #tpu.memory_space<vmem>>, %arg3: memref<1x256xf32, #tpu.memory_space<vmem>>, %arg4: memref<256x256xf32, #tpu.memory_space<vmem>>, %arg5: memref<256x256xf32, #tpu.memory_space<vmem>>, %arg6: memref<256x256xf32, #tpu.memory_space<vmem>>, %arg7: memref<128x256xf32, #tpu.memory_space<vmem>>, %arg8: memref<128x256xf32, #tpu.memory_space<vmem>>, %arg9: memref<128x256xf32, #tpu.memory_space<vmem>>) attributes {dimension_semantics = [#tpu.dimension_semantics<parallel>], iteration_bounds = array<i64: 1>, scalar_prefetch = 0 : i64, scratch_operands = 0 : i64, tpu.core_type = #tpu.core_type<tc>, window_params = [{transform_indices = @transform_0, window_bounds = array<i64: 128, 256>}, {pipeline_mode = #tpu.pipeline_mode<synchronous>, transform_indices = @transform_1, window_bounds = array<i64: 1, 256>}, {pipeline_mode = #tpu.pipeline_mode<synchronous>, transform_indices = @transform_2, window_bounds = array<i64: 1, 256>}, {pipeline_mode = #tpu.pipeline_mode<synchronous>, transform_indices = @transform_3, window_bounds = array<i64: 256, 256>}, {pipeline_mode = #tpu.pipeline_mode<synchronous>, transform_indices = @transform_4, window_bounds = array<i64: 256, 256>}, {pipeline_mode = #tpu.pipeline_mode<synchronous>, transform_indices = @transform_5, window_bounds = array<i64: 256, 256>}, {transform_indices = @transform_6, window_bounds = array<i64: 128, 256>}, {transform_indices = @transform_7, window_bounds = array<i64: 128, 256>}, {transform_indices = @transform_8, window_bounds = array<i64: 128, 256>}]} {
    %c0 = arith.constant 0 : index
    %c0_0 = arith.constant 0 : index
    %0 = vector.load %arg1[%c0, %c0_0] : memref<128x256xf32, #tpu.memory_space<vmem>>, vector<128x256xf32>
    %cst = arith.constant dense<0.000000e+00> : vector<128xf32>
    %1 = vector.multi_reduction <add>, %0, %cst [1] : vector<128x256xf32> to vector<128xf32>
    %2 = vector.shape_cast %1 : vector<128xf32> to vector<128x1xf32>
    %cst_1 = arith.constant 2.560000e+02 : f32
    %3 = vector.broadcast %cst_1 : f32 to vector<128x1xf32>
    %4 = arith.divf %2, %3 : vector<128x1xf32>
    %5 = vector.broadcast %4 : vector<128x1xf32> to vector<128x256xf32>
    %6 = arith.subf %0, %5 : vector<128x256xf32>
    %7 = arith.mulf %6, %6 : vector<128x256xf32>
    %cst_2 = arith.constant dense<0.000000e+00> : vector<128xf32>
    %8 = vector.multi_reduction <add>, %7, %cst_2 [1] : vector<128x256xf32> to vector<128xf32>
    %9 = vector.shape_cast %8 : vector<128xf32> to vector<128x1xf32>
    %cst_3 = arith.constant 2.560000e+02 : f32
    %10 = vector.broadcast %cst_3 : f32 to vector<128x1xf32>
    %11 = arith.divf %9, %10 : vector<128x1xf32>
    %12 = vector.broadcast %4 : vector<128x1xf32> to vector<128x256xf32>
    %13 = arith.subf %0, %12 : vector<128x256xf32>
    %cst_4 = arith.constant 9.99999974E-6 : f32
    %14 = vector.broadcast %cst_4 : f32 to vector<128x1xf32>
    %15 = arith.addf %11, %14 : vector<128x1xf32>
    %16 = math.rsqrt %15 : vector<128x1xf32>
    %17 = vector.broadcast %16 : vector<128x1xf32> to vector<128x256xf32>
    %18 = arith.mulf %13, %17 : vector<128x256xf32>
    %c0_5 = arith.constant 0 : index
    %c0_6 = arith.constant 0 : index
    %19 = vector.load %arg2[%c0_5, %c0_6] : memref<1x256xf32, #tpu.memory_space<vmem>>, vector<1x256xf32>
    %20 = vector.broadcast %19 : vector<1x256xf32> to vector<128x256xf32>
    %21 = arith.mulf %18, %20 : vector<128x256xf32>
    %c0_7 = arith.constant 0 : index
    %c0_8 = arith.constant 0 : index
    %22 = vector.load %arg3[%c0_7, %c0_8] : memref<1x256xf32, #tpu.memory_space<vmem>>, vector<1x256xf32>
    %23 = vector.broadcast %22 : vector<1x256xf32> to vector<128x256xf32>
    %24 = arith.addf %21, %23 : vector<128x256xf32>
    %c0_9 = arith.constant 0 : index
    %c0_10 = arith.constant 0 : index
    %25 = vector.load %arg4[%c0_9, %c0_10] : memref<256x256xf32, #tpu.memory_space<vmem>>, vector<256x256xf32>
    %cst_11 = arith.constant dense<0.000000e+00> : vector<128x256xf32>
    %26 = tpu.matmul %24, %25, %cst_11 {dimension_numbers = #tpu.dot_dimension_numbers<[1], [0], [0], [1], [0, 0, 1, 1], [], []>} : vector<128x256xf32>, vector<256x256xf32>, vector<128x256xf32> -> vector<128x256xf32>
    %c0_12 = arith.constant 0 : index
    %c0_13 = arith.constant 0 : index
    %27 = vector.load %arg7[%c0_12, %c0_13] : memref<128x256xf32, #tpu.memory_space<vmem>>, vector<128x256xf32>
    tpu.vector_store %arg7[%c0_12, %c0_13], %26 {strides = array<i32>} : memref<128x256xf32, #tpu.memory_space<vmem>>, vector<128x256xf32>,
    %c0_14 = arith.constant 0 : index
    %c0_15 = arith.constant 0 : index
    %28 = vector.load %arg5[%c0_14, %c0_15] : memref<256x256xf32, #tpu.memory_space<vmem>>, vector<256x256xf32>
    %cst_16 = arith.constant dense<0.000000e+00> : vector<128x256xf32>
    %29 = tpu.matmul %24, %28, %cst_16 {dimension_numbers = #tpu.dot_dimension_numbers<[1], [0], [0], [1], [0, 0, 1, 1], [], []>} : vector<128x256xf32>, vector<256x256xf32>, vector<128x256xf32> -> vector<128x256xf32>
    %c0_17 = arith.constant 0 : index
    %c0_18 = arith.constant 0 : index
    %30 = vector.load %arg8[%c0_17, %c0_18] : memref<128x256xf32, #tpu.memory_space<vmem>>, vector<128x256xf32>
    tpu.vector_store %arg8[%c0_17, %c0_18], %29 {strides = array<i32>} : memref<128x256xf32, #tpu.memory_space<vmem>>, vector<128x256xf32>,
    %c0_19 = arith.constant 0 : index
    %c0_20 = arith.constant 0 : index
    %31 = vector.load %arg6[%c0_19, %c0_20] : memref<256x256xf32, #tpu.memory_space<vmem>>, vector<256x256xf32>
    %cst_21 = arith.constant dense<0.000000e+00> : vector<128x256xf32>
    %32 = tpu.matmul %24, %31, %cst_21 {dimension_numbers = #tpu.dot_dimension_numbers<[1], [0], [0], [1], [0, 0, 1, 1], [], []>} : vector<128x256xf32>, vector<256x256xf32>, vector<128x256xf32> -> vector<128x256xf32>
    %c0_22 = arith.constant 0 : index
    %c0_23 = arith.constant 0 : index
    %33 = vector.load %arg9[%c0_22, %c0_23] : memref<128x256xf32, #tpu.memory_space<vmem>>, vector<128x256xf32>
    tpu.vector_store %arg9[%c0_22, %c0_23], %32 {strides = array<i32>} : memref<128x256xf32, #tpu.memory_space<vmem>>, vector<128x256xf32>,
    return
  }
  func.func @transform_0(%arg0: i32) -> (i32, i32) {
    %c0_i32 = arith.constant 0 : i32
    %c0_i32_0 = arith.constant 0 : i32
    return %arg0, %c0_i32 : i32, i32
  }
  func.func @transform_1(%arg0: i32) -> (i32, i32) {
    %c0_i32 = arith.constant 0 : i32
    %c0_i32_0 = arith.constant 0 : i32
    %c0_i32_1 = arith.constant 0 : i32
    return %c0_i32, %c0_i32_0 : i32, i32
  }
  func.func @transform_2(%arg0: i32) -> (i32, i32) {
    %c0_i32 = arith.constant 0 : i32
    %c0_i32_0 = arith.constant 0 : i32
    %c0_i32_1 = arith.constant 0 : i32
    return %c0_i32, %c0_i32_0 : i32, i32
  }
  func.func @transform_3(%arg0: i32) -> (i32, i32) {
    %c0_i32 = arith.constant 0 : i32
    %c0_i32_0 = arith.constant 0 : i32
    %c0_i32_1 = arith.constant 0 : i32
    return %c0_i32, %c0_i32_0 : i32, i32
  }
  func.func @transform_4(%arg0: i32) -> (i32, i32) {
    %c0_i32 = arith.constant 0 : i32
    %c0_i32_0 = arith.constant 0 : i32
    %c0_i32_1 = arith.constant 0 : i32
    return %c0_i32, %c0_i32_0 : i32, i32
  }
  func.func @transform_5(%arg0: i32) -> (i32, i32) {
    %c0_i32 = arith.constant 0 : i32
    %c0_i32_0 = arith.constant 0 : i32
    %c0_i32_1 = arith.constant 0 : i32
    return %c0_i32, %c0_i32_0 : i32, i32
  }
  func.func @transform_6(%arg0: i32) -> (i32, i32) {
    %c0_i32 = arith.constant 0 : i32
    %c0_i32_0 = arith.constant 0 : i32
    return %arg0, %c0_i32 : i32, i32
  }
  func.func @transform_7(%arg0: i32) -> (i32, i32) {
    %c0_i32 = arith.constant 0 : i32
    %c0_i32_0 = arith.constant 0 : i32
    return %arg0, %c0_i32 : i32, i32
  }
  func.func @transform_8(%arg0: i32) -> (i32, i32) {
    %c0_i32 = arith.constant 0 : i32
    %c0_i32_0 = arith.constant 0 : i32
    return %arg0, %c0_i32 : i32, i32
  }
}

module attributes {stable_mosaic.version = 11 : i64} {
  func.func @_attn_kernel(%arg0: i32, %arg1: i32, %arg2: i32, %arg3: memref<1x16x128xf32, #tpu.memory_space<vmem>>, %arg4: memref<1x16x128xf32, #tpu.memory_space<vmem>>, %arg5: memref<1x16x128xf32, #tpu.memory_space<vmem>>, %arg6: memref<1x16x128xf32, #tpu.memory_space<vmem>>, %arg7: memref<1x16x128xf32, #tpu.memory_space<vmem>>, %arg8: memref<1x16x128xf32, #tpu.memory_space<vmem>>) attributes {dimension_semantics = [#tpu.dimension_semantics<parallel>, #tpu.dimension_semantics<parallel>, #tpu.dimension_semantics<parallel>], iteration_bounds = array<i64: 2, 4, 2>, scalar_prefetch = 0 : i64, scratch_operands = 0 : i64, tpu.core_type = #tpu.core_type<tc>, window_params = [{transform_indices = @transform_0, window_bounds = array<i64: 1, 16, 128>}, {transform_indices = @transform_1, window_bounds = array<i64: 1, 16, 128>}, {transform_indices = @transform_2, window_bounds = array<i64: 1, 16, 128>}, {transform_indices = @transform_3, window_bounds = array<i64: 1, 16, 128>}, {transform_indices = @transform_4, window_bounds = array<i64: 1, 16, 128>}, {transform_indices = @transform_5, window_bounds = array<i64: 1, 16, 128>}]} {
    %c0 = arith.constant 0 : index
    %c0_0 = arith.constant 0 : index
    %c0_1 = arith.constant 0 : index
    %0 = vector.load %arg3[%c0, %c0_0, %c0_1] : memref<1x16x128xf32, #tpu.memory_space<vmem>>, vector<1x16x128xf32>
    %1 = vector.shape_cast %0 : vector<1x16x128xf32> to vector<16x128xf32>
    %c0_2 = arith.constant 0 : index
    %c0_3 = arith.constant 0 : index
    %c0_4 = arith.constant 0 : index
    %2 = vector.load %arg4[%c0_2, %c0_3, %c0_4] : memref<1x16x128xf32, #tpu.memory_space<vmem>>, vector<1x16x128xf32>
    %3 = vector.shape_cast %2 : vector<1x16x128xf32> to vector<16x128xf32>
    %c0_5 = arith.constant 0 : index
    %c0_6 = arith.constant 0 : index
    %c0_7 = arith.constant 0 : index
    %4 = vector.load %arg5[%c0_5, %c0_6, %c0_7] : memref<1x16x128xf32, #tpu.memory_space<vmem>>, vector<1x16x128xf32>
    %5 = vector.shape_cast %4 : vector<1x16x128xf32> to vector<16x128xf32>
    %c0_8 = arith.constant 0 : index
    %c0_9 = arith.constant 0 : index
    %c0_10 = arith.constant 0 : index
    %6 = vector.load %arg6[%c0_8, %c0_9, %c0_10] : memref<1x16x128xf32, #tpu.memory_space<vmem>>, vector<1x16x128xf32>
    %7 = vector.shape_cast %6 : vector<1x16x128xf32> to vector<16x128xf32>
    %c0_11 = arith.constant 0 : index
    %c0_12 = arith.constant 0 : index
    %c0_13 = arith.constant 0 : index
    %8 = vector.load %arg7[%c0_11, %c0_12, %c0_13] : memref<1x16x128xf32, #tpu.memory_space<vmem>>, vector<1x16x128xf32>
    %9 = vector.shape_cast %8 : vector<1x16x128xf32> to vector<16x128xf32>
    %cst = arith.constant 0.0883883461 : f32
    %10 = vector.broadcast %cst : f32 to vector<16x128xf32>
    %11 = arith.mulf %1, %10 : vector<16x128xf32>
    %cst_14 = arith.constant dense<0.000000e+00> : vector<16x16xf32>
    %12 = tpu.matmul %11, %3, %cst_14 {dimension_numbers = #tpu.dot_dimension_numbers<[1], [1], [0], [0], [0, 0, 1, 0], [], []>} : vector<16x128xf32>, vector<16x128xf32>, vector<16x16xf32> -> vector<16x16xf32>
    %cst_15 = arith.constant dense<0.000000e+00> : vector<16x16xf32>
    %13 = tpu.matmul %11, %5, %cst_15 {dimension_numbers = #tpu.dot_dimension_numbers<[1], [1], [0], [0], [0, 0, 1, 0], [], []>} : vector<16x128xf32>, vector<16x128xf32>, vector<16x16xf32> -> vector<16x16xf32>
    %cst_16 = arith.constant dense<0xFF800000> : vector<16xf32>
    %14 = vector.multi_reduction <maximumf>, %12, %cst_16 [1] : vector<16x16xf32> to vector<16xf32>
    %15 = vector.shape_cast %14 : vector<16xf32> to vector<16x1xf32>
    %cst_17 = arith.constant dense<0xFF800000> : vector<16xf32>
    %16 = vector.multi_reduction <maximumf>, %13, %cst_17 [1] : vector<16x16xf32> to vector<16xf32>
    %17 = vector.shape_cast %16 : vector<16xf32> to vector<16x1xf32>
    %18 = arith.maximumf %15, %17 : vector<16x1xf32>
    %19 = vector.broadcast %18 : vector<16x1xf32> to vector<16x16xf32>
    %20 = arith.subf %12, %19 : vector<16x16xf32>
    %21 = math.exp %20 : vector<16x16xf32>
    %22 = vector.broadcast %18 : vector<16x1xf32> to vector<16x16xf32>
    %23 = arith.subf %13, %22 : vector<16x16xf32>
    %24 = math.exp %23 : vector<16x16xf32>
    %cst_18 = arith.constant dense<0.000000e+00> : vector<16xf32>
    %25 = vector.multi_reduction <add>, %21, %cst_18 [1] : vector<16x16xf32> to vector<16xf32>
    %26 = vector.shape_cast %25 : vector<16xf32> to vector<16x1xf32>
    %cst_19 = arith.constant dense<0.000000e+00> : vector<16xf32>
    %27 = vector.multi_reduction <add>, %24, %cst_19 [1] : vector<16x16xf32> to vector<16xf32>
    %28 = vector.shape_cast %27 : vector<16xf32> to vector<16x1xf32>
    %29 = arith.addf %26, %28 : vector<16x1xf32>
    %cst_20 = arith.constant dense<0.000000e+00> : vector<16x128xf32>
    %30 = tpu.matmul %21, %7, %cst_20 {dimension_numbers = #tpu.dot_dimension_numbers<[1], [0], [0], [1], [0, 0, 1, 1], [], []>} : vector<16x16xf32>, vector<16x128xf32>, vector<16x128xf32> -> vector<16x128xf32>
    %cst_21 = arith.constant dense<0.000000e+00> : vector<16x128xf32>
    %31 = tpu.matmul %24, %9, %cst_21 {dimension_numbers = #tpu.dot_dimension_numbers<[1], [0], [0], [1], [0, 0, 1, 1], [], []>} : vector<16x16xf32>, vector<16x128xf32>, vector<16x128xf32> -> vector<16x128xf32>
    %32 = arith.addf %30, %31 : vector<16x128xf32>
    %33 = tpu.reciprocal %29 : vector<16x1xf32> -> vector<16x1xf32>
    %34 = vector.broadcast %33 : vector<16x1xf32> to vector<16x128xf32>
    %35 = arith.mulf %32, %34 : vector<16x128xf32>
    %c0_22 = arith.constant 0 : index
    %c0_23 = arith.constant 0 : index
    %c0_24 = arith.constant 0 : index
    %36 = vector.load %arg8[%c0_22, %c0_23, %c0_24] : memref<1x16x128xf32, #tpu.memory_space<vmem>>, vector<1x16x128xf32>
    %37 = vector.shape_cast %36 : vector<1x16x128xf32> to vector<16x128xf32>
    %38 = vector.shape_cast %35 : vector<16x128xf32> to vector<1x16x128xf32>
    tpu.vector_store %arg8[%c0_22, %c0_23, %c0_24], %38 {strides = array<i32>} : memref<1x16x128xf32, #tpu.memory_space<vmem>>, vector<1x16x128xf32>,
    return
  }
  func.func @transform_0(%arg0: i32, %arg1: i32, %arg2: i32) -> (i32, i32, i32) {
    %c4_i32 = arith.constant 4 : i32
    %0 = arith.muli %arg0, %c4_i32 : i32
    %1 = arith.addi %0, %arg1 : i32
    %c0_i32 = arith.constant 0 : i32
    %c0_i32_0 = arith.constant 0 : i32
    return %1, %c0_i32, %arg2 : i32, i32, i32
  }
  func.func @transform_1(%arg0: i32, %arg1: i32, %arg2: i32) -> (i32, i32, i32) {
    %c4_i32 = arith.constant 4 : i32
    %0 = arith.muli %arg0, %c4_i32 : i32
    %c0_i32 = arith.constant 0 : i32
    %c0_i32_0 = arith.constant 0 : i32
    return %0, %c0_i32, %arg2 : i32, i32, i32
  }
  func.func @transform_2(%arg0: i32, %arg1: i32, %arg2: i32) -> (i32, i32, i32) {
    %c4_i32 = arith.constant 4 : i32
    %0 = arith.muli %arg0, %c4_i32 : i32
    %c1_i32 = arith.constant 1 : i32
    %1 = arith.subi %arg1, %c1_i32 : i32
    %c0_i32 = arith.constant 0 : i32
    %2 = arith.maxsi %1, %c0_i32 : i32
    %3 = arith.addi %0, %2 : i32
    %c0_i32_0 = arith.constant 0 : i32
    %c0_i32_1 = arith.constant 0 : i32
    return %3, %c0_i32_0, %arg2 : i32, i32, i32
  }
  func.func @transform_3(%arg0: i32, %arg1: i32, %arg2: i32) -> (i32, i32, i32) {
    %c4_i32 = arith.constant 4 : i32
    %0 = arith.muli %arg0, %c4_i32 : i32
    %c0_i32 = arith.constant 0 : i32
    %c0_i32_0 = arith.constant 0 : i32
    return %0, %c0_i32, %arg2 : i32, i32, i32
  }
  func.func @transform_4(%arg0: i32, %arg1: i32, %arg2: i32) -> (i32, i32, i32) {
    %c4_i32 = arith.constant 4 : i32
    %0 = arith.muli %arg0, %c4_i32 : i32
    %c1_i32 = arith.constant 1 : i32
    %1 = arith.subi %arg1, %c1_i32 : i32
    %c0_i32 = arith.constant 0 : i32
    %2 = arith.maxsi %1, %c0_i32 : i32
    %3 = arith.addi %0, %2 : i32
    %c0_i32_0 = arith.constant 0 : i32
    %c0_i32_1 = arith.constant 0 : i32
    return %3, %c0_i32_0, %arg2 : i32, i32, i32
  }
  func.func @transform_5(%arg0: i32, %arg1: i32, %arg2: i32) -> (i32, i32, i32) {
    %c4_i32 = arith.constant 4 : i32
    %0 = arith.muli %arg0, %c4_i32 : i32
    %1 = arith.addi %0, %arg1 : i32
    %c0_i32 = arith.constant 0 : i32
    %c0_i32_0 = arith.constant 0 : i32
    return %1, %c0_i32, %arg2 : i32, i32, i32
  }
}

module attributes {stable_mosaic.version = 11 : i64} {
  func.func @_out_residual_kernel(%arg0: i32, %arg1: memref<128x256xf32, #tpu.memory_space<vmem>>, %arg2: memref<128x256xf32, #tpu.memory_space<vmem>>, %arg3: memref<256x256xf32, #tpu.memory_space<vmem>>, %arg4: memref<1x256xf32, #tpu.memory_space<vmem>>, %arg5: memref<128x256xf32, #tpu.memory_space<vmem>>) attributes {dimension_semantics = [#tpu.dimension_semantics<parallel>], iteration_bounds = array<i64: 1>, scalar_prefetch = 0 : i64, scratch_operands = 0 : i64, tpu.core_type = #tpu.core_type<tc>, window_params = [{transform_indices = @transform_0, window_bounds = array<i64: 128, 256>}, {transform_indices = @transform_1, window_bounds = array<i64: 128, 256>}, {pipeline_mode = #tpu.pipeline_mode<synchronous>, transform_indices = @transform_2, window_bounds = array<i64: 256, 256>}, {pipeline_mode = #tpu.pipeline_mode<synchronous>, transform_indices = @transform_3, window_bounds = array<i64: 1, 256>}, {transform_indices = @transform_4, window_bounds = array<i64: 128, 256>}]} {
    %c0 = arith.constant 0 : index
    %c0_0 = arith.constant 0 : index
    %0 = vector.load %arg1[%c0, %c0_0] : memref<128x256xf32, #tpu.memory_space<vmem>>, vector<128x256xf32>
    %c0_1 = arith.constant 0 : index
    %c0_2 = arith.constant 0 : index
    %1 = vector.load %arg3[%c0_1, %c0_2] : memref<256x256xf32, #tpu.memory_space<vmem>>, vector<256x256xf32>
    %cst = arith.constant dense<0.000000e+00> : vector<128x256xf32>
    %2 = tpu.matmul %0, %1, %cst {dimension_numbers = #tpu.dot_dimension_numbers<[1], [0], [0], [1], [0, 0, 1, 1], [], []>} : vector<128x256xf32>, vector<256x256xf32>, vector<128x256xf32> -> vector<128x256xf32>
    %c0_3 = arith.constant 0 : index
    %c0_4 = arith.constant 0 : index
    %3 = vector.load %arg4[%c0_3, %c0_4] : memref<1x256xf32, #tpu.memory_space<vmem>>, vector<1x256xf32>
    %4 = vector.broadcast %3 : vector<1x256xf32> to vector<128x256xf32>
    %5 = arith.addf %2, %4 : vector<128x256xf32>
    %c0_5 = arith.constant 0 : index
    %c0_6 = arith.constant 0 : index
    %6 = vector.load %arg2[%c0_5, %c0_6] : memref<128x256xf32, #tpu.memory_space<vmem>>, vector<128x256xf32>
    %7 = arith.addf %5, %6 : vector<128x256xf32>
    %c0_7 = arith.constant 0 : index
    %c0_8 = arith.constant 0 : index
    %8 = vector.load %arg5[%c0_7, %c0_8] : memref<128x256xf32, #tpu.memory_space<vmem>>, vector<128x256xf32>
    tpu.vector_store %arg5[%c0_7, %c0_8], %7 {strides = array<i32>} : memref<128x256xf32, #tpu.memory_space<vmem>>, vector<128x256xf32>,
    return
  }
  func.func @transform_0(%arg0: i32) -> (i32, i32) {
    %c0_i32 = arith.constant 0 : i32
    %c0_i32_0 = arith.constant 0 : i32
    return %arg0, %c0_i32 : i32, i32
  }
  func.func @transform_1(%arg0: i32) -> (i32, i32) {
    %c0_i32 = arith.constant 0 : i32
    %c0_i32_0 = arith.constant 0 : i32
    return %arg0, %c0_i32 : i32, i32
  }
  func.func @transform_2(%arg0: i32) -> (i32, i32) {
    %c0_i32 = arith.constant 0 : i32
    %c0_i32_0 = arith.constant 0 : i32
    %c0_i32_1 = arith.constant 0 : i32
    return %c0_i32, %c0_i32_0 : i32, i32
  }
  func.func @transform_3(%arg0: i32) -> (i32, i32) {
    %c0_i32 = arith.constant 0 : i32
    %c0_i32_0 = arith.constant 0 : i32
    %c0_i32_1 = arith.constant 0 : i32
    return %c0_i32, %c0_i32_0 : i32, i32
  }
  func.func @transform_4(%arg0: i32) -> (i32, i32) {
    %c0_i32 = arith.constant 0 : i32
    %c0_i32_0 = arith.constant 0 : i32
    return %arg0, %c0_i32 : i32, i32
  }
}

module attributes {stable_mosaic.version = 11 : i64} {
  func.func @_ff_kernel(%arg0: i32, %arg1: i32, %arg2: memref<128x256xf32, #tpu.memory_space<vmem>>, %arg3: memref<1x256xf32, #tpu.memory_space<vmem>>, %arg4: memref<1x256xf32, #tpu.memory_space<vmem>>, %arg5: memref<256x512xf32, #tpu.memory_space<vmem>>, %arg6: memref<1x512xf32, #tpu.memory_space<vmem>>, %arg7: memref<256x512xf32, #tpu.memory_space<vmem>>, %arg8: memref<1x512xf32, #tpu.memory_space<vmem>>, %arg9: memref<512x256xf32, #tpu.memory_space<vmem>>, %arg10: memref<1x256xf32, #tpu.memory_space<vmem>>, %arg11: memref<128x256xf32, #tpu.memory_space<vmem>>, %arg12: memref<128x256xf32, #tpu.memory_space<vmem>>) attributes {dimension_semantics = [#tpu.dimension_semantics<parallel>, #tpu.dimension_semantics<arbitrary>], iteration_bounds = array<i64: 1, 2>, scalar_prefetch = 0 : i64, scratch_operands = 1 : i64, tpu.core_type = #tpu.core_type<tc>, window_params = [{transform_indices = @transform_0, window_bounds = array<i64: 128, 256>}, {pipeline_mode = #tpu.pipeline_mode<synchronous>, transform_indices = @transform_1, window_bounds = array<i64: 1, 256>}, {pipeline_mode = #tpu.pipeline_mode<synchronous>, transform_indices = @transform_2, window_bounds = array<i64: 1, 256>}, {transform_indices = @transform_3, window_bounds = array<i64: 256, 512>}, {transform_indices = @transform_4, window_bounds = array<i64: 1, 512>}, {transform_indices = @transform_5, window_bounds = array<i64: 256, 512>}, {transform_indices = @transform_6, window_bounds = array<i64: 1, 512>}, {transform_indices = @transform_7, window_bounds = array<i64: 512, 256>}, {pipeline_mode = #tpu.pipeline_mode<synchronous>, transform_indices = @transform_8, window_bounds = array<i64: 1, 256>}, {transform_indices = @transform_9, window_bounds = array<i64: 128, 256>}]} {
    %c0 = arith.constant 0 : index
    %c0_0 = arith.constant 0 : index
    %0 = vector.load %arg2[%c0, %c0_0] : memref<128x256xf32, #tpu.memory_space<vmem>>, vector<128x256xf32>
    %cst = arith.constant dense<0.000000e+00> : vector<128xf32>
    %1 = vector.multi_reduction <add>, %0, %cst [1] : vector<128x256xf32> to vector<128xf32>
    %2 = vector.shape_cast %1 : vector<128xf32> to vector<128x1xf32>
    %cst_1 = arith.constant 2.560000e+02 : f32
    %3 = vector.broadcast %cst_1 : f32 to vector<128x1xf32>
    %4 = arith.divf %2, %3 : vector<128x1xf32>
    %5 = vector.broadcast %4 : vector<128x1xf32> to vector<128x256xf32>
    %6 = arith.subf %0, %5 : vector<128x256xf32>
    %7 = arith.mulf %6, %6 : vector<128x256xf32>
    %cst_2 = arith.constant dense<0.000000e+00> : vector<128xf32>
    %8 = vector.multi_reduction <add>, %7, %cst_2 [1] : vector<128x256xf32> to vector<128xf32>
    %9 = vector.shape_cast %8 : vector<128xf32> to vector<128x1xf32>
    %cst_3 = arith.constant 2.560000e+02 : f32
    %10 = vector.broadcast %cst_3 : f32 to vector<128x1xf32>
    %11 = arith.divf %9, %10 : vector<128x1xf32>
    %12 = vector.broadcast %4 : vector<128x1xf32> to vector<128x256xf32>
    %13 = arith.subf %0, %12 : vector<128x256xf32>
    %cst_4 = arith.constant 9.99999974E-6 : f32
    %14 = vector.broadcast %cst_4 : f32 to vector<128x1xf32>
    %15 = arith.addf %11, %14 : vector<128x1xf32>
    %16 = math.rsqrt %15 : vector<128x1xf32>
    %17 = vector.broadcast %16 : vector<128x1xf32> to vector<128x256xf32>
    %18 = arith.mulf %13, %17 : vector<128x256xf32>
    %c0_5 = arith.constant 0 : index
    %c0_6 = arith.constant 0 : index
    %19 = vector.load %arg3[%c0_5, %c0_6] : memref<1x256xf32, #tpu.memory_space<vmem>>, vector<1x256xf32>
    %20 = vector.broadcast %19 : vector<1x256xf32> to vector<128x256xf32>
    %21 = arith.mulf %18, %20 : vector<128x256xf32>
    %c0_7 = arith.constant 0 : index
    %c0_8 = arith.constant 0 : index
    %22 = vector.load %arg4[%c0_7, %c0_8] : memref<1x256xf32, #tpu.memory_space<vmem>>, vector<1x256xf32>
    %23 = vector.broadcast %22 : vector<1x256xf32> to vector<128x256xf32>
    %24 = arith.addf %21, %23 : vector<128x256xf32>
    %c0_9 = arith.constant 0 : index
    %c0_10 = arith.constant 0 : index
    %25 = vector.load %arg5[%c0_9, %c0_10] : memref<256x512xf32, #tpu.memory_space<vmem>>, vector<256x512xf32>
    %cst_11 = arith.constant dense<0.000000e+00> : vector<128x512xf32>
    %26 = tpu.matmul %24, %25, %cst_11 {dimension_numbers = #tpu.dot_dimension_numbers<[1], [0], [0], [1], [0, 0, 1, 1], [], []>} : vector<128x256xf32>, vector<256x512xf32>, vector<128x512xf32> -> vector<128x512xf32>
    %c0_12 = arith.constant 0 : index
    %c0_13 = arith.constant 0 : index
    %27 = vector.load %arg6[%c0_12, %c0_13] : memref<1x512xf32, #tpu.memory_space<vmem>>, vector<1x512xf32>
    %28 = vector.broadcast %27 : vector<1x512xf32> to vector<128x512xf32>
    %29 = arith.addf %26, %28 : vector<128x512xf32>
    %c0_14 = arith.constant 0 : index
    %c0_15 = arith.constant 0 : index
    %30 = vector.load %arg7[%c0_14, %c0_15] : memref<256x512xf32, #tpu.memory_space<vmem>>, vector<256x512xf32>
    %cst_16 = arith.constant dense<0.000000e+00> : vector<128x512xf32>
    %31 = tpu.matmul %24, %30, %cst_16 {dimension_numbers = #tpu.dot_dimension_numbers<[1], [0], [0], [1], [0, 0, 1, 1], [], []>} : vector<128x256xf32>, vector<256x512xf32>, vector<128x512xf32> -> vector<128x512xf32>
    %c0_17 = arith.constant 0 : index
    %c0_18 = arith.constant 0 : index
    %32 = vector.load %arg8[%c0_17, %c0_18] : memref<1x512xf32, #tpu.memory_space<vmem>>, vector<1x512xf32>
    %33 = vector.broadcast %32 : vector<1x512xf32> to vector<128x512xf32>
    %34 = arith.addf %31, %33 : vector<128x512xf32>
    %cst_19 = arith.constant 5.000000e-01 : f32
    %35 = vector.broadcast %cst_19 : f32 to vector<128x512xf32>
    %36 = arith.mulf %35, %34 : vector<128x512xf32>
    %cst_20 = arith.constant 0.707106769 : f32
    %37 = vector.broadcast %cst_20 : f32 to vector<128x512xf32>
    %38 = arith.mulf %34, %37 : vector<128x512xf32>
    %39 = math.erf %38 : vector<128x512xf32>
    %cst_21 = arith.constant 1.000000e+00 : f32
    %40 = vector.broadcast %cst_21 : f32 to vector<128x512xf32>
    %41 = arith.addf %40, %39 : vector<128x512xf32>
    %42 = arith.mulf %36, %41 : vector<128x512xf32>
    %43 = arith.mulf %29, %42 : vector<128x512xf32>
    %c0_22 = arith.constant 0 : index
    %c0_23 = arith.constant 0 : index
    %44 = vector.load %arg9[%c0_22, %c0_23] : memref<512x256xf32, #tpu.memory_space<vmem>>, vector<512x256xf32>
    %cst_24 = arith.constant dense<0.000000e+00> : vector<128x256xf32>
    %45 = tpu.matmul %43, %44, %cst_24 {dimension_numbers = #tpu.dot_dimension_numbers<[1], [0], [0], [1], [0, 0, 1, 1], [], []>} : vector<128x512xf32>, vector<512x256xf32>, vector<128x256xf32> -> vector<128x256xf32>
    %c0_i32 = arith.constant 0 : i32
    %46 = arith.cmpi eq, %arg1, %c0_i32 : i32
    %47 = arith.extui %46 : i1 to i32
    %c0_i32_25 = arith.constant 0 : i32
    %48 = arith.cmpi ne, %47, %c0_i32_25 : i32
    scf.if %48 {
      %cst_31 = arith.constant 0.000000e+00 : f32
      %55 = vector.broadcast %cst_31 : f32 to vector<128x256xf32>
      %c0_32 = arith.constant 0 : index
      %c0_33 = arith.constant 0 : index
      %56 = vector.load %arg12[%c0_32, %c0_33] : memref<128x256xf32, #tpu.memory_space<vmem>>, vector<128x256xf32>
      tpu.vector_store %arg12[%c0_32, %c0_33], %55 {strides = array<i32>} : memref<128x256xf32, #tpu.memory_space<vmem>>, vector<128x256xf32>,
    } else {
    }
    %c0_26 = arith.constant 0 : index
    %c0_27 = arith.constant 0 : index
    %49 = vector.load %arg12[%c0_26, %c0_27] : memref<128x256xf32, #tpu.memory_space<vmem>>, vector<128x256xf32>
    %50 = arith.addf %49, %45 : vector<128x256xf32>
    %c0_28 = arith.constant 0 : index
    %c0_29 = arith.constant 0 : index
    %51 = vector.load %arg12[%c0_28, %c0_29] : memref<128x256xf32, #tpu.memory_space<vmem>>, vector<128x256xf32>
    tpu.vector_store %arg12[%c0_28, %c0_29], %50 {strides = array<i32>} : memref<128x256xf32, #tpu.memory_space<vmem>>, vector<128x256xf32>,
    %c1_i32 = arith.constant 1 : i32
    %52 = arith.cmpi eq, %arg1, %c1_i32 : i32
    %53 = arith.extui %52 : i1 to i32
    %c0_i32_30 = arith.constant 0 : i32
    %54 = arith.cmpi ne, %53, %c0_i32_30 : i32
    scf.if %54 {
      %c0_31 = arith.constant 0 : index
      %c0_32 = arith.constant 0 : index
      %55 = vector.load %arg12[%c0_31, %c0_32] : memref<128x256xf32, #tpu.memory_space<vmem>>, vector<128x256xf32>
      %56 = arith.addf %0, %55 : vector<128x256xf32>
      %c0_33 = arith.constant 0 : index
      %c0_34 = arith.constant 0 : index
      %57 = vector.load %arg10[%c0_33, %c0_34] : memref<1x256xf32, #tpu.memory_space<vmem>>, vector<1x256xf32>
      %58 = vector.broadcast %57 : vector<1x256xf32> to vector<128x256xf32>
      %59 = arith.addf %56, %58 : vector<128x256xf32>
      %c0_35 = arith.constant 0 : index
      %c0_36 = arith.constant 0 : index
      %60 = vector.load %arg11[%c0_35, %c0_36] : memref<128x256xf32, #tpu.memory_space<vmem>>, vector<128x256xf32>
      tpu.vector_store %arg11[%c0_35, %c0_36], %59 {strides = array<i32>} : memref<128x256xf32, #tpu.memory_space<vmem>>, vector<128x256xf32>,
    } else {
    }
    return
  }
  func.func @transform_0(%arg0: i32, %arg1: i32) -> (i32, i32) {
    %c0_i32 = arith.constant 0 : i32
    %c0_i32_0 = arith.constant 0 : i32
    return %arg0, %c0_i32 : i32, i32
  }
  func.func @transform_1(%arg0: i32, %arg1: i32) -> (i32, i32) {
    %c0_i32 = arith.constant 0 : i32
    %c0_i32_0 = arith.constant 0 : i32
    %c0_i32_1 = arith.constant 0 : i32
    return %c0_i32, %c0_i32_0 : i32, i32
  }
  func.func @transform_2(%arg0: i32, %arg1: i32) -> (i32, i32) {
    %c0_i32 = arith.constant 0 : i32
    %c0_i32_0 = arith.constant 0 : i32
    %c0_i32_1 = arith.constant 0 : i32
    return %c0_i32, %c0_i32_0 : i32, i32
  }
  func.func @transform_3(%arg0: i32, %arg1: i32) -> (i32, i32) {
    %c0_i32 = arith.constant 0 : i32
    %c0_i32_0 = arith.constant 0 : i32
    return %c0_i32, %arg1 : i32, i32
  }
  func.func @transform_4(%arg0: i32, %arg1: i32) -> (i32, i32) {
    %c0_i32 = arith.constant 0 : i32
    %c0_i32_0 = arith.constant 0 : i32
    return %c0_i32, %arg1 : i32, i32
  }
  func.func @transform_5(%arg0: i32, %arg1: i32) -> (i32, i32) {
    %c0_i32 = arith.constant 0 : i32
    %c0_i32_0 = arith.constant 0 : i32
    return %c0_i32, %arg1 : i32, i32
  }
  func.func @transform_6(%arg0: i32, %arg1: i32) -> (i32, i32) {
    %c0_i32 = arith.constant 0 : i32
    %c0_i32_0 = arith.constant 0 : i32
    return %c0_i32, %arg1 : i32, i32
  }
  func.func @transform_7(%arg0: i32, %arg1: i32) -> (i32, i32) {
    %c0_i32 = arith.constant 0 : i32
    %c0_i32_0 = arith.constant 0 : i32
    return %arg1, %c0_i32 : i32, i32
  }
  func.func @transform_8(%arg0: i32, %arg1: i32) -> (i32, i32) {
    %c0_i32 = arith.constant 0 : i32
    %c0_i32_0 = arith.constant 0 : i32
    %c0_i32_1 = arith.constant 0 : i32
    return %c0_i32, %c0_i32_0 : i32, i32
  }
  func.func @transform_9(%arg0: i32, %arg1: i32) -> (i32, i32) {
    %c0_i32 = arith.constant 0 : i32
    %c0_i32_0 = arith.constant 0 : i32
    return %arg0, %c0_i32 : i32, i32
  }
}

</mosaic_0001>

<llo_original>
// kernel: basic_transformer_block.5
$region0: #{basic_transformer_block.5}
  #allocation0 [shape = 'u32[]', space=smem, size = 0x4, offset = 0x4, fixed_abs, tag = 'smem constant byte address 0x4 - core index']
  #allocation1 [shape = 'u32[144,128]{1,0:T(1,128)}', space=vmem, size = 0x12000, scoped, tag = 'internal scratch']
  %s0 = inlined_call_operand.vmem [shape: f32[8,16,256], index: 0, kind: input, shape index: {}]
  %s1 = inlined_call_operand.vmem [shape: f32[8,16,256], index: 1, kind: input, shape index: {}, may-alias: {1,2}]
  %s2 = inlined_call_operand.vmem [shape: f32[8,16,256], index: 2, kind: input, shape index: {}, may-alias: {1,2}]
  %s3 = inlined_call_operand.vmem [shape: f32[8,16,256], index: 3, kind: input, shape index: {}, may-alias: {3,4}]
  %s4 = inlined_call_operand.vmem [shape: f32[8,16,256], index: 4, kind: input, shape index: {}, may-alias: {3,4}]
  %s5 = inlined_call_operand.vmem [shape: f32[8,16,256], index: 5, kind: output, shape index: {}]
  %s6 = sld [smem:[#allocation0]]
  $region277: #{basic_transformer_block.5} parent=0
    _
  %s8 = ssub.s32 1, %s6
  %s9 = scalar_select 0, %s8, %s6
  $region1: #{basic_transformer_block.5} parent=0
    #allocation2 [shape = 'u8[16384]{0}', space=vmem, size = 0x4000, scoped, tag = 'input window, operand 0']
    #allocation3 [shape = 'u8[16384]{0}', space=vmem, size = 0x4000, scoped, tag = 'input window, operand 1']
    #allocation4 [shape = 'u8[16384]{0}', space=vmem, size = 0x4000, scoped, tag = 'input window, operand 2']
    #allocation5 [shape = 'u8[16384]{0}', space=vmem, size = 0x4000, scoped, tag = 'input window, operand 3']
    #allocation6 [shape = 'u8[16384]{0}', space=vmem, size = 0x4000, scoped, tag = 'input window, operand 4']
    #allocation7 [shape = 'u8[16384]{0}', space=vmem, size = 0x4000, scoped, tag = 'output window, operand 0']
    loop: start=0, step=1, limit=18
    $region2: #{basic_transformer_block.5} parent=1 // loop_pre_header
      _
    $region3: #{basic_transformer_block.5} parent=1 // loop_header
      %s11 = sphi 0, %s15
      %p12 = scmp.ge.s32.totalorder %s11, 18
      %s18 = sphi 0, %s37
      %s19 = sphi 0, %s33
      %s20 = sphi 0, %s29
      %s21 = sphi 0, %s18
      %s22 = sphi 0, %s19
      %s23 = sphi 0, %s20
      %s24 = sphi 0, %s21
      %s25 = sphi 0, %s22
      %s26 = sphi 0, %s23
      %s46 = sphi 0, %s48
      %s49 = sphi 0, %s46
      %s50 = sphi 0, %s49
      %s66 = sphi 0, %s50
      %s76 = sphi 0, %s78
      %s79 = sphi 0, %s76
      %s80 = sphi 0, %s79
      %s96 = sphi 0, %s80
      %s114 = sphi 0, %s116
      %s117 = sphi 0, %s114
      %s118 = sphi 0, %s117
      %s134 = sphi 0, %s118
      %s144 = sphi 0, %s146
      %s147 = sphi 0, %s144
      %s148 = sphi 0, %s147
      %s164 = sphi 0, %s148
      %s182 = sphi 0, %s184
      %s185 = sphi 0, %s182
      %s186 = sphi 0, %s185
      %s202 = sphi 0, %s186
      %s214 = sphi 0, %s216
      %s217 = sphi 0, %s214
      %s218 = sphi 0, %s217
      %s234 = sphi 0, %s218
    $region4: #{basic_transformer_block.5} parent=1 // loop_header_branch
      %14 = sbr.rel (%p12) target = $region8
    $region5: #{basic_transformer_block.5} parent=1 // loop_body
      %s16 = ssub.s32 %s11, 1
      %s17 = ssub.s32 %s11, 2
      %s27 = sadd.s32 1, %s20
      %p28 = scmp.ge.s32.totalorder %s27, 2
      %s29 = scalar_select %p28, 0, %s27
      %s30 = sadd.s32 1, %s19
      %s31 = scalar_select %p28, %s30, %s19
      %p32 = scmp.ge.s32.totalorder %s31, 4
      %s33 = scalar_select %p32, 0, %s31
      %s34 = sadd.s32 1, %s18
      %s35 = scalar_select %p32, %s34, %s18
      %p36 = scmp.ge.s32.totalorder %s35, 2
      %s37 = scalar_select %p36, 0, %s35
      %s38 = smul.u32 %s18, 4
      %s39 = sadd.s32 %s38, %s19
      %s40 = smul.u32 %s37, 4
      %s41 = sadd.s32 %s40, %s33
      %s42 = ssub.s32 %s39, %s41
      %s43 = ssub.s32 %s20, %s29
      %s44 = sor.u32 %s42, %s43
      %p45 = scmp.eq.s32.totalorder %s44, 0
      %s47 = sadd.s32 %s46, 1
      %s48 = scalar_select %p45, %s46, %s47
      %p51 = pneg %p45
      %p52 = scmp.eq.s32.totalorder %s11, 15
      %p53 = por %p51, %p52
      %p54 = scmp.ne.s32.totalorder %s46, %s49
      %p55 = scmp.eq.s32.totalorder %s11, 0
      %p56 = por %p54, %p55
      %p57 = scmp.ne.s32.totalorder %s46, %s49
      %p58 = scmp.eq.s32.totalorder %s16, 15
      %p59 = por %p57, %p58
      %p60 = scmp.ne.s32.totalorder %s49, %s50
      %p61 = scmp.eq.s32.totalorder %s16, 0
      %p62 = por %p60, %p61
      %p63 = scmp.ne.s32.totalorder %s49, %s50
      %p64 = scmp.eq.s32.totalorder %s17, 15
      %p65 = por %p63, %p64
      %p67 = scmp.ne.s32.totalorder %s50, %s66
      %p68 = scmp.eq.s32.totalorder %s17, 0
      %p69 = por %p67, %p68
      %s70 = smul.u32 %s18, 4
      %s71 = smul.u32 %s37, 4
      %s72 = ssub.s32 %s70, %s71
      %s73 = ssub.s32 %s20, %s29
      %s74 = sor.u32 %s72, %s73
      %p75 = scmp.eq.s32.totalorder %s74, 0
      %s77 = sadd.s32 %s76, 1
      %s78 = scalar_select %p75, %s76, %s77
      %p81 = pneg %p75
      %p82 = scmp.eq.s32.totalorder %s11, 15
      %p83 = por %p81, %p82
      %p84 = scmp.ne.s32.totalorder %s76, %s79
      %p85 = scmp.eq.s32.totalorder %s11, 0
      %p86 = por %p84, %p85
      %p87 = scmp.ne.s32.totalorder %s76, %s79
      %p88 = scmp.eq.s32.totalorder %s16, 15
      %p89 = por %p87, %p88
      %p90 = scmp.ne.s32.totalorder %s79, %s80
      %p91 = scmp.eq.s32.totalorder %s16, 0
      %p92 = por %p90, %p91
      %p93 = scmp.ne.s32.totalorder %s79, %s80
      %p94 = scmp.eq.s32.totalorder %s17, 15
      %p95 = por %p93, %p94
      %p97 = scmp.ne.s32.totalorder %s80, %s96
      %p98 = scmp.eq.s32.totalorder %s17, 0
      %p99 = por %p97, %p98
      %s100 = smul.u32 %s18, 4
      %s101 = ssub.s32 %s19, 1
      %p102 = scmp.gt.s32.totalorder %s101, 0
      %s103 = scalar_select %p102, %s101, 0
      %s104 = sadd.s32 %s100, %s103
      %s105 = smul.u32 %s37, 4
      %s106 = ssub.s32 %s33, 1
      %p107 = scmp.gt.s32.totalorder %s106, 0
      %s108 = scalar_select %p107, %s106, 0
      %s109 = sadd.s32 %s105, %s108
      %s110 = ssub.s32 %s104, %s109
      %s111 = ssub.s32 %s20, %s29
      %s112 = sor.u32 %s110, %s111
      %p113 = scmp.eq.s32.totalorder %s112, 0
      %s115 = sadd.s32 %s114, 1
      %s116 = scalar_select %p113, %s114, %s115
      %p119 = pneg %p113
      %p120 = scmp.eq.s32.totalorder %s11, 15
      %p121 = por %p119, %p120
      %p122 = scmp.ne.s32.totalorder %s114, %s117
      %p123 = scmp.eq.s32.totalorder %s11, 0
      %p124 = por %p122, %p123
      %p125 = scmp.ne.s32.totalorder %s114, %s117
      %p126 = scmp.eq.s32.totalorder %s16, 15
      %p127 = por %p125, %p126
      %p128 = scmp.ne.s32.totalorder %s117, %s118
      %p129 = scmp.eq.s32.totalorder %s16, 0
      %p130 = por %p128, %p129
      %p131 = scmp.ne.s32.totalorder %s117, %s118
      %p132 = scmp.eq.s32.totalorder %s17, 15
      %p133 = por %p131, %p132
      %p135 = scmp.ne.s32.totalorder %s118, %s134
      %p136 = scmp.eq.s32.totalorder %s17, 0
      %p137 = por %p135, %p136
      %s138 = smul.u32 %s18, 4
      %s139 = smul.u32 %s37, 4
      %s140 = ssub.s32 %s138, %s139
      %s141 = ssub.s32 %s20, %s29
      %s142 = sor.u32 %s140, %s141
      %p143 = scmp.eq.s32.totalorder %s142, 0
      %s145 = sadd.s32 %s144, 1
      %s146 = scalar_select %p143, %s144, %s145
      %p149 = pneg %p143
      %p150 = scmp.eq.s32.totalorder %s11, 15
      %p151 = por %p149, %p150
      %p152 = scmp.ne.s32.totalorder %s144, %s147
      %p153 = scmp.eq.s32.totalorder %s11, 0
      %p154 = por %p152, %p153
      %p155 = scmp.ne.s32.totalorder %s144, %s147
      %p156 = scmp.eq.s32.totalorder %s16, 15
      %p157 = por %p155, %p156
      %p158 = scmp.ne.s32.totalorder %s147, %s148
      %p159 = scmp.eq.s32.totalorder %s16, 0
      %p160 = por %p158, %p159
      %p161 = scmp.ne.s32.totalorder %s147, %s148
      %p162 = scmp.eq.s32.totalorder %s17, 15
      %p163 = por %p161, %p162
      %p165 = scmp.ne.s32.totalorder %s148, %s164
      %p166 = scmp.eq.s32.totalorder %s17, 0
      %p167 = por %p165, %p166
      %s168 = smul.u32 %s18, 4
      %s169 = ssub.s32 %s19, 1
      %p170 = scmp.gt.s32.totalorder %s169, 0
      %s171 = scalar_select %p170, %s169, 0
      %s172 = sadd.s32 %s168, %s171
      %s173 = smul.u32 %s37, 4
      %s174 = ssub.s32 %s33, 1
      %p175 = scmp.gt.s32.totalorder %s174, 0
      %s176 = scalar_select %p175, %s174, 0
      %s177 = sadd.s32 %s173, %s176
      %s178 = ssub.s32 %s172, %s177
      %s179 = ssub.s32 %s20, %s29
      %s180 = sor.u32 %s178, %s179
      %p181 = scmp.eq.s32.totalorder %s180, 0
      %s183 = sadd.s32 %s182, 1
      %s184 = scalar_select %p181, %s182, %s183
      %p187 = pneg %p181
      %p188 = scmp.eq.s32.totalorder %s11, 15
      %p189 = por %p187, %p188
      %p190 = scmp.ne.s32.totalorder %s182, %s185
      %p191 = scmp.eq.s32.totalorder %s11, 0
      %p192 = por %p190, %p191
      %p193 = scmp.ne.s32.totalorder %s182, %s185
      %p194 = scmp.eq.s32.totalorder %s16, 15
      %p195 = por %p193, %p194
      %p196 = scmp.ne.s32.totalorder %s185, %s186
      %p197 = scmp.eq.s32.totalorder %s16, 0
      %p198 = por %p196, %p197
      %p199 = scmp.ne.s32.totalorder %s185, %s186
      %p200 = scmp.eq.s32.totalorder %s17, 15
      %p201 = por %p199, %p200
      %p203 = scmp.ne.s32.totalorder %s186, %s202
      %p204 = scmp.eq.s32.totalorder %s17, 0
      %p205 = por %p203, %p204
      %s206 = smul.u32 %s18, 4
      %s207 = sadd.s32 %s206, %s19
      %s208 = smul.u32 %s37, 4
      %s209 = sadd.s32 %s208, %s33
      %s210 = ssub.s32 %s207, %s209
      %s211 = ssub.s32 %s20, %s29
      %s212 = sor.u32 %s210, %s211
      %p213 = scmp.eq.s32.totalorder %s212, 0
      %s215 = sadd.s32 %s214, 1
      %s216 = scalar_select %p213, %s214, %s215
      %p219 = pneg %p213
      %p220 = scmp.eq.s32.totalorder %s11, 15
      %p221 = por %p219, %p220
      %p222 = scmp.ne.s32.totalorder %s214, %s217
      %p223 = scmp.eq.s32.totalorder %s11, 0
      %p224 = por %p222, %p223
      %p225 = scmp.ne.s32.totalorder %s214, %s217
      %p226 = scmp.eq.s32.totalorder %s16, 15
      %p227 = por %p225, %p226
      %p228 = scmp.ne.s32.totalorder %s217, %s218
      %p229 = scmp.eq.s32.totalorder %s16, 0
      %p230 = por %p228, %p229
      %p231 = scmp.ne.s32.totalorder %s217, %s218
      %p232 = scmp.eq.s32.totalorder %s17, 15
      %p233 = por %p231, %p232
      %p235 = scmp.ne.s32.totalorder %s218, %s234
      %p236 = scmp.eq.s32.totalorder %s17, 0
      %p237 = por %p235, %p236
      %p238 = scmp.le.s32.totalorder 1, %s11
      %p239 = scmp.lt.s32.totalorder %s11, 17
      %p240 = pnand %p238, %p239
      %p241 = pneg %p240
      // Predicated region
      $region9: #{basic_transformer_block.5} parent=5 // pred_check
        _
      $region10: #{basic_transformer_block.5} parent=5 // pred_check_branch
        %243 = sbr.rel (%p240) target = $region12
      $region11: #{basic_transformer_block.5} parent=5 // pred_region
        %s244 = ssub.s32 %s11, 1
      $region12: #{basic_transformer_block.5} parent=5 // pred_fallthru
        _
      %p245 = scmp.lt.s32.totalorder %s11, 16
      // Predicated region
      $region13: #{basic_transformer_block.5} parent=5 // pred_check
        %p246 = pneg %p245
      $region14: #{basic_transformer_block.5} parent=5 // pred_check_branch
        %248 = sbr.rel (%p246) target = $region16
      $region15: #{basic_transformer_block.5} parent=5 // pred_region
        // Predicated region
        $region17: #{basic_transformer_block.5} parent=15 // pred_check
          %p249 = pneg %p56
        $region18: #{basic_transformer_block.5} parent=15 // pred_check_branch
          %251 = sbr.rel (%p249) target = $region20
        $region19: #{basic_transformer_block.5} parent=15 // pred_region
          %s252 = sand.u32 %s46, 1
          %s253 = sand.u32 %s46, 1
          %s254 = smul.addr %s253, 16
          %s255 = scalar_lea.vmem [#allocation2], %s254
          %s256 = smul.u32 %s18, 4
          %s257 = sadd.s32 %s256, %s19
          %s258 = smul.addr %s257, 4
          %s259 = sadd.s32 %s20, %s258
          %s260 = smul.addr %s259, 8
          %s261 = scalar_lea.vmem %s0, %s260
          // Predicated region
          $region21: #{basic_transformer_block.5} parent=19 // pred_check
            _
          $region22: #{basic_transformer_block.5} parent=19 // pred_check_branch
            %263 = sbr.rel (0) target = $region24
          $region23: #{basic_transformer_block.5} parent=19 // pred_region
            // Predicated region
            $region25: #{basic_transformer_block.5} parent=23 // pred_check
              _
            $region26: #{basic_transformer_block.5} parent=23 // pred_check_branch
              %265 = sbr.rel (0) target = $region28
            $region27: #{basic_transformer_block.5} parent=23 // pred_region
              // Predicated region
              $region40: #{basic_transformer_block.5} parent=27 // pred_check
                _
              $region41: #{basic_transformer_block.5} parent=27 // pred_check_branch
                %283 = sbr.rel (0) target = $region43
              $region42: #{basic_transformer_block.5} parent=27 // pred_region
                loop: start=0, step=1, limit=1
                $region44: #{basic_transformer_block.5} parent=42 // loop_pre_header
                  _
                $region45: #{basic_transformer_block.5} parent=42 // loop_header
                  %s285 = sphi 0, %s289
                  %p286 = scmp.ge.s32.totalorder %s285, 1
                  %s290 = sphi %s261, %s261
                  %s291 = sphi %s255, %s255
                $region46: #{basic_transformer_block.5} parent=42 // loop_header_branch
                  %288 = sbr.rel (%p286) target = $region50
                $region47: #{basic_transformer_block.5} parent=42 // loop_body
                  %v292 = vld [vmem:[%s290] sm:$0xff]
                  %293 = vst [vmem:[%s291] sm:$0xff] %v292
                  %v294 = vld [vmem:[%s290 + $0x10] sm:$0xff]
                  %295 = vst [vmem:[%s291 + $0x8] sm:$0xff] %v294
                $region48: #{basic_transformer_block.5} parent=42 // loop_footer
                  %s289 = sadd.s32 1, %s285
                $region49: #{basic_transformer_block.5} parent=42 // loop_footer_branch
                  %284 = sbr.rel target = $region45
                $region50: #{basic_transformer_block.5} parent=42 // loop_exit
                  _
              $region43: #{basic_transformer_block.5} parent=27 // pred_fallthru
                _
              // Predicated region
              $region51: #{basic_transformer_block.5} parent=27 // pred_check
                _
              $region52: #{basic_transformer_block.5} parent=27 // pred_check_branch
                %297 = sbr.rel target = $region54
              $region53: #{basic_transformer_block.5} parent=27 // pred_region
                _
              $region54: #{basic_transformer_block.5} parent=27 // pred_fallthru
                _
            $region28: #{basic_transformer_block.5} parent=23 // pred_fallthru
              _
            // Predicated region
            $region29: #{basic_transformer_block.5} parent=23 // pred_check
              _
            $region30: #{basic_transformer_block.5} parent=23 // pred_check_branch
              %267 = sbr.rel target = $region32
            $region31: #{basic_transformer_block.5} parent=23 // pred_region
              %s269 = ssub.s32 256, 1
              loop: start=0, step=1, limit=1
              $region33: #{basic_transformer_block.5} parent=31 // loop_pre_header
                _
              $region34: #{basic_transformer_block.5} parent=31 // loop_header
                %s271 = sphi 0, %s275
                %p272 = scmp.ge.s32.totalorder %s271, 1
                %s276 = sphi %s261, %s261
                %s277 = sphi %s255, %s255
              $region35: #{basic_transformer_block.5} parent=31 // loop_header_branch
                %274 = sbr.rel (%p272) target = $region39
              $region36: #{basic_transformer_block.5} parent=31 // loop_body
                %v278 = vld [vmem:[%s276] sm:%s269]
                %279 = vst [vmem:[%s277] sm:%s269] %v278
                %v280 = vld [vmem:[%s276 + $0x10] sm:%s269]
                %281 = vst [vmem:[%s277 + $0x8] sm:%s269] %v280
              $region37: #{basic_transformer_block.5} parent=31 // loop_footer
                %s275 = sadd.s32 1, %s271
              $region38: #{basic_transformer_block.5} parent=31 // loop_footer_branch
                %270 = sbr.rel target = $region34
              $region39: #{basic_transformer_block.5} parent=31 // loop_exit
                _
            $region32: #{basic_transformer_block.5} parent=23 // pred_fallthru
              _
          $region24: #{basic_transformer_block.5} parent=19 // pred_fallthru
            _
          %298 = vnop
        $region20: #{basic_transformer_block.5} parent=15 // pred_fallthru
          _
        // Predicated region
        $region55: #{basic_transformer_block.5} parent=15 // pred_check
          %p299 = pneg %p86
        $region56: #{basic_transformer_block.5} parent=15 // pred_check_branch
          %301 = sbr.rel (%p299) target = $region58
        $region57: #{basic_transformer_block.5} parent=15 // pred_region
          %s302 = sand.u32 %s76, 1
          %s303 = sand.u32 %s76, 1
          %s304 = smul.addr %s303, 16
          %s305 = scalar_lea.vmem [#allocation3], %s304
          %s306 = smul.u32 %s18, 4
          %s307 = smul.addr %s306, 4
          %s308 = sadd.s32 %s20, %s307
          %s309 = smul.addr %s308, 8
          %s310 = scalar_lea.vmem %s1, %s309
          // Predicated region
          $region59: #{basic_transformer_block.5} parent=57 // pred_check
            _
          $region60: #{basic_transformer_block.5} parent=57 // pred_check_branch
            %312 = sbr.rel (0) target = $region62
          $region61: #{basic_transformer_block.5} parent=57 // pred_region
            // Predicated region
            $region63: #{basic_transformer_block.5} parent=61 // pred_check
              _
            $region64: #{basic_transformer_block.5} parent=61 // pred_check_branch
              %314 = sbr.rel (0) target = $region66
            $region65: #{basic_transformer_block.5} parent=61 // pred_region
              // Predicated region
              $region78: #{basic_transformer_block.5} parent=65 // pred_check
                _
              $region79: #{basic_transformer_block.5} parent=65 // pred_check_branch
                %332 = sbr.rel (0) target = $region81
              $region80: #{basic_transformer_block.5} parent=65 // pred_region
                loop: start=0, step=1, limit=1
                $region82: #{basic_transformer_block.5} parent=80 // loop_pre_header
                  _
                $region83: #{basic_transformer_block.5} parent=80 // loop_header
                  %s334 = sphi 0, %s338
                  %p335 = scmp.ge.s32.totalorder %s334, 1
                  %s339 = sphi %s310, %s310
                  %s340 = sphi %s305, %s305
                $region84: #{basic_transformer_block.5} parent=80 // loop_header_branch
                  %337 = sbr.rel (%p335) target = $region88
                $region85: #{basic_transformer_block.5} parent=80 // loop_body
                  %v341 = vld [vmem:[%s339] sm:$0xff]
                  %342 = vst [vmem:[%s340] sm:$0xff] %v341
                  %v343 = vld [vmem:[%s339 + $0x10] sm:$0xff]
                  %344 = vst [vmem:[%s340 + $0x8] sm:$0xff] %v343
                $region86: #{basic_transformer_block.5} parent=80 // loop_footer
                  %s338 = sadd.s32 1, %s334
                $region87: #{basic_transformer_block.5} parent=80 // loop_footer_branch
                  %333 = sbr.rel target = $region83
                $region88: #{basic_transformer_block.5} parent=80 // loop_exit
                  _
              $region81: #{basic_transformer_block.5} parent=65 // pred_fallthru
                _
              // Predicated region
              $region89: #{basic_transformer_block.5} parent=65 // pred_check
                _
              $region90: #{basic_transformer_block.5} parent=65 // pred_check_branch
                %346 = sbr.rel target = $region92
              $region91: #{basic_transformer_block.5} parent=65 // pred_region
                _
              $region92: #{basic_transformer_block.5} parent=65 // pred_fallthru
                _
            $region66: #{basic_transformer_block.5} parent=61 // pred_fallthru
              _
            // Predicated region
            $region67: #{basic_transformer_block.5} parent=61 // pred_check
              _
            $region68: #{basic_transformer_block.5} parent=61 // pred_check_branch
              %316 = sbr.rel target = $region70
            $region69: #{basic_transformer_block.5} parent=61 // pred_region
              %s318 = ssub.s32 256, 1
              loop: start=0, step=1, limit=1
              $region71: #{basic_transformer_block.5} parent=69 // loop_pre_header
                _
              $region72: #{basic_transformer_block.5} parent=69 // loop_header
                %s320 = sphi 0, %s324
                %p321 = scmp.ge.s32.totalorder %s320, 1
                %s325 = sphi %s310, %s310
                %s326 = sphi %s305, %s305
              $region73: #{basic_transformer_block.5} parent=69 // loop_header_branch
                %323 = sbr.rel (%p321) target = $region77
              $region74: #{basic_transformer_block.5} parent=69 // loop_body
                %v327 = vld [vmem:[%s325] sm:%s318]
                %328 = vst [vmem:[%s326] sm:%s318] %v327
                %v329 = vld [vmem:[%s325 + $0x10] sm:%s318]
                %330 = vst [vmem:[%s326 + $0x8] sm:%s318] %v329
              $region75: #{basic_transformer_block.5} parent=69 // loop_footer
                %s324 = sadd.s32 1, %s320
              $region76: #{basic_transformer_block.5} parent=69 // loop_footer_branch
                %319 = sbr.rel target = $region72
              $region77: #{basic_transformer_block.5} parent=69 // loop_exit
                _
            $region70: #{basic_transformer_block.5} parent=61 // pred_fallthru
              _
          $region62: #{basic_transformer_block.5} parent=57 // pred_fallthru
            _
          %347 = vnop
        $region58: #{basic_transformer_block.5} parent=15 // pred_fallthru
          _
        // Predicated region
        $region93: #{basic_transformer_block.5} parent=15 // pred_check
          %p348 = pneg %p124
        $region94: #{basic_transformer_block.5} parent=15 // pred_check_branch
          %350 = sbr.rel (%p348) target = $region96
        $region95: #{basic_transformer_block.5} parent=15 // pred_region
          %s351 = sand.u32 %s114, 1
          %s352 = sand.u32 %s114, 1
          %s353 = smul.addr %s352, 16
          %s354 = scalar_lea.vmem [#allocation4], %s353
          %s355 = smul.u32 %s18, 4
          %s356 = ssub.s32 %s19, 1
          %p357 = scmp.gt.s32.totalorder %s356, 0
          %s358 = scalar_select %p357, %s356, 0
          %s359 = sadd.s32 %s355, %s358
          %s360 = smul.addr %s359, 4
          %s361 = sadd.s32 %s20, %s360
          %s362 = smul.addr %s361, 8
          %s363 = scalar_lea.vmem %s2, %s362
          // Predicated region
          $region97: #{basic_transformer_block.5} parent=95 // pred_check
            _
          $region98: #{basic_transformer_block.5} parent=95 // pred_check_branch
            %365 = sbr.rel (0) target = $region100
          $region99: #{basic_transformer_block.5} parent=95 // pred_region
            // Predicated region
            $region101: #{basic_transformer_block.5} parent=99 // pred_check
              _
            $region102: #{basic_transformer_block.5} parent=99 // pred_check_branch
              %367 = sbr.rel (0) target = $region104
            $region103: #{basic_transformer_block.5} parent=99 // pred_region
              // Predicated region
              $region116: #{basic_transformer_block.5} parent=103 // pred_check
                _
              $region117: #{basic_transformer_block.5} parent=103 // pred_check_branch
                %385 = sbr.rel (0) target = $region119
              $region118: #{basic_transformer_block.5} parent=103 // pred_region
                loop: start=0, step=1, limit=1
                $region120: #{basic_transformer_block.5} parent=118 // loop_pre_header
                  _
                $region121: #{basic_transformer_block.5} parent=118 // loop_header
                  %s387 = sphi 0, %s391
                  %p388 = scmp.ge.s32.totalorder %s387, 1
                  %s392 = sphi %s363, %s363
                  %s393 = sphi %s354, %s354
                $region122: #{basic_transformer_block.5} parent=118 // loop_header_branch
                  %390 = sbr.rel (%p388) target = $region126
                $region123: #{basic_transformer_block.5} parent=118 // loop_body
                  %v394 = vld [vmem:[%s392] sm:$0xff]
                  %395 = vst [vmem:[%s393] sm:$0xff] %v394
                  %v396 = vld [vmem:[%s392 + $0x10] sm:$0xff]
                  %397 = vst [vmem:[%s393 + $0x8] sm:$0xff] %v396
                $region124: #{basic_transformer_block.5} parent=118 // loop_footer
                  %s391 = sadd.s32 1, %s387
                $region125: #{basic_transformer_block.5} parent=118 // loop_footer_branch
                  %386 = sbr.rel target = $region121
                $region126: #{basic_transformer_block.5} parent=118 // loop_exit
                  _
              $region119: #{basic_transformer_block.5} parent=103 // pred_fallthru
                _
              // Predicated region
              $region127: #{basic_transformer_block.5} parent=103 // pred_check
                _
              $region128: #{basic_transformer_block.5} parent=103 // pred_check_branch
                %399 = sbr.rel target = $region130
              $region129: #{basic_transformer_block.5} parent=103 // pred_region
                _
              $region130: #{basic_transformer_block.5} parent=103 // pred_fallthru
                _
            $region104: #{basic_transformer_block.5} parent=99 // pred_fallthru
              _
            // Predicated region
            $region105: #{basic_transformer_block.5} parent=99 // pred_check
              _
            $region106: #{basic_transformer_block.5} parent=99 // pred_check_branch
              %369 = sbr.rel target = $region108
            $region107: #{basic_transformer_block.5} parent=99 // pred_region
              %s371 = ssub.s32 256, 1
              loop: start=0, step=1, limit=1
              $region109: #{basic_transformer_block.5} parent=107 // loop_pre_header
                _
              $region110: #{basic_transformer_block.5} parent=107 // loop_header
                %s373 = sphi 0, %s377
                %p374 = scmp.ge.s32.totalorder %s373, 1
                %s378 = sphi %s363, %s363
                %s379 = sphi %s354, %s354
              $region111: #{basic_transformer_block.5} parent=107 // loop_header_branch
                %376 = sbr.rel (%p374) target = $region115
              $region112: #{basic_transformer_block.5} parent=107 // loop_body
                %v380 = vld [vmem:[%s378] sm:%s371]
                %381 = vst [vmem:[%s379] sm:%s371] %v380
                %v382 = vld [vmem:[%s378 + $0x10] sm:%s371]
                %383 = vst [vmem:[%s379 + $0x8] sm:%s371] %v382
              $region113: #{basic_transformer_block.5} parent=107 // loop_footer
                %s377 = sadd.s32 1, %s373
              $region114: #{basic_transformer_block.5} parent=107 // loop_footer_branch
                %372 = sbr.rel target = $region110
              $region115: #{basic_transformer_block.5} parent=107 // loop_exit
                _
            $region108: #{basic_transformer_block.5} parent=99 // pred_fallthru
              _
          $region100: #{basic_transformer_block.5} parent=95 // pred_fallthru
            _
          %400 = vnop
        $region96: #{basic_transformer_block.5} parent=15 // pred_fallthru
          _
        // Predicated region
        $region131: #{basic_transformer_block.5} parent=15 // pred_check
          %p401 = pneg %p154
        $region132: #{basic_transformer_block.5} parent=15 // pred_check_branch
          %403 = sbr.rel (%p401) target = $region134
        $region133: #{basic_transformer_block.5} parent=15 // pred_region
          %s404 = sand.u32 %s144, 1
          %s405 = sand.u32 %s144, 1
          %s406 = smul.addr %s405, 16
          %s407 = scalar_lea.vmem [#allocation5], %s406
          %s408 = smul.u32 %s18, 4
          %s409 = smul.addr %s408, 4
          %s410 = sadd.s32 %s20, %s409
          %s411 = smul.addr %s410, 8
          %s412 = scalar_lea.vmem %s3, %s411
          // Predicated region
          $region135: #{basic_transformer_block.5} parent=133 // pred_check
            _
          $region136: #{basic_transformer_block.5} parent=133 // pred_check_branch
            %414 = sbr.rel (0) target = $region138
          $region137: #{basic_transformer_block.5} parent=133 // pred_region
            // Predicated region
            $region139: #{basic_transformer_block.5} parent=137 // pred_check
              _
            $region140: #{basic_transformer_block.5} parent=137 // pred_check_branch
              %416 = sbr.rel (0) target = $region142
            $region141: #{basic_transformer_block.5} parent=137 // pred_region
              // Predicated region
              $region154: #{basic_transformer_block.5} parent=141 // pred_check
                _
              $region155: #{basic_transformer_block.5} parent=141 // pred_check_branch
                %434 = sbr.rel (0) target = $region157
              $region156: #{basic_transformer_block.5} parent=141 // pred_region
                loop: start=0, step=1, limit=1
                $region158: #{basic_transformer_block.5} parent=156 // loop_pre_header
                  _
                $region159: #{basic_transformer_block.5} parent=156 // loop_header
                  %s436 = sphi 0, %s440
                  %p437 = scmp.ge.s32.totalorder %s436, 1
                  %s441 = sphi %s412, %s412
                  %s442 = sphi %s407, %s407
                $region160: #{basic_transformer_block.5} parent=156 // loop_header_branch
                  %439 = sbr.rel (%p437) target = $region164
                $region161: #{basic_transformer_block.5} parent=156 // loop_body
                  %v443 = vld [vmem:[%s441] sm:$0xff]
                  %444 = vst [vmem:[%s442] sm:$0xff] %v443
                  %v445 = vld [vmem:[%s441 + $0x10] sm:$0xff]
                  %446 = vst [vmem:[%s442 + $0x8] sm:$0xff] %v445
                $region162: #{basic_transformer_block.5} parent=156 // loop_footer
                  %s440 = sadd.s32 1, %s436
                $region163: #{basic_transformer_block.5} parent=156 // loop_footer_branch
                  %435 = sbr.rel target = $region159
                $region164: #{basic_transformer_block.5} parent=156 // loop_exit
                  _
              $region157: #{basic_transformer_block.5} parent=141 // pred_fallthru
                _
              // Predicated region
              $region165: #{basic_transformer_block.5} parent=141 // pred_check
                _
              $region166: #{basic_transformer_block.5} parent=141 // pred_check_branch
                %448 = sbr.rel target = $region168
              $region167: #{basic_transformer_block.5} parent=141 // pred_region
                _
              $region168: #{basic_transformer_block.5} parent=141 // pred_fallthru
                _
            $region142: #{basic_transformer_block.5} parent=137 // pred_fallthru
              _
            // Predicated region
            $region143: #{basic_transformer_block.5} parent=137 // pred_check
              _
            $region144: #{basic_transformer_block.5} parent=137 // pred_check_branch
              %418 = sbr.rel target = $region146
            $region145: #{basic_transformer_block.5} parent=137 // pred_region
              %s420 = ssub.s32 256, 1
              loop: start=0, step=1, limit=1
              $region147: #{basic_transformer_block.5} parent=145 // loop_pre_header
                _
              $region148: #{basic_transformer_block.5} parent=145 // loop_header
                %s422 = sphi 0, %s426
                %p423 = scmp.ge.s32.totalorder %s422, 1
                %s427 = sphi %s412, %s412
                %s428 = sphi %s407, %s407
              $region149: #{basic_transformer_block.5} parent=145 // loop_header_branch
                %425 = sbr.rel (%p423) target = $region153
              $region150: #{basic_transformer_block.5} parent=145 // loop_body
                %v429 = vld [vmem:[%s427] sm:%s420]
                %430 = vst [vmem:[%s428] sm:%s420] %v429
                %v431 = vld [vmem:[%s427 + $0x10] sm:%s420]
                %432 = vst [vmem:[%s428 + $0x8] sm:%s420] %v431
              $region151: #{basic_transformer_block.5} parent=145 // loop_footer
                %s426 = sadd.s32 1, %s422
              $region152: #{basic_transformer_block.5} parent=145 // loop_footer_branch
                %421 = sbr.rel target = $region148
              $region153: #{basic_transformer_block.5} parent=145 // loop_exit
                _
            $region146: #{basic_transformer_block.5} parent=137 // pred_fallthru
              _
          $region138: #{basic_transformer_block.5} parent=133 // pred_fallthru
            _
          %449 = vnop
        $region134: #{basic_transformer_block.5} parent=15 // pred_fallthru
          _
        // Predicated region
        $region169: #{basic_transformer_block.5} parent=15 // pred_check
          %p450 = pneg %p192
        $region170: #{basic_transformer_block.5} parent=15 // pred_check_branch
          %452 = sbr.rel (%p450) target = $region172
        $region171: #{basic_transformer_block.5} parent=15 // pred_region
          %s453 = sand.u32 %s182, 1
          %s454 = sand.u32 %s182, 1
          %s455 = smul.addr %s454, 16
          %s456 = scalar_lea.vmem [#allocation6], %s455
          %s457 = smul.u32 %s18, 4
          %s458 = ssub.s32 %s19, 1
          %p459 = scmp.gt.s32.totalorder %s458, 0
          %s460 = scalar_select %p459, %s458, 0
          %s461 = sadd.s32 %s457, %s460
          %s462 = smul.addr %s461, 4
          %s463 = sadd.s32 %s20, %s462
          %s464 = smul.addr %s463, 8
          %s465 = scalar_lea.vmem %s4, %s464
          // Predicated region
          $region173: #{basic_transformer_block.5} parent=171 // pred_check
            _
          $region174: #{basic_transformer_block.5} parent=171 // pred_check_branch
            %467 = sbr.rel (0) target = $region176
          $region175: #{basic_transformer_block.5} parent=171 // pred_region
            // Predicated region
            $region177: #{basic_transformer_block.5} parent=175 // pred_check
              _
            $region178: #{basic_transformer_block.5} parent=175 // pred_check_branch
              %469 = sbr.rel (0) target = $region180
            $region179: #{basic_transformer_block.5} parent=175 // pred_region
              // Predicated region
              $region192: #{basic_transformer_block.5} parent=179 // pred_check
                _
              $region193: #{basic_transformer_block.5} parent=179 // pred_check_branch
                %487 = sbr.rel (0) target = $region195
              $region194: #{basic_transformer_block.5} parent=179 // pred_region
                loop: start=0, step=1, limit=1
                $region196: #{basic_transformer_block.5} parent=194 // loop_pre_header
                  _
                $region197: #{basic_transformer_block.5} parent=194 // loop_header
                  %s489 = sphi 0, %s493
                  %p490 = scmp.ge.s32.totalorder %s489, 1
                  %s494 = sphi %s465, %s465
                  %s495 = sphi %s456, %s456
                $region198: #{basic_transformer_block.5} parent=194 // loop_header_branch
                  %492 = sbr.rel (%p490) target = $region202
                $region199: #{basic_transformer_block.5} parent=194 // loop_body
                  %v496 = vld [vmem:[%s494] sm:$0xff]
                  %497 = vst [vmem:[%s495] sm:$0xff] %v496
                  %v498 = vld [vmem:[%s494 + $0x10] sm:$0xff]
                  %499 = vst [vmem:[%s495 + $0x8] sm:$0xff] %v498
                $region200: #{basic_transformer_block.5} parent=194 // loop_footer
                  %s493 = sadd.s32 1, %s489
                $region201: #{basic_transformer_block.5} parent=194 // loop_footer_branch
                  %488 = sbr.rel target = $region197
                $region202: #{basic_transformer_block.5} parent=194 // loop_exit
                  _
              $region195: #{basic_transformer_block.5} parent=179 // pred_fallthru
                _
              // Predicated region
              $region203: #{basic_transformer_block.5} parent=179 // pred_check
                _
              $region204: #{basic_transformer_block.5} parent=179 // pred_check_branch
                %501 = sbr.rel target = $region206
              $region205: #{basic_transformer_block.5} parent=179 // pred_region
                _
              $region206: #{basic_transformer_block.5} parent=179 // pred_fallthru
                _
            $region180: #{basic_transformer_block.5} parent=175 // pred_fallthru
              _
            // Predicated region
            $region181: #{basic_transformer_block.5} parent=175 // pred_check
              _
            $region182: #{basic_transformer_block.5} parent=175 // pred_check_branch
              %471 = sbr.rel target = $region184
            $region183: #{basic_transformer_block.5} parent=175 // pred_region
              %s473 = ssub.s32 256, 1
              loop: start=0, step=1, limit=1
              $region185: #{basic_transformer_block.5} parent=183 // loop_pre_header
                _
              $region186: #{basic_transformer_block.5} parent=183 // loop_header
                %s475 = sphi 0, %s479
                %p476 = scmp.ge.s32.totalorder %s475, 1
                %s480 = sphi %s465, %s465
                %s481 = sphi %s456, %s456
              $region187: #{basic_transformer_block.5} parent=183 // loop_header_branch
                %478 = sbr.rel (%p476) target = $region191
              $region188: #{basic_transformer_block.5} parent=183 // loop_body
                %v482 = vld [vmem:[%s480] sm:%s473]
                %483 = vst [vmem:[%s481] sm:%s473] %v482
                %v484 = vld [vmem:[%s480 + $0x10] sm:%s473]
                %485 = vst [vmem:[%s481 + $0x8] sm:%s473] %v484
              $region189: #{basic_transformer_block.5} parent=183 // loop_footer
                %s479 = sadd.s32 1, %s475
              $region190: #{basic_transformer_block.5} parent=183 // loop_footer_branch
                %474 = sbr.rel target = $region186
              $region191: #{basic_transformer_block.5} parent=183 // loop_exit
                _
            $region184: #{basic_transformer_block.5} parent=175 // pred_fallthru
              _
          $region176: #{basic_transformer_block.5} parent=171 // pred_fallthru
            _
          %502 = vnop
        $region172: #{basic_transformer_block.5} parent=15 // pred_fallthru
          _
      $region16: #{basic_transformer_block.5} parent=5 // pred_fallthru
        _
      %p503 = scmp.le.s32.totalorder 1, %s11
      %p504 = scmp.lt.s32.totalorder %s11, 17
      %p505 = pnand %p503, %p504
      %p506 = pneg %p505
      // Predicated region
      $region207: #{basic_transformer_block.5} parent=5 // pred_check
        _
      $region208: #{basic_transformer_block.5} parent=5 // pred_check_branch
        %508 = sbr.rel (%p505) target = $region210
      $region209: #{basic_transformer_block.5} parent=5 // pred_region
        %s509 = ssub.s32 %s11, 1
        %s510 = sand.u32 %s49, 1
        %s511 = sand.u32 %s49, 1
        %s512 = smul.addr %s511, 16
        %s513 = scalar_lea.vmem [#allocation2], %s512
        // Predicated region
        $region211: #{basic_transformer_block.5} parent=209 // pred_check
          %p514 = pneg %p62
        $region212: #{basic_transformer_block.5} parent=209 // pred_check_branch
          %516 = sbr.rel (%p514) target = $region214
        $region213: #{basic_transformer_block.5} parent=209 // pred_region
          _
        $region214: #{basic_transformer_block.5} parent=209 // pred_fallthru
          _
        %s517 = sand.u32 %s79, 1
        %s518 = sand.u32 %s79, 1
        %s519 = smul.addr %s518, 16
        %s520 = scalar_lea.vmem [#allocation3], %s519
        // Predicated region
        $region215: #{basic_transformer_block.5} parent=209 // pred_check
          %p521 = pneg %p92
        $region216: #{basic_transformer_block.5} parent=209 // pred_check_branch
          %523 = sbr.rel (%p521) target = $region218
        $region217: #{basic_transformer_block.5} parent=209 // pred_region
          _
        $region218: #{basic_transformer_block.5} parent=209 // pred_fallthru
          _
        %s524 = sand.u32 %s117, 1
        %s525 = sand.u32 %s117, 1
        %s526 = smul.addr %s525, 16
        %s527 = scalar_lea.vmem [#allocation4], %s526
        // Predicated region
        $region219: #{basic_transformer_block.5} parent=209 // pred_check
          %p528 = pneg %p130
        $region220: #{basic_transformer_block.5} parent=209 // pred_check_branch
          %530 = sbr.rel (%p528) target = $region222
        $region221: #{basic_transformer_block.5} parent=209 // pred_region
          _
        $region222: #{basic_transformer_block.5} parent=209 // pred_fallthru
          _
        %s531 = sand.u32 %s147, 1
        %s532 = sand.u32 %s147, 1
        %s533 = smul.addr %s532, 16
        %s534 = scalar_lea.vmem [#allocation5], %s533
        // Predicated region
        $region223: #{basic_transformer_block.5} parent=209 // pred_check
          %p535 = pneg %p160
        $region224: #{basic_transformer_block.5} parent=209 // pred_check_branch
          %537 = sbr.rel (%p535) target = $region226
        $region225: #{basic_transformer_block.5} parent=209 // pred_region
          _
        $region226: #{basic_transformer_block.5} parent=209 // pred_fallthru
          _
        %s538 = sand.u32 %s185, 1
        %s539 = sand.u32 %s185, 1
        %s540 = smul.addr %s539, 16
        %s541 = scalar_lea.vmem [#allocation6], %s540
        // Predicated region
        $region227: #{basic_transformer_block.5} parent=209 // pred_check
          %p542 = pneg %p198
        $region228: #{basic_transformer_block.5} parent=209 // pred_check_branch
          %544 = sbr.rel (%p542) target = $region230
        $region229: #{basic_transformer_block.5} parent=209 // pred_region
          _
        $region230: #{basic_transformer_block.5} parent=209 // pred_fallthru
          _
        %s545 = sand.u32 %s49, 1
        %s546 = sand.u32 %s49, 1
        %s547 = smul.addr %s546, 16
        %s548 = scalar_lea.vmem [#allocation2], %s547
        %p549 = pneg %p62
        %p550 = pneg %p59
        %s551 = sand.u32 %s79, 1
        %s552 = sand.u32 %s79, 1
        %s553 = smul.addr %s552, 16
        %s554 = scalar_lea.vmem [#allocation3], %s553
        %p555 = pneg %p92
        %p556 = pneg %p89
        %s557 = sand.u32 %s117, 1
        %s558 = sand.u32 %s117, 1
        %s559 = smul.addr %s558, 16
        %s560 = scalar_lea.vmem [#allocation4], %s559
        %p561 = pneg %p130
        %p562 = pneg %p127
        %s563 = sand.u32 %s147, 1
        %s564 = sand.u32 %s147, 1
        %s565 = smul.addr %s564, 16
        %s566 = scalar_lea.vmem [#allocation5], %s565
        %p567 = pneg %p160
        %p568 = pneg %p157
        %s569 = sand.u32 %s185, 1
        %s570 = sand.u32 %s185, 1
        %s571 = smul.addr %s570, 16
        %s572 = scalar_lea.vmem [#allocation6], %s571
        %p573 = pneg %p198
        %p574 = pneg %p195
        %p575 = pneg %p230
        %p576 = pneg %p227
        %s577 = sand.u32 %s217, 1
        %s578 = sand.u32 %s217, 1
        %s579 = smul.addr %s578, 16
        %s580 = scalar_lea.vmem [#allocation7], %s579
        %s581 = smul.u32 %s21, 4
        %s582 = sadd.s32 %s581, %s22
        %s583 = smul.u32 %s21, 4
        %s584 = smul.u32 %s21, 4
        %s585 = ssub.s32 %s22, 1
        %p586 = scmp.gt.s32.totalorder %s585, 0
        %s587 = scalar_select %p586, %s585, 0
        %s588 = sadd.s32 %s584, %s587
        %s589 = smul.u32 %s21, 4
        %s590 = smul.u32 %s21, 4
        %s591 = ssub.s32 %s22, 1
        %p592 = scmp.gt.s32.totalorder %s591, 0
        %s593 = scalar_select %p592, %s591, 0
        %s594 = sadd.s32 %s590, %s593
        %s595 = smul.u32 %s21, 4
        %s596 = sadd.s32 %s595, %s22
        %v597 = vld [vmem:[%s513] sm:$0xff]
        %v598 = vld [vmem:[%s513 + $0x8] sm:$0xff]
        %v599 = vld [vmem:[%s520] sm:$0xff]
        %v600 = vld [vmem:[%s520 + $0x8] sm:$0xff]
        %v601 = vld [vmem:[%s527] sm:$0xff]
        %v602 = vld [vmem:[%s527 + $0x8] sm:$0xff]
        %v603 = vld [vmem:[%s534] sm:$0xff]
        %v604 = vld [vmem:[%s534 + $0x8] sm:$0xff]
        %v605 = vld [vmem:[%s541] sm:$0xff]
        %v606 = vld [vmem:[%s541 + $0x8] sm:$0xff]
        %v607 = vmul.f32 %v597, 0.088388346
        %v608 = vmul.f32 %v598, 0.088388346
        %609 = vmatprep.subr.mxu0 0.0
        %610 = vmatpush1.xpose.msra.mxu0 0.0
        %611 = vmatprep.subr.mxu0 0.0
        %612 = vmatpush1.xpose.msra.mxu0 0.0
        %613 = vmatprep.subr.mxu0 0.0
        %614 = vmatpush1.xpose.msra.mxu0 0.0
        %615 = vmatprep.subr.mxu0 0.0
        %616 = vmatpush1.xpose.msra.mxu0 0.0
        %617 = vmatprep.subr.mxu0 0.0
        %618 = vmatpush1.xpose.msra.mxu0 0.0
        %619 = vmatprep.subr.mxu0 0.0
        %620 = vmatpush1.xpose.msra.mxu0 0.0
        %621 = vmatprep.subr.mxu0 0.0
        %622 = vmatpush1.xpose.msra.mxu0 0.0
        %623 = vmatprep.subr.mxu0 0.0
        %624 = vmatpush1.xpose.msra.mxu0 0.0
        %625 = vmatprep.subr.mxu0 0.0
        %626 = vmatpush1.xpose.msra.mxu0 0.0
        %627 = vmatprep.subr.mxu0 0.0
        %628 = vmatpush1.xpose.msra.mxu0 0.0
        %629 = vmatprep.subr.mxu0 0.0
        %630 = vmatpush1.xpose.msra.mxu0 0.0
        %631 = vmatprep.subr.mxu0 0.0
        %632 = vmatpush1.xpose.msra.mxu0 0.0
        %633 = vmatprep.subr.mxu0 0.0
        %634 = vmatpush1.xpose.msra.mxu0 0.0
        %635 = vmatprep.subr.mxu0 0.0
        %636 = vmatpush1.xpose.msra.mxu0 0.0
        %637 = vmatprep.subr.mxu0 0.0
        %638 = vmatpush1.xpose.msra.mxu0 %v600
        %639 = vmatprep.subr.mxu0 0.0
        %640 = vmatpush1.xpose.msra.mxu0 %v599
        %641 = vmatprep.subr.mxu0 0.0
        %642 = vmatpush2.xpose.msra.mxu0 0.0
        %643 = vmatprep.subr.mxu0 0.0
        %644 = vmatpush2.xpose.msra.mxu0 0.0
        %645 = vmatprep.subr.mxu0 0.0
        %646 = vmatpush2.xpose.msra.mxu0 0.0
        %647 = vmatprep.subr.mxu0 0.0
        %648 = vmatpush2.xpose.msra.mxu0 0.0
        %649 = vmatprep.subr.mxu0 0.0
        %650 = vmatpush2.xpose.msra.mxu0 0.0
        %651 = vmatprep.subr.mxu0 0.0
        %652 = vmatpush2.xpose.msra.mxu0 0.0
        %653 = vmatprep.subr.mxu0 0.0
        %654 = vmatpush2.xpose.msra.mxu0 0.0
        %655 = vmatprep.subr.mxu0 0.0
        %656 = vmatpush2.xpose.msra.mxu0 0.0
        %657 = vmatprep.subr.mxu0 0.0
        %658 = vmatpush2.xpose.msra.mxu0 0.0
        %659 = vmatprep.subr.mxu0 0.0
        %660 = vmatpush2.xpose.msra.mxu0 0.0
        %661 = vmatprep.subr.mxu0 0.0
        %662 = vmatpush2.xpose.msra.mxu0 0.0
        %663 = vmatprep.subr.mxu0 0.0
        %664 = vmatpush2.xpose.msra.mxu0 0.0
        %665 = vmatprep.subr.mxu0 0.0
        %666 = vmatpush2.xpose.msra.mxu0 0.0
        %667 = vmatprep.subr.mxu0 0.0
        %668 = vmatpush2.xpose.msra.mxu0 0.0
        %669 = vmatprep.subr.mxu0 0.0
        %670 = vmatpush2.xpose.msra.mxu0 0.0
        %671 = vmatprep.subr.mxu0 0.0
        %672 = vmatpush2.xpose.msra.mxu0 0.0
        %673 = vmatprep.mubr.f32.mxu0 0.0
        %674 = vmatmul.mubr.f32.gmra.mxu0 %v607
        %v675 = vpop.f32.mrf.mxu0
        %v676 = vadd.f32 0.0, %v675
        %v677 = vpop.f32.mrf.mxu0
        %678 = vmatprep.mubr.f32.mxu0 0.0
        %679 = vmatmul.mubr.f32.gmra.mxu0 %v608
        %v680 = vpop.f32.mrf.mxu0
        %v681 = vadd.f32 0.0, %v680
        %v682 = vpop.f32.mrf.mxu0
        %683 = vdwg.mxu0
        %684 = vmatprep.subr.mxu0 0.0
        %685 = vmatpush1.xpose.msra.mxu0 0.0
        %686 = vmatprep.subr.mxu0 0.0
        %687 = vmatpush1.xpose.msra.mxu0 0.0
        %688 = vmatprep.subr.mxu0 0.0
        %689 = vmatpush1.xpose.msra.mxu0 0.0
        %690 = vmatprep.subr.mxu0 0.0
        %691 = vmatpush1.xpose.msra.mxu0 0.0
        %692 = vmatprep.subr.mxu0 0.0
        %693 = vmatpush1.xpose.msra.mxu0 0.0
        %694 = vmatprep.subr.mxu0 0.0
        %695 = vmatpush1.xpose.msra.mxu0 0.0
        %696 = vmatprep.subr.mxu0 0.0
        %697 = vmatpush1.xpose.msra.mxu0 0.0
        %698 = vmatprep.subr.mxu0 0.0
        %699 = vmatpush1.xpose.msra.mxu0 0.0
        %700 = vmatprep.subr.mxu0 0.0
        %701 = vmatpush1.xpose.msra.mxu0 0.0
        %702 = vmatprep.subr.mxu0 0.0
        %703 = vmatpush1.xpose.msra.mxu0 0.0
        %704 = vmatprep.subr.mxu0 0.0
        %705 = vmatpush1.xpose.msra.mxu0 0.0
        %706 = vmatprep.subr.mxu0 0.0
        %707 = vmatpush1.xpose.msra.mxu0 0.0
        %708 = vmatprep.subr.mxu0 0.0
        %709 = vmatpush1.xpose.msra.mxu0 0.0
        %710 = vmatprep.subr.mxu0 0.0
        %711 = vmatpush1.xpose.msra.mxu0 0.0
        %712 = vmatprep.subr.mxu0 0.0
        %713 = vmatpush1.xpose.msra.mxu0 %v602
        %714 = vmatprep.subr.mxu0 0.0
        %715 = vmatpush1.xpose.msra.mxu0 %v601
        %716 = vmatprep.subr.mxu0 0.0
        %717 = vmatpush2.xpose.msra.mxu0 0.0
        %718 = vmatprep.subr.mxu0 0.0
        %719 = vmatpush2.xpose.msra.mxu0 0.0
        %720 = vmatprep.subr.mxu0 0.0
        %721 = vmatpush2.xpose.msra.mxu0 0.0
        %722 = vmatprep.subr.mxu0 0.0
        %723 = vmatpush2.xpose.msra.mxu0 0.0
        %724 = vmatprep.subr.mxu0 0.0
        %725 = vmatpush2.xpose.msra.mxu0 0.0
        %726 = vmatprep.subr.mxu0 0.0
        %727 = vmatpush2.xpose.msra.mxu0 0.0
        %728 = vmatprep.subr.mxu0 0.0
        %729 = vmatpush2.xpose.msra.mxu0 0.0
        %730 = vmatprep.subr.mxu0 0.0
        %731 = vmatpush2.xpose.msra.mxu0 0.0
        %732 = vmatprep.subr.mxu0 0.0
        %733 = vmatpush2.xpose.msra.mxu0 0.0
        %734 = vmatprep.subr.mxu0 0.0
        %735 = vmatpush2.xpose.msra.mxu0 0.0
        %736 = vmatprep.subr.mxu0 0.0
        %737 = vmatpush2.xpose.msra.mxu0 0.0
        %738 = vmatprep.subr.mxu0 0.0
        %739 = vmatpush2.xpose.msra.mxu0 0.0
        %740 = vmatprep.subr.mxu0 0.0
        %741 = vmatpush2.xpose.msra.mxu0 0.0
        %742 = vmatprep.subr.mxu0 0.0
        %743 = vmatpush2.xpose.msra.mxu0 0.0
        %744 = vmatprep.subr.mxu0 0.0
        %745 = vmatpush2.xpose.msra.mxu0 0.0
        %746 = vmatprep.subr.mxu0 0.0
        %747 = vmatpush2.xpose.msra.mxu0 0.0
        %748 = vmatprep.mubr.f32.mxu0 0.0
        %749 = vmatmul.mubr.f32.gmra.mxu0 %v607
        %v750 = vpop.f32.mrf.mxu0
        %v751 = vadd.f32 0.0, %v750
        %v752 = vpop.f32.mrf.mxu0
        %753 = vmatprep.mubr.f32.mxu0 0.0
        %754 = vmatmul.mubr.f32.gmra.mxu0 %v608
        %v755 = vpop.f32.mrf.mxu0
        %v756 = vadd.f32 0.0, %v755
        %v757 = vpop.f32.mrf.mxu0
        %758 = vdwg.mxu0
        %vm759 = vcmask 130048
        %v760 = vsel %vm759, %v676, -inf
        %761 = vmax.xlane.f32.xlu0 %v760
        %v762 = vpop.xlane.xlu0 %761
        %v763 = vsel %vm759, %v681, -inf
        %764 = vmax.xlane.f32.xlu0 %v763
        %v765 = vpop.xlane.xlu0 %764
        %v766 = vsel %vm759, %v751, -inf
        %767 = vmax.xlane.f32.xlu0 %v766
        %v768 = vpop.xlane.xlu0 %767
        %v769 = vsel %vm759, %v756, -inf
        %770 = vmax.xlane.f32.xlu0 %v769
        %v771 = vpop.xlane.xlu0 %770
        %v772 = vmax.f32 %v762, %v768
        %v773 = vmax.f32 %v765, %v771
        %v774 = vsub.f32 %v676, %v772
        %v775 = vsub.f32 %v681, %v773
        %v776 = vmul.f32 %v774, 1.442695
        %v777 = vpow.pop %v776
        %v778 = vmul.f32 %v775, 1.442695
        %v779 = vpow.pop %v778
        %v780 = vsub.f32 %v751, %v772
        %v781 = vsub.f32 %v756, %v773
        %v782 = vmul.f32 %v780, 1.442695
        %v783 = vpow.pop %v782
        %v784 = vmul.f32 %v781, 1.442695
        %v785 = vpow.pop %v784
        %v786 = vsel %vm759, %v777, 0.0
        %787 = vadd.xlane.f32.xlu0 %v786
        %v788 = vpop.xlane.xlu0 %787
        %v789 = vsel %vm759, %v779, 0.0
        %790 = vadd.xlane.f32.xlu0 %v789
        %v791 = vpop.xlane.xlu0 %790
        %v792 = vsel %vm759, %v783, 0.0
        %793 = vadd.xlane.f32.xlu0 %v792
        %v794 = vpop.xlane.xlu0 %793
        %v795 = vsel %vm759, %v785, 0.0
        %796 = vadd.xlane.f32.xlu0 %v795
        %v797 = vpop.xlane.xlu0 %796
        %v798 = vadd.f32 %v788, %v794
        %v799 = vadd.f32 %v791, %v797
        %v801 = vsel %vm759, %v783, 0
        %v804 = vsel %vm759, %v785, 0
        %806 = vmatprep.subr.mxu0 0.0
        %807 = vmatpush1.msra.mxu0 0.0
        %808 = vmatprep.subr.mxu0 0.0
        %809 = vmatpush1.msra.mxu0 0.0
        %810 = vmatprep.subr.mxu0 0.0
        %811 = vmatpush1.msra.mxu0 0.0
        %812 = vmatprep.subr.mxu0 0.0
        %813 = vmatpush1.msra.mxu0 0.0
        %814 = vmatprep.subr.mxu0 0.0
        %815 = vmatpush1.msra.mxu0 0.0
        %816 = vmatprep.subr.mxu0 0.0
        %817 = vmatpush1.msra.mxu0 0.0
        %818 = vmatprep.subr.mxu0 0.0
        %819 = vmatpush1.msra.mxu0 0.0
        %820 = vmatprep.subr.mxu0 0.0
        %821 = vmatpush1.msra.mxu0 0.0
        %822 = vmatprep.subr.mxu0 0.0
        %823 = vmatpush1.msra.mxu0 0.0
        %824 = vmatprep.subr.mxu0 0.0
        %825 = vmatpush1.msra.mxu0 0.0
        %826 = vmatprep.subr.mxu0 0.0
        %827 = vmatpush1.msra.mxu0 0.0
        %828 = vmatprep.subr.mxu0 0.0
        %829 = vmatpush1.msra.mxu0 0.0
        %830 = vmatprep.subr.mxu0 0.0
        %831 = vmatpush1.msra.mxu0 0.0
        %832 = vmatprep.subr.mxu0 0.0
        %833 = vmatpush1.msra.mxu0 0.0
        %834 = vmatprep.subr.mxu0 0.0
        %835 = vmatpush1.msra.mxu0 %v606
        %836 = vmatprep.subr.mxu0 0.0
        %837 = vmatpush1.msra.mxu0 %v605
        %838 = vmatprep.subr.mxu0 0.0
        %839 = vmatpush2.msra.mxu0 0.0
        %840 = vmatprep.subr.mxu0 0.0
        %841 = vmatpush2.msra.mxu0 0.0
        %842 = vmatprep.subr.mxu0 0.0
        %843 = vmatpush2.msra.mxu0 0.0
        %844 = vmatprep.subr.mxu0 0.0
        %845 = vmatpush2.msra.mxu0 0.0
        %846 = vmatprep.subr.mxu0 0.0
        %847 = vmatpush2.msra.mxu0 0.0
        %848 = vmatprep.subr.mxu0 0.0
        %849 = vmatpush2.msra.mxu0 0.0
        %850 = vmatprep.subr.mxu0 0.0
        %851 = vmatpush2.msra.mxu0 0.0
        %852 = vmatprep.subr.mxu0 0.0
        %853 = vmatpush2.msra.mxu0 0.0
        %854 = vmatprep.subr.mxu0 0.0
        %855 = vmatpush2.msra.mxu0 0.0
        %856 = vmatprep.subr.mxu0 0.0
        %857 = vmatpush2.msra.mxu0 0.0
        %858 = vmatprep.subr.mxu0 0.0
        %859 = vmatpush2.msra.mxu0 0.0
        %860 = vmatprep.subr.mxu0 0.0
        %861 = vmatpush2.msra.mxu0 0.0
        %862 = vmatprep.subr.mxu0 0.0
        %863 = vmatpush2.msra.mxu0 0.0
        %864 = vmatprep.subr.mxu0 0.0
        %865 = vmatpush2.msra.mxu0 0.0
        %866 = vmatprep.subr.mxu0 0.0
        %867 = vmatpush2.msra.mxu0 0.0
        %868 = vmatprep.subr.mxu0 0.0
        %869 = vmatpush2.msra.mxu0 0.0
        %870 = vmatprep.mubr.f32.mxu0 0.0
        %871 = vmatmul.mubr.f32.gmra.mxu0 %v801
        %v872 = vpop.f32.mrf.mxu0
        %v873 = vadd.f32 0.0, %v872
        %v874 = vpop.f32.mrf.mxu0
        %875 = vmatprep.mubr.f32.mxu0 0.0
        %876 = vmatmul.mubr.f32.gmra.mxu0 %v804
        %v877 = vpop.f32.mrf.mxu0
        %v878 = vadd.f32 0.0, %v877
        %v879 = vpop.f32.mrf.mxu0
        %880 = vdwg.mxu0
        %v882 = vsel %vm759, %v777, 0
        %v885 = vsel %vm759, %v779, 0
        %887 = vmatprep.subr.mxu0 0.0
        %888 = vmatpush1.msra.mxu0 0.0
        %889 = vmatprep.subr.mxu0 0.0
        %890 = vmatpush1.msra.mxu0 0.0
        %891 = vmatprep.subr.mxu0 0.0
        %892 = vmatpush1.msra.mxu0 0.0
        %893 = vmatprep.subr.mxu0 0.0
        %894 = vmatpush1.msra.mxu0 0.0
        %895 = vmatprep.subr.mxu0 0.0
        %896 = vmatpush1.msra.mxu0 0.0
        %897 = vmatprep.subr.mxu0 0.0
        %898 = vmatpush1.msra.mxu0 0.0
        %899 = vmatprep.subr.mxu0 0.0
        %900 = vmatpush1.msra.mxu0 0.0
        %901 = vmatprep.subr.mxu0 0.0
        %902 = vmatpush1.msra.mxu0 0.0
        %903 = vmatprep.subr.mxu0 0.0
        %904 = vmatpush1.msra.mxu0 0.0
        %905 = vmatprep.subr.mxu0 0.0
        %906 = vmatpush1.msra.mxu0 0.0
        %907 = vmatprep.subr.mxu0 0.0
        %908 = vmatpush1.msra.mxu0 0.0
        %909 = vmatprep.subr.mxu0 0.0
        %910 = vmatpush1.msra.mxu0 0.0
        %911 = vmatprep.subr.mxu0 0.0
        %912 = vmatpush1.msra.mxu0 0.0
        %913 = vmatprep.subr.mxu0 0.0
        %914 = vmatpush1.msra.mxu0 0.0
        %915 = vmatprep.subr.mxu0 0.0
        %916 = vmatpush1.msra.mxu0 %v604
        %917 = vmatprep.subr.mxu0 0.0
        %918 = vmatpush1.msra.mxu0 %v603
        %919 = vmatprep.subr.mxu0 0.0
        %920 = vmatpush2.msra.mxu0 0.0
        %921 = vmatprep.subr.mxu0 0.0
        %922 = vmatpush2.msra.mxu0 0.0
        %923 = vmatprep.subr.mxu0 0.0
        %924 = vmatpush2.msra.mxu0 0.0
        %925 = vmatprep.subr.mxu0 0.0
        %926 = vmatpush2.msra.mxu0 0.0
        %927 = vmatprep.subr.mxu0 0.0
        %928 = vmatpush2.msra.mxu0 0.0
        %929 = vmatprep.subr.mxu0 0.0
        %930 = vmatpush2.msra.mxu0 0.0
        %931 = vmatprep.subr.mxu0 0.0
        %932 = vmatpush2.msra.mxu0 0.0
        %933 = vmatprep.subr.mxu0 0.0
        %934 = vmatpush2.msra.mxu0 0.0
        %935 = vmatprep.subr.mxu0 0.0
        %936 = vmatpush2.msra.mxu0 0.0
        %937 = vmatprep.subr.mxu0 0.0
        %938 = vmatpush2.msra.mxu0 0.0
        %939 = vmatprep.subr.mxu0 0.0
        %940 = vmatpush2.msra.mxu0 0.0
        %941 = vmatprep.subr.mxu0 0.0
        %942 = vmatpush2.msra.mxu0 0.0
        %943 = vmatprep.subr.mxu0 0.0
        %944 = vmatpush2.msra.mxu0 0.0
        %945 = vmatprep.subr.mxu0 0.0
        %946 = vmatpush2.msra.mxu0 0.0
        %947 = vmatprep.subr.mxu0 0.0
        %948 = vmatpush2.msra.mxu0 0.0
        %949 = vmatprep.subr.mxu0 0.0
        %950 = vmatpush2.msra.mxu0 0.0
        %951 = vmatprep.mubr.f32.mxu0 0.0
        %952 = vmatmul.mubr.f32.gmra.mxu0 %v882
        %v953 = vpop.f32.mrf.mxu0
        %v954 = vadd.f32 %v873, %v953
        %v955 = vpop.f32.mrf.mxu0
        %956 = vmatprep.mubr.f32.mxu0 0.0
        %957 = vmatmul.mubr.f32.gmra.mxu0 %v885
        %v958 = vpop.f32.mrf.mxu0
        %v959 = vadd.f32 %v878, %v958
        %v960 = vpop.f32.mrf.mxu0
        %961 = vdwg.mxu0
        %v962 = vrcp.pop %v798
        %v963 = vrcp.pop %v799
        %v964 = vmul.f32 %v954, %v962
        %v965 = vmul.f32 %v959, %v963
        %966 = vst [vmem:[%s580] sm:$0xff] %v964
        %967 = vst [vmem:[%s580 + $0x8] sm:$0xff] %v965
        %s968 = sand.u32 %s217, 1
        %s969 = sand.u32 %s217, 1
        %s970 = smul.addr %s969, 16
        %s971 = scalar_lea.vmem [#allocation7], %s970
        // Predicated region
        $region231: #{basic_transformer_block.5} parent=209 // pred_check
          %p972 = pneg %p227
        $region232: #{basic_transformer_block.5} parent=209 // pred_check_branch
          %974 = sbr.rel (%p972) target = $region234
        $region233: #{basic_transformer_block.5} parent=209 // pred_region
          %s975 = smul.u32 %s21, 4
          %s976 = sadd.s32 %s975, %s22
          %s977 = smul.addr %s976, 4
          %s978 = sadd.s32 %s23, %s977
          %s979 = smul.addr %s978, 8
          %s980 = scalar_lea.vmem %s5, %s979
          // Predicated region
          $region235: #{basic_transformer_block.5} parent=233 // pred_check
            _
          $region236: #{basic_transformer_block.5} parent=233 // pred_check_branch
            %982 = sbr.rel (0) target = $region238
          $region237: #{basic_transformer_block.5} parent=233 // pred_region
            // Predicated region
            $region239: #{basic_transformer_block.5} parent=237 // pred_check
              _
            $region240: #{basic_transformer_block.5} parent=237 // pred_check_branch
              %984 = sbr.rel (0) target = $region242
            $region241: #{basic_transformer_block.5} parent=237 // pred_region
              // Predicated region
              $region254: #{basic_transformer_block.5} parent=241 // pred_check
                _
              $region255: #{basic_transformer_block.5} parent=241 // pred_check_branch
                %1002 = sbr.rel (0) target = $region257
              $region256: #{basic_transformer_block.5} parent=241 // pred_region
                loop: start=0, step=1, limit=1
                $region258: #{basic_transformer_block.5} parent=256 // loop_pre_header
                  _
                $region259: #{basic_transformer_block.5} parent=256 // loop_header
                  %s1004 = sphi 0, %s1008
                  %p1005 = scmp.ge.s32.totalorder %s1004, 1
                  %s1009 = sphi %s971, %s971
                  %s1010 = sphi %s980, %s980
                $region260: #{basic_transformer_block.5} parent=256 // loop_header_branch
                  %1007 = sbr.rel (%p1005) target = $region264
                $region261: #{basic_transformer_block.5} parent=256 // loop_body
                  %v1011 = vld [vmem:[%s1009] sm:$0xff]
                  %1012 = vst [vmem:[%s1010] sm:$0xff] %v1011
                  %v1013 = vld [vmem:[%s1009 + $0x8] sm:$0xff]
                  %1014 = vst [vmem:[%s1010 + $0x10] sm:$0xff] %v1013
                $region262: #{basic_transformer_block.5} parent=256 // loop_footer
                  %s1008 = sadd.s32 1, %s1004
                $region263: #{basic_transformer_block.5} parent=256 // loop_footer_branch
                  %1003 = sbr.rel target = $region259
                $region264: #{basic_transformer_block.5} parent=256 // loop_exit
                  _
              $region257: #{basic_transformer_block.5} parent=241 // pred_fallthru
                _
              // Predicated region
              $region265: #{basic_transformer_block.5} parent=241 // pred_check
                _
              $region266: #{basic_transformer_block.5} parent=241 // pred_check_branch
                %1016 = sbr.rel target = $region268
              $region267: #{basic_transformer_block.5} parent=241 // pred_region
                _
              $region268: #{basic_transformer_block.5} parent=241 // pred_fallthru
                _
            $region242: #{basic_transformer_block.5} parent=237 // pred_fallthru
              _
            // Predicated region
            $region243: #{basic_transformer_block.5} parent=237 // pred_check
              _
            $region244: #{basic_transformer_block.5} parent=237 // pred_check_branch
              %986 = sbr.rel target = $region246
            $region245: #{basic_transformer_block.5} parent=237 // pred_region
              %s988 = ssub.s32 256, 1
              loop: start=0, step=1, limit=1
              $region247: #{basic_transformer_block.5} parent=245 // loop_pre_header
                _
              $region248: #{basic_transformer_block.5} parent=245 // loop_header
                %s990 = sphi 0, %s994
                %p991 = scmp.ge.s32.totalorder %s990, 1
                %s995 = sphi %s971, %s971
                %s996 = sphi %s980, %s980
              $region249: #{basic_transformer_block.5} parent=245 // loop_header_branch
                %993 = sbr.rel (%p991) target = $region253
              $region250: #{basic_transformer_block.5} parent=245 // loop_body
                %v997 = vld [vmem:[%s995] sm:%s988]
                %998 = vst [vmem:[%s996] sm:%s988] %v997
                %v999 = vld [vmem:[%s995 + $0x8] sm:%s988]
                %1000 = vst [vmem:[%s996 + $0x10] sm:%s988] %v999
              $region251: #{basic_transformer_block.5} parent=245 // loop_footer
                %s994 = sadd.s32 1, %s990
              $region252: #{basic_transformer_block.5} parent=245 // loop_footer_branch
                %989 = sbr.rel target = $region248
              $region253: #{basic_transformer_block.5} parent=245 // loop_exit
                _
            $region246: #{basic_transformer_block.5} parent=237 // pred_fallthru
              _
          $region238: #{basic_transformer_block.5} parent=233 // pred_fallthru
            _
          %1017 = vnop
        $region234: #{basic_transformer_block.5} parent=209 // pred_fallthru
          _
      $region210: #{basic_transformer_block.5} parent=5 // pred_fallthru
        _
      %p1018 = scmp.le.s32.totalorder 2, %s11
      // Predicated region
      $region269: #{basic_transformer_block.5} parent=5 // pred_check
        %p1019 = pneg %p1018
      $region270: #{basic_transformer_block.5} parent=5 // pred_check_branch
        %1021 = sbr.rel (%p1019) target = $region272
      $region271: #{basic_transformer_block.5} parent=5 // pred_region
        %s1022 = ssub.s32 %s11, 2
        // Predicated region
        $region273: #{basic_transformer_block.5} parent=271 // pred_check
          %p1023 = pneg %p233
        $region274: #{basic_transformer_block.5} parent=271 // pred_check_branch
          %1025 = sbr.rel (%p1023) target = $region276
        $region275: #{basic_transformer_block.5} parent=271 // pred_region
          %s1026 = sand.u32 %s218, 1
          %s1027 = sand.u32 %s218, 1
          %s1028 = smul.addr %s1027, 16
          %s1029 = scalar_lea.vmem [#allocation7], %s1028
        $region276: #{basic_transformer_block.5} parent=271 // pred_fallthru
          _
      $region272: #{basic_transformer_block.5} parent=5 // pred_fallthru
        _
    $region6: #{basic_transformer_block.5} parent=1 // loop_footer
      %s15 = sadd.s32 1, %s11
    $region7: #{basic_transformer_block.5} parent=1 // loop_footer_branch
      %10 = sbr.rel target = $region3
    $region8: #{basic_transformer_block.5} parent=1 // loop_exit
      _

// kernel: basic_transformer_block.6
$region0: #{basic_transformer_block.6}
  #allocation0 [shape = 'u32[]', space=smem, size = 0x4, offset = 0x4, fixed_abs, tag = 'smem constant byte address 0x4 - core index']
  #allocation1 [shape = 'u32[144,128]{1,0:T(1,128)}', space=vmem, size = 0x12000, scoped, tag = 'internal scratch']
  %s0 = inlined_call_operand.vmem [shape: f32[128,256], index: 0, kind: input, shape index: {}]
  %s1 = inlined_call_operand.hbm [shape: f32[128,256], index: 1, kind: input, shape index: {}]
  %s2 = inlined_call_operand.hbm [shape: f32[256,256], index: 2, kind: input, shape index: {}]
  %s3 = inlined_call_operand.hbm [shape: f32[1,256], index: 3, kind: input, shape index: {}]
  %s4 = inlined_call_operand.vmem [shape: f32[128,256], index: 4, kind: output, shape index: {}]
  %s5 = sld [smem:[#allocation0]]
  $region38: #{basic_transformer_block.6} parent=0
    _
  %s7 = ssub.s32 1, %s5
  %s8 = scalar_select 0, %s7, %s5
  $region1: #{basic_transformer_block.6} parent=0
    #allocation2 [shape = 'u8[131072]{0}', space=vmem, size = 0x20000, scoped, tag = 'input window, operand 1, single buffered']
    #allocation3 [shape = 's32[1]{0}', space=sflag, size = 0x4, scoped, tag = 'scoped memory for basic_transformer_block.6']
    #allocation4 [shape = 'u8[262144]{0}', space=vmem, size = 0x40000, scoped, tag = 'input window, operand 2, single buffered']
    #allocation5 [shape = 's32[1]{0}', space=sflag, size = 0x4, scoped, tag = 'scoped memory for basic_transformer_block.6']
    #allocation6 [shape = 'u8[1024]{0}', space=vmem, size = 0x400, scoped, tag = 'input window, operand 3, single buffered']
    %9 = vsyncpa [#allocation3], 0
    %10 = vsyncpa [#allocation5], 0
    // Predicated region
    $region2: #{basic_transformer_block.6} parent=1 // pred_check
      _
    $region3: #{basic_transformer_block.6} parent=1 // pred_check_branch
      %12 = sbr.rel (0) target = $region5
    $region4: #{basic_transformer_block.6} parent=1 // pred_region
      _
    $region5: #{basic_transformer_block.6} parent=1 // pred_fallthru
      _
    // Predicated region
    $region6: #{basic_transformer_block.6} parent=1 // pred_check
      _
    $region7: #{basic_transformer_block.6} parent=1 // pred_check_branch
      %14 = sbr.rel (0) target = $region9
    $region8: #{basic_transformer_block.6} parent=1 // pred_region
      %s16 = ssub.s32 4096, 4096
      %17 = vsyncadd [#allocation3], %s16
      %s18 = sshll.u32 [#allocation2], 4
      %s19 = int_to_ptr.vmem [resolvable:$true] %s18
      %24 = dma.hbm_to_vmem [thread:$0]  %s1, 4096, %s19, [#allocation3], 256, 256, 16
    $region9: #{basic_transformer_block.6} parent=1 // pred_fallthru
      _
    // Predicated region
    $region10: #{basic_transformer_block.6} parent=1 // pred_check
      _
    $region11: #{basic_transformer_block.6} parent=1 // pred_check_branch
      %26 = sbr.rel (0) target = $region13
    $region12: #{basic_transformer_block.6} parent=1 // pred_region
      %s28 = ssub.s32 8192, 8192
      %29 = vsyncadd [#allocation5], %s28
      %s30 = sshll.u32 [#allocation4], 4
      %s31 = int_to_ptr.vmem [resolvable:$true] %s30
      %36 = dma.hbm_to_vmem [thread:$0]  %s2, 8192, %s31, [#allocation5], 256, 256, 16
    $region13: #{basic_transformer_block.6} parent=1 // pred_fallthru
      _
    // Predicated region
    $region14: #{basic_transformer_block.6} parent=1 // pred_check
      _
    $region15: #{basic_transformer_block.6} parent=1 // pred_check_branch
      %38 = sbr.rel (0) target = $region17
    $region16: #{basic_transformer_block.6} parent=1 // pred_region
      %s40 = ssub.s32 32, 32
      %41 = vsyncadd [#allocation5], %s40
      %s43 = sshll.u32 [#allocation6], 4
      %s44 = int_to_ptr.vmem [resolvable:$true] %s43
      %46 = dma.hbm_to_vmem [thread:$0]  %s3, 32, %s44, [#allocation5]
    $region17: #{basic_transformer_block.6} parent=1 // pred_fallthru
      _
    // Predicated region
    $region18: #{basic_transformer_block.6} parent=1 // pred_check
      _
    $region19: #{basic_transformer_block.6} parent=1 // pred_check_branch
      %48 = sbr.rel (0) target = $region21
    $region20: #{basic_transformer_block.6} parent=1 // pred_region
      %49 = dma.done [#allocation3], 4096
    $region21: #{basic_transformer_block.6} parent=1 // pred_fallthru
      _
    // Predicated region
    $region22: #{basic_transformer_block.6} parent=1 // pred_check
      _
    $region23: #{basic_transformer_block.6} parent=1 // pred_check_branch
      %51 = sbr.rel (0) target = $region25
    $region24: #{basic_transformer_block.6} parent=1 // pred_region
      %52 = dma.done [#allocation5], 8192
    $region25: #{basic_transformer_block.6} parent=1 // pred_fallthru
      _
    // Predicated region
    $region26: #{basic_transformer_block.6} parent=1 // pred_check
      _
    $region27: #{basic_transformer_block.6} parent=1 // pred_check_branch
      %54 = sbr.rel (0) target = $region29
    $region28: #{basic_transformer_block.6} parent=1 // pred_region
      %55 = dma.done [#allocation5], 32
    $region29: #{basic_transformer_block.6} parent=1 // pred_fallthru
      _
    %v56 = vld [vmem:[%s0] sm:$0xff]
    %v57 = vld [vmem:[%s0 + $0x8] sm:$0xff]
    %v58 = vld [vmem:[%s0 + $0x10] sm:$0xff]
    %v59 = vld [vmem:[%s0 + $0x18] sm:$0xff]
    %v60 = vld [vmem:[%s0 + $0x20] sm:$0xff]
    %v61 = vld [vmem:[%s0 + $0x28] sm:$0xff]
    %v62 = vld [vmem:[%s0 + $0x30] sm:$0xff]
    %v63 = vld [vmem:[%s0 + $0x38] sm:$0xff]
    %v64 = vld [vmem:[%s0 + $0x40] sm:$0xff]
    %v65 = vld [vmem:[%s0 + $0x48] sm:$0xff]
    %v66 = vld [vmem:[%s0 + $0x50] sm:$0xff]
    %v67 = vld [vmem:[%s0 + $0x58] sm:$0xff]
    %v68 = vld [vmem:[%s0 + $0x60] sm:$0xff]
    %v69 = vld [vmem:[%s0 + $0x68] sm:$0xff]
    %v70 = vld [vmem:[%s0 + $0x70] sm:$0xff]
    %v71 = vld [vmem:[%s0 + $0x78] sm:$0xff]
    %v72 = vld [vmem:[%s0 + $0x80] sm:$0xff]
    %v73 = vld [vmem:[%s0 + $0x88] sm:$0xff]
    %v74 = vld [vmem:[%s0 + $0x90] sm:$0xff]
    %v75 = vld [vmem:[%s0 + $0x98] sm:$0xff]
    %v76 = vld [vmem:[%s0 + $0xa0] sm:$0xff]
    %v77 = vld [vmem:[%s0 + $0xa8] sm:$0xff]
    %v78 = vld [vmem:[%s0 + $0xb0] sm:$0xff]
    %v79 = vld [vmem:[%s0 + $0xb8] sm:$0xff]
    %v80 = vld [vmem:[%s0 + $0xc0] sm:$0xff]
    %v81 = vld [vmem:[%s0 + $0xc8] sm:$0xff]
    %v82 = vld [vmem:[%s0 + $0xd0] sm:$0xff]
    %v83 = vld [vmem:[%s0 + $0xd8] sm:$0xff]
    %v84 = vld [vmem:[%s0 + $0xe0] sm:$0xff]
    %v85 = vld [vmem:[%s0 + $0xe8] sm:$0xff]
    %v86 = vld [vmem:[%s0 + $0xf0] sm:$0xff]
    %v87 = vld [vmem:[%s0 + $0xf8] sm:$0xff]
    %v88 = vld [vmem:[#allocation4] sm:$0xff]
    %v89 = vld [vmem:[#allocation4 + $0x8] sm:$0xff]
    %v90 = vld [vmem:[#allocation4 + $0x10] sm:$0xff]
    %v91 = vld [vmem:[#allocation4 + $0x18] sm:$0xff]
    %v92 = vld [vmem:[#allocation4 + $0x20] sm:$0xff]
    %v93 = vld [vmem:[#allocation4 + $0x28] sm:$0xff]
    %v94 = vld [vmem:[#allocation4 + $0x30] sm:$0xff]
    %v95 = vld [vmem:[#allocation4 + $0x38] sm:$0xff]
    %v96 = vld [vmem:[#allocation4 + $0x40] sm:$0xff]
    %v97 = vld [vmem:[#allocation4 + $0x48] sm:$0xff]
    %v98 = vld [vmem:[#allocation4 + $0x50] sm:$0xff]
    %v99 = vld [vmem:[#allocation4 + $0x58] sm:$0xff]
    %v100 = vld [vmem:[#allocation4 + $0x60] sm:$0xff]
    %v101 = vld [vmem:[#allocation4 + $0x68] sm:$0xff]
    %v102 = vld [vmem:[#allocation4 + $0x70] sm:$0xff]
    %v103 = vld [vmem:[#allocation4 + $0x78] sm:$0xff]
    %v104 = vld [vmem:[#allocation4 + $0x80] sm:$0xff]
    %v105 = vld [vmem:[#allocation4 + $0x88] sm:$0xff]
    %v106 = vld [vmem:[#allocation4 + $0x90] sm:$0xff]
    %v107 = vld [vmem:[#allocation4 + $0x98] sm:$0xff]
    %v108 = vld [vmem:[#allocation4 + $0xa0] sm:$0xff]
    %v109 = vld [vmem:[#allocation4 + $0xa8] sm:$0xff]
    %v110 = vld [vmem:[#allocation4 + $0xb0] sm:$0xff]
    %v111 = vld [vmem:[#allocation4 + $0xb8] sm:$0xff]
    %v112 = vld [vmem:[#allocation4 + $0xc0] sm:$0xff]
    %v113 = vld [vmem:[#allocation4 + $0xc8] sm:$0xff]
    %v114 = vld [vmem:[#allocation4 + $0xd0] sm:$0xff]
    %v115 = vld [vmem:[#allocation4 + $0xd8] sm:$0xff]
    %v116 = vld [vmem:[#allocation4 + $0xe0] sm:$0xff]
    %v117 = vld [vmem:[#allocation4 + $0xe8] sm:$0xff]
    %v118 = vld [vmem:[#allocation4 + $0xf0] sm:$0xff]
    %v119 = vld [vmem:[#allocation4 + $0xf8] sm:$0xff]
    %v120 = vld [vmem:[#allocation4 + $0x100] sm:$0xff]
    %v121 = vld [vmem:[#allocation4 + $0x108] sm:$0xff]
    %v122 = vld [vmem:[#allocation4 + $0x110] sm:$0xff]
    %v123 = vld [vmem:[#allocation4 + $0x118] sm:$0xff]
    %v124 = vld [vmem:[#allocation4 + $0x120] sm:$0xff]
    %v125 = vld [vmem:[#allocation4 + $0x128] sm:$0xff]
    %v126 = vld [vmem:[#allocation4 + $0x130] sm:$0xff]
    %v127 = vld [vmem:[#allocation4 + $0x138] sm:$0xff]
    %v128 = vld [vmem:[#allocation4 + $0x140] sm:$0xff]
    %v129 = vld [vmem:[#allocation4 + $0x148] sm:$0xff]
    %v130 = vld [vmem:[#allocation4 + $0x150] sm:$0xff]
    %v131 = vld [vmem:[#allocation4 + $0x158] sm:$0xff]
    %v132 = vld [vmem:[#allocation4 + $0x160] sm:$0xff]
    %v133 = vld [vmem:[#allocation4 + $0x168] sm:$0xff]
    %v134 = vld [vmem:[#allocation4 + $0x170] sm:$0xff]
    %v135 = vld [vmem:[#allocation4 + $0x178] sm:$0xff]
    %v136 = vld [vmem:[#allocation4 + $0x180] sm:$0xff]
    %v137 = vld [vmem:[#allocation4 + $0x188] sm:$0xff]
    %v138 = vld [vmem:[#allocation4 + $0x190] sm:$0xff]
    %v139 = vld [vmem:[#allocation4 + $0x198] sm:$0xff]
    %v140 = vld [vmem:[#allocation4 + $0x1a0] sm:$0xff]
    %v141 = vld [vmem:[#allocation4 + $0x1a8] sm:$0xff]
    %v142 = vld [vmem:[#allocation4 + $0x1b0] sm:$0xff]
    %v143 = vld [vmem:[#allocation4 + $0x1b8] sm:$0xff]
    %v144 = vld [vmem:[#allocation4 + $0x1c0] sm:$0xff]
    %v145 = vld [vmem:[#allocation4 + $0x1c8] sm:$0xff]
    %v146 = vld [vmem:[#allocation4 + $0x1d0] sm:$0xff]
    %v147 = vld [vmem:[#allocation4 + $0x1d8] sm:$0xff]
    %v148 = vld [vmem:[#allocation4 + $0x1e0] sm:$0xff]
    %v149 = vld [vmem:[#allocation4 + $0x1e8] sm:$0xff]
    %v150 = vld [vmem:[#allocation4 + $0x1f0] sm:$0xff]
    %v151 = vld [vmem:[#allocation4 + $0x1f8] sm:$0xff]
    %v152 = vld [vmem:[#allocation6] sm:$0x3]
    %v154 = vlaneseq
    %v155 = vshrl.u32 %v154, 7
    %v156 = vsub.s32 0, %v155
    %v157 = vrot.slane %v152, %v156
    %v158 = vlaneseq
    %v159 = vshrl.u32 %v158, 7
    %v160 = vsub.s32 1, %v159
    %v161 = vrot.slane %v152, %v160
    %164 = vmatprep.subr.mxu0 %v119
    %165 = vmatpush1.msra.mxu0 %v118
    %166 = vmatprep.subr.mxu0 %v117
    %167 = vmatpush1.msra.mxu0 %v116
    %168 = vmatprep.subr.mxu0 %v115
    %169 = vmatpush1.msra.mxu0 %v114
    %170 = vmatprep.subr.mxu0 %v113
    %171 = vmatpush1.msra.mxu0 %v112
    %172 = vmatprep.subr.mxu0 %v111
    %173 = vmatpush1.msra.mxu0 %v110
    %174 = vmatprep.subr.mxu0 %v109
    %175 = vmatpush1.msra.mxu0 %v108
    %176 = vmatprep.subr.mxu0 %v107
    %177 = vmatpush1.msra.mxu0 %v106
    %178 = vmatprep.subr.mxu0 %v105
    %179 = vmatpush1.msra.mxu0 %v104
    %180 = vmatprep.subr.mxu0 %v103
    %181 = vmatpush1.msra.mxu0 %v102
    %182 = vmatprep.subr.mxu0 %v101
    %183 = vmatpush1.msra.mxu0 %v100
    %184 = vmatprep.subr.mxu0 %v99
    %185 = vmatpush1.msra.mxu0 %v98
    %186 = vmatprep.subr.mxu0 %v97
    %187 = vmatpush1.msra.mxu0 %v96
    %188 = vmatprep.subr.mxu0 %v95
    %189 = vmatpush1.msra.mxu0 %v94
    %190 = vmatprep.subr.mxu0 %v93
    %191 = vmatpush1.msra.mxu0 %v92
    %192 = vmatprep.subr.mxu0 %v91
    %193 = vmatpush1.msra.mxu0 %v90
    %194 = vmatprep.subr.mxu0 %v89
    %195 = vmatpush1.msra.mxu0 %v88
    %196 = vmatprep.subr.mxu0 %v151
    %197 = vmatpush2.msra.mxu0 %v150
    %198 = vmatprep.subr.mxu0 %v149
    %199 = vmatpush2.msra.mxu0 %v148
    %200 = vmatprep.subr.mxu0 %v147
    %201 = vmatpush2.msra.mxu0 %v146
    %202 = vmatprep.subr.mxu0 %v145
    %203 = vmatpush2.msra.mxu0 %v144
    %204 = vmatprep.subr.mxu0 %v143
    %205 = vmatpush2.msra.mxu0 %v142
    %206 = vmatprep.subr.mxu0 %v141
    %207 = vmatpush2.msra.mxu0 %v140
    %208 = vmatprep.subr.mxu0 %v139
    %209 = vmatpush2.msra.mxu0 %v138
    %210 = vmatprep.subr.mxu0 %v137
    %211 = vmatpush2.msra.mxu0 %v136
    %212 = vmatprep.subr.mxu0 %v135
    %213 = vmatpush2.msra.mxu0 %v134
    %214 = vmatprep.subr.mxu0 %v133
    %215 = vmatpush2.msra.mxu0 %v132
    %216 = vmatprep.subr.mxu0 %v131
    %217 = vmatpush2.msra.mxu0 %v130
    %218 = vmatprep.subr.mxu0 %v129
    %219 = vmatpush2.msra.mxu0 %v128
    %220 = vmatprep.subr.mxu0 %v127
    %221 = vmatpush2.msra.mxu0 %v126
    %222 = vmatprep.subr.mxu0 %v125
    %223 = vmatpush2.msra.mxu0 %v124
    %224 = vmatprep.subr.mxu0 %v123
    %225 = vmatpush2.msra.mxu0 %v122
    %226 = vmatprep.subr.mxu0 %v121
    %227 = vmatpush2.msra.mxu0 %v120
    %228 = vmatprep.mubr.f32.mxu0 %v57
    %229 = vmatmul.mubr.f32.gmra.mxu0 %v56
    %v230 = vpop.f32.mrf.mxu0
    %v231 = vadd.f32 %v157, %v230
    %v232 = vpop.f32.mrf.mxu0
    %v233 = vadd.f32 %v161, %v232
    %234 = vmatprep.mubr.f32.mxu0 %v59
    %235 = vmatmul.mubr.f32.gmra.mxu0 %v58
    %v236 = vpop.f32.mrf.mxu0
    %v237 = vadd.f32 %v157, %v236
    %v238 = vpop.f32.mrf.mxu0
    %v239 = vadd.f32 %v161, %v238
    %240 = vmatprep.mubr.f32.mxu0 %v61
    %241 = vmatmul.mubr.f32.gmra.mxu0 %v60
    %v242 = vpop.f32.mrf.mxu0
    %v243 = vadd.f32 %v157, %v242
    %v244 = vpop.f32.mrf.mxu0
    %v245 = vadd.f32 %v161, %v244
    %246 = vmatprep.mubr.f32.mxu0 %v63
    %247 = vmatmul.mubr.f32.gmra.mxu0 %v62
    %v248 = vpop.f32.mrf.mxu0
    %v249 = vadd.f32 %v157, %v248
    %v250 = vpop.f32.mrf.mxu0
    %v251 = vadd.f32 %v161, %v250
    %252 = vmatprep.mubr.f32.mxu0 %v65
    %253 = vmatmul.mubr.f32.gmra.mxu0 %v64
    %v254 = vpop.f32.mrf.mxu0
    %v255 = vadd.f32 %v157, %v254
    %v256 = vpop.f32.mrf.mxu0
    %v257 = vadd.f32 %v161, %v256
    %258 = vmatprep.mubr.f32.mxu0 %v67
    %259 = vmatmul.mubr.f32.gmra.mxu0 %v66
    %v260 = vpop.f32.mrf.mxu0
    %v261 = vadd.f32 %v157, %v260
    %v262 = vpop.f32.mrf.mxu0
    %v263 = vadd.f32 %v161, %v262
    %264 = vmatprep.mubr.f32.mxu0 %v69
    %265 = vmatmul.mubr.f32.gmra.mxu0 %v68
    %v266 = vpop.f32.mrf.mxu0
    %v267 = vadd.f32 %v157, %v266
    %v268 = vpop.f32.mrf.mxu0
    %v269 = vadd.f32 %v161, %v268
    %270 = vmatprep.mubr.f32.mxu0 %v71
    %271 = vmatmul.mubr.f32.gmra.mxu0 %v70
    %v272 = vpop.f32.mrf.mxu0
    %v273 = vadd.f32 %v157, %v272
    %v274 = vpop.f32.mrf.mxu0
    %v275 = vadd.f32 %v161, %v274
    %276 = vmatprep.mubr.f32.mxu0 %v73
    %277 = vmatmul.mubr.f32.gmra.mxu0 %v72
    %v278 = vpop.f32.mrf.mxu0
    %v279 = vadd.f32 %v157, %v278
    %v280 = vpop.f32.mrf.mxu0
    %v281 = vadd.f32 %v161, %v280
    %282 = vmatprep.mubr.f32.mxu0 %v75
    %283 = vmatmul.mubr.f32.gmra.mxu0 %v74
    %v284 = vpop.f32.mrf.mxu0
    %v285 = vadd.f32 %v157, %v284
    %v286 = vpop.f32.mrf.mxu0
    %v287 = vadd.f32 %v161, %v286
    %288 = vmatprep.mubr.f32.mxu0 %v77
    %289 = vmatmul.mubr.f32.gmra.mxu0 %v76
    %v290 = vpop.f32.mrf.mxu0
    %v291 = vadd.f32 %v157, %v290
    %v292 = vpop.f32.mrf.mxu0
    %v293 = vadd.f32 %v161, %v292
    %294 = vmatprep.mubr.f32.mxu0 %v79
    %295 = vmatmul.mubr.f32.gmra.mxu0 %v78
    %v296 = vpop.f32.mrf.mxu0
    %v297 = vadd.f32 %v157, %v296
    %v298 = vpop.f32.mrf.mxu0
    %v299 = vadd.f32 %v161, %v298
    %300 = vmatprep.mubr.f32.mxu0 %v81
    %301 = vmatmul.mubr.f32.gmra.mxu0 %v80
    %v302 = vpop.f32.mrf.mxu0
    %v303 = vadd.f32 %v157, %v302
    %v304 = vpop.f32.mrf.mxu0
    %v305 = vadd.f32 %v161, %v304
    %306 = vmatprep.mubr.f32.mxu0 %v83
    %307 = vmatmul.mubr.f32.gmra.mxu0 %v82
    %v308 = vpop.f32.mrf.mxu0
    %v309 = vadd.f32 %v157, %v308
    %v310 = vpop.f32.mrf.mxu0
    %v311 = vadd.f32 %v161, %v310
    %312 = vmatprep.mubr.f32.mxu0 %v85
    %313 = vmatmul.mubr.f32.gmra.mxu0 %v84
    %v314 = vpop.f32.mrf.mxu0
    %v315 = vadd.f32 %v157, %v314
    %v316 = vpop.f32.mrf.mxu0
    %v317 = vadd.f32 %v161, %v316
    %318 = vmatprep.mubr.f32.mxu0 %v87
    %319 = vmatmul.mubr.f32.gmra.mxu0 %v86
    %v320 = vpop.f32.mrf.mxu0
    %v321 = vadd.f32 %v157, %v320
    %v322 = vpop.f32.mrf.mxu0
    %v323 = vadd.f32 %v161, %v322
    %324 = vdwg.mxu0
    %v325 = vld [vmem:[#allocation2] sm:$0xff]
    %v326 = vld [vmem:[#allocation2 + $0x8] sm:$0xff]
    %v327 = vld [vmem:[#allocation2 + $0x10] sm:$0xff]
    %v328 = vld [vmem:[#allocation2 + $0x18] sm:$0xff]
    %v329 = vld [vmem:[#allocation2 + $0x20] sm:$0xff]
    %v330 = vld [vmem:[#allocation2 + $0x28] sm:$0xff]
    %v331 = vld [vmem:[#allocation2 + $0x30] sm:$0xff]
    %v332 = vld [vmem:[#allocation2 + $0x38] sm:$0xff]
    %v333 = vld [vmem:[#allocation2 + $0x40] sm:$0xff]
    %v334 = vld [vmem:[#allocation2 + $0x48] sm:$0xff]
    %v335 = vld [vmem:[#allocation2 + $0x50] sm:$0xff]
    %v336 = vld [vmem:[#allocation2 + $0x58] sm:$0xff]
    %v337 = vld [vmem:[#allocation2 + $0x60] sm:$0xff]
    %v338 = vld [vmem:[#allocation2 + $0x68] sm:$0xff]
    %v339 = vld [vmem:[#allocation2 + $0x70] sm:$0xff]
    %v340 = vld [vmem:[#allocation2 + $0x78] sm:$0xff]
    %v341 = vld [vmem:[#allocation2 + $0x80] sm:$0xff]
    %v342 = vld [vmem:[#allocation2 + $0x88] sm:$0xff]
    %v343 = vld [vmem:[#allocation2 + $0x90] sm:$0xff]
    %v344 = vld [vmem:[#allocation2 + $0x98] sm:$0xff]
    %v345 = vld [vmem:[#allocation2 + $0xa0] sm:$0xff]
    %v346 = vld [vmem:[#allocation2 + $0xa8] sm:$0xff]
    %v347 = vld [vmem:[#allocation2 + $0xb0] sm:$0xff]
    %v348 = vld [vmem:[#allocation2 + $0xb8] sm:$0xff]
    %v349 = vld [vmem:[#allocation2 + $0xc0] sm:$0xff]
    %v350 = vld [vmem:[#allocation2 + $0xc8] sm:$0xff]
    %v351 = vld [vmem:[#allocation2 + $0xd0] sm:$0xff]
    %v352 = vld [vmem:[#allocation2 + $0xd8] sm:$0xff]
    %v353 = vld [vmem:[#allocation2 + $0xe0] sm:$0xff]
    %v354 = vld [vmem:[#allocation2 + $0xe8] sm:$0xff]
    %v355 = vld [vmem:[#allocation2 + $0xf0] sm:$0xff]
    %v356 = vld [vmem:[#allocation2 + $0xf8] sm:$0xff]
    %v357 = vadd.f32 %v231, %v325
    %v358 = vadd.f32 %v233, %v326
    %v359 = vadd.f32 %v237, %v327
    %v360 = vadd.f32 %v239, %v328
    %v361 = vadd.f32 %v243, %v329
    %v362 = vadd.f32 %v245, %v330
    %v363 = vadd.f32 %v249, %v331
    %v364 = vadd.f32 %v251, %v332
    %v365 = vadd.f32 %v255, %v333
    %v366 = vadd.f32 %v257, %v334
    %v367 = vadd.f32 %v261, %v335
    %v368 = vadd.f32 %v263, %v336
    %v369 = vadd.f32 %v267, %v337
    %v370 = vadd.f32 %v269, %v338
    %v371 = vadd.f32 %v273, %v339
    %v372 = vadd.f32 %v275, %v340
    %v373 = vadd.f32 %v279, %v341
    %v374 = vadd.f32 %v281, %v342
    %v375 = vadd.f32 %v285, %v343
    %v376 = vadd.f32 %v287, %v344
    %v377 = vadd.f32 %v291, %v345
    %v378 = vadd.f32 %v293, %v346
    %v379 = vadd.f32 %v297, %v347
    %v380 = vadd.f32 %v299, %v348
    %v381 = vadd.f32 %v303, %v349
    %v382 = vadd.f32 %v305, %v350
    %v383 = vadd.f32 %v309, %v351
    %v384 = vadd.f32 %v311, %v352
    %v385 = vadd.f32 %v315, %v353
    %v386 = vadd.f32 %v317, %v354
    %v387 = vadd.f32 %v321, %v355
    %v388 = vadd.f32 %v323, %v356
    %389 = vst [vmem:[%s4] sm:$0xff] %v357
    %390 = vst [vmem:[%s4 + $0x8] sm:$0xff] %v358
    %391 = vst [vmem:[%s4 + $0x10] sm:$0xff] %v359
    %392 = vst [vmem:[%s4 + $0x18] sm:$0xff] %v360
    %393 = vst [vmem:[%s4 + $0x20] sm:$0xff] %v361
    %394 = vst [vmem:[%s4 + $0x28] sm:$0xff] %v362
    %395 = vst [vmem:[%s4 + $0x30] sm:$0xff] %v363
    %396 = vst [vmem:[%s4 + $0x38] sm:$0xff] %v364
    %397 = vst [vmem:[%s4 + $0x40] sm:$0xff] %v365
    %398 = vst [vmem:[%s4 + $0x48] sm:$0xff] %v366
    %399 = vst [vmem:[%s4 + $0x50] sm:$0xff] %v367
    %400 = vst [vmem:[%s4 + $0x58] sm:$0xff] %v368
    %401 = vst [vmem:[%s4 + $0x60] sm:$0xff] %v369
    %402 = vst [vmem:[%s4 + $0x68] sm:$0xff] %v370
    %403 = vst [vmem:[%s4 + $0x70] sm:$0xff] %v371
    %404 = vst [vmem:[%s4 + $0x78] sm:$0xff] %v372
    %405 = vst [vmem:[%s4 + $0x80] sm:$0xff] %v373
    %406 = vst [vmem:[%s4 + $0x88] sm:$0xff] %v374
    %407 = vst [vmem:[%s4 + $0x90] sm:$0xff] %v375
    %408 = vst [vmem:[%s4 + $0x98] sm:$0xff] %v376
    %409 = vst [vmem:[%s4 + $0xa0] sm:$0xff] %v377
    %410 = vst [vmem:[%s4 + $0xa8] sm:$0xff] %v378
    %411 = vst [vmem:[%s4 + $0xb0] sm:$0xff] %v379
    %412 = vst [vmem:[%s4 + $0xb8] sm:$0xff] %v380
    %413 = vst [vmem:[%s4 + $0xc0] sm:$0xff] %v381
    %414 = vst [vmem:[%s4 + $0xc8] sm:$0xff] %v382
    %415 = vst [vmem:[%s4 + $0xd0] sm:$0xff] %v383
    %416 = vst [vmem:[%s4 + $0xd8] sm:$0xff] %v384
    %417 = vst [vmem:[%s4 + $0xe0] sm:$0xff] %v385
    %418 = vst [vmem:[%s4 + $0xe8] sm:$0xff] %v386
    %419 = vst [vmem:[%s4 + $0xf0] sm:$0xff] %v387
    %420 = vst [vmem:[%s4 + $0xf8] sm:$0xff] %v388
    // Predicated region
    $region30: #{basic_transformer_block.6} parent=1 // pred_check
      _
    $region31: #{basic_transformer_block.6} parent=1 // pred_check_branch
      %422 = sbr.rel (0) target = $region33
    $region32: #{basic_transformer_block.6} parent=1 // pred_region
      _
    $region33: #{basic_transformer_block.6} parent=1 // pred_fallthru
      _
    // Predicated region
    $region34: #{basic_transformer_block.6} parent=1 // pred_check
      _
    $region35: #{basic_transformer_block.6} parent=1 // pred_check_branch
      %424 = sbr.rel (0) target = $region37
    $region36: #{basic_transformer_block.6} parent=1 // pred_region
      _
    $region37: #{basic_transformer_block.6} parent=1 // pred_fallthru
      _
    %425 = vsyncpa [#allocation3], 1
    %426 = vsyncpa [#allocation5], 1

// kernel: basic_transformer_block.4
$region0: #{basic_transformer_block.4}
  #allocation0 [shape = 'u32[]', space=smem, size = 0x4, offset = 0x4, fixed_abs, tag = 'smem constant byte address 0x4 - core index']
  #allocation1 [shape = 'u32[144,128]{1,0:T(1,128)}', space=vmem, size = 0x12000, scoped, tag = 'internal scratch']
  %s0 = inlined_call_operand.hbm [shape: f32[128,256], index: 0, kind: input, shape index: {}]
  %s1 = inlined_call_operand.hbm [shape: f32[1,256], index: 1, kind: input, shape index: {}]
  %s2 = inlined_call_operand.hbm [shape: f32[1,256], index: 2, kind: input, shape index: {}]
  %s3 = inlined_call_operand.hbm [shape: f32[256,256], index: 3, kind: input, shape index: {}]
  %s4 = inlined_call_operand.hbm [shape: f32[256,256], index: 4, kind: input, shape index: {}]
  %s5 = inlined_call_operand.hbm [shape: f32[256,256], index: 5, kind: input, shape index: {}]
  %s6 = inlined_call_operand.vmem [shape: f32[128,256], index: 6, kind: output, shape index: {0}]
  %s7 = inlined_call_operand.vmem [shape: f32[128,256], index: 7, kind: output, shape index: {1}]
  %s8 = inlined_call_operand.vmem [shape: f32[128,256], index: 8, kind: output, shape index: {2}]
  %9 = xla_tuple %s6, %s7, %s8
  %s10 = sld [smem:[#allocation0]]
  $region74: #{basic_transformer_block.4} parent=0
    _
  %s12 = ssub.s32 1, %s10
  %s13 = scalar_select 0, %s12, %s10
  $region1: #{basic_transformer_block.4} parent=0
    #allocation2 [shape = 'u8[131072]{0}', space=vmem, size = 0x20000, scoped, tag = 'input window, operand 0, single buffered']
    #allocation3 [shape = 's32[1]{0}', space=sflag, size = 0x4, scoped, tag = 'scoped memory for basic_transformer_block.4']
    #allocation4 [shape = 'u8[1024]{0}', space=vmem, size = 0x400, scoped, tag = 'input window, operand 1, single buffered']
    #allocation5 [shape = 's32[1]{0}', space=sflag, size = 0x4, scoped, tag = 'scoped memory for basic_transformer_block.4']
    #allocation6 [shape = 'u8[1024]{0}', space=vmem, size = 0x400, scoped, tag = 'input window, operand 2, single buffered']
    #allocation7 [shape = 'u8[262144]{0}', space=vmem, size = 0x40000, scoped, tag = 'input window, operand 3, single buffered']
    #allocation8 [shape = 's32[1]{0}', space=sflag, size = 0x4, scoped, tag = 'scoped memory for basic_transformer_block.4']
    #allocation9 [shape = 'u8[262144]{0}', space=vmem, size = 0x40000, scoped, tag = 'input window, operand 4, single buffered']
    #allocation10 [shape = 'u8[262144]{0}', space=vmem, size = 0x40000, scoped, tag = 'input window, operand 5, single buffered']
    #allocation11 [shape = 's32[1]{0}', space=sflag, size = 0x4, scoped, tag = 'scoped memory for basic_transformer_block.4']
    %14 = vsyncpa [#allocation3], 0
    %15 = vsyncpa [#allocation5], 0
    %16 = vsyncpa [#allocation8], 0
    %17 = vsyncpa [#allocation11], 0
    // Predicated region
    $region2: #{basic_transformer_block.4} parent=1 // pred_check
      _
    $region3: #{basic_transformer_block.4} parent=1 // pred_check_branch
      %19 = sbr.rel (0) target = $region5
    $region4: #{basic_transformer_block.4} parent=1 // pred_region
      %s21 = ssub.s32 4096, 4096
      %22 = vsyncadd [#allocation3], %s21
      %s23 = sshll.u32 [#allocation2], 4
      %s24 = int_to_ptr.vmem [resolvable:$true] %s23
      %29 = dma.hbm_to_vmem [thread:$0]  %s0, 4096, %s24, [#allocation3], 256, 256, 16
    $region5: #{basic_transformer_block.4} parent=1 // pred_fallthru
      _
    // Predicated region
    $region6: #{basic_transformer_block.4} parent=1 // pred_check
      _
    $region7: #{basic_transformer_block.4} parent=1 // pred_check_branch
      %31 = sbr.rel (0) target = $region9
    $region8: #{basic_transformer_block.4} parent=1 // pred_region
      %s33 = ssub.s32 32, 32
      %34 = vsyncadd [#allocation5], %s33
      %s36 = sshll.u32 [#allocation4], 4
      %s37 = int_to_ptr.vmem [resolvable:$true] %s36
      %39 = dma.hbm_to_vmem [thread:$0]  %s1, 32, %s37, [#allocation5]
    $region9: #{basic_transformer_block.4} parent=1 // pred_fallthru
      _
    // Predicated region
    $region10: #{basic_transformer_block.4} parent=1 // pred_check
      _
    $region11: #{basic_transformer_block.4} parent=1 // pred_check_branch
      %41 = sbr.rel (0) target = $region13
    $region12: #{basic_transformer_block.4} parent=1 // pred_region
      %s43 = ssub.s32 32, 32
      %44 = vsyncadd [#allocation5], %s43
      %s46 = sshll.u32 [#allocation6], 4
      %s47 = int_to_ptr.vmem [resolvable:$true] %s46
      %49 = dma.hbm_to_vmem [thread:$0]  %s2, 32, %s47, [#allocation5]
    $region13: #{basic_transformer_block.4} parent=1 // pred_fallthru
      _
    // Predicated region
    $region14: #{basic_transformer_block.4} parent=1 // pred_check
      _
    $region15: #{basic_transformer_block.4} parent=1 // pred_check_branch
      %51 = sbr.rel (0) target = $region17
    $region16: #{basic_transformer_block.4} parent=1 // pred_region
      %s53 = ssub.s32 8192, 8192
      %54 = vsyncadd [#allocation8], %s53
      %s55 = sshll.u32 [#allocation7], 4
      %s56 = int_to_ptr.vmem [resolvable:$true] %s55
      %61 = dma.hbm_to_vmem [thread:$0]  %s3, 8192, %s56, [#allocation8], 256, 256, 16
    $region17: #{basic_transformer_block.4} parent=1 // pred_fallthru
      _
    // Predicated region
    $region18: #{basic_transformer_block.4} parent=1 // pred_check
      _
    $region19: #{basic_transformer_block.4} parent=1 // pred_check_branch
      %63 = sbr.rel (0) target = $region21
    $region20: #{basic_transformer_block.4} parent=1 // pred_region
      %s65 = ssub.s32 8192, 8192
      %66 = vsyncadd [#allocation8], %s65
      %s67 = sshll.u32 [#allocation9], 4
      %s68 = int_to_ptr.vmem [resolvable:$true] %s67
      %73 = dma.hbm_to_vmem [thread:$0]  %s4, 8192, %s68, [#allocation8], 256, 256, 16
    $region21: #{basic_transformer_block.4} parent=1 // pred_fallthru
      _
    // Predicated region
    $region22: #{basic_transformer_block.4} parent=1 // pred_check
      _
    $region23: #{basic_transformer_block.4} parent=1 // pred_check_branch
      %75 = sbr.rel (0) target = $region25
    $region24: #{basic_transformer_block.4} parent=1 // pred_region
      %s77 = ssub.s32 8192, 8192
      %78 = vsyncadd [#allocation11], %s77
      %s79 = sshll.u32 [#allocation10], 4
      %s80 = int_to_ptr.vmem [resolvable:$true] %s79
      %85 = dma.hbm_to_vmem [thread:$0]  %s5, 8192, %s80, [#allocation11], 256, 256, 16
    $region25: #{basic_transformer_block.4} parent=1 // pred_fallthru
      _
    // Predicated region
    $region26: #{basic_transformer_block.4} parent=1 // pred_check
      _
    $region27: #{basic_transformer_block.4} parent=1 // pred_check_branch
      %87 = sbr.rel (0) target = $region29
    $region28: #{basic_transformer_block.4} parent=1 // pred_region
      %88 = dma.done [#allocation3], 4096
    $region29: #{basic_transformer_block.4} parent=1 // pred_fallthru
      _
    // Predicated region
    $region30: #{basic_transformer_block.4} parent=1 // pred_check
      _
    $region31: #{basic_transformer_block.4} parent=1 // pred_check_branch
      %90 = sbr.rel (0) target = $region33
    $region32: #{basic_transformer_block.4} parent=1 // pred_region
      %91 = dma.done [#allocation5], 32
    $region33: #{basic_transformer_block.4} parent=1 // pred_fallthru
      _
    // Predicated region
    $region34: #{basic_transformer_block.4} parent=1 // pred_check
      _
    $region35: #{basic_transformer_block.4} parent=1 // pred_check_branch
      %93 = sbr.rel (0) target = $region37
    $region36: #{basic_transformer_block.4} parent=1 // pred_region
      %94 = dma.done [#allocation5], 32
    $region37: #{basic_transformer_block.4} parent=1 // pred_fallthru
      _
    // Predicated region
    $region38: #{basic_transformer_block.4} parent=1 // pred_check
      _
    $region39: #{basic_transformer_block.4} parent=1 // pred_check_branch
      %96 = sbr.rel (0) target = $region41
    $region40: #{basic_transformer_block.4} parent=1 // pred_region
      %97 = dma.done [#allocation8], 8192
    $region41: #{basic_transformer_block.4} parent=1 // pred_fallthru
      _
    // Predicated region
    $region42: #{basic_transformer_block.4} parent=1 // pred_check
      _
    $region43: #{basic_transformer_block.4} parent=1 // pred_check_branch
      %99 = sbr.rel (0) target = $region45
    $region44: #{basic_transformer_block.4} parent=1 // pred_region
      %100 = dma.done [#allocation8], 8192
    $region45: #{basic_transformer_block.4} parent=1 // pred_fallthru
      _
    // Predicated region
    $region46: #{basic_transformer_block.4} parent=1 // pred_check
      _
    $region47: #{basic_transformer_block.4} parent=1 // pred_check_branch
      %102 = sbr.rel (0) target = $region49
    $region48: #{basic_transformer_block.4} parent=1 // pred_region
      %103 = dma.done [#allocation11], 8192
    $region49: #{basic_transformer_block.4} parent=1 // pred_fallthru
      _
    %v104 = vld [vmem:[#allocation2] sm:$0xff]
    %v105 = vld [vmem:[#allocation2 + $0x8] sm:$0xff]
    %v106 = vld [vmem:[#allocation2 + $0x10] sm:$0xff]
    %v107 = vld [vmem:[#allocation2 + $0x18] sm:$0xff]
    %v108 = vld [vmem:[#allocation2 + $0x20] sm:$0xff]
    %v109 = vld [vmem:[#allocation2 + $0x28] sm:$0xff]
    %v110 = vld [vmem:[#allocation2 + $0x30] sm:$0xff]
    %v111 = vld [vmem:[#allocation2 + $0x38] sm:$0xff]
    %v112 = vld [vmem:[#allocation2 + $0x40] sm:$0xff]
    %v113 = vld [vmem:[#allocation2 + $0x48] sm:$0xff]
    %v114 = vld [vmem:[#allocation2 + $0x50] sm:$0xff]
    %v115 = vld [vmem:[#allocation2 + $0x58] sm:$0xff]
    %v116 = vld [vmem:[#allocation2 + $0x60] sm:$0xff]
    %v117 = vld [vmem:[#allocation2 + $0x68] sm:$0xff]
    %v118 = vld [vmem:[#allocation2 + $0x70] sm:$0xff]
    %v119 = vld [vmem:[#allocation2 + $0x78] sm:$0xff]
    %v120 = vld [vmem:[#allocation2 + $0x80] sm:$0xff]
    %v121 = vld [vmem:[#allocation2 + $0x88] sm:$0xff]
    %v122 = vld [vmem:[#allocation2 + $0x90] sm:$0xff]
    %v123 = vld [vmem:[#allocation2 + $0x98] sm:$0xff]
    %v124 = vld [vmem:[#allocation2 + $0xa0] sm:$0xff]
    %v125 = vld [vmem:[#allocation2 + $0xa8] sm:$0xff]
    %v126 = vld [vmem:[#allocation2 + $0xb0] sm:$0xff]
    %v127 = vld [vmem:[#allocation2 + $0xb8] sm:$0xff]
    %v128 = vld [vmem:[#allocation2 + $0xc0] sm:$0xff]
    %v129 = vld [vmem:[#allocation2 + $0xc8] sm:$0xff]
    %v130 = vld [vmem:[#allocation2 + $0xd0] sm:$0xff]
    %v131 = vld [vmem:[#allocation2 + $0xd8] sm:$0xff]
    %v132 = vld [vmem:[#allocation2 + $0xe0] sm:$0xff]
    %v133 = vld [vmem:[#allocation2 + $0xe8] sm:$0xff]
    %v134 = vld [vmem:[#allocation2 + $0xf0] sm:$0xff]
    %v135 = vld [vmem:[#allocation2 + $0xf8] sm:$0xff]
    %v136 = vadd.f32 %v104, %v105
    %137 = vadd.xlane.f32.xlu0 %v136
    %v138 = vpop.xlane.xlu0 %137
    %v139 = vadd.f32 %v106, %v107
    %140 = vadd.xlane.f32.xlu0 %v139
    %v141 = vpop.xlane.xlu0 %140
    %v142 = vadd.f32 %v108, %v109
    %143 = vadd.xlane.f32.xlu0 %v142
    %v144 = vpop.xlane.xlu0 %143
    %v145 = vadd.f32 %v110, %v111
    %146 = vadd.xlane.f32.xlu0 %v145
    %v147 = vpop.xlane.xlu0 %146
    %v148 = vadd.f32 %v112, %v113
    %149 = vadd.xlane.f32.xlu0 %v148
    %v150 = vpop.xlane.xlu0 %149
    %v151 = vadd.f32 %v114, %v115
    %152 = vadd.xlane.f32.xlu0 %v151
    %v153 = vpop.xlane.xlu0 %152
    %v154 = vadd.f32 %v116, %v117
    %155 = vadd.xlane.f32.xlu0 %v154
    %v156 = vpop.xlane.xlu0 %155
    %v157 = vadd.f32 %v118, %v119
    %158 = vadd.xlane.f32.xlu0 %v157
    %v159 = vpop.xlane.xlu0 %158
    %v160 = vadd.f32 %v120, %v121
    %161 = vadd.xlane.f32.xlu0 %v160
    %v162 = vpop.xlane.xlu0 %161
    %v163 = vadd.f32 %v122, %v123
    %164 = vadd.xlane.f32.xlu0 %v163
    %v165 = vpop.xlane.xlu0 %164
    %v166 = vadd.f32 %v124, %v125
    %167 = vadd.xlane.f32.xlu0 %v166
    %v168 = vpop.xlane.xlu0 %167
    %v169 = vadd.f32 %v126, %v127
    %170 = vadd.xlane.f32.xlu0 %v169
    %v171 = vpop.xlane.xlu0 %170
    %v172 = vadd.f32 %v128, %v129
    %173 = vadd.xlane.f32.xlu0 %v172
    %v174 = vpop.xlane.xlu0 %173
    %v175 = vadd.f32 %v130, %v131
    %176 = vadd.xlane.f32.xlu0 %v175
    %v177 = vpop.xlane.xlu0 %176
    %v178 = vadd.f32 %v132, %v133
    %179 = vadd.xlane.f32.xlu0 %v178
    %v180 = vpop.xlane.xlu0 %179
    %v181 = vadd.f32 %v134, %v135
    %182 = vadd.xlane.f32.xlu0 %v181
    %v183 = vpop.xlane.xlu0 %182
    %v184 = vrcp.pop 256.0
    %v185 = vmul.f32 %v138, %v184
    %v186 = vmul.f32 %v141, %v184
    %v187 = vmul.f32 %v144, %v184
    %v188 = vmul.f32 %v147, %v184
    %v189 = vmul.f32 %v150, %v184
    %v190 = vmul.f32 %v153, %v184
    %v191 = vmul.f32 %v156, %v184
    %v192 = vmul.f32 %v159, %v184
    %v193 = vmul.f32 %v162, %v184
    %v194 = vmul.f32 %v165, %v184
    %v195 = vmul.f32 %v168, %v184
    %v196 = vmul.f32 %v171, %v184
    %v197 = vmul.f32 %v174, %v184
    %v198 = vmul.f32 %v177, %v184
    %v199 = vmul.f32 %v180, %v184
    %v200 = vmul.f32 %v183, %v184
    %v201 = vsub.f32 %v104, %v185
    %v202 = vsub.f32 %v105, %v185
    %v203 = vsub.f32 %v106, %v186
    %v204 = vsub.f32 %v107, %v186
    %v205 = vsub.f32 %v108, %v187
    %v206 = vsub.f32 %v109, %v187
    %v207 = vsub.f32 %v110, %v188
    %v208 = vsub.f32 %v111, %v188
    %v209 = vsub.f32 %v112, %v189
    %v210 = vsub.f32 %v113, %v189
    %v211 = vsub.f32 %v114, %v190
    %v212 = vsub.f32 %v115, %v190
    %v213 = vsub.f32 %v116, %v191
    %v214 = vsub.f32 %v117, %v191
    %v215 = vsub.f32 %v118, %v192
    %v216 = vsub.f32 %v119, %v192
    %v217 = vsub.f32 %v120, %v193
    %v218 = vsub.f32 %v121, %v193
    %v219 = vsub.f32 %v122, %v194
    %v220 = vsub.f32 %v123, %v194
    %v221 = vsub.f32 %v124, %v195
    %v222 = vsub.f32 %v125, %v195
    %v223 = vsub.f32 %v126, %v196
    %v224 = vsub.f32 %v127, %v196
    %v225 = vsub.f32 %v128, %v197
    %v226 = vsub.f32 %v129, %v197
    %v227 = vsub.f32 %v130, %v198
    %v228 = vsub.f32 %v131, %v198
    %v229 = vsub.f32 %v132, %v199
    %v230 = vsub.f32 %v133, %v199
    %v231 = vsub.f32 %v134, %v200
    %v232 = vsub.f32 %v135, %v200
    %v233 = vmul.f32 %v201, %v201
    %v234 = vmul.f32 %v202, %v202
    %v235 = vmul.f32 %v203, %v203
    %v236 = vmul.f32 %v204, %v204
    %v237 = vmul.f32 %v205, %v205
    %v238 = vmul.f32 %v206, %v206
    %v239 = vmul.f32 %v207, %v207
    %v240 = vmul.f32 %v208, %v208
    %v241 = vmul.f32 %v209, %v209
    %v242 = vmul.f32 %v210, %v210
    %v243 = vmul.f32 %v211, %v211
    %v244 = vmul.f32 %v212, %v212
    %v245 = vmul.f32 %v213, %v213
    %v246 = vmul.f32 %v214, %v214
    %v247 = vmul.f32 %v215, %v215
    %v248 = vmul.f32 %v216, %v216
    %v249 = vmul.f32 %v217, %v217
    %v250 = vmul.f32 %v218, %v218
    %v251 = vmul.f32 %v219, %v219
    %v252 = vmul.f32 %v220, %v220
    %v253 = vmul.f32 %v221, %v221
    %v254 = vmul.f32 %v222, %v222
    %v255 = vmul.f32 %v223, %v223
    %v256 = vmul.f32 %v224, %v224
    %v257 = vmul.f32 %v225, %v225
    %v258 = vmul.f32 %v226, %v226
    %v259 = vmul.f32 %v227, %v227
    %v260 = vmul.f32 %v228, %v228
    %v261 = vmul.f32 %v229, %v229
    %v262 = vmul.f32 %v230, %v230
    %v263 = vmul.f32 %v231, %v231
    %v264 = vmul.f32 %v232, %v232
    %v265 = vadd.f32 %v233, %v234
    %266 = vadd.xlane.f32.xlu0 %v265
    %v267 = vpop.xlane.xlu0 %266
    %v268 = vadd.f32 %v235, %v236
    %269 = vadd.xlane.f32.xlu0 %v268
    %v270 = vpop.xlane.xlu0 %269
    %v271 = vadd.f32 %v237, %v238
    %272 = vadd.xlane.f32.xlu0 %v271
    %v273 = vpop.xlane.xlu0 %272
    %v274 = vadd.f32 %v239, %v240
    %275 = vadd.xlane.f32.xlu0 %v274
    %v276 = vpop.xlane.xlu0 %275
    %v277 = vadd.f32 %v241, %v242
    %278 = vadd.xlane.f32.xlu0 %v277
    %v279 = vpop.xlane.xlu0 %278
    %v280 = vadd.f32 %v243, %v244
    %281 = vadd.xlane.f32.xlu0 %v280
    %v282 = vpop.xlane.xlu0 %281
    %v283 = vadd.f32 %v245, %v246
    %284 = vadd.xlane.f32.xlu0 %v283
    %v285 = vpop.xlane.xlu0 %284
    %v286 = vadd.f32 %v247, %v248
    %287 = vadd.xlane.f32.xlu0 %v286
    %v288 = vpop.xlane.xlu0 %287
    %v289 = vadd.f32 %v249, %v250
    %290 = vadd.xlane.f32.xlu0 %v289
    %v291 = vpop.xlane.xlu0 %290
    %v292 = vadd.f32 %v251, %v252
    %293 = vadd.xlane.f32.xlu0 %v292
    %v294 = vpop.xlane.xlu0 %293
    %v295 = vadd.f32 %v253, %v254
    %296 = vadd.xlane.f32.xlu0 %v295
    %v297 = vpop.xlane.xlu0 %296
    %v298 = vadd.f32 %v255, %v256
    %299 = vadd.xlane.f32.xlu0 %v298
    %v300 = vpop.xlane.xlu0 %299
    %v301 = vadd.f32 %v257, %v258
    %302 = vadd.xlane.f32.xlu0 %v301
    %v303 = vpop.xlane.xlu0 %302
    %v304 = vadd.f32 %v259, %v260
    %305 = vadd.xlane.f32.xlu0 %v304
    %v306 = vpop.xlane.xlu0 %305
    %v307 = vadd.f32 %v261, %v262
    %308 = vadd.xlane.f32.xlu0 %v307
    %v309 = vpop.xlane.xlu0 %308
    %v310 = vadd.f32 %v263, %v264
    %311 = vadd.xlane.f32.xlu0 %v310
    %v312 = vpop.xlane.xlu0 %311
    %v313 = vmul.f32 %v267, %v184
    %v314 = vmul.f32 %v270, %v184
    %v315 = vmul.f32 %v273, %v184
    %v316 = vmul.f32 %v276, %v184
    %v317 = vmul.f32 %v279, %v184
    %v318 = vmul.f32 %v282, %v184
    %v319 = vmul.f32 %v285, %v184
    %v320 = vmul.f32 %v288, %v184
    %v321 = vmul.f32 %v291, %v184
    %v322 = vmul.f32 %v294, %v184
    %v323 = vmul.f32 %v297, %v184
    %v324 = vmul.f32 %v300, %v184
    %v325 = vmul.f32 %v303, %v184
    %v326 = vmul.f32 %v306, %v184
    %v327 = vmul.f32 %v309, %v184
    %v328 = vmul.f32 %v312, %v184
    %v329 = vadd.f32 %v313, 1e-05
    %v330 = vadd.f32 %v314, 1e-05
    %v331 = vadd.f32 %v315, 1e-05
    %v332 = vadd.f32 %v316, 1e-05
    %v333 = vadd.f32 %v317, 1e-05
    %v334 = vadd.f32 %v318, 1e-05
    %v335 = vadd.f32 %v319, 1e-05
    %v336 = vadd.f32 %v320, 1e-05
    %v337 = vadd.f32 %v321, 1e-05
    %v338 = vadd.f32 %v322, 1e-05
    %v339 = vadd.f32 %v323, 1e-05
    %v340 = vadd.f32 %v324, 1e-05
    %v341 = vadd.f32 %v325, 1e-05
    %v342 = vadd.f32 %v326, 1e-05
    %v343 = vadd.f32 %v327, 1e-05
    %v344 = vadd.f32 %v328, 1e-05
    %v345 = vrsqrt.pop %v329
    %v346 = vrsqrt.pop %v330
    %v347 = vrsqrt.pop %v331
    %v348 = vrsqrt.pop %v332
    %v349 = vrsqrt.pop %v333
    %v350 = vrsqrt.pop %v334
    %v351 = vrsqrt.pop %v335
    %v352 = vrsqrt.pop %v336
    %v353 = vrsqrt.pop %v337
    %v354 = vrsqrt.pop %v338
    %v355 = vrsqrt.pop %v339
    %v356 = vrsqrt.pop %v340
    %v357 = vrsqrt.pop %v341
    %v358 = vrsqrt.pop %v342
    %v359 = vrsqrt.pop %v343
    %v360 = vrsqrt.pop %v344
    %v361 = vmul.f32 %v201, %v345
    %v362 = vmul.f32 %v202, %v345
    %v363 = vmul.f32 %v203, %v346
    %v364 = vmul.f32 %v204, %v346
    %v365 = vmul.f32 %v205, %v347
    %v366 = vmul.f32 %v206, %v347
    %v367 = vmul.f32 %v207, %v348
    %v368 = vmul.f32 %v208, %v348
    %v369 = vmul.f32 %v209, %v349
    %v370 = vmul.f32 %v210, %v349
    %v371 = vmul.f32 %v211, %v350
    %v372 = vmul.f32 %v212, %v350
    %v373 = vmul.f32 %v213, %v351
    %v374 = vmul.f32 %v214, %v351
    %v375 = vmul.f32 %v215, %v352
    %v376 = vmul.f32 %v216, %v352
    %v377 = vmul.f32 %v217, %v353
    %v378 = vmul.f32 %v218, %v353
    %v379 = vmul.f32 %v219, %v354
    %v380 = vmul.f32 %v220, %v354
    %v381 = vmul.f32 %v221, %v355
    %v382 = vmul.f32 %v222, %v355
    %v383 = vmul.f32 %v223, %v356
    %v384 = vmul.f32 %v224, %v356
    %v385 = vmul.f32 %v225, %v357
    %v386 = vmul.f32 %v226, %v357
    %v387 = vmul.f32 %v227, %v358
    %v388 = vmul.f32 %v228, %v358
    %v389 = vmul.f32 %v229, %v359
    %v390 = vmul.f32 %v230, %v359
    %v391 = vmul.f32 %v231, %v360
    %v392 = vmul.f32 %v232, %v360
    %v393 = vld [vmem:[#allocation4] sm:$0x3]
    %v395 = vlaneseq
    %v396 = vshrl.u32 %v395, 7
    %v397 = vsub.s32 0, %v396
    %v398 = vrot.slane %v393, %v397
    %v399 = vlaneseq
    %v400 = vshrl.u32 %v399, 7
    %v401 = vsub.s32 1, %v400
    %v402 = vrot.slane %v393, %v401
    %v405 = vmul.f32 %v361, %v398
    %v406 = vmul.f32 %v362, %v402
    %v407 = vmul.f32 %v363, %v398
    %v408 = vmul.f32 %v364, %v402
    %v409 = vmul.f32 %v365, %v398
    %v410 = vmul.f32 %v366, %v402
    %v411 = vmul.f32 %v367, %v398
    %v412 = vmul.f32 %v368, %v402
    %v413 = vmul.f32 %v369, %v398
    %v414 = vmul.f32 %v370, %v402
    %v415 = vmul.f32 %v371, %v398
    %v416 = vmul.f32 %v372, %v402
    %v417 = vmul.f32 %v373, %v398
    %v418 = vmul.f32 %v374, %v402
    %v419 = vmul.f32 %v375, %v398
    %v420 = vmul.f32 %v376, %v402
    %v421 = vmul.f32 %v377, %v398
    %v422 = vmul.f32 %v378, %v402
    %v423 = vmul.f32 %v379, %v398
    %v424 = vmul.f32 %v380, %v402
    %v425 = vmul.f32 %v381, %v398
    %v426 = vmul.f32 %v382, %v402
    %v427 = vmul.f32 %v383, %v398
    %v428 = vmul.f32 %v384, %v402
    %v429 = vmul.f32 %v385, %v398
    %v430 = vmul.f32 %v386, %v402
    %v431 = vmul.f32 %v387, %v398
    %v432 = vmul.f32 %v388, %v402
    %v433 = vmul.f32 %v389, %v398
    %v434 = vmul.f32 %v390, %v402
    %v435 = vmul.f32 %v391, %v398
    %v436 = vmul.f32 %v392, %v402
    %v437 = vld [vmem:[#allocation6] sm:$0x3]
    %v439 = vlaneseq
    %v440 = vshrl.u32 %v439, 7
    %v441 = vsub.s32 0, %v440
    %v442 = vrot.slane %v437, %v441
    %v443 = vlaneseq
    %v444 = vshrl.u32 %v443, 7
    %v445 = vsub.s32 1, %v444
    %v446 = vrot.slane %v437, %v445
    %v449 = vadd.f32 %v405, %v442
    %v450 = vadd.f32 %v406, %v446
    %v451 = vadd.f32 %v407, %v442
    %v452 = vadd.f32 %v408, %v446
    %v453 = vadd.f32 %v409, %v442
    %v454 = vadd.f32 %v410, %v446
    %v455 = vadd.f32 %v411, %v442
    %v456 = vadd.f32 %v412, %v446
    %v457 = vadd.f32 %v413, %v442
    %v458 = vadd.f32 %v414, %v446
    %v459 = vadd.f32 %v415, %v442
    %v460 = vadd.f32 %v416, %v446
    %v461 = vadd.f32 %v417, %v442
    %v462 = vadd.f32 %v418, %v446
    %v463 = vadd.f32 %v419, %v442
    %v464 = vadd.f32 %v420, %v446
    %v465 = vadd.f32 %v421, %v442
    %v466 = vadd.f32 %v422, %v446
    %v467 = vadd.f32 %v423, %v442
    %v468 = vadd.f32 %v424, %v446
    %v469 = vadd.f32 %v425, %v442
    %v470 = vadd.f32 %v426, %v446
    %v471 = vadd.f32 %v427, %v442
    %v472 = vadd.f32 %v428, %v446
    %v473 = vadd.f32 %v429, %v442
    %v474 = vadd.f32 %v430, %v446
    %v475 = vadd.f32 %v431, %v442
    %v476 = vadd.f32 %v432, %v446
    %v477 = vadd.f32 %v433, %v442
    %v478 = vadd.f32 %v434, %v446
    %v479 = vadd.f32 %v435, %v442
    %v480 = vadd.f32 %v436, %v446
    %v481 = vld [vmem:[#allocation7] sm:$0xff]
    %v482 = vld [vmem:[#allocation7 + $0x8] sm:$0xff]
    %v483 = vld [vmem:[#allocation7 + $0x10] sm:$0xff]
    %v484 = vld [vmem:[#allocation7 + $0x18] sm:$0xff]
    %v485 = vld [vmem:[#allocation7 + $0x20] sm:$0xff]
    %v486 = vld [vmem:[#allocation7 + $0x28] sm:$0xff]
    %v487 = vld [vmem:[#allocation7 + $0x30] sm:$0xff]
    %v488 = vld [vmem:[#allocation7 + $0x38] sm:$0xff]
    %v489 = vld [vmem:[#allocation7 + $0x40] sm:$0xff]
    %v490 = vld [vmem:[#allocation7 + $0x48] sm:$0xff]
    %v491 = vld [vmem:[#allocation7 + $0x50] sm:$0xff]
    %v492 = vld [vmem:[#allocation7 + $0x58] sm:$0xff]
    %v493 = vld [vmem:[#allocation7 + $0x60] sm:$0xff]
    %v494 = vld [vmem:[#allocation7 + $0x68] sm:$0xff]
    %v495 = vld [vmem:[#allocation7 + $0x70] sm:$0xff]
    %v496 = vld [vmem:[#allocation7 + $0x78] sm:$0xff]
    %v497 = vld [vmem:[#allocation7 + $0x80] sm:$0xff]
    %v498 = vld [vmem:[#allocation7 + $0x88] sm:$0xff]
    %v499 = vld [vmem:[#allocation7 + $0x90] sm:$0xff]
    %v500 = vld [vmem:[#allocation7 + $0x98] sm:$0xff]
    %v501 = vld [vmem:[#allocation7 + $0xa0] sm:$0xff]
    %v502 = vld [vmem:[#allocation7 + $0xa8] sm:$0xff]
    %v503 = vld [vmem:[#allocation7 + $0xb0] sm:$0xff]
    %v504 = vld [vmem:[#allocation7 + $0xb8] sm:$0xff]
    %v505 = vld [vmem:[#allocation7 + $0xc0] sm:$0xff]
    %v506 = vld [vmem:[#allocation7 + $0xc8] sm:$0xff]
    %v507 = vld [vmem:[#allocation7 + $0xd0] sm:$0xff]
    %v508 = vld [vmem:[#allocation7 + $0xd8] sm:$0xff]
    %v509 = vld [vmem:[#allocation7 + $0xe0] sm:$0xff]
    %v510 = vld [vmem:[#allocation7 + $0xe8] sm:$0xff]
    %v511 = vld [vmem:[#allocation7 + $0xf0] sm:$0xff]
    %v512 = vld [vmem:[#allocation7 + $0xf8] sm:$0xff]
    %v513 = vld [vmem:[#allocation7 + $0x100] sm:$0xff]
    %v514 = vld [vmem:[#allocation7 + $0x108] sm:$0xff]
    %v515 = vld [vmem:[#allocation7 + $0x110] sm:$0xff]
    %v516 = vld [vmem:[#allocation7 + $0x118] sm:$0xff]
    %v517 = vld [vmem:[#allocation7 + $0x120] sm:$0xff]
    %v518 = vld [vmem:[#allocation7 + $0x128] sm:$0xff]
    %v519 = vld [vmem:[#allocation7 + $0x130] sm:$0xff]
    %v520 = vld [vmem:[#allocation7 + $0x138] sm:$0xff]
    %v521 = vld [vmem:[#allocation7 + $0x140] sm:$0xff]
    %v522 = vld [vmem:[#allocation7 + $0x148] sm:$0xff]
    %v523 = vld [vmem:[#allocation7 + $0x150] sm:$0xff]
    %v524 = vld [vmem:[#allocation7 + $0x158] sm:$0xff]
    %v525 = vld [vmem:[#allocation7 + $0x160] sm:$0xff]
    %v526 = vld [vmem:[#allocation7 + $0x168] sm:$0xff]
    %v527 = vld [vmem:[#allocation7 + $0x170] sm:$0xff]
    %v528 = vld [vmem:[#allocation7 + $0x178] sm:$0xff]
    %v529 = vld [vmem:[#allocation7 + $0x180] sm:$0xff]
    %v530 = vld [vmem:[#allocation7 + $0x188] sm:$0xff]
    %v531 = vld [vmem:[#allocation7 + $0x190] sm:$0xff]
    %v532 = vld [vmem:[#allocation7 + $0x198] sm:$0xff]
    %v533 = vld [vmem:[#allocation7 + $0x1a0] sm:$0xff]
    %v534 = vld [vmem:[#allocation7 + $0x1a8] sm:$0xff]
    %v535 = vld [vmem:[#allocation7 + $0x1b0] sm:$0xff]
    %v536 = vld [vmem:[#allocation7 + $0x1b8] sm:$0xff]
    %v537 = vld [vmem:[#allocation7 + $0x1c0] sm:$0xff]
    %v538 = vld [vmem:[#allocation7 + $0x1c8] sm:$0xff]
    %v539 = vld [vmem:[#allocation7 + $0x1d0] sm:$0xff]
    %v540 = vld [vmem:[#allocation7 + $0x1d8] sm:$0xff]
    %v541 = vld [vmem:[#allocation7 + $0x1e0] sm:$0xff]
    %v542 = vld [vmem:[#allocation7 + $0x1e8] sm:$0xff]
    %v543 = vld [vmem:[#allocation7 + $0x1f0] sm:$0xff]
    %v544 = vld [vmem:[#allocation7 + $0x1f8] sm:$0xff]
    %545 = vmatprep.subr.mxu0 %v512
    %546 = vmatpush1.msra.mxu0 %v511
    %547 = vmatprep.subr.mxu0 %v510
    %548 = vmatpush1.msra.mxu0 %v509
    %549 = vmatprep.subr.mxu0 %v508
    %550 = vmatpush1.msra.mxu0 %v507
    %551 = vmatprep.subr.mxu0 %v506
    %552 = vmatpush1.msra.mxu0 %v505
    %553 = vmatprep.subr.mxu0 %v504
    %554 = vmatpush1.msra.mxu0 %v503
    %555 = vmatprep.subr.mxu0 %v502
    %556 = vmatpush1.msra.mxu0 %v501
    %557 = vmatprep.subr.mxu0 %v500
    %558 = vmatpush1.msra.mxu0 %v499
    %559 = vmatprep.subr.mxu0 %v498
    %560 = vmatpush1.msra.mxu0 %v497
    %561 = vmatprep.subr.mxu0 %v496
    %562 = vmatpush1.msra.mxu0 %v495
    %563 = vmatprep.subr.mxu0 %v494
    %564 = vmatpush1.msra.mxu0 %v493
    %565 = vmatprep.subr.mxu0 %v492
    %566 = vmatpush1.msra.mxu0 %v491
    %567 = vmatprep.subr.mxu0 %v490
    %568 = vmatpush1.msra.mxu0 %v489
    %569 = vmatprep.subr.mxu0 %v488
    %570 = vmatpush1.msra.mxu0 %v487
    %571 = vmatprep.subr.mxu0 %v486
    %572 = vmatpush1.msra.mxu0 %v485
    %573 = vmatprep.subr.mxu0 %v484
    %574 = vmatpush1.msra.mxu0 %v483
    %575 = vmatprep.subr.mxu0 %v482
    %576 = vmatpush1.msra.mxu0 %v481
    %577 = vmatprep.subr.mxu0 %v544
    %578 = vmatpush2.msra.mxu0 %v543
    %579 = vmatprep.subr.mxu0 %v542
    %580 = vmatpush2.msra.mxu0 %v541
    %581 = vmatprep.subr.mxu0 %v540
    %582 = vmatpush2.msra.mxu0 %v539
    %583 = vmatprep.subr.mxu0 %v538
    %584 = vmatpush2.msra.mxu0 %v537
    %585 = vmatprep.subr.mxu0 %v536
    %586 = vmatpush2.msra.mxu0 %v535
    %587 = vmatprep.subr.mxu0 %v534
    %588 = vmatpush2.msra.mxu0 %v533
    %589 = vmatprep.subr.mxu0 %v532
    %590 = vmatpush2.msra.mxu0 %v531
    %591 = vmatprep.subr.mxu0 %v530
    %592 = vmatpush2.msra.mxu0 %v529
    %593 = vmatprep.subr.mxu0 %v528
    %594 = vmatpush2.msra.mxu0 %v527
    %595 = vmatprep.subr.mxu0 %v526
    %596 = vmatpush2.msra.mxu0 %v525
    %597 = vmatprep.subr.mxu0 %v524
    %598 = vmatpush2.msra.mxu0 %v523
    %599 = vmatprep.subr.mxu0 %v522
    %600 = vmatpush2.msra.mxu0 %v521
    %601 = vmatprep.subr.mxu0 %v520
    %602 = vmatpush2.msra.mxu0 %v519
    %603 = vmatprep.subr.mxu0 %v518
    %604 = vmatpush2.msra.mxu0 %v517
    %605 = vmatprep.subr.mxu0 %v516
    %606 = vmatpush2.msra.mxu0 %v515
    %607 = vmatprep.subr.mxu0 %v514
    %608 = vmatpush2.msra.mxu0 %v513
    %609 = vmatprep.mubr.f32.mxu0 %v450
    %610 = vmatmul.mubr.f32.gmra.mxu0 %v449
    %v611 = vpop.f32.mrf.mxu0
    %v612 = vadd.f32 0.0, %v611
    %v613 = vpop.f32.mrf.mxu0
    %v614 = vadd.f32 0.0, %v613
    %615 = vmatprep.mubr.f32.mxu0 %v452
    %616 = vmatmul.mubr.f32.gmra.mxu0 %v451
    %v617 = vpop.f32.mrf.mxu0
    %v618 = vadd.f32 0.0, %v617
    %v619 = vpop.f32.mrf.mxu0
    %v620 = vadd.f32 0.0, %v619
    %621 = vmatprep.mubr.f32.mxu0 %v454
    %622 = vmatmul.mubr.f32.gmra.mxu0 %v453
    %v623 = vpop.f32.mrf.mxu0
    %v624 = vadd.f32 0.0, %v623
    %v625 = vpop.f32.mrf.mxu0
    %v626 = vadd.f32 0.0, %v625
    %627 = vmatprep.mubr.f32.mxu0 %v456
    %628 = vmatmul.mubr.f32.gmra.mxu0 %v455
    %v629 = vpop.f32.mrf.mxu0
    %v630 = vadd.f32 0.0, %v629
    %v631 = vpop.f32.mrf.mxu0
    %v632 = vadd.f32 0.0, %v631
    %633 = vmatprep.mubr.f32.mxu0 %v458
    %634 = vmatmul.mubr.f32.gmra.mxu0 %v457
    %v635 = vpop.f32.mrf.mxu0
    %v636 = vadd.f32 0.0, %v635
    %v637 = vpop.f32.mrf.mxu0
    %v638 = vadd.f32 0.0, %v637
    %639 = vmatprep.mubr.f32.mxu0 %v460
    %640 = vmatmul.mubr.f32.gmra.mxu0 %v459
    %v641 = vpop.f32.mrf.mxu0
    %v642 = vadd.f32 0.0, %v641
    %v643 = vpop.f32.mrf.mxu0
    %v644 = vadd.f32 0.0, %v643
    %645 = vmatprep.mubr.f32.mxu0 %v462
    %646 = vmatmul.mubr.f32.gmra.mxu0 %v461
    %v647 = vpop.f32.mrf.mxu0
    %v648 = vadd.f32 0.0, %v647
    %v649 = vpop.f32.mrf.mxu0
    %v650 = vadd.f32 0.0, %v649
    %651 = vmatprep.mubr.f32.mxu0 %v464
    %652 = vmatmul.mubr.f32.gmra.mxu0 %v463
    %v653 = vpop.f32.mrf.mxu0
    %v654 = vadd.f32 0.0, %v653
    %v655 = vpop.f32.mrf.mxu0
    %v656 = vadd.f32 0.0, %v655
    %657 = vmatprep.mubr.f32.mxu0 %v466
    %658 = vmatmul.mubr.f32.gmra.mxu0 %v465
    %v659 = vpop.f32.mrf.mxu0
    %v660 = vadd.f32 0.0, %v659
    %v661 = vpop.f32.mrf.mxu0
    %v662 = vadd.f32 0.0, %v661
    %663 = vmatprep.mubr.f32.mxu0 %v468
    %664 = vmatmul.mubr.f32.gmra.mxu0 %v467
    %v665 = vpop.f32.mrf.mxu0
    %v666 = vadd.f32 0.0, %v665
    %v667 = vpop.f32.mrf.mxu0
    %v668 = vadd.f32 0.0, %v667
    %669 = vmatprep.mubr.f32.mxu0 %v470
    %670 = vmatmul.mubr.f32.gmra.mxu0 %v469
    %v671 = vpop.f32.mrf.mxu0
    %v672 = vadd.f32 0.0, %v671
    %v673 = vpop.f32.mrf.mxu0
    %v674 = vadd.f32 0.0, %v673
    %675 = vmatprep.mubr.f32.mxu0 %v472
    %676 = vmatmul.mubr.f32.gmra.mxu0 %v471
    %v677 = vpop.f32.mrf.mxu0
    %v678 = vadd.f32 0.0, %v677
    %v679 = vpop.f32.mrf.mxu0
    %v680 = vadd.f32 0.0, %v679
    %681 = vmatprep.mubr.f32.mxu0 %v474
    %682 = vmatmul.mubr.f32.gmra.mxu0 %v473
    %v683 = vpop.f32.mrf.mxu0
    %v684 = vadd.f32 0.0, %v683
    %v685 = vpop.f32.mrf.mxu0
    %v686 = vadd.f32 0.0, %v685
    %687 = vmatprep.mubr.f32.mxu0 %v476
    %688 = vmatmul.mubr.f32.gmra.mxu0 %v475
    %v689 = vpop.f32.mrf.mxu0
    %v690 = vadd.f32 0.0, %v689
    %v691 = vpop.f32.mrf.mxu0
    %v692 = vadd.f32 0.0, %v691
    %693 = vmatprep.mubr.f32.mxu0 %v478
    %694 = vmatmul.mubr.f32.gmra.mxu0 %v477
    %v695 = vpop.f32.mrf.mxu0
    %v696 = vadd.f32 0.0, %v695
    %v697 = vpop.f32.mrf.mxu0
    %v698 = vadd.f32 0.0, %v697
    %699 = vmatprep.mubr.f32.mxu0 %v480
    %700 = vmatmul.mubr.f32.gmra.mxu0 %v479
    %v701 = vpop.f32.mrf.mxu0
    %v702 = vadd.f32 0.0, %v701
    %v703 = vpop.f32.mrf.mxu0
    %v704 = vadd.f32 0.0, %v703
    %705 = vdwg.mxu0
    %706 = vst [vmem:[%s6] sm:$0xff] %v612
    %707 = vst [vmem:[%s6 + $0x8] sm:$0xff] %v614
    %708 = vst [vmem:[%s6 + $0x10] sm:$0xff] %v618
    %709 = vst [vmem:[%s6 + $0x18] sm:$0xff] %v620
    %710 = vst [vmem:[%s6 + $0x20] sm:$0xff] %v624
    %711 = vst [vmem:[%s6 + $0x28] sm:$0xff] %v626
    %712 = vst [vmem:[%s6 + $0x30] sm:$0xff] %v630
    %713 = vst [vmem:[%s6 + $0x38] sm:$0xff] %v632
    %714 = vst [vmem:[%s6 + $0x40] sm:$0xff] %v636
    %715 = vst [vmem:[%s6 + $0x48] sm:$0xff] %v638
    %716 = vst [vmem:[%s6 + $0x50] sm:$0xff] %v642
    %717 = vst [vmem:[%s6 + $0x58] sm:$0xff] %v644
    %718 = vst [vmem:[%s6 + $0x60] sm:$0xff] %v648
    %719 = vst [vmem:[%s6 + $0x68] sm:$0xff] %v650
    %720 = vst [vmem:[%s6 + $0x70] sm:$0xff] %v654
    %721 = vst [vmem:[%s6 + $0x78] sm:$0xff] %v656
    %722 = vst [vmem:[%s6 + $0x80] sm:$0xff] %v660
    %723 = vst [vmem:[%s6 + $0x88] sm:$0xff] %v662
    %724 = vst [vmem:[%s6 + $0x90] sm:$0xff] %v666
    %725 = vst [vmem:[%s6 + $0x98] sm:$0xff] %v668
    %726 = vst [vmem:[%s6 + $0xa0] sm:$0xff] %v672
    %727 = vst [vmem:[%s6 + $0xa8] sm:$0xff] %v674
    %728 = vst [vmem:[%s6 + $0xb0] sm:$0xff] %v678
    %729 = vst [vmem:[%s6 + $0xb8] sm:$0xff] %v680
    %730 = vst [vmem:[%s6 + $0xc0] sm:$0xff] %v684
    %731 = vst [vmem:[%s6 + $0xc8] sm:$0xff] %v686
    %732 = vst [vmem:[%s6 + $0xd0] sm:$0xff] %v690
    %733 = vst [vmem:[%s6 + $0xd8] sm:$0xff] %v692
    %734 = vst [vmem:[%s6 + $0xe0] sm:$0xff] %v696
    %735 = vst [vmem:[%s6 + $0xe8] sm:$0xff] %v698
    %736 = vst [vmem:[%s6 + $0xf0] sm:$0xff] %v702
    %737 = vst [vmem:[%s6 + $0xf8] sm:$0xff] %v704
    %v738 = vld [vmem:[#allocation9] sm:$0xff]
    %v739 = vld [vmem:[#allocation9 + $0x8] sm:$0xff]
    %v740 = vld [vmem:[#allocation9 + $0x10] sm:$0xff]
    %v741 = vld [vmem:[#allocation9 + $0x18] sm:$0xff]
    %v742 = vld [vmem:[#allocation9 + $0x20] sm:$0xff]
    %v743 = vld [vmem:[#allocation9 + $0x28] sm:$0xff]
    %v744 = vld [vmem:[#allocation9 + $0x30] sm:$0xff]
    %v745 = vld [vmem:[#allocation9 + $0x38] sm:$0xff]
    %v746 = vld [vmem:[#allocation9 + $0x40] sm:$0xff]
    %v747 = vld [vmem:[#allocation9 + $0x48] sm:$0xff]
    %v748 = vld [vmem:[#allocation9 + $0x50] sm:$0xff]
    %v749 = vld [vmem:[#allocation9 + $0x58] sm:$0xff]
    %v750 = vld [vmem:[#allocation9 + $0x60] sm:$0xff]
    %v751 = vld [vmem:[#allocation9 + $0x68] sm:$0xff]
    %v752 = vld [vmem:[#allocation9 + $0x70] sm:$0xff]
    %v753 = vld [vmem:[#allocation9 + $0x78] sm:$0xff]
    %v754 = vld [vmem:[#allocation9 + $0x80] sm:$0xff]
    %v755 = vld [vmem:[#allocation9 + $0x88] sm:$0xff]
    %v756 = vld [vmem:[#allocation9 + $0x90] sm:$0xff]
    %v757 = vld [vmem:[#allocation9 + $0x98] sm:$0xff]
    %v758 = vld [vmem:[#allocation9 + $0xa0] sm:$0xff]
    %v759 = vld [vmem:[#allocation9 + $0xa8] sm:$0xff]
    %v760 = vld [vmem:[#allocation9 + $0xb0] sm:$0xff]
    %v761 = vld [vmem:[#allocation9 + $0xb8] sm:$0xff]
    %v762 = vld [vmem:[#allocation9 + $0xc0] sm:$0xff]
    %v763 = vld [vmem:[#allocation9 + $0xc8] sm:$0xff]
    %v764 = vld [vmem:[#allocation9 + $0xd0] sm:$0xff]
    %v765 = vld [vmem:[#allocation9 + $0xd8] sm:$0xff]
    %v766 = vld [vmem:[#allocation9 + $0xe0] sm:$0xff]
    %v767 = vld [vmem:[#allocation9 + $0xe8] sm:$0xff]
    %v768 = vld [vmem:[#allocation9 + $0xf0] sm:$0xff]
    %v769 = vld [vmem:[#allocation9 + $0xf8] sm:$0xff]
    %v770 = vld [vmem:[#allocation9 + $0x100] sm:$0xff]
    %v771 = vld [vmem:[#allocation9 + $0x108] sm:$0xff]
    %v772 = vld [vmem:[#allocation9 + $0x110] sm:$0xff]
    %v773 = vld [vmem:[#allocation9 + $0x118] sm:$0xff]
    %v774 = vld [vmem:[#allocation9 + $0x120] sm:$0xff]
    %v775 = vld [vmem:[#allocation9 + $0x128] sm:$0xff]
    %v776 = vld [vmem:[#allocation9 + $0x130] sm:$0xff]
    %v777 = vld [vmem:[#allocation9 + $0x138] sm:$0xff]
    %v778 = vld [vmem:[#allocation9 + $0x140] sm:$0xff]
    %v779 = vld [vmem:[#allocation9 + $0x148] sm:$0xff]
    %v780 = vld [vmem:[#allocation9 + $0x150] sm:$0xff]
    %v781 = vld [vmem:[#allocation9 + $0x158] sm:$0xff]
    %v782 = vld [vmem:[#allocation9 + $0x160] sm:$0xff]
    %v783 = vld [vmem:[#allocation9 + $0x168] sm:$0xff]
    %v784 = vld [vmem:[#allocation9 + $0x170] sm:$0xff]
    %v785 = vld [vmem:[#allocation9 + $0x178] sm:$0xff]
    %v786 = vld [vmem:[#allocation9 + $0x180] sm:$0xff]
    %v787 = vld [vmem:[#allocation9 + $0x188] sm:$0xff]
    %v788 = vld [vmem:[#allocation9 + $0x190] sm:$0xff]
    %v789 = vld [vmem:[#allocation9 + $0x198] sm:$0xff]
    %v790 = vld [vmem:[#allocation9 + $0x1a0] sm:$0xff]
    %v791 = vld [vmem:[#allocation9 + $0x1a8] sm:$0xff]
    %v792 = vld [vmem:[#allocation9 + $0x1b0] sm:$0xff]
    %v793 = vld [vmem:[#allocation9 + $0x1b8] sm:$0xff]
    %v794 = vld [vmem:[#allocation9 + $0x1c0] sm:$0xff]
    %v795 = vld [vmem:[#allocation9 + $0x1c8] sm:$0xff]
    %v796 = vld [vmem:[#allocation9 + $0x1d0] sm:$0xff]
    %v797 = vld [vmem:[#allocation9 + $0x1d8] sm:$0xff]
    %v798 = vld [vmem:[#allocation9 + $0x1e0] sm:$0xff]
    %v799 = vld [vmem:[#allocation9 + $0x1e8] sm:$0xff]
    %v800 = vld [vmem:[#allocation9 + $0x1f0] sm:$0xff]
    %v801 = vld [vmem:[#allocation9 + $0x1f8] sm:$0xff]
    %802 = vmatprep.subr.mxu0 %v769
    %803 = vmatpush1.msra.mxu0 %v768
    %804 = vmatprep.subr.mxu0 %v767
    %805 = vmatpush1.msra.mxu0 %v766
    %806 = vmatprep.subr.mxu0 %v765
    %807 = vmatpush1.msra.mxu0 %v764
    %808 = vmatprep.subr.mxu0 %v763
    %809 = vmatpush1.msra.mxu0 %v762
    %810 = vmatprep.subr.mxu0 %v761
    %811 = vmatpush1.msra.mxu0 %v760
    %812 = vmatprep.subr.mxu0 %v759
    %813 = vmatpush1.msra.mxu0 %v758
    %814 = vmatprep.subr.mxu0 %v757
    %815 = vmatpush1.msra.mxu0 %v756
    %816 = vmatprep.subr.mxu0 %v755
    %817 = vmatpush1.msra.mxu0 %v754
    %818 = vmatprep.subr.mxu0 %v753
    %819 = vmatpush1.msra.mxu0 %v752
    %820 = vmatprep.subr.mxu0 %v751
    %821 = vmatpush1.msra.mxu0 %v750
    %822 = vmatprep.subr.mxu0 %v749
    %823 = vmatpush1.msra.mxu0 %v748
    %824 = vmatprep.subr.mxu0 %v747
    %825 = vmatpush1.msra.mxu0 %v746
    %826 = vmatprep.subr.mxu0 %v745
    %827 = vmatpush1.msra.mxu0 %v744
    %828 = vmatprep.subr.mxu0 %v743
    %829 = vmatpush1.msra.mxu0 %v742
    %830 = vmatprep.subr.mxu0 %v741
    %831 = vmatpush1.msra.mxu0 %v740
    %832 = vmatprep.subr.mxu0 %v739
    %833 = vmatpush1.msra.mxu0 %v738
    %834 = vmatprep.subr.mxu0 %v801
    %835 = vmatpush2.msra.mxu0 %v800
    %836 = vmatprep.subr.mxu0 %v799
    %837 = vmatpush2.msra.mxu0 %v798
    %838 = vmatprep.subr.mxu0 %v797
    %839 = vmatpush2.msra.mxu0 %v796
    %840 = vmatprep.subr.mxu0 %v795
    %841 = vmatpush2.msra.mxu0 %v794
    %842 = vmatprep.subr.mxu0 %v793
    %843 = vmatpush2.msra.mxu0 %v792
    %844 = vmatprep.subr.mxu0 %v791
    %845 = vmatpush2.msra.mxu0 %v790
    %846 = vmatprep.subr.mxu0 %v789
    %847 = vmatpush2.msra.mxu0 %v788
    %848 = vmatprep.subr.mxu0 %v787
    %849 = vmatpush2.msra.mxu0 %v786
    %850 = vmatprep.subr.mxu0 %v785
    %851 = vmatpush2.msra.mxu0 %v784
    %852 = vmatprep.subr.mxu0 %v783
    %853 = vmatpush2.msra.mxu0 %v782
    %854 = vmatprep.subr.mxu0 %v781
    %855 = vmatpush2.msra.mxu0 %v780
    %856 = vmatprep.subr.mxu0 %v779
    %857 = vmatpush2.msra.mxu0 %v778
    %858 = vmatprep.subr.mxu0 %v777
    %859 = vmatpush2.msra.mxu0 %v776
    %860 = vmatprep.subr.mxu0 %v775
    %861 = vmatpush2.msra.mxu0 %v774
    %862 = vmatprep.subr.mxu0 %v773
    %863 = vmatpush2.msra.mxu0 %v772
    %864 = vmatprep.subr.mxu0 %v771
    %865 = vmatpush2.msra.mxu0 %v770
    %866 = vmatprep.mubr.f32.mxu0 %v450
    %867 = vmatmul.mubr.f32.gmra.mxu0 %v449
    %v868 = vpop.f32.mrf.mxu0
    %v869 = vadd.f32 0.0, %v868
    %v870 = vpop.f32.mrf.mxu0
    %v871 = vadd.f32 0.0, %v870
    %872 = vmatprep.mubr.f32.mxu0 %v452
    %873 = vmatmul.mubr.f32.gmra.mxu0 %v451
    %v874 = vpop.f32.mrf.mxu0
    %v875 = vadd.f32 0.0, %v874
    %v876 = vpop.f32.mrf.mxu0
    %v877 = vadd.f32 0.0, %v876
    %878 = vmatprep.mubr.f32.mxu0 %v454
    %879 = vmatmul.mubr.f32.gmra.mxu0 %v453
    %v880 = vpop.f32.mrf.mxu0
    %v881 = vadd.f32 0.0, %v880
    %v882 = vpop.f32.mrf.mxu0
    %v883 = vadd.f32 0.0, %v882
    %884 = vmatprep.mubr.f32.mxu0 %v456
    %885 = vmatmul.mubr.f32.gmra.mxu0 %v455
    %v886 = vpop.f32.mrf.mxu0
    %v887 = vadd.f32 0.0, %v886
    %v888 = vpop.f32.mrf.mxu0
    %v889 = vadd.f32 0.0, %v888
    %890 = vmatprep.mubr.f32.mxu0 %v458
    %891 = vmatmul.mubr.f32.gmra.mxu0 %v457
    %v892 = vpop.f32.mrf.mxu0
    %v893 = vadd.f32 0.0, %v892
    %v894 = vpop.f32.mrf.mxu0
    %v895 = vadd.f32 0.0, %v894
    %896 = vmatprep.mubr.f32.mxu0 %v460
    %897 = vmatmul.mubr.f32.gmra.mxu0 %v459
    %v898 = vpop.f32.mrf.mxu0
    %v899 = vadd.f32 0.0, %v898
    %v900 = vpop.f32.mrf.mxu0
    %v901 = vadd.f32 0.0, %v900
    %902 = vmatprep.mubr.f32.mxu0 %v462
    %903 = vmatmul.mubr.f32.gmra.mxu0 %v461
    %v904 = vpop.f32.mrf.mxu0
    %v905 = vadd.f32 0.0, %v904
    %v906 = vpop.f32.mrf.mxu0
    %v907 = vadd.f32 0.0, %v906
    %908 = vmatprep.mubr.f32.mxu0 %v464
    %909 = vmatmul.mubr.f32.gmra.mxu0 %v463
    %v910 = vpop.f32.mrf.mxu0
    %v911 = vadd.f32 0.0, %v910
    %v912 = vpop.f32.mrf.mxu0
    %v913 = vadd.f32 0.0, %v912
    %914 = vmatprep.mubr.f32.mxu0 %v466
    %915 = vmatmul.mubr.f32.gmra.mxu0 %v465
    %v916 = vpop.f32.mrf.mxu0
    %v917 = vadd.f32 0.0, %v916
    %v918 = vpop.f32.mrf.mxu0
    %v919 = vadd.f32 0.0, %v918
    %920 = vmatprep.mubr.f32.mxu0 %v468
    %921 = vmatmul.mubr.f32.gmra.mxu0 %v467
    %v922 = vpop.f32.mrf.mxu0
    %v923 = vadd.f32 0.0, %v922
    %v924 = vpop.f32.mrf.mxu0
    %v925 = vadd.f32 0.0, %v924
    %926 = vmatprep.mubr.f32.mxu0 %v470
    %927 = vmatmul.mubr.f32.gmra.mxu0 %v469
    %v928 = vpop.f32.mrf.mxu0
    %v929 = vadd.f32 0.0, %v928
    %v930 = vpop.f32.mrf.mxu0
    %v931 = vadd.f32 0.0, %v930
    %932 = vmatprep.mubr.f32.mxu0 %v472
    %933 = vmatmul.mubr.f32.gmra.mxu0 %v471
    %v934 = vpop.f32.mrf.mxu0
    %v935 = vadd.f32 0.0, %v934
    %v936 = vpop.f32.mrf.mxu0
    %v937 = vadd.f32 0.0, %v936
    %938 = vmatprep.mubr.f32.mxu0 %v474
    %939 = vmatmul.mubr.f32.gmra.mxu0 %v473
    %v940 = vpop.f32.mrf.mxu0
    %v941 = vadd.f32 0.0, %v940
    %v942 = vpop.f32.mrf.mxu0
    %v943 = vadd.f32 0.0, %v942
    %944 = vmatprep.mubr.f32.mxu0 %v476
    %945 = vmatmul.mubr.f32.gmra.mxu0 %v475
    %v946 = vpop.f32.mrf.mxu0
    %v947 = vadd.f32 0.0, %v946
    %v948 = vpop.f32.mrf.mxu0
    %v949 = vadd.f32 0.0, %v948
    %950 = vmatprep.mubr.f32.mxu0 %v478
    %951 = vmatmul.mubr.f32.gmra.mxu0 %v477
    %v952 = vpop.f32.mrf.mxu0
    %v953 = vadd.f32 0.0, %v952
    %v954 = vpop.f32.mrf.mxu0
    %v955 = vadd.f32 0.0, %v954
    %956 = vmatprep.mubr.f32.mxu0 %v480
    %957 = vmatmul.mubr.f32.gmra.mxu0 %v479
    %v958 = vpop.f32.mrf.mxu0
    %v959 = vadd.f32 0.0, %v958
    %v960 = vpop.f32.mrf.mxu0
    %v961 = vadd.f32 0.0, %v960
    %962 = vdwg.mxu0
    %963 = vst [vmem:[%s7] sm:$0xff] %v869
    %964 = vst [vmem:[%s7 + $0x8] sm:$0xff] %v871
    %965 = vst [vmem:[%s7 + $0x10] sm:$0xff] %v875
    %966 = vst [vmem:[%s7 + $0x18] sm:$0xff] %v877
    %967 = vst [vmem:[%s7 + $0x20] sm:$0xff] %v881
    %968 = vst [vmem:[%s7 + $0x28] sm:$0xff] %v883
    %969 = vst [vmem:[%s7 + $0x30] sm:$0xff] %v887
    %970 = vst [vmem:[%s7 + $0x38] sm:$0xff] %v889
    %971 = vst [vmem:[%s7 + $0x40] sm:$0xff] %v893
    %972 = vst [vmem:[%s7 + $0x48] sm:$0xff] %v895
    %973 = vst [vmem:[%s7 + $0x50] sm:$0xff] %v899
    %974 = vst [vmem:[%s7 + $0x58] sm:$0xff] %v901
    %975 = vst [vmem:[%s7 + $0x60] sm:$0xff] %v905
    %976 = vst [vmem:[%s7 + $0x68] sm:$0xff] %v907
    %977 = vst [vmem:[%s7 + $0x70] sm:$0xff] %v911
    %978 = vst [vmem:[%s7 + $0x78] sm:$0xff] %v913
    %979 = vst [vmem:[%s7 + $0x80] sm:$0xff] %v917
    %980 = vst [vmem:[%s7 + $0x88] sm:$0xff] %v919
    %981 = vst [vmem:[%s7 + $0x90] sm:$0xff] %v923
    %982 = vst [vmem:[%s7 + $0x98] sm:$0xff] %v925
    %983 = vst [vmem:[%s7 + $0xa0] sm:$0xff] %v929
    %984 = vst [vmem:[%s7 + $0xa8] sm:$0xff] %v931
    %985 = vst [vmem:[%s7 + $0xb0] sm:$0xff] %v935
    %986 = vst [vmem:[%s7 + $0xb8] sm:$0xff] %v937
    %987 = vst [vmem:[%s7 + $0xc0] sm:$0xff] %v941
    %988 = vst [vmem:[%s7 + $0xc8] sm:$0xff] %v943
    %989 = vst [vmem:[%s7 + $0xd0] sm:$0xff] %v947
    %990 = vst [vmem:[%s7 + $0xd8] sm:$0xff] %v949
    %991 = vst [vmem:[%s7 + $0xe0] sm:$0xff] %v953
    %992 = vst [vmem:[%s7 + $0xe8] sm:$0xff] %v955
    %993 = vst [vmem:[%s7 + $0xf0] sm:$0xff] %v959
    %994 = vst [vmem:[%s7 + $0xf8] sm:$0xff] %v961
    %v995 = vld [vmem:[#allocation10] sm:$0xff]
    %v996 = vld [vmem:[#allocation10 + $0x8] sm:$0xff]
    %v997 = vld [vmem:[#allocation10 + $0x10] sm:$0xff]
    %v998 = vld [vmem:[#allocation10 + $0x18] sm:$0xff]
    %v999 = vld [vmem:[#allocation10 + $0x20] sm:$0xff]
    %v1000 = vld [vmem:[#allocation10 + $0x28] sm:$0xff]
    %v1001 = vld [vmem:[#allocation10 + $0x30] sm:$0xff]
    %v1002 = vld [vmem:[#allocation10 + $0x38] sm:$0xff]
    %v1003 = vld [vmem:[#allocation10 + $0x40] sm:$0xff]
    %v1004 = vld [vmem:[#allocation10 + $0x48] sm:$0xff]
    %v1005 = vld [vmem:[#allocation10 + $0x50] sm:$0xff]
    %v1006 = vld [vmem:[#allocation10 + $0x58] sm:$0xff]
    %v1007 = vld [vmem:[#allocation10 + $0x60] sm:$0xff]
    %v1008 = vld [vmem:[#allocation10 + $0x68] sm:$0xff]
    %v1009 = vld [vmem:[#allocation10 + $0x70] sm:$0xff]
    %v1010 = vld [vmem:[#allocation10 + $0x78] sm:$0xff]
    %v1011 = vld [vmem:[#allocation10 + $0x80] sm:$0xff]
    %v1012 = vld [vmem:[#allocation10 + $0x88] sm:$0xff]
    %v1013 = vld [vmem:[#allocation10 + $0x90] sm:$0xff]
    %v1014 = vld [vmem:[#allocation10 + $0x98] sm:$0xff]
    %v1015 = vld [vmem:[#allocation10 + $0xa0] sm:$0xff]
    %v1016 = vld [vmem:[#allocation10 + $0xa8] sm:$0xff]
    %v1017 = vld [vmem:[#allocation10 + $0xb0] sm:$0xff]
    %v1018 = vld [vmem:[#allocation10 + $0xb8] sm:$0xff]
    %v1019 = vld [vmem:[#allocation10 + $0xc0] sm:$0xff]
    %v1020 = vld [vmem:[#allocation10 + $0xc8] sm:$0xff]
    %v1021 = vld [vmem:[#allocation10 + $0xd0] sm:$0xff]
    %v1022 = vld [vmem:[#allocation10 + $0xd8] sm:$0xff]
    %v1023 = vld [vmem:[#allocation10 + $0xe0] sm:$0xff]
    %v1024 = vld [vmem:[#allocation10 + $0xe8] sm:$0xff]
    %v1025 = vld [vmem:[#allocation10 + $0xf0] sm:$0xff]
    %v1026 = vld [vmem:[#allocation10 + $0xf8] sm:$0xff]
    %v1027 = vld [vmem:[#allocation10 + $0x100] sm:$0xff]
    %v1028 = vld [vmem:[#allocation10 + $0x108] sm:$0xff]
    %v1029 = vld [vmem:[#allocation10 + $0x110] sm:$0xff]
    %v1030 = vld [vmem:[#allocation10 + $0x118] sm:$0xff]
    %v1031 = vld [vmem:[#allocation10 + $0x120] sm:$0xff]
    %v1032 = vld [vmem:[#allocation10 + $0x128] sm:$0xff]
    %v1033 = vld [vmem:[#allocation10 + $0x130] sm:$0xff]
    %v1034 = vld [vmem:[#allocation10 + $0x138] sm:$0xff]
    %v1035 = vld [vmem:[#allocation10 + $0x140] sm:$0xff]
    %v1036 = vld [vmem:[#allocation10 + $0x148] sm:$0xff]
    %v1037 = vld [vmem:[#allocation10 + $0x150] sm:$0xff]
    %v1038 = vld [vmem:[#allocation10 + $0x158] sm:$0xff]
    %v1039 = vld [vmem:[#allocation10 + $0x160] sm:$0xff]
    %v1040 = vld [vmem:[#allocation10 + $0x168] sm:$0xff]
    %v1041 = vld [vmem:[#allocation10 + $0x170] sm:$0xff]
    %v1042 = vld [vmem:[#allocation10 + $0x178] sm:$0xff]
    %v1043 = vld [vmem:[#allocation10 + $0x180] sm:$0xff]
    %v1044 = vld [vmem:[#allocation10 + $0x188] sm:$0xff]
    %v1045 = vld [vmem:[#allocation10 + $0x190] sm:$0xff]
    %v1046 = vld [vmem:[#allocation10 + $0x198] sm:$0xff]
    %v1047 = vld [vmem:[#allocation10 + $0x1a0] sm:$0xff]
    %v1048 = vld [vmem:[#allocation10 + $0x1a8] sm:$0xff]
    %v1049 = vld [vmem:[#allocation10 + $0x1b0] sm:$0xff]
    %v1050 = vld [vmem:[#allocation10 + $0x1b8] sm:$0xff]
    %v1051 = vld [vmem:[#allocation10 + $0x1c0] sm:$0xff]
    %v1052 = vld [vmem:[#allocation10 + $0x1c8] sm:$0xff]
    %v1053 = vld [vmem:[#allocation10 + $0x1d0] sm:$0xff]
    %v1054 = vld [vmem:[#allocation10 + $0x1d8] sm:$0xff]
    %v1055 = vld [vmem:[#allocation10 + $0x1e0] sm:$0xff]
    %v1056 = vld [vmem:[#allocation10 + $0x1e8] sm:$0xff]
    %v1057 = vld [vmem:[#allocation10 + $0x1f0] sm:$0xff]
    %v1058 = vld [vmem:[#allocation10 + $0x1f8] sm:$0xff]
    %1059 = vmatprep.subr.mxu0 %v1026
    %1060 = vmatpush1.msra.mxu0 %v1025
    %1061 = vmatprep.subr.mxu0 %v1024
    %1062 = vmatpush1.msra.mxu0 %v1023
    %1063 = vmatprep.subr.mxu0 %v1022
    %1064 = vmatpush1.msra.mxu0 %v1021
    %1065 = vmatprep.subr.mxu0 %v1020
    %1066 = vmatpush1.msra.mxu0 %v1019
    %1067 = vmatprep.subr.mxu0 %v1018
    %1068 = vmatpush1.msra.mxu0 %v1017
    %1069 = vmatprep.subr.mxu0 %v1016
    %1070 = vmatpush1.msra.mxu0 %v1015
    %1071 = vmatprep.subr.mxu0 %v1014
    %1072 = vmatpush1.msra.mxu0 %v1013
    %1073 = vmatprep.subr.mxu0 %v1012
    %1074 = vmatpush1.msra.mxu0 %v1011
    %1075 = vmatprep.subr.mxu0 %v1010
    %1076 = vmatpush1.msra.mxu0 %v1009
    %1077 = vmatprep.subr.mxu0 %v1008
    %1078 = vmatpush1.msra.mxu0 %v1007
    %1079 = vmatprep.subr.mxu0 %v1006
    %1080 = vmatpush1.msra.mxu0 %v1005
    %1081 = vmatprep.subr.mxu0 %v1004
    %1082 = vmatpush1.msra.mxu0 %v1003
    %1083 = vmatprep.subr.mxu0 %v1002
    %1084 = vmatpush1.msra.mxu0 %v1001
    %1085 = vmatprep.subr.mxu0 %v1000
    %1086 = vmatpush1.msra.mxu0 %v999
    %1087 = vmatprep.subr.mxu0 %v998
    %1088 = vmatpush1.msra.mxu0 %v997
    %1089 = vmatprep.subr.mxu0 %v996
    %1090 = vmatpush1.msra.mxu0 %v995
    %1091 = vmatprep.subr.mxu0 %v1058
    %1092 = vmatpush2.msra.mxu0 %v1057
    %1093 = vmatprep.subr.mxu0 %v1056
    %1094 = vmatpush2.msra.mxu0 %v1055
    %1095 = vmatprep.subr.mxu0 %v1054
    %1096 = vmatpush2.msra.mxu0 %v1053
    %1097 = vmatprep.subr.mxu0 %v1052
    %1098 = vmatpush2.msra.mxu0 %v1051
    %1099 = vmatprep.subr.mxu0 %v1050
    %1100 = vmatpush2.msra.mxu0 %v1049
    %1101 = vmatprep.subr.mxu0 %v1048
    %1102 = vmatpush2.msra.mxu0 %v1047
    %1103 = vmatprep.subr.mxu0 %v1046
    %1104 = vmatpush2.msra.mxu0 %v1045
    %1105 = vmatprep.subr.mxu0 %v1044
    %1106 = vmatpush2.msra.mxu0 %v1043
    %1107 = vmatprep.subr.mxu0 %v1042
    %1108 = vmatpush2.msra.mxu0 %v1041
    %1109 = vmatprep.subr.mxu0 %v1040
    %1110 = vmatpush2.msra.mxu0 %v1039
    %1111 = vmatprep.subr.mxu0 %v1038
    %1112 = vmatpush2.msra.mxu0 %v1037
    %1113 = vmatprep.subr.mxu0 %v1036
    %1114 = vmatpush2.msra.mxu0 %v1035
    %1115 = vmatprep.subr.mxu0 %v1034
    %1116 = vmatpush2.msra.mxu0 %v1033
    %1117 = vmatprep.subr.mxu0 %v1032
    %1118 = vmatpush2.msra.mxu0 %v1031
    %1119 = vmatprep.subr.mxu0 %v1030
    %1120 = vmatpush2.msra.mxu0 %v1029
    %1121 = vmatprep.subr.mxu0 %v1028
    %1122 = vmatpush2.msra.mxu0 %v1027
    %1123 = vmatprep.mubr.f32.mxu0 %v450
    %1124 = vmatmul.mubr.f32.gmra.mxu0 %v449
    %v1125 = vpop.f32.mrf.mxu0
    %v1126 = vadd.f32 0.0, %v1125
    %v1127 = vpop.f32.mrf.mxu0
    %v1128 = vadd.f32 0.0, %v1127
    %1129 = vmatprep.mubr.f32.mxu0 %v452
    %1130 = vmatmul.mubr.f32.gmra.mxu0 %v451
    %v1131 = vpop.f32.mrf.mxu0
    %v1132 = vadd.f32 0.0, %v1131
    %v1133 = vpop.f32.mrf.mxu0
    %v1134 = vadd.f32 0.0, %v1133
    %1135 = vmatprep.mubr.f32.mxu0 %v454
    %1136 = vmatmul.mubr.f32.gmra.mxu0 %v453
    %v1137 = vpop.f32.mrf.mxu0
    %v1138 = vadd.f32 0.0, %v1137
    %v1139 = vpop.f32.mrf.mxu0
    %v1140 = vadd.f32 0.0, %v1139
    %1141 = vmatprep.mubr.f32.mxu0 %v456
    %1142 = vmatmul.mubr.f32.gmra.mxu0 %v455
    %v1143 = vpop.f32.mrf.mxu0
    %v1144 = vadd.f32 0.0, %v1143
    %v1145 = vpop.f32.mrf.mxu0
    %v1146 = vadd.f32 0.0, %v1145
    %1147 = vmatprep.mubr.f32.mxu0 %v458
    %1148 = vmatmul.mubr.f32.gmra.mxu0 %v457
    %v1149 = vpop.f32.mrf.mxu0
    %v1150 = vadd.f32 0.0, %v1149
    %v1151 = vpop.f32.mrf.mxu0
    %v1152 = vadd.f32 0.0, %v1151
    %1153 = vmatprep.mubr.f32.mxu0 %v460
    %1154 = vmatmul.mubr.f32.gmra.mxu0 %v459
    %v1155 = vpop.f32.mrf.mxu0
    %v1156 = vadd.f32 0.0, %v1155
    %v1157 = vpop.f32.mrf.mxu0
    %v1158 = vadd.f32 0.0, %v1157
    %1159 = vmatprep.mubr.f32.mxu0 %v462
    %1160 = vmatmul.mubr.f32.gmra.mxu0 %v461
    %v1161 = vpop.f32.mrf.mxu0
    %v1162 = vadd.f32 0.0, %v1161
    %v1163 = vpop.f32.mrf.mxu0
    %v1164 = vadd.f32 0.0, %v1163
    %1165 = vmatprep.mubr.f32.mxu0 %v464
    %1166 = vmatmul.mubr.f32.gmra.mxu0 %v463
    %v1167 = vpop.f32.mrf.mxu0
    %v1168 = vadd.f32 0.0, %v1167
    %v1169 = vpop.f32.mrf.mxu0
    %v1170 = vadd.f32 0.0, %v1169
    %1171 = vmatprep.mubr.f32.mxu0 %v466
    %1172 = vmatmul.mubr.f32.gmra.mxu0 %v465
    %v1173 = vpop.f32.mrf.mxu0
    %v1174 = vadd.f32 0.0, %v1173
    %v1175 = vpop.f32.mrf.mxu0
    %v1176 = vadd.f32 0.0, %v1175
    %1177 = vmatprep.mubr.f32.mxu0 %v468
    %1178 = vmatmul.mubr.f32.gmra.mxu0 %v467
    %v1179 = vpop.f32.mrf.mxu0
    %v1180 = vadd.f32 0.0, %v1179
    %v1181 = vpop.f32.mrf.mxu0
    %v1182 = vadd.f32 0.0, %v1181
    %1183 = vmatprep.mubr.f32.mxu0 %v470
    %1184 = vmatmul.mubr.f32.gmra.mxu0 %v469
    %v1185 = vpop.f32.mrf.mxu0
    %v1186 = vadd.f32 0.0, %v1185
    %v1187 = vpop.f32.mrf.mxu0
    %v1188 = vadd.f32 0.0, %v1187
    %1189 = vmatprep.mubr.f32.mxu0 %v472
    %1190 = vmatmul.mubr.f32.gmra.mxu0 %v471
    %v1191 = vpop.f32.mrf.mxu0
    %v1192 = vadd.f32 0.0, %v1191
    %v1193 = vpop.f32.mrf.mxu0
    %v1194 = vadd.f32 0.0, %v1193
    %1195 = vmatprep.mubr.f32.mxu0 %v474
    %1196 = vmatmul.mubr.f32.gmra.mxu0 %v473
    %v1197 = vpop.f32.mrf.mxu0
    %v1198 = vadd.f32 0.0, %v1197
    %v1199 = vpop.f32.mrf.mxu0
    %v1200 = vadd.f32 0.0, %v1199
    %1201 = vmatprep.mubr.f32.mxu0 %v476
    %1202 = vmatmul.mubr.f32.gmra.mxu0 %v475
    %v1203 = vpop.f32.mrf.mxu0
    %v1204 = vadd.f32 0.0, %v1203
    %v1205 = vpop.f32.mrf.mxu0
    %v1206 = vadd.f32 0.0, %v1205
    %1207 = vmatprep.mubr.f32.mxu0 %v478
    %1208 = vmatmul.mubr.f32.gmra.mxu0 %v477
    %v1209 = vpop.f32.mrf.mxu0
    %v1210 = vadd.f32 0.0, %v1209
    %v1211 = vpop.f32.mrf.mxu0
    %v1212 = vadd.f32 0.0, %v1211
    %1213 = vmatprep.mubr.f32.mxu0 %v480
    %1214 = vmatmul.mubr.f32.gmra.mxu0 %v479
    %v1215 = vpop.f32.mrf.mxu0
    %v1216 = vadd.f32 0.0, %v1215
    %v1217 = vpop.f32.mrf.mxu0
    %v1218 = vadd.f32 0.0, %v1217
    %1219 = vdwg.mxu0
    %1220 = vst [vmem:[%s8] sm:$0xff] %v1126
    %1221 = vst [vmem:[%s8 + $0x8] sm:$0xff] %v1128
    %1222 = vst [vmem:[%s8 + $0x10] sm:$0xff] %v1132
    %1223 = vst [vmem:[%s8 + $0x18] sm:$0xff] %v1134
    %1224 = vst [vmem:[%s8 + $0x20] sm:$0xff] %v1138
    %1225 = vst [vmem:[%s8 + $0x28] sm:$0xff] %v1140
    %1226 = vst [vmem:[%s8 + $0x30] sm:$0xff] %v1144
    %1227 = vst [vmem:[%s8 + $0x38] sm:$0xff] %v1146
    %1228 = vst [vmem:[%s8 + $0x40] sm:$0xff] %v1150
    %1229 = vst [vmem:[%s8 + $0x48] sm:$0xff] %v1152
    %1230 = vst [vmem:[%s8 + $0x50] sm:$0xff] %v1156
    %1231 = vst [vmem:[%s8 + $0x58] sm:$0xff] %v1158
    %1232 = vst [vmem:[%s8 + $0x60] sm:$0xff] %v1162
    %1233 = vst [vmem:[%s8 + $0x68] sm:$0xff] %v1164
    %1234 = vst [vmem:[%s8 + $0x70] sm:$0xff] %v1168
    %1235 = vst [vmem:[%s8 + $0x78] sm:$0xff] %v1170
    %1236 = vst [vmem:[%s8 + $0x80] sm:$0xff] %v1174
    %1237 = vst [vmem:[%s8 + $0x88] sm:$0xff] %v1176
    %1238 = vst [vmem:[%s8 + $0x90] sm:$0xff] %v1180
    %1239 = vst [vmem:[%s8 + $0x98] sm:$0xff] %v1182
    %1240 = vst [vmem:[%s8 + $0xa0] sm:$0xff] %v1186
    %1241 = vst [vmem:[%s8 + $0xa8] sm:$0xff] %v1188
    %1242 = vst [vmem:[%s8 + $0xb0] sm:$0xff] %v1192
    %1243 = vst [vmem:[%s8 + $0xb8] sm:$0xff] %v1194
    %1244 = vst [vmem:[%s8 + $0xc0] sm:$0xff] %v1198
    %1245 = vst [vmem:[%s8 + $0xc8] sm:$0xff] %v1200
    %1246 = vst [vmem:[%s8 + $0xd0] sm:$0xff] %v1204
    %1247 = vst [vmem:[%s8 + $0xd8] sm:$0xff] %v1206
    %1248 = vst [vmem:[%s8 + $0xe0] sm:$0xff] %v1210
    %1249 = vst [vmem:[%s8 + $0xe8] sm:$0xff] %v1212
    %1250 = vst [vmem:[%s8 + $0xf0] sm:$0xff] %v1216
    %1251 = vst [vmem:[%s8 + $0xf8] sm:$0xff] %v1218
    // Predicated region
    $region50: #{basic_transformer_block.4} parent=1 // pred_check
      _
    $region51: #{basic_transformer_block.4} parent=1 // pred_check_branch
      %1253 = sbr.rel (0) target = $region53
    $region52: #{basic_transformer_block.4} parent=1 // pred_region
      _
    $region53: #{basic_transformer_block.4} parent=1 // pred_fallthru
      _
    // Predicated region
    $region54: #{basic_transformer_block.4} parent=1 // pred_check
      _
    $region55: #{basic_transformer_block.4} parent=1 // pred_check_branch
      %1255 = sbr.rel (0) target = $region57
    $region56: #{basic_transformer_block.4} parent=1 // pred_region
      _
    $region57: #{basic_transformer_block.4} parent=1 // pred_fallthru
      _
    // Predicated region
    $region58: #{basic_transformer_block.4} parent=1 // pred_check
      _
    $region59: #{basic_transformer_block.4} parent=1 // pred_check_branch
      %1257 = sbr.rel (0) target = $region61
    $region60: #{basic_transformer_block.4} parent=1 // pred_region
      _
    $region61: #{basic_transformer_block.4} parent=1 // pred_fallthru
      _
    // Predicated region
    $region62: #{basic_transformer_block.4} parent=1 // pred_check
      _
    $region63: #{basic_transformer_block.4} parent=1 // pred_check_branch
      %1259 = sbr.rel (0) target = $region65
    $region64: #{basic_transformer_block.4} parent=1 // pred_region
      _
    $region65: #{basic_transformer_block.4} parent=1 // pred_fallthru
      _
    // Predicated region
    $region66: #{basic_transformer_block.4} parent=1 // pred_check
      _
    $region67: #{basic_transformer_block.4} parent=1 // pred_check_branch
      %1261 = sbr.rel (0) target = $region69
    $region68: #{basic_transformer_block.4} parent=1 // pred_region
      _
    $region69: #{basic_transformer_block.4} parent=1 // pred_fallthru
      _
    // Predicated region
    $region70: #{basic_transformer_block.4} parent=1 // pred_check
      _
    $region71: #{basic_transformer_block.4} parent=1 // pred_check_branch
      %1263 = sbr.rel (0) target = $region73
    $region72: #{basic_transformer_block.4} parent=1 // pred_region
      _
    $region73: #{basic_transformer_block.4} parent=1 // pred_fallthru
      _
    %1264 = vsyncpa [#allocation3], 1
    %1265 = vsyncpa [#allocation5], 1
    %1266 = vsyncpa [#allocation8], 1
    %1267 = vsyncpa [#allocation11], 1

// kernel: basic_transformer_block.7
$region0: #{basic_transformer_block.7}
  #allocation0 [shape = 'u32[]', space=smem, size = 0x4, offset = 0x4, fixed_abs, tag = 'smem constant byte address 0x4 - core index']
  #allocation1 [shape = 'u32[144,128]{1,0:T(1,128)}', space=vmem, size = 0x12000, scoped, tag = 'internal scratch']
  #allocation2 [shape = 'f32[128,256]{1,0:T(8,128)}', space=vmem, size = 0x20000, scoped, tag = 'scratch operand']
  %s0 = inlined_call_operand.vmem [shape: f32[128,256], index: 0, kind: input, shape index: {}]
  %s1 = inlined_call_operand.vmem [shape: f32[1,256], index: 1, kind: input, shape index: {}]
  %s2 = inlined_call_operand.vmem [shape: f32[1,256], index: 2, kind: input, shape index: {}]
  %s3 = inlined_call_operand.vmem [shape: f32[256,1024], index: 3, kind: input, shape index: {}]
  %s4 = inlined_call_operand.vmem [shape: f32[1,1024], index: 4, kind: input, shape index: {}]
  %s5 = inlined_call_operand.vmem [shape: f32[256,1024], index: 5, kind: input, shape index: {}]
  %s6 = inlined_call_operand.vmem [shape: f32[1,1024], index: 6, kind: input, shape index: {}]
  %s7 = inlined_call_operand.vmem [shape: f32[1024,256], index: 7, kind: input, shape index: {}]
  %s8 = inlined_call_operand.vmem [shape: f32[1,256], index: 8, kind: input, shape index: {}]
  %s9 = inlined_call_operand.hbm [shape: f32[128,256], index: 9, kind: output, shape index: {}]
  %s10 = sld [smem:[#allocation0]]
  $region123: #{basic_transformer_block.7} parent=0
    _
  %s12 = ssub.s32 1, %s10
  %s13 = scalar_select 0, %s12, %s10
  $region1: #{basic_transformer_block.7} parent=0
    #allocation3 [shape = 'u8[1048576]{0}', space=vmem, size = 0x100000, scoped, tag = 'input window, operand 3']
    #allocation4 [shape = 'u8[1048576]{0}', space=vmem, size = 0x100000, scoped, tag = 'input window, operand 5']
    #allocation5 [shape = 'u8[131072]{0}', space=vmem, size = 0x20000, scoped, tag = 'output window, operand 0, single buffered']
    #allocation6 [shape = 's32[2]{0}', space=sflag, size = 0x8, scoped, tag = 'scoped memory for basic_transformer_block.7']
    %14 = vsyncpa [#allocation6], 0
    loop: start=0, step=1, limit=4
    $region2: #{basic_transformer_block.7} parent=1 // loop_pre_header
      _
    $region3: #{basic_transformer_block.7} parent=1 // loop_header
      %s16 = sphi 0, %s20
      %p17 = scmp.ge.s32.totalorder %s16, 4
      %s23 = sphi 0, %s35
      %s24 = sphi 0, %s31
      %s25 = sphi 0, %s23
      %s26 = sphi 0, %s24
      %s27 = sphi 0, %s25
      %s28 = sphi 0, %s26
      %s38 = sphi 0, %s40
      %s41 = sphi 0, %s38
      %s42 = sphi 0, %s41
      %s58 = sphi 0, %s42
      %s62 = sphi 0, %s62
      %s64 = sphi 0, %s62
      %s65 = sphi 0, %s64
      %s79 = sphi 0, %s65
      %s83 = sphi 0, %s83
      %s85 = sphi 0, %s83
      %s86 = sphi 0, %s85
      %s100 = sphi 0, %s86
      %s106 = sphi 0, %s108
      %s109 = sphi 0, %s106
      %s110 = sphi 0, %s109
      %s126 = sphi 0, %s110
      %s132 = sphi 0, %s134
      %s135 = sphi 0, %s132
      %s136 = sphi 0, %s135
      %s152 = sphi 0, %s136
      %s158 = sphi 0, %s160
      %s161 = sphi 0, %s158
      %s162 = sphi 0, %s161
      %s178 = sphi 0, %s162
      %s184 = sphi 0, %s186
      %s187 = sphi 0, %s184
      %s188 = sphi 0, %s187
      %s204 = sphi 0, %s188
      %s210 = sphi 0, %s212
      %s213 = sphi 0, %s210
      %s214 = sphi 0, %s213
      %s230 = sphi 0, %s214
      %s234 = sphi 0, %s234
      %s236 = sphi 0, %s234
      %s237 = sphi 0, %s236
      %s251 = sphi 0, %s237
      %s257 = sphi 0, %s259
      %s260 = sphi 0, %s257
      %s261 = sphi 0, %s260
      %s277 = sphi 0, %s261
    $region4: #{basic_transformer_block.7} parent=1 // loop_header_branch
      %19 = sbr.rel (%p17) target = $region8
    $region5: #{basic_transformer_block.7} parent=1 // loop_body
      %s21 = ssub.s32 %s16, 1
      %s22 = ssub.s32 %s16, 2
      %s29 = sadd.s32 1, %s24
      %p30 = scmp.ge.s32.totalorder %s29, 2
      %s31 = scalar_select %p30, 0, %s29
      %s32 = sadd.s32 1, %s23
      %s33 = scalar_select %p30, %s32, %s23
      %p34 = scmp.ge.s32.totalorder %s33, 1
      %s35 = scalar_select %p34, 0, %s33
      %s36 = ssub.s32 %s23, %s35
      %p37 = scmp.eq.s32.totalorder %s36, 0
      %s39 = sadd.s32 %s38, 1
      %s40 = scalar_select %p37, %s38, %s39
      %p43 = pneg %p37
      %p44 = scmp.eq.s32.totalorder %s16, 1
      %p45 = por %p43, %p44
      %p46 = scmp.ne.s32.totalorder %s38, %s41
      %p47 = scmp.eq.s32.totalorder %s16, 0
      %p48 = por %p46, %p47
      %p49 = scmp.ne.s32.totalorder %s38, %s41
      %p50 = scmp.eq.s32.totalorder %s21, 1
      %p51 = por %p49, %p50
      %p52 = scmp.ne.s32.totalorder %s41, %s42
      %p53 = scmp.eq.s32.totalorder %s21, 0
      %p54 = por %p52, %p53
      %p55 = scmp.ne.s32.totalorder %s41, %s42
      %p56 = scmp.eq.s32.totalorder %s22, 1
      %p57 = por %p55, %p56
      %p59 = scmp.ne.s32.totalorder %s42, %s58
      %p60 = scmp.eq.s32.totalorder %s22, 0
      %p61 = por %p59, %p60
      %s63 = sadd.s32 %s62, 1
      %p66 = scmp.eq.s32.totalorder %s16, 1
      %p67 = scmp.ne.s32.totalorder %s62, %s64
      %p68 = scmp.eq.s32.totalorder %s16, 0
      %p69 = por %p67, %p68
      %p70 = scmp.ne.s32.totalorder %s62, %s64
      %p71 = scmp.eq.s32.totalorder %s21, 1
      %p72 = por %p70, %p71
      %p73 = scmp.ne.s32.totalorder %s64, %s65
      %p74 = scmp.eq.s32.totalorder %s21, 0
      %p75 = por %p73, %p74
      %p76 = scmp.ne.s32.totalorder %s64, %s65
      %p77 = scmp.eq.s32.totalorder %s22, 1
      %p78 = por %p76, %p77
      %p80 = scmp.ne.s32.totalorder %s65, %s79
      %p81 = scmp.eq.s32.totalorder %s22, 0
      %p82 = por %p80, %p81
      %s84 = sadd.s32 %s83, 1
      %p87 = scmp.eq.s32.totalorder %s16, 1
      %p88 = scmp.ne.s32.totalorder %s83, %s85
      %p89 = scmp.eq.s32.totalorder %s16, 0
      %p90 = por %p88, %p89
      %p91 = scmp.ne.s32.totalorder %s83, %s85
      %p92 = scmp.eq.s32.totalorder %s21, 1
      %p93 = por %p91, %p92
      %p94 = scmp.ne.s32.totalorder %s85, %s86
      %p95 = scmp.eq.s32.totalorder %s21, 0
      %p96 = por %p94, %p95
      %p97 = scmp.ne.s32.totalorder %s85, %s86
      %p98 = scmp.eq.s32.totalorder %s22, 1
      %p99 = por %p97, %p98
      %p101 = scmp.ne.s32.totalorder %s86, %s100
      %p102 = scmp.eq.s32.totalorder %s22, 0
      %p103 = por %p101, %p102
      %s104 = ssub.s32 %s24, %s31
      %p105 = scmp.eq.s32.totalorder %s104, 0
      %s107 = sadd.s32 %s106, 1
      %s108 = scalar_select %p105, %s106, %s107
      %p111 = pneg %p105
      %p112 = scmp.eq.s32.totalorder %s16, 1
      %p113 = por %p111, %p112
      %p114 = scmp.ne.s32.totalorder %s106, %s109
      %p115 = scmp.eq.s32.totalorder %s16, 0
      %p116 = por %p114, %p115
      %p117 = scmp.ne.s32.totalorder %s106, %s109
      %p118 = scmp.eq.s32.totalorder %s21, 1
      %p119 = por %p117, %p118
      %p120 = scmp.ne.s32.totalorder %s109, %s110
      %p121 = scmp.eq.s32.totalorder %s21, 0
      %p122 = por %p120, %p121
      %p123 = scmp.ne.s32.totalorder %s109, %s110
      %p124 = scmp.eq.s32.totalorder %s22, 1
      %p125 = por %p123, %p124
      %p127 = scmp.ne.s32.totalorder %s110, %s126
      %p128 = scmp.eq.s32.totalorder %s22, 0
      %p129 = por %p127, %p128
      %s130 = ssub.s32 %s24, %s31
      %p131 = scmp.eq.s32.totalorder %s130, 0
      %s133 = sadd.s32 %s132, 1
      %s134 = scalar_select %p131, %s132, %s133
      %p137 = pneg %p131
      %p138 = scmp.eq.s32.totalorder %s16, 1
      %p139 = por %p137, %p138
      %p140 = scmp.ne.s32.totalorder %s132, %s135
      %p141 = scmp.eq.s32.totalorder %s16, 0
      %p142 = por %p140, %p141
      %p143 = scmp.ne.s32.totalorder %s132, %s135
      %p144 = scmp.eq.s32.totalorder %s21, 1
      %p145 = por %p143, %p144
      %p146 = scmp.ne.s32.totalorder %s135, %s136
      %p147 = scmp.eq.s32.totalorder %s21, 0
      %p148 = por %p146, %p147
      %p149 = scmp.ne.s32.totalorder %s135, %s136
      %p150 = scmp.eq.s32.totalorder %s22, 1
      %p151 = por %p149, %p150
      %p153 = scmp.ne.s32.totalorder %s136, %s152
      %p154 = scmp.eq.s32.totalorder %s22, 0
      %p155 = por %p153, %p154
      %s156 = ssub.s32 %s24, %s31
      %p157 = scmp.eq.s32.totalorder %s156, 0
      %s159 = sadd.s32 %s158, 1
      %s160 = scalar_select %p157, %s158, %s159
      %p163 = pneg %p157
      %p164 = scmp.eq.s32.totalorder %s16, 1
      %p165 = por %p163, %p164
      %p166 = scmp.ne.s32.totalorder %s158, %s161
      %p167 = scmp.eq.s32.totalorder %s16, 0
      %p168 = por %p166, %p167
      %p169 = scmp.ne.s32.totalorder %s158, %s161
      %p170 = scmp.eq.s32.totalorder %s21, 1
      %p171 = por %p169, %p170
      %p172 = scmp.ne.s32.totalorder %s161, %s162
      %p173 = scmp.eq.s32.totalorder %s21, 0
      %p174 = por %p172, %p173
      %p175 = scmp.ne.s32.totalorder %s161, %s162
      %p176 = scmp.eq.s32.totalorder %s22, 1
      %p177 = por %p175, %p176
      %p179 = scmp.ne.s32.totalorder %s162, %s178
      %p180 = scmp.eq.s32.totalorder %s22, 0
      %p181 = por %p179, %p180
      %s182 = ssub.s32 %s24, %s31
      %p183 = scmp.eq.s32.totalorder %s182, 0
      %s185 = sadd.s32 %s184, 1
      %s186 = scalar_select %p183, %s184, %s185
      %p189 = pneg %p183
      %p190 = scmp.eq.s32.totalorder %s16, 1
      %p191 = por %p189, %p190
      %p192 = scmp.ne.s32.totalorder %s184, %s187
      %p193 = scmp.eq.s32.totalorder %s16, 0
      %p194 = por %p192, %p193
      %p195 = scmp.ne.s32.totalorder %s184, %s187
      %p196 = scmp.eq.s32.totalorder %s21, 1
      %p197 = por %p195, %p196
      %p198 = scmp.ne.s32.totalorder %s187, %s188
      %p199 = scmp.eq.s32.totalorder %s21, 0
      %p200 = por %p198, %p199
      %p201 = scmp.ne.s32.totalorder %s187, %s188
      %p202 = scmp.eq.s32.totalorder %s22, 1
      %p203 = por %p201, %p202
      %p205 = scmp.ne.s32.totalorder %s188, %s204
      %p206 = scmp.eq.s32.totalorder %s22, 0
      %p207 = por %p205, %p206
      %s208 = ssub.s32 %s24, %s31
      %p209 = scmp.eq.s32.totalorder %s208, 0
      %s211 = sadd.s32 %s210, 1
      %s212 = scalar_select %p209, %s210, %s211
      %p215 = pneg %p209
      %p216 = scmp.eq.s32.totalorder %s16, 1
      %p217 = por %p215, %p216
      %p218 = scmp.ne.s32.totalorder %s210, %s213
      %p219 = scmp.eq.s32.totalorder %s16, 0
      %p220 = por %p218, %p219
      %p221 = scmp.ne.s32.totalorder %s210, %s213
      %p222 = scmp.eq.s32.totalorder %s21, 1
      %p223 = por %p221, %p222
      %p224 = scmp.ne.s32.totalorder %s213, %s214
      %p225 = scmp.eq.s32.totalorder %s21, 0
      %p226 = por %p224, %p225
      %p227 = scmp.ne.s32.totalorder %s213, %s214
      %p228 = scmp.eq.s32.totalorder %s22, 1
      %p229 = por %p227, %p228
      %p231 = scmp.ne.s32.totalorder %s214, %s230
      %p232 = scmp.eq.s32.totalorder %s22, 0
      %p233 = por %p231, %p232
      %s235 = sadd.s32 %s234, 1
      %p238 = scmp.eq.s32.totalorder %s16, 1
      %p239 = scmp.ne.s32.totalorder %s234, %s236
      %p240 = scmp.eq.s32.totalorder %s16, 0
      %p241 = por %p239, %p240
      %p242 = scmp.ne.s32.totalorder %s234, %s236
      %p243 = scmp.eq.s32.totalorder %s21, 1
      %p244 = por %p242, %p243
      %p245 = scmp.ne.s32.totalorder %s236, %s237
      %p246 = scmp.eq.s32.totalorder %s21, 0
      %p247 = por %p245, %p246
      %p248 = scmp.ne.s32.totalorder %s236, %s237
      %p249 = scmp.eq.s32.totalorder %s22, 1
      %p250 = por %p248, %p249
      %p252 = scmp.ne.s32.totalorder %s237, %s251
      %p253 = scmp.eq.s32.totalorder %s22, 0
      %p254 = por %p252, %p253
      %s255 = ssub.s32 %s23, %s35
      %p256 = scmp.eq.s32.totalorder %s255, 0
      %s258 = sadd.s32 %s257, 1
      %s259 = scalar_select %p256, %s257, %s258
      %p262 = pneg %p256
      %p263 = scmp.eq.s32.totalorder %s16, 1
      %p264 = por %p262, %p263
      %p265 = scmp.ne.s32.totalorder %s257, %s260
      %p266 = scmp.eq.s32.totalorder %s16, 0
      %p267 = por %p265, %p266
      %p268 = scmp.ne.s32.totalorder %s257, %s260
      %p269 = scmp.eq.s32.totalorder %s21, 1
      %p270 = por %p268, %p269
      %p271 = scmp.ne.s32.totalorder %s260, %s261
      %p272 = scmp.eq.s32.totalorder %s21, 0
      %p273 = por %p271, %p272
      %p274 = scmp.ne.s32.totalorder %s260, %s261
      %p275 = scmp.eq.s32.totalorder %s22, 1
      %p276 = por %p274, %p275
      %p278 = scmp.ne.s32.totalorder %s261, %s277
      %p279 = scmp.eq.s32.totalorder %s22, 0
      %p280 = por %p278, %p279
      %p281 = scmp.le.s32.totalorder 1, %s16
      %p282 = scmp.lt.s32.totalorder %s16, 3
      %p283 = pnand %p281, %p282
      %p284 = pneg %p283
      // Predicated region
      $region9: #{basic_transformer_block.7} parent=5 // pred_check
        _
      $region10: #{basic_transformer_block.7} parent=5 // pred_check_branch
        %286 = sbr.rel (%p283) target = $region12
      $region11: #{basic_transformer_block.7} parent=5 // pred_region
        %s287 = ssub.s32 %s16, 1
        // Predicated region
        $region13: #{basic_transformer_block.7} parent=11 // pred_check
          %p288 = pneg %p54
        $region14: #{basic_transformer_block.7} parent=11 // pred_check_branch
          %290 = sbr.rel (%p288) target = $region16
        $region15: #{basic_transformer_block.7} parent=11 // pred_region
          %s291 = smul.u32 16, %s25
          %p292 = scmp.lt.s32.totalorder %s291, 15
          %s293 = scalar_select %p292, %s291, 15
          %s294 = smul.addr %s293, 2
          %s295 = smul.addr %s294, 8
          %s296 = scalar_lea.vmem %s0, %s295
          %s297 = smul.u32 16, %s25
        $region16: #{basic_transformer_block.7} parent=11 // pred_fallthru
          _
        // Predicated region
        $region17: #{basic_transformer_block.7} parent=11 // pred_check
          %p298 = pneg %p75
        $region18: #{basic_transformer_block.7} parent=11 // pred_check_branch
          %300 = sbr.rel (%p298) target = $region20
        $region19: #{basic_transformer_block.7} parent=11 // pred_region
          _
        $region20: #{basic_transformer_block.7} parent=11 // pred_fallthru
          _
        // Predicated region
        $region21: #{basic_transformer_block.7} parent=11 // pred_check
          %p301 = pneg %p96
        $region22: #{basic_transformer_block.7} parent=11 // pred_check_branch
          %303 = sbr.rel (%p301) target = $region24
        $region23: #{basic_transformer_block.7} parent=11 // pred_region
          _
        $region24: #{basic_transformer_block.7} parent=11 // pred_fallthru
          _
        // Predicated region
        $region25: #{basic_transformer_block.7} parent=11 // pred_check
          %p304 = pneg %p247
        $region26: #{basic_transformer_block.7} parent=11 // pred_check_branch
          %306 = sbr.rel (%p304) target = $region28
        $region27: #{basic_transformer_block.7} parent=11 // pred_region
          _
        $region28: #{basic_transformer_block.7} parent=11 // pred_fallthru
          _
      $region12: #{basic_transformer_block.7} parent=5 // pred_fallthru
        _
      %p307 = scmp.lt.s32.totalorder %s16, 2
      // Predicated region
      $region29: #{basic_transformer_block.7} parent=5 // pred_check
        %p308 = pneg %p307
      $region30: #{basic_transformer_block.7} parent=5 // pred_check_branch
        %310 = sbr.rel (%p308) target = $region32
      $region31: #{basic_transformer_block.7} parent=5 // pred_region
        // Predicated region
        $region33: #{basic_transformer_block.7} parent=31 // pred_check
          %p311 = pneg %p116
        $region34: #{basic_transformer_block.7} parent=31 // pred_check_branch
          %313 = sbr.rel (%p311) target = $region36
        $region35: #{basic_transformer_block.7} parent=31 // pred_region
          %s314 = sand.u32 %s106, 1
          %s315 = sand.u32 %s106, 1
          %s316 = smul.addr %s315, 1024
          %s317 = scalar_lea.vmem [#allocation3], %s316
          %s318 = smul.u32 4, %s24
          %s319 = smul.addr %s318, 8
          %s320 = scalar_lea.vmem %s3, %s319
          // Predicated region
          $region37: #{basic_transformer_block.7} parent=35 // pred_check
            _
          $region38: #{basic_transformer_block.7} parent=35 // pred_check_branch
            %322 = sbr.rel (0) target = $region40
          $region39: #{basic_transformer_block.7} parent=35 // pred_region
            // Predicated region
            $region41: #{basic_transformer_block.7} parent=39 // pred_check
              _
            $region42: #{basic_transformer_block.7} parent=39 // pred_check_branch
              %324 = sbr.rel (0) target = $region44
            $region43: #{basic_transformer_block.7} parent=39 // pred_region
              loop: start=0, step=1, limit=1
              $region45: #{basic_transformer_block.7} parent=43 // loop_pre_header
                _
              $region46: #{basic_transformer_block.7} parent=43 // loop_header
                %s326 = sphi 0, %s330
                %p327 = scmp.ge.s32.totalorder %s326, 1
                %s331 = sphi %s320, %s320
                %s332 = sphi %s317, %s317
              $region47: #{basic_transformer_block.7} parent=43 // loop_header_branch
                %329 = sbr.rel (%p327) target = $region51
              $region48: #{basic_transformer_block.7} parent=43 // loop_body
                %v333 = vld [vmem:[%s331] sm:$0xff]
                %334 = vst [vmem:[%s332] sm:$0xff] %v333
                %v335 = vld [vmem:[%s331 + $0x8] sm:$0xff]
                %336 = vst [vmem:[%s332 + $0x8] sm:$0xff] %v335
                %v337 = vld [vmem:[%s331 + $0x10] sm:$0xff]
                %338 = vst [vmem:[%s332 + $0x10] sm:$0xff] %v337
                %v339 = vld [vmem:[%s331 + $0x18] sm:$0xff]
                %340 = vst [vmem:[%s332 + $0x18] sm:$0xff] %v339
                %v341 = vld [vmem:[%s331 + $0x40] sm:$0xff]
                %342 = vst [vmem:[%s332 + $0x20] sm:$0xff] %v341
                %v343 = vld [vmem:[%s331 + $0x48] sm:$0xff]
                %344 = vst [vmem:[%s332 + $0x28] sm:$0xff] %v343
                %v345 = vld [vmem:[%s331 + $0x50] sm:$0xff]
                %346 = vst [vmem:[%s332 + $0x30] sm:$0xff] %v345
                %v347 = vld [vmem:[%s331 + $0x58] sm:$0xff]
                %348 = vst [vmem:[%s332 + $0x38] sm:$0xff] %v347
                %v349 = vld [vmem:[%s331 + $0x80] sm:$0xff]
                %350 = vst [vmem:[%s332 + $0x40] sm:$0xff] %v349
                %v351 = vld [vmem:[%s331 + $0x88] sm:$0xff]
                %352 = vst [vmem:[%s332 + $0x48] sm:$0xff] %v351
                %v353 = vld [vmem:[%s331 + $0x90] sm:$0xff]
                %354 = vst [vmem:[%s332 + $0x50] sm:$0xff] %v353
                %v355 = vld [vmem:[%s331 + $0x98] sm:$0xff]
                %356 = vst [vmem:[%s332 + $0x58] sm:$0xff] %v355
                %v357 = vld [vmem:[%s331 + $0xc0] sm:$0xff]
                %358 = vst [vmem:[%s332 + $0x60] sm:$0xff] %v357
                %v359 = vld [vmem:[%s331 + $0xc8] sm:$0xff]
                %360 = vst [vmem:[%s332 + $0x68] sm:$0xff] %v359
                %v361 = vld [vmem:[%s331 + $0xd0] sm:$0xff]
                %362 = vst [vmem:[%s332 + $0x70] sm:$0xff] %v361
                %v363 = vld [vmem:[%s331 + $0xd8] sm:$0xff]
                %364 = vst [vmem:[%s332 + $0x78] sm:$0xff] %v363
                %v365 = vld [vmem:[%s331 + $0x100] sm:$0xff]
                %366 = vst [vmem:[%s332 + $0x80] sm:$0xff] %v365
                %v367 = vld [vmem:[%s331 + $0x108] sm:$0xff]
                %368 = vst [vmem:[%s332 + $0x88] sm:$0xff] %v367
                %v369 = vld [vmem:[%s331 + $0x110] sm:$0xff]
                %370 = vst [vmem:[%s332 + $0x90] sm:$0xff] %v369
                %v371 = vld [vmem:[%s331 + $0x118] sm:$0xff]
                %372 = vst [vmem:[%s332 + $0x98] sm:$0xff] %v371
                %v373 = vld [vmem:[%s331 + $0x140] sm:$0xff]
                %374 = vst [vmem:[%s332 + $0xa0] sm:$0xff] %v373
                %v375 = vld [vmem:[%s331 + $0x148] sm:$0xff]
                %376 = vst [vmem:[%s332 + $0xa8] sm:$0xff] %v375
                %v377 = vld [vmem:[%s331 + $0x150] sm:$0xff]
                %378 = vst [vmem:[%s332 + $0xb0] sm:$0xff] %v377
                %v379 = vld [vmem:[%s331 + $0x158] sm:$0xff]
                %380 = vst [vmem:[%s332 + $0xb8] sm:$0xff] %v379
                %v381 = vld [vmem:[%s331 + $0x180] sm:$0xff]
                %382 = vst [vmem:[%s332 + $0xc0] sm:$0xff] %v381
                %v383 = vld [vmem:[%s331 + $0x188] sm:$0xff]
                %384 = vst [vmem:[%s332 + $0xc8] sm:$0xff] %v383
                %v385 = vld [vmem:[%s331 + $0x190] sm:$0xff]
                %386 = vst [vmem:[%s332 + $0xd0] sm:$0xff] %v385
                %v387 = vld [vmem:[%s331 + $0x198] sm:$0xff]
                %388 = vst [vmem:[%s332 + $0xd8] sm:$0xff] %v387
                %v389 = vld [vmem:[%s331 + $0x1c0] sm:$0xff]
                %390 = vst [vmem:[%s332 + $0xe0] sm:$0xff] %v389
                %v391 = vld [vmem:[%s331 + $0x1c8] sm:$0xff]
                %392 = vst [vmem:[%s332 + $0xe8] sm:$0xff] %v391
                %v393 = vld [vmem:[%s331 + $0x1d0] sm:$0xff]
                %394 = vst [vmem:[%s332 + $0xf0] sm:$0xff] %v393
                %v395 = vld [vmem:[%s331 + $0x1d8] sm:$0xff]
                %396 = vst [vmem:[%s332 + $0xf8] sm:$0xff] %v395
                %v397 = vld [vmem:[%s331 + $0x200] sm:$0xff]
                %398 = vst [vmem:[%s332 + $0x100] sm:$0xff] %v397
                %v399 = vld [vmem:[%s331 + $0x208] sm:$0xff]
                %400 = vst [vmem:[%s332 + $0x108] sm:$0xff] %v399
                %v401 = vld [vmem:[%s331 + $0x210] sm:$0xff]
                %402 = vst [vmem:[%s332 + $0x110] sm:$0xff] %v401
                %v403 = vld [vmem:[%s331 + $0x218] sm:$0xff]
                %404 = vst [vmem:[%s332 + $0x118] sm:$0xff] %v403
                %v405 = vld [vmem:[%s331 + $0x240] sm:$0xff]
                %406 = vst [vmem:[%s332 + $0x120] sm:$0xff] %v405
                %v407 = vld [vmem:[%s331 + $0x248] sm:$0xff]
                %408 = vst [vmem:[%s332 + $0x128] sm:$0xff] %v407
                %v409 = vld [vmem:[%s331 + $0x250] sm:$0xff]
                %410 = vst [vmem:[%s332 + $0x130] sm:$0xff] %v409
                %v411 = vld [vmem:[%s331 + $0x258] sm:$0xff]
                %412 = vst [vmem:[%s332 + $0x138] sm:$0xff] %v411
                %v413 = vld [vmem:[%s331 + $0x280] sm:$0xff]
                %414 = vst [vmem:[%s332 + $0x140] sm:$0xff] %v413
                %v415 = vld [vmem:[%s331 + $0x288] sm:$0xff]
                %416 = vst [vmem:[%s332 + $0x148] sm:$0xff] %v415
                %v417 = vld [vmem:[%s331 + $0x290] sm:$0xff]
                %418 = vst [vmem:[%s332 + $0x150] sm:$0xff] %v417
                %v419 = vld [vmem:[%s331 + $0x298] sm:$0xff]
                %420 = vst [vmem:[%s332 + $0x158] sm:$0xff] %v419
                %v421 = vld [vmem:[%s331 + $0x2c0] sm:$0xff]
                %422 = vst [vmem:[%s332 + $0x160] sm:$0xff] %v421
                %v423 = vld [vmem:[%s331 + $0x2c8] sm:$0xff]
                %424 = vst [vmem:[%s332 + $0x168] sm:$0xff] %v423
                %v425 = vld [vmem:[%s331 + $0x2d0] sm:$0xff]
                %426 = vst [vmem:[%s332 + $0x170] sm:$0xff] %v425
                %v427 = vld [vmem:[%s331 + $0x2d8] sm:$0xff]
                %428 = vst [vmem:[%s332 + $0x178] sm:$0xff] %v427
                %v429 = vld [vmem:[%s331 + $0x300] sm:$0xff]
                %430 = vst [vmem:[%s332 + $0x180] sm:$0xff] %v429
                %v431 = vld [vmem:[%s331 + $0x308] sm:$0xff]
                %432 = vst [vmem:[%s332 + $0x188] sm:$0xff] %v431
                %v433 = vld [vmem:[%s331 + $0x310] sm:$0xff]
                %434 = vst [vmem:[%s332 + $0x190] sm:$0xff] %v433
                %v435 = vld [vmem:[%s331 + $0x318] sm:$0xff]
                %436 = vst [vmem:[%s332 + $0x198] sm:$0xff] %v435
                %v437 = vld [vmem:[%s331 + $0x340] sm:$0xff]
                %438 = vst [vmem:[%s332 + $0x1a0] sm:$0xff] %v437
                %v439 = vld [vmem:[%s331 + $0x348] sm:$0xff]
                %440 = vst [vmem:[%s332 + $0x1a8] sm:$0xff] %v439
                %v441 = vld [vmem:[%s331 + $0x350] sm:$0xff]
                %442 = vst [vmem:[%s332 + $0x1b0] sm:$0xff] %v441
                %v443 = vld [vmem:[%s331 + $0x358] sm:$0xff]
                %444 = vst [vmem:[%s332 + $0x1b8] sm:$0xff] %v443
                %v445 = vld [vmem:[%s331 + $0x380] sm:$0xff]
                %446 = vst [vmem:[%s332 + $0x1c0] sm:$0xff] %v445
                %v447 = vld [vmem:[%s331 + $0x388] sm:$0xff]
                %448 = vst [vmem:[%s332 + $0x1c8] sm:$0xff] %v447
                %v449 = vld [vmem:[%s331 + $0x390] sm:$0xff]
                %450 = vst [vmem:[%s332 + $0x1d0] sm:$0xff] %v449
                %v451 = vld [vmem:[%s331 + $0x398] sm:$0xff]
                %452 = vst [vmem:[%s332 + $0x1d8] sm:$0xff] %v451
                %v453 = vld [vmem:[%s331 + $0x3c0] sm:$0xff]
                %454 = vst [vmem:[%s332 + $0x1e0] sm:$0xff] %v453
                %v455 = vld [vmem:[%s331 + $0x3c8] sm:$0xff]
                %456 = vst [vmem:[%s332 + $0x1e8] sm:$0xff] %v455
                %v457 = vld [vmem:[%s331 + $0x3d0] sm:$0xff]
                %458 = vst [vmem:[%s332 + $0x1f0] sm:$0xff] %v457
                %v459 = vld [vmem:[%s331 + $0x3d8] sm:$0xff]
                %460 = vst [vmem:[%s332 + $0x1f8] sm:$0xff] %v459
                %v461 = vld [vmem:[%s331 + $0x400] sm:$0xff]
                %462 = vst [vmem:[%s332 + $0x200] sm:$0xff] %v461
                %v463 = vld [vmem:[%s331 + $0x408] sm:$0xff]
                %464 = vst [vmem:[%s332 + $0x208] sm:$0xff] %v463
                %v465 = vld [vmem:[%s331 + $0x410] sm:$0xff]
                %466 = vst [vmem:[%s332 + $0x210] sm:$0xff] %v465
                %v467 = vld [vmem:[%s331 + $0x418] sm:$0xff]
                %468 = vst [vmem:[%s332 + $0x218] sm:$0xff] %v467
                %v469 = vld [vmem:[%s331 + $0x440] sm:$0xff]
                %470 = vst [vmem:[%s332 + $0x220] sm:$0xff] %v469
                %v471 = vld [vmem:[%s331 + $0x448] sm:$0xff]
                %472 = vst [vmem:[%s332 + $0x228] sm:$0xff] %v471
                %v473 = vld [vmem:[%s331 + $0x450] sm:$0xff]
                %474 = vst [vmem:[%s332 + $0x230] sm:$0xff] %v473
                %v475 = vld [vmem:[%s331 + $0x458] sm:$0xff]
                %476 = vst [vmem:[%s332 + $0x238] sm:$0xff] %v475
                %v477 = vld [vmem:[%s331 + $0x480] sm:$0xff]
                %478 = vst [vmem:[%s332 + $0x240] sm:$0xff] %v477
                %v479 = vld [vmem:[%s331 + $0x488] sm:$0xff]
                %480 = vst [vmem:[%s332 + $0x248] sm:$0xff] %v479
                %v481 = vld [vmem:[%s331 + $0x490] sm:$0xff]
                %482 = vst [vmem:[%s332 + $0x250] sm:$0xff] %v481
                %v483 = vld [vmem:[%s331 + $0x498] sm:$0xff]
                %484 = vst [vmem:[%s332 + $0x258] sm:$0xff] %v483
                %v485 = vld [vmem:[%s331 + $0x4c0] sm:$0xff]
                %486 = vst [vmem:[%s332 + $0x260] sm:$0xff] %v485
                %v487 = vld [vmem:[%s331 + $0x4c8] sm:$0xff]
                %488 = vst [vmem:[%s332 + $0x268] sm:$0xff] %v487
                %v489 = vld [vmem:[%s331 + $0x4d0] sm:$0xff]
                %490 = vst [vmem:[%s332 + $0x270] sm:$0xff] %v489
                %v491 = vld [vmem:[%s331 + $0x4d8] sm:$0xff]
                %492 = vst [vmem:[%s332 + $0x278] sm:$0xff] %v491
                %v493 = vld [vmem:[%s331 + $0x500] sm:$0xff]
                %494 = vst [vmem:[%s332 + $0x280] sm:$0xff] %v493
                %v495 = vld [vmem:[%s331 + $0x508] sm:$0xff]
                %496 = vst [vmem:[%s332 + $0x288] sm:$0xff] %v495
                %v497 = vld [vmem:[%s331 + $0x510] sm:$0xff]
                %498 = vst [vmem:[%s332 + $0x290] sm:$0xff] %v497
                %v499 = vld [vmem:[%s331 + $0x518] sm:$0xff]
                %500 = vst [vmem:[%s332 + $0x298] sm:$0xff] %v499
                %v501 = vld [vmem:[%s331 + $0x540] sm:$0xff]
                %502 = vst [vmem:[%s332 + $0x2a0] sm:$0xff] %v501
                %v503 = vld [vmem:[%s331 + $0x548] sm:$0xff]
                %504 = vst [vmem:[%s332 + $0x2a8] sm:$0xff] %v503
                %v505 = vld [vmem:[%s331 + $0x550] sm:$0xff]
                %506 = vst [vmem:[%s332 + $0x2b0] sm:$0xff] %v505
                %v507 = vld [vmem:[%s331 + $0x558] sm:$0xff]
                %508 = vst [vmem:[%s332 + $0x2b8] sm:$0xff] %v507
                %v509 = vld [vmem:[%s331 + $0x580] sm:$0xff]
                %510 = vst [vmem:[%s332 + $0x2c0] sm:$0xff] %v509
                %v511 = vld [vmem:[%s331 + $0x588] sm:$0xff]
                %512 = vst [vmem:[%s332 + $0x2c8] sm:$0xff] %v511
                %v513 = vld [vmem:[%s331 + $0x590] sm:$0xff]
                %514 = vst [vmem:[%s332 + $0x2d0] sm:$0xff] %v513
                %v515 = vld [vmem:[%s331 + $0x598] sm:$0xff]
                %516 = vst [vmem:[%s332 + $0x2d8] sm:$0xff] %v515
                %v517 = vld [vmem:[%s331 + $0x5c0] sm:$0xff]
                %518 = vst [vmem:[%s332 + $0x2e0] sm:$0xff] %v517
                %v519 = vld [vmem:[%s331 + $0x5c8] sm:$0xff]
                %520 = vst [vmem:[%s332 + $0x2e8] sm:$0xff] %v519
                %v521 = vld [vmem:[%s331 + $0x5d0] sm:$0xff]
                %522 = vst [vmem:[%s332 + $0x2f0] sm:$0xff] %v521
                %v523 = vld [vmem:[%s331 + $0x5d8] sm:$0xff]
                %524 = vst [vmem:[%s332 + $0x2f8] sm:$0xff] %v523
                %v525 = vld [vmem:[%s331 + $0x600] sm:$0xff]
                %526 = vst [vmem:[%s332 + $0x300] sm:$0xff] %v525
                %v527 = vld [vmem:[%s331 + $0x608] sm:$0xff]
                %528 = vst [vmem:[%s332 + $0x308] sm:$0xff] %v527
                %v529 = vld [vmem:[%s331 + $0x610] sm:$0xff]
                %530 = vst [vmem:[%s332 + $0x310] sm:$0xff] %v529
                %v531 = vld [vmem:[%s331 + $0x618] sm:$0xff]
                %532 = vst [vmem:[%s332 + $0x318] sm:$0xff] %v531
                %v533 = vld [vmem:[%s331 + $0x640] sm:$0xff]
                %534 = vst [vmem:[%s332 + $0x320] sm:$0xff] %v533
                %v535 = vld [vmem:[%s331 + $0x648] sm:$0xff]
                %536 = vst [vmem:[%s332 + $0x328] sm:$0xff] %v535
                %v537 = vld [vmem:[%s331 + $0x650] sm:$0xff]
                %538 = vst [vmem:[%s332 + $0x330] sm:$0xff] %v537
                %v539 = vld [vmem:[%s331 + $0x658] sm:$0xff]
                %540 = vst [vmem:[%s332 + $0x338] sm:$0xff] %v539
                %v541 = vld [vmem:[%s331 + $0x680] sm:$0xff]
                %542 = vst [vmem:[%s332 + $0x340] sm:$0xff] %v541
                %v543 = vld [vmem:[%s331 + $0x688] sm:$0xff]
                %544 = vst [vmem:[%s332 + $0x348] sm:$0xff] %v543
                %v545 = vld [vmem:[%s331 + $0x690] sm:$0xff]
                %546 = vst [vmem:[%s332 + $0x350] sm:$0xff] %v545
                %v547 = vld [vmem:[%s331 + $0x698] sm:$0xff]
                %548 = vst [vmem:[%s332 + $0x358] sm:$0xff] %v547
                %v549 = vld [vmem:[%s331 + $0x6c0] sm:$0xff]
                %550 = vst [vmem:[%s332 + $0x360] sm:$0xff] %v549
                %v551 = vld [vmem:[%s331 + $0x6c8] sm:$0xff]
                %552 = vst [vmem:[%s332 + $0x368] sm:$0xff] %v551
                %v553 = vld [vmem:[%s331 + $0x6d0] sm:$0xff]
                %554 = vst [vmem:[%s332 + $0x370] sm:$0xff] %v553
                %v555 = vld [vmem:[%s331 + $0x6d8] sm:$0xff]
                %556 = vst [vmem:[%s332 + $0x378] sm:$0xff] %v555
                %v557 = vld [vmem:[%s331 + $0x700] sm:$0xff]
                %558 = vst [vmem:[%s332 + $0x380] sm:$0xff] %v557
                %v559 = vld [vmem:[%s331 + $0x708] sm:$0xff]
                %560 = vst [vmem:[%s332 + $0x388] sm:$0xff] %v559
                %v561 = vld [vmem:[%s331 + $0x710] sm:$0xff]
                %562 = vst [vmem:[%s332 + $0x390] sm:$0xff] %v561
                %v563 = vld [vmem:[%s331 + $0x718] sm:$0xff]
                %564 = vst [vmem:[%s332 + $0x398] sm:$0xff] %v563
                %v565 = vld [vmem:[%s331 + $0x740] sm:$0xff]
                %566 = vst [vmem:[%s332 + $0x3a0] sm:$0xff] %v565
                %v567 = vld [vmem:[%s331 + $0x748] sm:$0xff]
                %568 = vst [vmem:[%s332 + $0x3a8] sm:$0xff] %v567
                %v569 = vld [vmem:[%s331 + $0x750] sm:$0xff]
                %570 = vst [vmem:[%s332 + $0x3b0] sm:$0xff] %v569
                %v571 = vld [vmem:[%s331 + $0x758] sm:$0xff]
                %572 = vst [vmem:[%s332 + $0x3b8] sm:$0xff] %v571
                %v573 = vld [vmem:[%s331 + $0x780] sm:$0xff]
                %574 = vst [vmem:[%s332 + $0x3c0] sm:$0xff] %v573
                %v575 = vld [vmem:[%s331 + $0x788] sm:$0xff]
                %576 = vst [vmem:[%s332 + $0x3c8] sm:$0xff] %v575
                %v577 = vld [vmem:[%s331 + $0x790] sm:$0xff]
                %578 = vst [vmem:[%s332 + $0x3d0] sm:$0xff] %v577
                %v579 = vld [vmem:[%s331 + $0x798] sm:$0xff]
                %580 = vst [vmem:[%s332 + $0x3d8] sm:$0xff] %v579
                %v581 = vld [vmem:[%s331 + $0x7c0] sm:$0xff]
                %582 = vst [vmem:[%s332 + $0x3e0] sm:$0xff] %v581
                %v583 = vld [vmem:[%s331 + $0x7c8] sm:$0xff]
                %584 = vst [vmem:[%s332 + $0x3e8] sm:$0xff] %v583
                %v585 = vld [vmem:[%s331 + $0x7d0] sm:$0xff]
                %586 = vst [vmem:[%s332 + $0x3f0] sm:$0xff] %v585
                %v587 = vld [vmem:[%s331 + $0x7d8] sm:$0xff]
                %588 = vst [vmem:[%s332 + $0x3f8] sm:$0xff] %v587
              $region49: #{basic_transformer_block.7} parent=43 // loop_footer
                %s330 = sadd.s32 1, %s326
              $region50: #{basic_transformer_block.7} parent=43 // loop_footer_branch
                %325 = sbr.rel target = $region46
              $region51: #{basic_transformer_block.7} parent=43 // loop_exit
                _
            $region44: #{basic_transformer_block.7} parent=39 // pred_fallthru
              _
            // Predicated region
            $region52: #{basic_transformer_block.7} parent=39 // pred_check
              _
            $region53: #{basic_transformer_block.7} parent=39 // pred_check_branch
              %590 = sbr.rel target = $region55
            $region54: #{basic_transformer_block.7} parent=39 // pred_region
              _
            $region55: #{basic_transformer_block.7} parent=39 // pred_fallthru
              _
          $region40: #{basic_transformer_block.7} parent=35 // pred_fallthru
            _
          %591 = vnop
        $region36: #{basic_transformer_block.7} parent=31 // pred_fallthru
          _
        // Predicated region
        $region56: #{basic_transformer_block.7} parent=31 // pred_check
          %p592 = pneg %p142
        $region57: #{basic_transformer_block.7} parent=31 // pred_check_branch
          %594 = sbr.rel (%p592) target = $region59
        $region58: #{basic_transformer_block.7} parent=31 // pred_region
          %s595 = smul.u32 4, %s24
          %p596 = scmp.lt.s32.totalorder %s595, 7
          %s597 = scalar_select %p596, %s595, 7
          %s598 = scalar_lea.vmem %s4, %s597
          %s599 = smul.u32 4, %s24
        $region59: #{basic_transformer_block.7} parent=31 // pred_fallthru
          _
        // Predicated region
        $region60: #{basic_transformer_block.7} parent=31 // pred_check
          %p600 = pneg %p168
        $region61: #{basic_transformer_block.7} parent=31 // pred_check_branch
          %602 = sbr.rel (%p600) target = $region63
        $region62: #{basic_transformer_block.7} parent=31 // pred_region
          %s603 = sand.u32 %s158, 1
          %s604 = sand.u32 %s158, 1
          %s605 = smul.addr %s604, 1024
          %s606 = scalar_lea.vmem [#allocation4], %s605
          %s607 = smul.u32 4, %s24
          %s608 = smul.addr %s607, 8
          %s609 = scalar_lea.vmem %s5, %s608
          // Predicated region
          $region64: #{basic_transformer_block.7} parent=62 // pred_check
            _
          $region65: #{basic_transformer_block.7} parent=62 // pred_check_branch
            %611 = sbr.rel (0) target = $region67
          $region66: #{basic_transformer_block.7} parent=62 // pred_region
            // Predicated region
            $region68: #{basic_transformer_block.7} parent=66 // pred_check
              _
            $region69: #{basic_transformer_block.7} parent=66 // pred_check_branch
              %613 = sbr.rel (0) target = $region71
            $region70: #{basic_transformer_block.7} parent=66 // pred_region
              loop: start=0, step=1, limit=1
              $region72: #{basic_transformer_block.7} parent=70 // loop_pre_header
                _
              $region73: #{basic_transformer_block.7} parent=70 // loop_header
                %s615 = sphi 0, %s619
                %p616 = scmp.ge.s32.totalorder %s615, 1
                %s620 = sphi %s609, %s609
                %s621 = sphi %s606, %s606
              $region74: #{basic_transformer_block.7} parent=70 // loop_header_branch
                %618 = sbr.rel (%p616) target = $region78
              $region75: #{basic_transformer_block.7} parent=70 // loop_body
                %v622 = vld [vmem:[%s620] sm:$0xff]
                %623 = vst [vmem:[%s621] sm:$0xff] %v622
                %v624 = vld [vmem:[%s620 + $0x8] sm:$0xff]
                %625 = vst [vmem:[%s621 + $0x8] sm:$0xff] %v624
                %v626 = vld [vmem:[%s620 + $0x10] sm:$0xff]
                %627 = vst [vmem:[%s621 + $0x10] sm:$0xff] %v626
                %v628 = vld [vmem:[%s620 + $0x18] sm:$0xff]
                %629 = vst [vmem:[%s621 + $0x18] sm:$0xff] %v628
                %v630 = vld [vmem:[%s620 + $0x40] sm:$0xff]
                %631 = vst [vmem:[%s621 + $0x20] sm:$0xff] %v630
                %v632 = vld [vmem:[%s620 + $0x48] sm:$0xff]
                %633 = vst [vmem:[%s621 + $0x28] sm:$0xff] %v632
                %v634 = vld [vmem:[%s620 + $0x50] sm:$0xff]
                %635 = vst [vmem:[%s621 + $0x30] sm:$0xff] %v634
                %v636 = vld [vmem:[%s620 + $0x58] sm:$0xff]
                %637 = vst [vmem:[%s621 + $0x38] sm:$0xff] %v636
                %v638 = vld [vmem:[%s620 + $0x80] sm:$0xff]
                %639 = vst [vmem:[%s621 + $0x40] sm:$0xff] %v638
                %v640 = vld [vmem:[%s620 + $0x88] sm:$0xff]
                %641 = vst [vmem:[%s621 + $0x48] sm:$0xff] %v640
                %v642 = vld [vmem:[%s620 + $0x90] sm:$0xff]
                %643 = vst [vmem:[%s621 + $0x50] sm:$0xff] %v642
                %v644 = vld [vmem:[%s620 + $0x98] sm:$0xff]
                %645 = vst [vmem:[%s621 + $0x58] sm:$0xff] %v644
                %v646 = vld [vmem:[%s620 + $0xc0] sm:$0xff]
                %647 = vst [vmem:[%s621 + $0x60] sm:$0xff] %v646
                %v648 = vld [vmem:[%s620 + $0xc8] sm:$0xff]
                %649 = vst [vmem:[%s621 + $0x68] sm:$0xff] %v648
                %v650 = vld [vmem:[%s620 + $0xd0] sm:$0xff]
                %651 = vst [vmem:[%s621 + $0x70] sm:$0xff] %v650
                %v652 = vld [vmem:[%s620 + $0xd8] sm:$0xff]
                %653 = vst [vmem:[%s621 + $0x78] sm:$0xff] %v652
                %v654 = vld [vmem:[%s620 + $0x100] sm:$0xff]
                %655 = vst [vmem:[%s621 + $0x80] sm:$0xff] %v654
                %v656 = vld [vmem:[%s620 + $0x108] sm:$0xff]
                %657 = vst [vmem:[%s621 + $0x88] sm:$0xff] %v656
                %v658 = vld [vmem:[%s620 + $0x110] sm:$0xff]
                %659 = vst [vmem:[%s621 + $0x90] sm:$0xff] %v658
                %v660 = vld [vmem:[%s620 + $0x118] sm:$0xff]
                %661 = vst [vmem:[%s621 + $0x98] sm:$0xff] %v660
                %v662 = vld [vmem:[%s620 + $0x140] sm:$0xff]
                %663 = vst [vmem:[%s621 + $0xa0] sm:$0xff] %v662
                %v664 = vld [vmem:[%s620 + $0x148] sm:$0xff]
                %665 = vst [vmem:[%s621 + $0xa8] sm:$0xff] %v664
                %v666 = vld [vmem:[%s620 + $0x150] sm:$0xff]
                %667 = vst [vmem:[%s621 + $0xb0] sm:$0xff] %v666
                %v668 = vld [vmem:[%s620 + $0x158] sm:$0xff]
                %669 = vst [vmem:[%s621 + $0xb8] sm:$0xff] %v668
                %v670 = vld [vmem:[%s620 + $0x180] sm:$0xff]
                %671 = vst [vmem:[%s621 + $0xc0] sm:$0xff] %v670
                %v672 = vld [vmem:[%s620 + $0x188] sm:$0xff]
                %673 = vst [vmem:[%s621 + $0xc8] sm:$0xff] %v672
                %v674 = vld [vmem:[%s620 + $0x190] sm:$0xff]
                %675 = vst [vmem:[%s621 + $0xd0] sm:$0xff] %v674
                %v676 = vld [vmem:[%s620 + $0x198] sm:$0xff]
                %677 = vst [vmem:[%s621 + $0xd8] sm:$0xff] %v676
                %v678 = vld [vmem:[%s620 + $0x1c0] sm:$0xff]
                %679 = vst [vmem:[%s621 + $0xe0] sm:$0xff] %v678
                %v680 = vld [vmem:[%s620 + $0x1c8] sm:$0xff]
                %681 = vst [vmem:[%s621 + $0xe8] sm:$0xff] %v680
                %v682 = vld [vmem:[%s620 + $0x1d0] sm:$0xff]
                %683 = vst [vmem:[%s621 + $0xf0] sm:$0xff] %v682
                %v684 = vld [vmem:[%s620 + $0x1d8] sm:$0xff]
                %685 = vst [vmem:[%s621 + $0xf8] sm:$0xff] %v684
                %v686 = vld [vmem:[%s620 + $0x200] sm:$0xff]
                %687 = vst [vmem:[%s621 + $0x100] sm:$0xff] %v686
                %v688 = vld [vmem:[%s620 + $0x208] sm:$0xff]
                %689 = vst [vmem:[%s621 + $0x108] sm:$0xff] %v688
                %v690 = vld [vmem:[%s620 + $0x210] sm:$0xff]
                %691 = vst [vmem:[%s621 + $0x110] sm:$0xff] %v690
                %v692 = vld [vmem:[%s620 + $0x218] sm:$0xff]
                %693 = vst [vmem:[%s621 + $0x118] sm:$0xff] %v692
                %v694 = vld [vmem:[%s620 + $0x240] sm:$0xff]
                %695 = vst [vmem:[%s621 + $0x120] sm:$0xff] %v694
                %v696 = vld [vmem:[%s620 + $0x248] sm:$0xff]
                %697 = vst [vmem:[%s621 + $0x128] sm:$0xff] %v696
                %v698 = vld [vmem:[%s620 + $0x250] sm:$0xff]
                %699 = vst [vmem:[%s621 + $0x130] sm:$0xff] %v698
                %v700 = vld [vmem:[%s620 + $0x258] sm:$0xff]
                %701 = vst [vmem:[%s621 + $0x138] sm:$0xff] %v700
                %v702 = vld [vmem:[%s620 + $0x280] sm:$0xff]
                %703 = vst [vmem:[%s621 + $0x140] sm:$0xff] %v702
                %v704 = vld [vmem:[%s620 + $0x288] sm:$0xff]
                %705 = vst [vmem:[%s621 + $0x148] sm:$0xff] %v704
                %v706 = vld [vmem:[%s620 + $0x290] sm:$0xff]
                %707 = vst [vmem:[%s621 + $0x150] sm:$0xff] %v706
                %v708 = vld [vmem:[%s620 + $0x298] sm:$0xff]
                %709 = vst [vmem:[%s621 + $0x158] sm:$0xff] %v708
                %v710 = vld [vmem:[%s620 + $0x2c0] sm:$0xff]
                %711 = vst [vmem:[%s621 + $0x160] sm:$0xff] %v710
                %v712 = vld [vmem:[%s620 + $0x2c8] sm:$0xff]
                %713 = vst [vmem:[%s621 + $0x168] sm:$0xff] %v712
                %v714 = vld [vmem:[%s620 + $0x2d0] sm:$0xff]
                %715 = vst [vmem:[%s621 + $0x170] sm:$0xff] %v714
                %v716 = vld [vmem:[%s620 + $0x2d8] sm:$0xff]
                %717 = vst [vmem:[%s621 + $0x178] sm:$0xff] %v716
                %v718 = vld [vmem:[%s620 + $0x300] sm:$0xff]
                %719 = vst [vmem:[%s621 + $0x180] sm:$0xff] %v718
                %v720 = vld [vmem:[%s620 + $0x308] sm:$0xff]
                %721 = vst [vmem:[%s621 + $0x188] sm:$0xff] %v720
                %v722 = vld [vmem:[%s620 + $0x310] sm:$0xff]
                %723 = vst [vmem:[%s621 + $0x190] sm:$0xff] %v722
                %v724 = vld [vmem:[%s620 + $0x318] sm:$0xff]
                %725 = vst [vmem:[%s621 + $0x198] sm:$0xff] %v724
                %v726 = vld [vmem:[%s620 + $0x340] sm:$0xff]
                %727 = vst [vmem:[%s621 + $0x1a0] sm:$0xff] %v726
                %v728 = vld [vmem:[%s620 + $0x348] sm:$0xff]
                %729 = vst [vmem:[%s621 + $0x1a8] sm:$0xff] %v728
                %v730 = vld [vmem:[%s620 + $0x350] sm:$0xff]
                %731 = vst [vmem:[%s621 + $0x1b0] sm:$0xff] %v730
                %v732 = vld [vmem:[%s620 + $0x358] sm:$0xff]
                %733 = vst [vmem:[%s621 + $0x1b8] sm:$0xff] %v732
                %v734 = vld [vmem:[%s620 + $0x380] sm:$0xff]
                %735 = vst [vmem:[%s621 + $0x1c0] sm:$0xff] %v734
                %v736 = vld [vmem:[%s620 + $0x388] sm:$0xff]
                %737 = vst [vmem:[%s621 + $0x1c8] sm:$0xff] %v736
                %v738 = vld [vmem:[%s620 + $0x390] sm:$0xff]
                %739 = vst [vmem:[%s621 + $0x1d0] sm:$0xff] %v738
                %v740 = vld [vmem:[%s620 + $0x398] sm:$0xff]
                %741 = vst [vmem:[%s621 + $0x1d8] sm:$0xff] %v740
                %v742 = vld [vmem:[%s620 + $0x3c0] sm:$0xff]
                %743 = vst [vmem:[%s621 + $0x1e0] sm:$0xff] %v742
                %v744 = vld [vmem:[%s620 + $0x3c8] sm:$0xff]
                %745 = vst [vmem:[%s621 + $0x1e8] sm:$0xff] %v744
                %v746 = vld [vmem:[%s620 + $0x3d0] sm:$0xff]
                %747 = vst [vmem:[%s621 + $0x1f0] sm:$0xff] %v746
                %v748 = vld [vmem:[%s620 + $0x3d8] sm:$0xff]
                %749 = vst [vmem:[%s621 + $0x1f8] sm:$0xff] %v748
                %v750 = vld [vmem:[%s620 + $0x400] sm:$0xff]
                %751 = vst [vmem:[%s621 + $0x200] sm:$0xff] %v750
                %v752 = vld [vmem:[%s620 + $0x408] sm:$0xff]
                %753 = vst [vmem:[%s621 + $0x208] sm:$0xff] %v752
                %v754 = vld [vmem:[%s620 + $0x410] sm:$0xff]
                %755 = vst [vmem:[%s621 + $0x210] sm:$0xff] %v754
                %v756 = vld [vmem:[%s620 + $0x418] sm:$0xff]
                %757 = vst [vmem:[%s621 + $0x218] sm:$0xff] %v756
                %v758 = vld [vmem:[%s620 + $0x440] sm:$0xff]
                %759 = vst [vmem:[%s621 + $0x220] sm:$0xff] %v758
                %v760 = vld [vmem:[%s620 + $0x448] sm:$0xff]
                %761 = vst [vmem:[%s621 + $0x228] sm:$0xff] %v760
                %v762 = vld [vmem:[%s620 + $0x450] sm:$0xff]
                %763 = vst [vmem:[%s621 + $0x230] sm:$0xff] %v762
                %v764 = vld [vmem:[%s620 + $0x458] sm:$0xff]
                %765 = vst [vmem:[%s621 + $0x238] sm:$0xff] %v764
                %v766 = vld [vmem:[%s620 + $0x480] sm:$0xff]
                %767 = vst [vmem:[%s621 + $0x240] sm:$0xff] %v766
                %v768 = vld [vmem:[%s620 + $0x488] sm:$0xff]
                %769 = vst [vmem:[%s621 + $0x248] sm:$0xff] %v768
                %v770 = vld [vmem:[%s620 + $0x490] sm:$0xff]
                %771 = vst [vmem:[%s621 + $0x250] sm:$0xff] %v770
                %v772 = vld [vmem:[%s620 + $0x498] sm:$0xff]
                %773 = vst [vmem:[%s621 + $0x258] sm:$0xff] %v772
                %v774 = vld [vmem:[%s620 + $0x4c0] sm:$0xff]
                %775 = vst [vmem:[%s621 + $0x260] sm:$0xff] %v774
                %v776 = vld [vmem:[%s620 + $0x4c8] sm:$0xff]
                %777 = vst [vmem:[%s621 + $0x268] sm:$0xff] %v776
                %v778 = vld [vmem:[%s620 + $0x4d0] sm:$0xff]
                %779 = vst [vmem:[%s621 + $0x270] sm:$0xff] %v778
                %v780 = vld [vmem:[%s620 + $0x4d8] sm:$0xff]
                %781 = vst [vmem:[%s621 + $0x278] sm:$0xff] %v780
                %v782 = vld [vmem:[%s620 + $0x500] sm:$0xff]
                %783 = vst [vmem:[%s621 + $0x280] sm:$0xff] %v782
                %v784 = vld [vmem:[%s620 + $0x508] sm:$0xff]
                %785 = vst [vmem:[%s621 + $0x288] sm:$0xff] %v784
                %v786 = vld [vmem:[%s620 + $0x510] sm:$0xff]
                %787 = vst [vmem:[%s621 + $0x290] sm:$0xff] %v786
                %v788 = vld [vmem:[%s620 + $0x518] sm:$0xff]
                %789 = vst [vmem:[%s621 + $0x298] sm:$0xff] %v788
                %v790 = vld [vmem:[%s620 + $0x540] sm:$0xff]
                %791 = vst [vmem:[%s621 + $0x2a0] sm:$0xff] %v790
                %v792 = vld [vmem:[%s620 + $0x548] sm:$0xff]
                %793 = vst [vmem:[%s621 + $0x2a8] sm:$0xff] %v792
                %v794 = vld [vmem:[%s620 + $0x550] sm:$0xff]
                %795 = vst [vmem:[%s621 + $0x2b0] sm:$0xff] %v794
                %v796 = vld [vmem:[%s620 + $0x558] sm:$0xff]
                %797 = vst [vmem:[%s621 + $0x2b8] sm:$0xff] %v796
                %v798 = vld [vmem:[%s620 + $0x580] sm:$0xff]
                %799 = vst [vmem:[%s621 + $0x2c0] sm:$0xff] %v798
                %v800 = vld [vmem:[%s620 + $0x588] sm:$0xff]
                %801 = vst [vmem:[%s621 + $0x2c8] sm:$0xff] %v800
                %v802 = vld [vmem:[%s620 + $0x590] sm:$0xff]
                %803 = vst [vmem:[%s621 + $0x2d0] sm:$0xff] %v802
                %v804 = vld [vmem:[%s620 + $0x598] sm:$0xff]
                %805 = vst [vmem:[%s621 + $0x2d8] sm:$0xff] %v804
                %v806 = vld [vmem:[%s620 + $0x5c0] sm:$0xff]
                %807 = vst [vmem:[%s621 + $0x2e0] sm:$0xff] %v806
                %v808 = vld [vmem:[%s620 + $0x5c8] sm:$0xff]
                %809 = vst [vmem:[%s621 + $0x2e8] sm:$0xff] %v808
                %v810 = vld [vmem:[%s620 + $0x5d0] sm:$0xff]
                %811 = vst [vmem:[%s621 + $0x2f0] sm:$0xff] %v810
                %v812 = vld [vmem:[%s620 + $0x5d8] sm:$0xff]
                %813 = vst [vmem:[%s621 + $0x2f8] sm:$0xff] %v812
                %v814 = vld [vmem:[%s620 + $0x600] sm:$0xff]
                %815 = vst [vmem:[%s621 + $0x300] sm:$0xff] %v814
                %v816 = vld [vmem:[%s620 + $0x608] sm:$0xff]
                %817 = vst [vmem:[%s621 + $0x308] sm:$0xff] %v816
                %v818 = vld [vmem:[%s620 + $0x610] sm:$0xff]
                %819 = vst [vmem:[%s621 + $0x310] sm:$0xff] %v818
                %v820 = vld [vmem:[%s620 + $0x618] sm:$0xff]
                %821 = vst [vmem:[%s621 + $0x318] sm:$0xff] %v820
                %v822 = vld [vmem:[%s620 + $0x640] sm:$0xff]
                %823 = vst [vmem:[%s621 + $0x320] sm:$0xff] %v822
                %v824 = vld [vmem:[%s620 + $0x648] sm:$0xff]
                %825 = vst [vmem:[%s621 + $0x328] sm:$0xff] %v824
                %v826 = vld [vmem:[%s620 + $0x650] sm:$0xff]
                %827 = vst [vmem:[%s621 + $0x330] sm:$0xff] %v826
                %v828 = vld [vmem:[%s620 + $0x658] sm:$0xff]
                %829 = vst [vmem:[%s621 + $0x338] sm:$0xff] %v828
                %v830 = vld [vmem:[%s620 + $0x680] sm:$0xff]
                %831 = vst [vmem:[%s621 + $0x340] sm:$0xff] %v830
                %v832 = vld [vmem:[%s620 + $0x688] sm:$0xff]
                %833 = vst [vmem:[%s621 + $0x348] sm:$0xff] %v832
                %v834 = vld [vmem:[%s620 + $0x690] sm:$0xff]
                %835 = vst [vmem:[%s621 + $0x350] sm:$0xff] %v834
                %v836 = vld [vmem:[%s620 + $0x698] sm:$0xff]
                %837 = vst [vmem:[%s621 + $0x358] sm:$0xff] %v836
                %v838 = vld [vmem:[%s620 + $0x6c0] sm:$0xff]
                %839 = vst [vmem:[%s621 + $0x360] sm:$0xff] %v838
                %v840 = vld [vmem:[%s620 + $0x6c8] sm:$0xff]
                %841 = vst [vmem:[%s621 + $0x368] sm:$0xff] %v840
                %v842 = vld [vmem:[%s620 + $0x6d0] sm:$0xff]
                %843 = vst [vmem:[%s621 + $0x370] sm:$0xff] %v842
                %v844 = vld [vmem:[%s620 + $0x6d8] sm:$0xff]
                %845 = vst [vmem:[%s621 + $0x378] sm:$0xff] %v844
                %v846 = vld [vmem:[%s620 + $0x700] sm:$0xff]
                %847 = vst [vmem:[%s621 + $0x380] sm:$0xff] %v846
                %v848 = vld [vmem:[%s620 + $0x708] sm:$0xff]
                %849 = vst [vmem:[%s621 + $0x388] sm:$0xff] %v848
                %v850 = vld [vmem:[%s620 + $0x710] sm:$0xff]
                %851 = vst [vmem:[%s621 + $0x390] sm:$0xff] %v850
                %v852 = vld [vmem:[%s620 + $0x718] sm:$0xff]
                %853 = vst [vmem:[%s621 + $0x398] sm:$0xff] %v852
                %v854 = vld [vmem:[%s620 + $0x740] sm:$0xff]
                %855 = vst [vmem:[%s621 + $0x3a0] sm:$0xff] %v854
                %v856 = vld [vmem:[%s620 + $0x748] sm:$0xff]
                %857 = vst [vmem:[%s621 + $0x3a8] sm:$0xff] %v856
                %v858 = vld [vmem:[%s620 + $0x750] sm:$0xff]
                %859 = vst [vmem:[%s621 + $0x3b0] sm:$0xff] %v858
                %v860 = vld [vmem:[%s620 + $0x758] sm:$0xff]
                %861 = vst [vmem:[%s621 + $0x3b8] sm:$0xff] %v860
                %v862 = vld [vmem:[%s620 + $0x780] sm:$0xff]
                %863 = vst [vmem:[%s621 + $0x3c0] sm:$0xff] %v862
                %v864 = vld [vmem:[%s620 + $0x788] sm:$0xff]
                %865 = vst [vmem:[%s621 + $0x3c8] sm:$0xff] %v864
                %v866 = vld [vmem:[%s620 + $0x790] sm:$0xff]
                %867 = vst [vmem:[%s621 + $0x3d0] sm:$0xff] %v866
                %v868 = vld [vmem:[%s620 + $0x798] sm:$0xff]
                %869 = vst [vmem:[%s621 + $0x3d8] sm:$0xff] %v868
                %v870 = vld [vmem:[%s620 + $0x7c0] sm:$0xff]
                %871 = vst [vmem:[%s621 + $0x3e0] sm:$0xff] %v870
                %v872 = vld [vmem:[%s620 + $0x7c8] sm:$0xff]
                %873 = vst [vmem:[%s621 + $0x3e8] sm:$0xff] %v872
                %v874 = vld [vmem:[%s620 + $0x7d0] sm:$0xff]
                %875 = vst [vmem:[%s621 + $0x3f0] sm:$0xff] %v874
                %v876 = vld [vmem:[%s620 + $0x7d8] sm:$0xff]
                %877 = vst [vmem:[%s621 + $0x3f8] sm:$0xff] %v876
              $region76: #{basic_transformer_block.7} parent=70 // loop_footer
                %s619 = sadd.s32 1, %s615
              $region77: #{basic_transformer_block.7} parent=70 // loop_footer_branch
                %614 = sbr.rel target = $region73
              $region78: #{basic_transformer_block.7} parent=70 // loop_exit
                _
            $region71: #{basic_transformer_block.7} parent=66 // pred_fallthru
              _
            // Predicated region
            $region79: #{basic_transformer_block.7} parent=66 // pred_check
              _
            $region80: #{basic_transformer_block.7} parent=66 // pred_check_branch
              %879 = sbr.rel target = $region82
            $region81: #{basic_transformer_block.7} parent=66 // pred_region
              _
            $region82: #{basic_transformer_block.7} parent=66 // pred_fallthru
              _
          $region67: #{basic_transformer_block.7} parent=62 // pred_fallthru
            _
          %880 = vnop
        $region63: #{basic_transformer_block.7} parent=31 // pred_fallthru
          _
        // Predicated region
        $region83: #{basic_transformer_block.7} parent=31 // pred_check
          %p881 = pneg %p194
        $region84: #{basic_transformer_block.7} parent=31 // pred_check_branch
          %883 = sbr.rel (%p881) target = $region86
        $region85: #{basic_transformer_block.7} parent=31 // pred_region
          %s884 = smul.u32 4, %s24
          %p885 = scmp.lt.s32.totalorder %s884, 7
          %s886 = scalar_select %p885, %s884, 7
          %s887 = scalar_lea.vmem %s6, %s886
          %s888 = smul.u32 4, %s24
        $region86: #{basic_transformer_block.7} parent=31 // pred_fallthru
          _
        // Predicated region
        $region87: #{basic_transformer_block.7} parent=31 // pred_check
          %p889 = pneg %p220
        $region88: #{basic_transformer_block.7} parent=31 // pred_check_branch
          %891 = sbr.rel (%p889) target = $region90
        $region89: #{basic_transformer_block.7} parent=31 // pred_region
          %s892 = smul.u32 64, %s24
          %p893 = scmp.lt.s32.totalorder %s892, 127
          %s894 = scalar_select %p893, %s892, 127
          %s895 = smul.addr %s894, 2
          %s896 = smul.addr %s895, 8
          %s897 = scalar_lea.vmem %s7, %s896
          %s898 = smul.u32 64, %s24
        $region90: #{basic_transformer_block.7} parent=31 // pred_fallthru
          _
      $region32: #{basic_transformer_block.7} parent=5 // pred_fallthru
        _
      %p899 = scmp.le.s32.totalorder 1, %s16
      %p900 = scmp.lt.s32.totalorder %s16, 3
      %p901 = pnand %p899, %p900
      %p902 = pneg %p901
      // Predicated region
      $region91: #{basic_transformer_block.7} parent=5 // pred_check
        _
      $region92: #{basic_transformer_block.7} parent=5 // pred_check_branch
        %904 = sbr.rel (%p901) target = $region94
      $region93: #{basic_transformer_block.7} parent=5 // pred_region
        %s905 = ssub.s32 %s16, 1
        %s906 = sand.u32 %s109, 1
        %s907 = sand.u32 %s109, 1
        %s908 = smul.addr %s907, 1024
        %s909 = scalar_lea.vmem [#allocation3], %s908
        // Predicated region
        $region95: #{basic_transformer_block.7} parent=93 // pred_check
          %p910 = pneg %p122
        $region96: #{basic_transformer_block.7} parent=93 // pred_check_branch
          %912 = sbr.rel (%p910) target = $region98
        $region97: #{basic_transformer_block.7} parent=93 // pred_region
          _
        $region98: #{basic_transformer_block.7} parent=93 // pred_fallthru
          _
        %s913 = sand.u32 %s161, 1
        %s914 = sand.u32 %s161, 1
        %s915 = smul.addr %s914, 1024
        %s916 = scalar_lea.vmem [#allocation4], %s915
        // Predicated region
        $region99: #{basic_transformer_block.7} parent=93 // pred_check
          %p917 = pneg %p174
        $region100: #{basic_transformer_block.7} parent=93 // pred_check_branch
          %919 = sbr.rel (%p917) target = $region102
        $region101: #{basic_transformer_block.7} parent=93 // pred_region
          _
        $region102: #{basic_transformer_block.7} parent=93 // pred_fallthru
          _
        %s920 = smul.u32 16, %s25
        %p921 = scmp.lt.s32.totalorder %s920, 15
        %s922 = scalar_select %p921, %s920, 15
        %s923 = smul.addr %s922, 2
        %s924 = smul.addr %s923, 8
        %s925 = scalar_lea.vmem %s0, %s924
        %p926 = pneg %p54
        %p927 = pneg %p51
        %p928 = pneg %p75
        %p929 = pneg %p72
        %p930 = pneg %p96
        %p931 = pneg %p93
        %s932 = sand.u32 %s109, 1
        %s933 = sand.u32 %s109, 1
        %s934 = smul.addr %s933, 1024
        %s935 = scalar_lea.vmem [#allocation3], %s934
        %p936 = pneg %p122
        %p937 = pneg %p119
        %s938 = smul.u32 4, %s26
        %p939 = scmp.lt.s32.totalorder %s938, 7
        %s940 = scalar_select %p939, %s938, 7
        %s941 = scalar_lea.vmem %s4, %s940
        %p942 = pneg %p148
        %p943 = pneg %p145
        %s944 = sand.u32 %s161, 1
        %s945 = sand.u32 %s161, 1
        %s946 = smul.addr %s945, 1024
        %s947 = scalar_lea.vmem [#allocation4], %s946
        %p948 = pneg %p174
        %p949 = pneg %p171
        %s950 = smul.u32 4, %s26
        %p951 = scmp.lt.s32.totalorder %s950, 7
        %s952 = scalar_select %p951, %s950, 7
        %s953 = scalar_lea.vmem %s6, %s952
        %p954 = pneg %p200
        %p955 = pneg %p197
        %s956 = smul.u32 64, %s26
        %p957 = scmp.lt.s32.totalorder %s956, 127
        %s958 = scalar_select %p957, %s956, 127
        %s959 = smul.addr %s958, 2
        %s960 = smul.addr %s959, 8
        %s961 = scalar_lea.vmem %s7, %s960
        %p962 = pneg %p226
        %p963 = pneg %p223
        %p964 = pneg %p247
        %p965 = pneg %p244
        %p966 = pneg %p273
        %p967 = pneg %p270
        %s968 = smul.u32 16, %s25
        %p969 = scmp.lt.s32.totalorder %s968, 15
        %s970 = scalar_select %p969, %s968, 15
        %s971 = smul.addr %s970, 2
        %s972 = smul.addr %s971, 8
        %s973 = scalar_lea.vmem %s0, %s972
        %s974 = smul.u32 16, %s25
        %s975 = smul.u32 4, %s26
        %s976 = smul.u32 4, %s26
        %p977 = scmp.lt.s32.totalorder %s976, 7
        %s978 = scalar_select %p977, %s976, 7
        %s979 = scalar_lea.vmem %s4, %s978
        %s980 = smul.u32 4, %s26
        %s981 = smul.u32 4, %s26
        %s982 = smul.u32 4, %s26
        %p983 = scmp.lt.s32.totalorder %s982, 7
        %s984 = scalar_select %p983, %s982, 7
        %s985 = scalar_lea.vmem %s6, %s984
        %s986 = smul.u32 4, %s26
        %s987 = smul.u32 64, %s26
        %p988 = scmp.lt.s32.totalorder %s987, 127
        %s989 = scalar_select %p988, %s987, 127
        %s990 = smul.addr %s989, 2
        %s991 = smul.addr %s990, 8
        %s992 = scalar_lea.vmem %s7, %s991
        %s993 = smul.u32 64, %s26
        %s994 = smul.u32 16, %s25
        %v995 = vld [vmem:[%s973] sm:$0xff]
        %v996 = vld [vmem:[%s973 + $0x8] sm:$0xff]
        %v997 = vld [vmem:[%s973 + $0x10] sm:$0xff]
        %v998 = vld [vmem:[%s973 + $0x18] sm:$0xff]
        %v999 = vld [vmem:[%s973 + $0x20] sm:$0xff]
        %v1000 = vld [vmem:[%s973 + $0x28] sm:$0xff]
        %v1001 = vld [vmem:[%s973 + $0x30] sm:$0xff]
        %v1002 = vld [vmem:[%s973 + $0x38] sm:$0xff]
        %v1003 = vld [vmem:[%s973 + $0x40] sm:$0xff]
        %v1004 = vld [vmem:[%s973 + $0x48] sm:$0xff]
        %v1005 = vld [vmem:[%s973 + $0x50] sm:$0xff]
        %v1006 = vld [vmem:[%s973 + $0x58] sm:$0xff]
        %v1007 = vld [vmem:[%s973 + $0x60] sm:$0xff]
        %v1008 = vld [vmem:[%s973 + $0x68] sm:$0xff]
        %v1009 = vld [vmem:[%s973 + $0x70] sm:$0xff]
        %v1010 = vld [vmem:[%s973 + $0x78] sm:$0xff]
        %v1011 = vld [vmem:[%s973 + $0x80] sm:$0xff]
        %v1012 = vld [vmem:[%s973 + $0x88] sm:$0xff]
        %v1013 = vld [vmem:[%s973 + $0x90] sm:$0xff]
        %v1014 = vld [vmem:[%s973 + $0x98] sm:$0xff]
        %v1015 = vld [vmem:[%s973 + $0xa0] sm:$0xff]
        %v1016 = vld [vmem:[%s973 + $0xa8] sm:$0xff]
        %v1017 = vld [vmem:[%s973 + $0xb0] sm:$0xff]
        %v1018 = vld [vmem:[%s973 + $0xb8] sm:$0xff]
        %v1019 = vld [vmem:[%s973 + $0xc0] sm:$0xff]
        %v1020 = vld [vmem:[%s973 + $0xc8] sm:$0xff]
        %v1021 = vld [vmem:[%s973 + $0xd0] sm:$0xff]
        %v1022 = vld [vmem:[%s973 + $0xd8] sm:$0xff]
        %v1023 = vld [vmem:[%s973 + $0xe0] sm:$0xff]
        %v1024 = vld [vmem:[%s973 + $0xe8] sm:$0xff]
        %v1025 = vld [vmem:[%s973 + $0xf0] sm:$0xff]
        %v1026 = vld [vmem:[%s973 + $0xf8] sm:$0xff]
        %v1027 = vadd.f32 %v995, %v996
        %1028 = vadd.xlane.f32.xlu0 %v1027
        %v1029 = vpop.xlane.xlu0 %1028
        %v1030 = vadd.f32 %v997, %v998
        %1031 = vadd.xlane.f32.xlu0 %v1030
        %v1032 = vpop.xlane.xlu0 %1031
        %v1033 = vadd.f32 %v999, %v1000
        %1034 = vadd.xlane.f32.xlu0 %v1033
        %v1035 = vpop.xlane.xlu0 %1034
        %v1036 = vadd.f32 %v1001, %v1002
        %1037 = vadd.xlane.f32.xlu0 %v1036
        %v1038 = vpop.xlane.xlu0 %1037
        %v1039 = vadd.f32 %v1003, %v1004
        %1040 = vadd.xlane.f32.xlu0 %v1039
        %v1041 = vpop.xlane.xlu0 %1040
        %v1042 = vadd.f32 %v1005, %v1006
        %1043 = vadd.xlane.f32.xlu0 %v1042
        %v1044 = vpop.xlane.xlu0 %1043
        %v1045 = vadd.f32 %v1007, %v1008
        %1046 = vadd.xlane.f32.xlu0 %v1045
        %v1047 = vpop.xlane.xlu0 %1046
        %v1048 = vadd.f32 %v1009, %v1010
        %1049 = vadd.xlane.f32.xlu0 %v1048
        %v1050 = vpop.xlane.xlu0 %1049
        %v1051 = vadd.f32 %v1011, %v1012
        %1052 = vadd.xlane.f32.xlu0 %v1051
        %v1053 = vpop.xlane.xlu0 %1052
        %v1054 = vadd.f32 %v1013, %v1014
        %1055 = vadd.xlane.f32.xlu0 %v1054
        %v1056 = vpop.xlane.xlu0 %1055
        %v1057 = vadd.f32 %v1015, %v1016
        %1058 = vadd.xlane.f32.xlu0 %v1057
        %v1059 = vpop.xlane.xlu0 %1058
        %v1060 = vadd.f32 %v1017, %v1018
        %1061 = vadd.xlane.f32.xlu0 %v1060
        %v1062 = vpop.xlane.xlu0 %1061
        %v1063 = vadd.f32 %v1019, %v1020
        %1064 = vadd.xlane.f32.xlu0 %v1063
        %v1065 = vpop.xlane.xlu0 %1064
        %v1066 = vadd.f32 %v1021, %v1022
        %1067 = vadd.xlane.f32.xlu0 %v1066
        %v1068 = vpop.xlane.xlu0 %1067
        %v1069 = vadd.f32 %v1023, %v1024
        %1070 = vadd.xlane.f32.xlu0 %v1069
        %v1071 = vpop.xlane.xlu0 %1070
        %v1072 = vadd.f32 %v1025, %v1026
        %1073 = vadd.xlane.f32.xlu0 %v1072
        %v1074 = vpop.xlane.xlu0 %1073
        %v1075 = vrcp.pop 256.0
        %v1076 = vmul.f32 %v1029, %v1075
        %v1077 = vmul.f32 %v1032, %v1075
        %v1078 = vmul.f32 %v1035, %v1075
        %v1079 = vmul.f32 %v1038, %v1075
        %v1080 = vmul.f32 %v1041, %v1075
        %v1081 = vmul.f32 %v1044, %v1075
        %v1082 = vmul.f32 %v1047, %v1075
        %v1083 = vmul.f32 %v1050, %v1075
        %v1084 = vmul.f32 %v1053, %v1075
        %v1085 = vmul.f32 %v1056, %v1075
        %v1086 = vmul.f32 %v1059, %v1075
        %v1087 = vmul.f32 %v1062, %v1075
        %v1088 = vmul.f32 %v1065, %v1075
        %v1089 = vmul.f32 %v1068, %v1075
        %v1090 = vmul.f32 %v1071, %v1075
        %v1091 = vmul.f32 %v1074, %v1075
        %v1092 = vsub.f32 %v995, %v1076
        %v1093 = vsub.f32 %v996, %v1076
        %v1094 = vsub.f32 %v997, %v1077
        %v1095 = vsub.f32 %v998, %v1077
        %v1096 = vsub.f32 %v999, %v1078
        %v1097 = vsub.f32 %v1000, %v1078
        %v1098 = vsub.f32 %v1001, %v1079
        %v1099 = vsub.f32 %v1002, %v1079
        %v1100 = vsub.f32 %v1003, %v1080
        %v1101 = vsub.f32 %v1004, %v1080
        %v1102 = vsub.f32 %v1005, %v1081
        %v1103 = vsub.f32 %v1006, %v1081
        %v1104 = vsub.f32 %v1007, %v1082
        %v1105 = vsub.f32 %v1008, %v1082
        %v1106 = vsub.f32 %v1009, %v1083
        %v1107 = vsub.f32 %v1010, %v1083
        %v1108 = vsub.f32 %v1011, %v1084
        %v1109 = vsub.f32 %v1012, %v1084
        %v1110 = vsub.f32 %v1013, %v1085
        %v1111 = vsub.f32 %v1014, %v1085
        %v1112 = vsub.f32 %v1015, %v1086
        %v1113 = vsub.f32 %v1016, %v1086
        %v1114 = vsub.f32 %v1017, %v1087
        %v1115 = vsub.f32 %v1018, %v1087
        %v1116 = vsub.f32 %v1019, %v1088
        %v1117 = vsub.f32 %v1020, %v1088
        %v1118 = vsub.f32 %v1021, %v1089
        %v1119 = vsub.f32 %v1022, %v1089
        %v1120 = vsub.f32 %v1023, %v1090
        %v1121 = vsub.f32 %v1024, %v1090
        %v1122 = vsub.f32 %v1025, %v1091
        %v1123 = vsub.f32 %v1026, %v1091
        %v1124 = vmul.f32 %v1092, %v1092
        %v1125 = vmul.f32 %v1093, %v1093
        %v1126 = vmul.f32 %v1094, %v1094
        %v1127 = vmul.f32 %v1095, %v1095
        %v1128 = vmul.f32 %v1096, %v1096
        %v1129 = vmul.f32 %v1097, %v1097
        %v1130 = vmul.f32 %v1098, %v1098
        %v1131 = vmul.f32 %v1099, %v1099
        %v1132 = vmul.f32 %v1100, %v1100
        %v1133 = vmul.f32 %v1101, %v1101
        %v1134 = vmul.f32 %v1102, %v1102
        %v1135 = vmul.f32 %v1103, %v1103
        %v1136 = vmul.f32 %v1104, %v1104
        %v1137 = vmul.f32 %v1105, %v1105
        %v1138 = vmul.f32 %v1106, %v1106
        %v1139 = vmul.f32 %v1107, %v1107
        %v1140 = vmul.f32 %v1108, %v1108
        %v1141 = vmul.f32 %v1109, %v1109
        %v1142 = vmul.f32 %v1110, %v1110
        %v1143 = vmul.f32 %v1111, %v1111
        %v1144 = vmul.f32 %v1112, %v1112
        %v1145 = vmul.f32 %v1113, %v1113
        %v1146 = vmul.f32 %v1114, %v1114
        %v1147 = vmul.f32 %v1115, %v1115
        %v1148 = vmul.f32 %v1116, %v1116
        %v1149 = vmul.f32 %v1117, %v1117
        %v1150 = vmul.f32 %v1118, %v1118
        %v1151 = vmul.f32 %v1119, %v1119
        %v1152 = vmul.f32 %v1120, %v1120
        %v1153 = vmul.f32 %v1121, %v1121
        %v1154 = vmul.f32 %v1122, %v1122
        %v1155 = vmul.f32 %v1123, %v1123
        %v1156 = vadd.f32 %v1124, %v1125
        %1157 = vadd.xlane.f32.xlu0 %v1156
        %v1158 = vpop.xlane.xlu0 %1157
        %v1159 = vadd.f32 %v1126, %v1127
        %1160 = vadd.xlane.f32.xlu0 %v1159
        %v1161 = vpop.xlane.xlu0 %1160
        %v1162 = vadd.f32 %v1128, %v1129
        %1163 = vadd.xlane.f32.xlu0 %v1162
        %v1164 = vpop.xlane.xlu0 %1163
        %v1165 = vadd.f32 %v1130, %v1131
        %1166 = vadd.xlane.f32.xlu0 %v1165
        %v1167 = vpop.xlane.xlu0 %1166
        %v1168 = vadd.f32 %v1132, %v1133
        %1169 = vadd.xlane.f32.xlu0 %v1168
        %v1170 = vpop.xlane.xlu0 %1169
        %v1171 = vadd.f32 %v1134, %v1135
        %1172 = vadd.xlane.f32.xlu0 %v1171
        %v1173 = vpop.xlane.xlu0 %1172
        %v1174 = vadd.f32 %v1136, %v1137
        %1175 = vadd.xlane.f32.xlu0 %v1174
        %v1176 = vpop.xlane.xlu0 %1175
        %v1177 = vadd.f32 %v1138, %v1139
        %1178 = vadd.xlane.f32.xlu0 %v1177
        %v1179 = vpop.xlane.xlu0 %1178
        %v1180 = vadd.f32 %v1140, %v1141
        %1181 = vadd.xlane.f32.xlu0 %v1180
        %v1182 = vpop.xlane.xlu0 %1181
        %v1183 = vadd.f32 %v1142, %v1143
        %1184 = vadd.xlane.f32.xlu0 %v1183
        %v1185 = vpop.xlane.xlu0 %1184
        %v1186 = vadd.f32 %v1144, %v1145
        %1187 = vadd.xlane.f32.xlu0 %v1186
        %v1188 = vpop.xlane.xlu0 %1187
        %v1189 = vadd.f32 %v1146, %v1147
        %1190 = vadd.xlane.f32.xlu0 %v1189
        %v1191 = vpop.xlane.xlu0 %1190
        %v1192 = vadd.f32 %v1148, %v1149
        %1193 = vadd.xlane.f32.xlu0 %v1192
        %v1194 = vpop.xlane.xlu0 %1193
        %v1195 = vadd.f32 %v1150, %v1151
        %1196 = vadd.xlane.f32.xlu0 %v1195
        %v1197 = vpop.xlane.xlu0 %1196
        %v1198 = vadd.f32 %v1152, %v1153
        %1199 = vadd.xlane.f32.xlu0 %v1198
        %v1200 = vpop.xlane.xlu0 %1199
        %v1201 = vadd.f32 %v1154, %v1155
        %1202 = vadd.xlane.f32.xlu0 %v1201
        %v1203 = vpop.xlane.xlu0 %1202
        %v1204 = vmul.f32 %v1158, %v1075
        %v1205 = vmul.f32 %v1161, %v1075
        %v1206 = vmul.f32 %v1164, %v1075
        %v1207 = vmul.f32 %v1167, %v1075
        %v1208 = vmul.f32 %v1170, %v1075
        %v1209 = vmul.f32 %v1173, %v1075
        %v1210 = vmul.f32 %v1176, %v1075
        %v1211 = vmul.f32 %v1179, %v1075
        %v1212 = vmul.f32 %v1182, %v1075
        %v1213 = vmul.f32 %v1185, %v1075
        %v1214 = vmul.f32 %v1188, %v1075
        %v1215 = vmul.f32 %v1191, %v1075
        %v1216 = vmul.f32 %v1194, %v1075
        %v1217 = vmul.f32 %v1197, %v1075
        %v1218 = vmul.f32 %v1200, %v1075
        %v1219 = vmul.f32 %v1203, %v1075
        %v1220 = vadd.f32 %v1204, 1e-05
        %v1221 = vadd.f32 %v1205, 1e-05
        %v1222 = vadd.f32 %v1206, 1e-05
        %v1223 = vadd.f32 %v1207, 1e-05
        %v1224 = vadd.f32 %v1208, 1e-05
        %v1225 = vadd.f32 %v1209, 1e-05
        %v1226 = vadd.f32 %v1210, 1e-05
        %v1227 = vadd.f32 %v1211, 1e-05
        %v1228 = vadd.f32 %v1212, 1e-05
        %v1229 = vadd.f32 %v1213, 1e-05
        %v1230 = vadd.f32 %v1214, 1e-05
        %v1231 = vadd.f32 %v1215, 1e-05
        %v1232 = vadd.f32 %v1216, 1e-05
        %v1233 = vadd.f32 %v1217, 1e-05
        %v1234 = vadd.f32 %v1218, 1e-05
        %v1235 = vadd.f32 %v1219, 1e-05
        %v1236 = vrsqrt.pop %v1220
        %v1237 = vrsqrt.pop %v1221
        %v1238 = vrsqrt.pop %v1222
        %v1239 = vrsqrt.pop %v1223
        %v1240 = vrsqrt.pop %v1224
        %v1241 = vrsqrt.pop %v1225
        %v1242 = vrsqrt.pop %v1226
        %v1243 = vrsqrt.pop %v1227
        %v1244 = vrsqrt.pop %v1228
        %v1245 = vrsqrt.pop %v1229
        %v1246 = vrsqrt.pop %v1230
        %v1247 = vrsqrt.pop %v1231
        %v1248 = vrsqrt.pop %v1232
        %v1249 = vrsqrt.pop %v1233
        %v1250 = vrsqrt.pop %v1234
        %v1251 = vrsqrt.pop %v1235
        %v1252 = vmul.f32 %v1092, %v1236
        %v1253 = vmul.f32 %v1093, %v1236
        %v1254 = vmul.f32 %v1094, %v1237
        %v1255 = vmul.f32 %v1095, %v1237
        %v1256 = vmul.f32 %v1096, %v1238
        %v1257 = vmul.f32 %v1097, %v1238
        %v1258 = vmul.f32 %v1098, %v1239
        %v1259 = vmul.f32 %v1099, %v1239
        %v1260 = vmul.f32 %v1100, %v1240
        %v1261 = vmul.f32 %v1101, %v1240
        %v1262 = vmul.f32 %v1102, %v1241
        %v1263 = vmul.f32 %v1103, %v1241
        %v1264 = vmul.f32 %v1104, %v1242
        %v1265 = vmul.f32 %v1105, %v1242
        %v1266 = vmul.f32 %v1106, %v1243
        %v1267 = vmul.f32 %v1107, %v1243
        %v1268 = vmul.f32 %v1108, %v1244
        %v1269 = vmul.f32 %v1109, %v1244
        %v1270 = vmul.f32 %v1110, %v1245
        %v1271 = vmul.f32 %v1111, %v1245
        %v1272 = vmul.f32 %v1112, %v1246
        %v1273 = vmul.f32 %v1113, %v1246
        %v1274 = vmul.f32 %v1114, %v1247
        %v1275 = vmul.f32 %v1115, %v1247
        %v1276 = vmul.f32 %v1116, %v1248
        %v1277 = vmul.f32 %v1117, %v1248
        %v1278 = vmul.f32 %v1118, %v1249
        %v1279 = vmul.f32 %v1119, %v1249
        %v1280 = vmul.f32 %v1120, %v1250
        %v1281 = vmul.f32 %v1121, %v1250
        %v1282 = vmul.f32 %v1122, %v1251
        %v1283 = vmul.f32 %v1123, %v1251
        %v1284 = vld [vmem:[%s1] sm:$0x3]
        %v1286 = vlaneseq
        %v1287 = vshrl.u32 %v1286, 7
        %v1288 = vsub.s32 0, %v1287
        %v1289 = vrot.slane %v1284, %v1288
        %v1290 = vlaneseq
        %v1291 = vshrl.u32 %v1290, 7
        %v1292 = vsub.s32 1, %v1291
        %v1293 = vrot.slane %v1284, %v1292
        %v1296 = vmul.f32 %v1252, %v1289
        %v1297 = vmul.f32 %v1253, %v1293
        %v1298 = vmul.f32 %v1254, %v1289
        %v1299 = vmul.f32 %v1255, %v1293
        %v1300 = vmul.f32 %v1256, %v1289
        %v1301 = vmul.f32 %v1257, %v1293
        %v1302 = vmul.f32 %v1258, %v1289
        %v1303 = vmul.f32 %v1259, %v1293
        %v1304 = vmul.f32 %v1260, %v1289
        %v1305 = vmul.f32 %v1261, %v1293
        %v1306 = vmul.f32 %v1262, %v1289
        %v1307 = vmul.f32 %v1263, %v1293
        %v1308 = vmul.f32 %v1264, %v1289
        %v1309 = vmul.f32 %v1265, %v1293
        %v1310 = vmul.f32 %v1266, %v1289
        %v1311 = vmul.f32 %v1267, %v1293
        %v1312 = vmul.f32 %v1268, %v1289
        %v1313 = vmul.f32 %v1269, %v1293
        %v1314 = vmul.f32 %v1270, %v1289
        %v1315 = vmul.f32 %v1271, %v1293
        %v1316 = vmul.f32 %v1272, %v1289
        %v1317 = vmul.f32 %v1273, %v1293
        %v1318 = vmul.f32 %v1274, %v1289
        %v1319 = vmul.f32 %v1275, %v1293
        %v1320 = vmul.f32 %v1276, %v1289
        %v1321 = vmul.f32 %v1277, %v1293
        %v1322 = vmul.f32 %v1278, %v1289
        %v1323 = vmul.f32 %v1279, %v1293
        %v1324 = vmul.f32 %v1280, %v1289
        %v1325 = vmul.f32 %v1281, %v1293
        %v1326 = vmul.f32 %v1282, %v1289
        %v1327 = vmul.f32 %v1283, %v1293
        %v1328 = vld [vmem:[%s2] sm:$0x3]
        %v1330 = vlaneseq
        %v1331 = vshrl.u32 %v1330, 7
        %v1332 = vsub.s32 0, %v1331
        %v1333 = vrot.slane %v1328, %v1332
        %v1334 = vlaneseq
        %v1335 = vshrl.u32 %v1334, 7
        %v1336 = vsub.s32 1, %v1335
        %v1337 = vrot.slane %v1328, %v1336
        %v1340 = vadd.f32 %v1296, %v1333
        %v1341 = vadd.f32 %v1297, %v1337
        %v1342 = vadd.f32 %v1298, %v1333
        %v1343 = vadd.f32 %v1299, %v1337
        %v1344 = vadd.f32 %v1300, %v1333
        %v1345 = vadd.f32 %v1301, %v1337
        %v1346 = vadd.f32 %v1302, %v1333
        %v1347 = vadd.f32 %v1303, %v1337
        %v1348 = vadd.f32 %v1304, %v1333
        %v1349 = vadd.f32 %v1305, %v1337
        %v1350 = vadd.f32 %v1306, %v1333
        %v1351 = vadd.f32 %v1307, %v1337
        %v1352 = vadd.f32 %v1308, %v1333
        %v1353 = vadd.f32 %v1309, %v1337
        %v1354 = vadd.f32 %v1310, %v1333
        %v1355 = vadd.f32 %v1311, %v1337
        %v1356 = vadd.f32 %v1312, %v1333
        %v1357 = vadd.f32 %v1313, %v1337
        %v1358 = vadd.f32 %v1314, %v1333
        %v1359 = vadd.f32 %v1315, %v1337
        %v1360 = vadd.f32 %v1316, %v1333
        %v1361 = vadd.f32 %v1317, %v1337
        %v1362 = vadd.f32 %v1318, %v1333
        %v1363 = vadd.f32 %v1319, %v1337
        %v1364 = vadd.f32 %v1320, %v1333
        %v1365 = vadd.f32 %v1321, %v1337
        %v1366 = vadd.f32 %v1322, %v1333
        %v1367 = vadd.f32 %v1323, %v1337
        %v1368 = vadd.f32 %v1324, %v1333
        %v1369 = vadd.f32 %v1325, %v1337
        %v1370 = vadd.f32 %v1326, %v1333
        %v1371 = vadd.f32 %v1327, %v1337
        %v1372 = vld [vmem:[%s909] sm:$0xff]
        %v1373 = vld [vmem:[%s909 + $0x8] sm:$0xff]
        %v1374 = vld [vmem:[%s909 + $0x10] sm:$0xff]
        %v1375 = vld [vmem:[%s909 + $0x18] sm:$0xff]
        %v1376 = vld [vmem:[%s909 + $0x20] sm:$0xff]
        %v1377 = vld [vmem:[%s909 + $0x28] sm:$0xff]
        %v1378 = vld [vmem:[%s909 + $0x30] sm:$0xff]
        %v1379 = vld [vmem:[%s909 + $0x38] sm:$0xff]
        %v1380 = vld [vmem:[%s909 + $0x40] sm:$0xff]
        %v1381 = vld [vmem:[%s909 + $0x48] sm:$0xff]
        %v1382 = vld [vmem:[%s909 + $0x50] sm:$0xff]
        %v1383 = vld [vmem:[%s909 + $0x58] sm:$0xff]
        %v1384 = vld [vmem:[%s909 + $0x60] sm:$0xff]
        %v1385 = vld [vmem:[%s909 + $0x68] sm:$0xff]
        %v1386 = vld [vmem:[%s909 + $0x70] sm:$0xff]
        %v1387 = vld [vmem:[%s909 + $0x78] sm:$0xff]
        %v1388 = vld [vmem:[%s909 + $0x80] sm:$0xff]
        %v1389 = vld [vmem:[%s909 + $0x88] sm:$0xff]
        %v1390 = vld [vmem:[%s909 + $0x90] sm:$0xff]
        %v1391 = vld [vmem:[%s909 + $0x98] sm:$0xff]
        %v1392 = vld [vmem:[%s909 + $0xa0] sm:$0xff]
        %v1393 = vld [vmem:[%s909 + $0xa8] sm:$0xff]
        %v1394 = vld [vmem:[%s909 + $0xb0] sm:$0xff]
        %v1395 = vld [vmem:[%s909 + $0xb8] sm:$0xff]
        %v1396 = vld [vmem:[%s909 + $0xc0] sm:$0xff]
        %v1397 = vld [vmem:[%s909 + $0xc8] sm:$0xff]
        %v1398 = vld [vmem:[%s909 + $0xd0] sm:$0xff]
        %v1399 = vld [vmem:[%s909 + $0xd8] sm:$0xff]
        %v1400 = vld [vmem:[%s909 + $0xe0] sm:$0xff]
        %v1401 = vld [vmem:[%s909 + $0xe8] sm:$0xff]
        %v1402 = vld [vmem:[%s909 + $0xf0] sm:$0xff]
        %v1403 = vld [vmem:[%s909 + $0xf8] sm:$0xff]
        %v1404 = vld [vmem:[%s909 + $0x100] sm:$0xff]
        %v1405 = vld [vmem:[%s909 + $0x108] sm:$0xff]
        %v1406 = vld [vmem:[%s909 + $0x110] sm:$0xff]
        %v1407 = vld [vmem:[%s909 + $0x118] sm:$0xff]
        %v1408 = vld [vmem:[%s909 + $0x120] sm:$0xff]
        %v1409 = vld [vmem:[%s909 + $0x128] sm:$0xff]
        %v1410 = vld [vmem:[%s909 + $0x130] sm:$0xff]
        %v1411 = vld [vmem:[%s909 + $0x138] sm:$0xff]
        %v1412 = vld [vmem:[%s909 + $0x140] sm:$0xff]
        %v1413 = vld [vmem:[%s909 + $0x148] sm:$0xff]
        %v1414 = vld [vmem:[%s909 + $0x150] sm:$0xff]
        %v1415 = vld [vmem:[%s909 + $0x158] sm:$0xff]
        %v1416 = vld [vmem:[%s909 + $0x160] sm:$0xff]
        %v1417 = vld [vmem:[%s909 + $0x168] sm:$0xff]
        %v1418 = vld [vmem:[%s909 + $0x170] sm:$0xff]
        %v1419 = vld [vmem:[%s909 + $0x178] sm:$0xff]
        %v1420 = vld [vmem:[%s909 + $0x180] sm:$0xff]
        %v1421 = vld [vmem:[%s909 + $0x188] sm:$0xff]
        %v1422 = vld [vmem:[%s909 + $0x190] sm:$0xff]
        %v1423 = vld [vmem:[%s909 + $0x198] sm:$0xff]
        %v1424 = vld [vmem:[%s909 + $0x1a0] sm:$0xff]
        %v1425 = vld [vmem:[%s909 + $0x1a8] sm:$0xff]
        %v1426 = vld [vmem:[%s909 + $0x1b0] sm:$0xff]
        %v1427 = vld [vmem:[%s909 + $0x1b8] sm:$0xff]
        %v1428 = vld [vmem:[%s909 + $0x1c0] sm:$0xff]
        %v1429 = vld [vmem:[%s909 + $0x1c8] sm:$0xff]
        %v1430 = vld [vmem:[%s909 + $0x1d0] sm:$0xff]
        %v1431 = vld [vmem:[%s909 + $0x1d8] sm:$0xff]
        %v1432 = vld [vmem:[%s909 + $0x1e0] sm:$0xff]
        %v1433 = vld [vmem:[%s909 + $0x1e8] sm:$0xff]
        %v1434 = vld [vmem:[%s909 + $0x1f0] sm:$0xff]
        %v1435 = vld [vmem:[%s909 + $0x1f8] sm:$0xff]
        %v1436 = vld [vmem:[%s909 + $0x200] sm:$0xff]
        %v1437 = vld [vmem:[%s909 + $0x208] sm:$0xff]
        %v1438 = vld [vmem:[%s909 + $0x210] sm:$0xff]
        %v1439 = vld [vmem:[%s909 + $0x218] sm:$0xff]
        %v1440 = vld [vmem:[%s909 + $0x220] sm:$0xff]
        %v1441 = vld [vmem:[%s909 + $0x228] sm:$0xff]
        %v1442 = vld [vmem:[%s909 + $0x230] sm:$0xff]
        %v1443 = vld [vmem:[%s909 + $0x238] sm:$0xff]
        %v1444 = vld [vmem:[%s909 + $0x240] sm:$0xff]
        %v1445 = vld [vmem:[%s909 + $0x248] sm:$0xff]
        %v1446 = vld [vmem:[%s909 + $0x250] sm:$0xff]
        %v1447 = vld [vmem:[%s909 + $0x258] sm:$0xff]
        %v1448 = vld [vmem:[%s909 + $0x260] sm:$0xff]
        %v1449 = vld [vmem:[%s909 + $0x268] sm:$0xff]
        %v1450 = vld [vmem:[%s909 + $0x270] sm:$0xff]
        %v1451 = vld [vmem:[%s909 + $0x278] sm:$0xff]
        %v1452 = vld [vmem:[%s909 + $0x280] sm:$0xff]
        %v1453 = vld [vmem:[%s909 + $0x288] sm:$0xff]
        %v1454 = vld [vmem:[%s909 + $0x290] sm:$0xff]
        %v1455 = vld [vmem:[%s909 + $0x298] sm:$0xff]
        %v1456 = vld [vmem:[%s909 + $0x2a0] sm:$0xff]
        %v1457 = vld [vmem:[%s909 + $0x2a8] sm:$0xff]
        %v1458 = vld [vmem:[%s909 + $0x2b0] sm:$0xff]
        %v1459 = vld [vmem:[%s909 + $0x2b8] sm:$0xff]
        %v1460 = vld [vmem:[%s909 + $0x2c0] sm:$0xff]
        %v1461 = vld [vmem:[%s909 + $0x2c8] sm:$0xff]
        %v1462 = vld [vmem:[%s909 + $0x2d0] sm:$0xff]
        %v1463 = vld [vmem:[%s909 + $0x2d8] sm:$0xff]
        %v1464 = vld [vmem:[%s909 + $0x2e0] sm:$0xff]
        %v1465 = vld [vmem:[%s909 + $0x2e8] sm:$0xff]
        %v1466 = vld [vmem:[%s909 + $0x2f0] sm:$0xff]
        %v1467 = vld [vmem:[%s909 + $0x2f8] sm:$0xff]
        %v1468 = vld [vmem:[%s909 + $0x300] sm:$0xff]
        %v1469 = vld [vmem:[%s909 + $0x308] sm:$0xff]
        %v1470 = vld [vmem:[%s909 + $0x310] sm:$0xff]
        %v1471 = vld [vmem:[%s909 + $0x318] sm:$0xff]
        %v1472 = vld [vmem:[%s909 + $0x320] sm:$0xff]
        %v1473 = vld [vmem:[%s909 + $0x328] sm:$0xff]
        %v1474 = vld [vmem:[%s909 + $0x330] sm:$0xff]
        %v1475 = vld [vmem:[%s909 + $0x338] sm:$0xff]
        %v1476 = vld [vmem:[%s909 + $0x340] sm:$0xff]
        %v1477 = vld [vmem:[%s909 + $0x348] sm:$0xff]
        %v1478 = vld [vmem:[%s909 + $0x350] sm:$0xff]
        %v1479 = vld [vmem:[%s909 + $0x358] sm:$0xff]
        %v1480 = vld [vmem:[%s909 + $0x360] sm:$0xff]
        %v1481 = vld [vmem:[%s909 + $0x368] sm:$0xff]
        %v1482 = vld [vmem:[%s909 + $0x370] sm:$0xff]
        %v1483 = vld [vmem:[%s909 + $0x378] sm:$0xff]
        %v1484 = vld [vmem:[%s909 + $0x380] sm:$0xff]
        %v1485 = vld [vmem:[%s909 + $0x388] sm:$0xff]
        %v1486 = vld [vmem:[%s909 + $0x390] sm:$0xff]
        %v1487 = vld [vmem:[%s909 + $0x398] sm:$0xff]
        %v1488 = vld [vmem:[%s909 + $0x3a0] sm:$0xff]
        %v1489 = vld [vmem:[%s909 + $0x3a8] sm:$0xff]
        %v1490 = vld [vmem:[%s909 + $0x3b0] sm:$0xff]
        %v1491 = vld [vmem:[%s909 + $0x3b8] sm:$0xff]
        %v1492 = vld [vmem:[%s909 + $0x3c0] sm:$0xff]
        %v1493 = vld [vmem:[%s909 + $0x3c8] sm:$0xff]
        %v1494 = vld [vmem:[%s909 + $0x3d0] sm:$0xff]
        %v1495 = vld [vmem:[%s909 + $0x3d8] sm:$0xff]
        %v1496 = vld [vmem:[%s909 + $0x3e0] sm:$0xff]
        %v1497 = vld [vmem:[%s909 + $0x3e8] sm:$0xff]
        %v1498 = vld [vmem:[%s909 + $0x3f0] sm:$0xff]
        %v1499 = vld [vmem:[%s909 + $0x3f8] sm:$0xff]
        %v1500 = vld [vmem:[%s979] sm:$0xf]
        %v1502 = vlaneseq
        %v1503 = vshrl.u32 %v1502, 7
        %v1504 = vsub.s32 0, %v1503
        %v1505 = vrot.slane %v1500, %v1504
        %v1506 = vlaneseq
        %v1507 = vshrl.u32 %v1506, 7
        %v1508 = vsub.s32 1, %v1507
        %v1509 = vrot.slane %v1500, %v1508
        %v1510 = vlaneseq
        %v1511 = vshrl.u32 %v1510, 7
        %v1512 = vsub.s32 2, %v1511
        %v1513 = vrot.slane %v1500, %v1512
        %v1514 = vlaneseq
        %v1515 = vshrl.u32 %v1514, 7
        %v1516 = vsub.s32 3, %v1515
        %v1517 = vrot.slane %v1500, %v1516
        %1522 = vmatprep.subr.mxu0 %v1433
        %1523 = vmatpush1.msra.mxu0 %v1432
        %1524 = vmatprep.subr.mxu0 %v1429
        %1525 = vmatpush1.msra.mxu0 %v1428
        %1526 = vmatprep.subr.mxu0 %v1425
        %1527 = vmatpush1.msra.mxu0 %v1424
        %1528 = vmatprep.subr.mxu0 %v1421
        %1529 = vmatpush1.msra.mxu0 %v1420
        %1530 = vmatprep.subr.mxu0 %v1417
        %1531 = vmatpush1.msra.mxu0 %v1416
        %1532 = vmatprep.subr.mxu0 %v1413
        %1533 = vmatpush1.msra.mxu0 %v1412
        %1534 = vmatprep.subr.mxu0 %v1409
        %1535 = vmatpush1.msra.mxu0 %v1408
        %1536 = vmatprep.subr.mxu0 %v1405
        %1537 = vmatpush1.msra.mxu0 %v1404
        %1538 = vmatprep.subr.mxu0 %v1401
        %1539 = vmatpush1.msra.mxu0 %v1400
        %1540 = vmatprep.subr.mxu0 %v1397
        %1541 = vmatpush1.msra.mxu0 %v1396
        %1542 = vmatprep.subr.mxu0 %v1393
        %1543 = vmatpush1.msra.mxu0 %v1392
        %1544 = vmatprep.subr.mxu0 %v1389
        %1545 = vmatpush1.msra.mxu0 %v1388
        %1546 = vmatprep.subr.mxu0 %v1385
        %1547 = vmatpush1.msra.mxu0 %v1384
        %1548 = vmatprep.subr.mxu0 %v1381
        %1549 = vmatpush1.msra.mxu0 %v1380
        %1550 = vmatprep.subr.mxu0 %v1377
        %1551 = vmatpush1.msra.mxu0 %v1376
        %1552 = vmatprep.subr.mxu0 %v1373
        %1553 = vmatpush1.msra.mxu0 %v1372
        %1554 = vmatprep.subr.mxu0 %v1497
        %1555 = vmatpush2.msra.mxu0 %v1496
        %1556 = vmatprep.subr.mxu0 %v1493
        %1557 = vmatpush2.msra.mxu0 %v1492
        %1558 = vmatprep.subr.mxu0 %v1489
        %1559 = vmatpush2.msra.mxu0 %v1488
        %1560 = vmatprep.subr.mxu0 %v1485
        %1561 = vmatpush2.msra.mxu0 %v1484
        %1562 = vmatprep.subr.mxu0 %v1481
        %1563 = vmatpush2.msra.mxu0 %v1480
        %1564 = vmatprep.subr.mxu0 %v1477
        %1565 = vmatpush2.msra.mxu0 %v1476
        %1566 = vmatprep.subr.mxu0 %v1473
        %1567 = vmatpush2.msra.mxu0 %v1472
        %1568 = vmatprep.subr.mxu0 %v1469
        %1569 = vmatpush2.msra.mxu0 %v1468
        %1570 = vmatprep.subr.mxu0 %v1465
        %1571 = vmatpush2.msra.mxu0 %v1464
        %1572 = vmatprep.subr.mxu0 %v1461
        %1573 = vmatpush2.msra.mxu0 %v1460
        %1574 = vmatprep.subr.mxu0 %v1457
        %1575 = vmatpush2.msra.mxu0 %v1456
        %1576 = vmatprep.subr.mxu0 %v1453
        %1577 = vmatpush2.msra.mxu0 %v1452
        %1578 = vmatprep.subr.mxu0 %v1449
        %1579 = vmatpush2.msra.mxu0 %v1448
        %1580 = vmatprep.subr.mxu0 %v1445
        %1581 = vmatpush2.msra.mxu0 %v1444
        %1582 = vmatprep.subr.mxu0 %v1441
        %1583 = vmatpush2.msra.mxu0 %v1440
        %1584 = vmatprep.subr.mxu0 %v1437
        %1585 = vmatpush2.msra.mxu0 %v1436
        %1586 = vmatprep.mubr.f32.mxu0 %v1341
        %1587 = vmatmul.mubr.f32.gmra.mxu0 %v1340
        %v1588 = vpop.f32.mrf.mxu0
        %v1589 = vadd.f32 %v1505, %v1588
        %v1590 = vpop.f32.mrf.mxu0
        %v1591 = vadd.f32 %v1509, %v1590
        %1592 = vmatprep.mubr.f32.mxu0 %v1343
        %1593 = vmatmul.mubr.f32.gmra.mxu0 %v1342
        %v1594 = vpop.f32.mrf.mxu0
        %v1595 = vadd.f32 %v1505, %v1594
        %v1596 = vpop.f32.mrf.mxu0
        %v1597 = vadd.f32 %v1509, %v1596
        %1598 = vmatprep.mubr.f32.mxu0 %v1345
        %1599 = vmatmul.mubr.f32.gmra.mxu0 %v1344
        %v1600 = vpop.f32.mrf.mxu0
        %v1601 = vadd.f32 %v1505, %v1600
        %v1602 = vpop.f32.mrf.mxu0
        %v1603 = vadd.f32 %v1509, %v1602
        %1604 = vmatprep.mubr.f32.mxu0 %v1347
        %1605 = vmatmul.mubr.f32.gmra.mxu0 %v1346
        %v1606 = vpop.f32.mrf.mxu0
        %v1607 = vadd.f32 %v1505, %v1606
        %v1608 = vpop.f32.mrf.mxu0
        %v1609 = vadd.f32 %v1509, %v1608
        %1610 = vmatprep.mubr.f32.mxu0 %v1349
        %1611 = vmatmul.mubr.f32.gmra.mxu0 %v1348
        %v1612 = vpop.f32.mrf.mxu0
        %v1613 = vadd.f32 %v1505, %v1612
        %v1614 = vpop.f32.mrf.mxu0
        %v1615 = vadd.f32 %v1509, %v1614
        %1616 = vmatprep.mubr.f32.mxu0 %v1351
        %1617 = vmatmul.mubr.f32.gmra.mxu0 %v1350
        %v1618 = vpop.f32.mrf.mxu0
        %v1619 = vadd.f32 %v1505, %v1618
        %v1620 = vpop.f32.mrf.mxu0
        %v1621 = vadd.f32 %v1509, %v1620
        %1622 = vmatprep.mubr.f32.mxu0 %v1353
        %1623 = vmatmul.mubr.f32.gmra.mxu0 %v1352
        %v1624 = vpop.f32.mrf.mxu0
        %v1625 = vadd.f32 %v1505, %v1624
        %v1626 = vpop.f32.mrf.mxu0
        %v1627 = vadd.f32 %v1509, %v1626
        %1628 = vmatprep.mubr.f32.mxu0 %v1355
        %1629 = vmatmul.mubr.f32.gmra.mxu0 %v1354
        %v1630 = vpop.f32.mrf.mxu0
        %v1631 = vadd.f32 %v1505, %v1630
        %v1632 = vpop.f32.mrf.mxu0
        %v1633 = vadd.f32 %v1509, %v1632
        %1634 = vmatprep.mubr.f32.mxu0 %v1357
        %1635 = vmatmul.mubr.f32.gmra.mxu0 %v1356
        %v1636 = vpop.f32.mrf.mxu0
        %v1637 = vadd.f32 %v1505, %v1636
        %v1638 = vpop.f32.mrf.mxu0
        %v1639 = vadd.f32 %v1509, %v1638
        %1640 = vmatprep.mubr.f32.mxu0 %v1359
        %1641 = vmatmul.mubr.f32.gmra.mxu0 %v1358
        %v1642 = vpop.f32.mrf.mxu0
        %v1643 = vadd.f32 %v1505, %v1642
        %v1644 = vpop.f32.mrf.mxu0
        %v1645 = vadd.f32 %v1509, %v1644
        %1646 = vmatprep.mubr.f32.mxu0 %v1361
        %1647 = vmatmul.mubr.f32.gmra.mxu0 %v1360
        %v1648 = vpop.f32.mrf.mxu0
        %v1649 = vadd.f32 %v1505, %v1648
        %v1650 = vpop.f32.mrf.mxu0
        %v1651 = vadd.f32 %v1509, %v1650
        %1652 = vmatprep.mubr.f32.mxu0 %v1363
        %1653 = vmatmul.mubr.f32.gmra.mxu0 %v1362
        %v1654 = vpop.f32.mrf.mxu0
        %v1655 = vadd.f32 %v1505, %v1654
        %v1656 = vpop.f32.mrf.mxu0
        %v1657 = vadd.f32 %v1509, %v1656
        %1658 = vmatprep.mubr.f32.mxu0 %v1365
        %1659 = vmatmul.mubr.f32.gmra.mxu0 %v1364
        %v1660 = vpop.f32.mrf.mxu0
        %v1661 = vadd.f32 %v1505, %v1660
        %v1662 = vpop.f32.mrf.mxu0
        %v1663 = vadd.f32 %v1509, %v1662
        %1664 = vmatprep.mubr.f32.mxu0 %v1367
        %1665 = vmatmul.mubr.f32.gmra.mxu0 %v1366
        %v1666 = vpop.f32.mrf.mxu0
        %v1667 = vadd.f32 %v1505, %v1666
        %v1668 = vpop.f32.mrf.mxu0
        %v1669 = vadd.f32 %v1509, %v1668
        %1670 = vmatprep.mubr.f32.mxu0 %v1369
        %1671 = vmatmul.mubr.f32.gmra.mxu0 %v1368
        %v1672 = vpop.f32.mrf.mxu0
        %v1673 = vadd.f32 %v1505, %v1672
        %v1674 = vpop.f32.mrf.mxu0
        %v1675 = vadd.f32 %v1509, %v1674
        %1676 = vmatprep.mubr.f32.mxu0 %v1371
        %1677 = vmatmul.mubr.f32.gmra.mxu0 %v1370
        %v1678 = vpop.f32.mrf.mxu0
        %v1679 = vadd.f32 %v1505, %v1678
        %v1680 = vpop.f32.mrf.mxu0
        %v1681 = vadd.f32 %v1509, %v1680
        %1682 = vdwg.mxu0
        %1683 = vmatprep.subr.mxu0 %v1435
        %1684 = vmatpush1.msra.mxu0 %v1434
        %1685 = vmatprep.subr.mxu0 %v1431
        %1686 = vmatpush1.msra.mxu0 %v1430
        %1687 = vmatprep.subr.mxu0 %v1427
        %1688 = vmatpush1.msra.mxu0 %v1426
        %1689 = vmatprep.subr.mxu0 %v1423
        %1690 = vmatpush1.msra.mxu0 %v1422
        %1691 = vmatprep.subr.mxu0 %v1419
        %1692 = vmatpush1.msra.mxu0 %v1418
        %1693 = vmatprep.subr.mxu0 %v1415
        %1694 = vmatpush1.msra.mxu0 %v1414
        %1695 = vmatprep.subr.mxu0 %v1411
        %1696 = vmatpush1.msra.mxu0 %v1410
        %1697 = vmatprep.subr.mxu0 %v1407
        %1698 = vmatpush1.msra.mxu0 %v1406
        %1699 = vmatprep.subr.mxu0 %v1403
        %1700 = vmatpush1.msra.mxu0 %v1402
        %1701 = vmatprep.subr.mxu0 %v1399
        %1702 = vmatpush1.msra.mxu0 %v1398
        %1703 = vmatprep.subr.mxu0 %v1395
        %1704 = vmatpush1.msra.mxu0 %v1394
        %1705 = vmatprep.subr.mxu0 %v1391
        %1706 = vmatpush1.msra.mxu0 %v1390
        %1707 = vmatprep.subr.mxu0 %v1387
        %1708 = vmatpush1.msra.mxu0 %v1386
        %1709 = vmatprep.subr.mxu0 %v1383
        %1710 = vmatpush1.msra.mxu0 %v1382
        %1711 = vmatprep.subr.mxu0 %v1379
        %1712 = vmatpush1.msra.mxu0 %v1378
        %1713 = vmatprep.subr.mxu0 %v1375
        %1714 = vmatpush1.msra.mxu0 %v1374
        %1715 = vmatprep.subr.mxu0 %v1499
        %1716 = vmatpush2.msra.mxu0 %v1498
        %1717 = vmatprep.subr.mxu0 %v1495
        %1718 = vmatpush2.msra.mxu0 %v1494
        %1719 = vmatprep.subr.mxu0 %v1491
        %1720 = vmatpush2.msra.mxu0 %v1490
        %1721 = vmatprep.subr.mxu0 %v1487
        %1722 = vmatpush2.msra.mxu0 %v1486
        %1723 = vmatprep.subr.mxu0 %v1483
        %1724 = vmatpush2.msra.mxu0 %v1482
        %1725 = vmatprep.subr.mxu0 %v1479
        %1726 = vmatpush2.msra.mxu0 %v1478
        %1727 = vmatprep.subr.mxu0 %v1475
        %1728 = vmatpush2.msra.mxu0 %v1474
        %1729 = vmatprep.subr.mxu0 %v1471
        %1730 = vmatpush2.msra.mxu0 %v1470
        %1731 = vmatprep.subr.mxu0 %v1467
        %1732 = vmatpush2.msra.mxu0 %v1466
        %1733 = vmatprep.subr.mxu0 %v1463
        %1734 = vmatpush2.msra.mxu0 %v1462
        %1735 = vmatprep.subr.mxu0 %v1459
        %1736 = vmatpush2.msra.mxu0 %v1458
        %1737 = vmatprep.subr.mxu0 %v1455
        %1738 = vmatpush2.msra.mxu0 %v1454
        %1739 = vmatprep.subr.mxu0 %v1451
        %1740 = vmatpush2.msra.mxu0 %v1450
        %1741 = vmatprep.subr.mxu0 %v1447
        %1742 = vmatpush2.msra.mxu0 %v1446
        %1743 = vmatprep.subr.mxu0 %v1443
        %1744 = vmatpush2.msra.mxu0 %v1442
        %1745 = vmatprep.subr.mxu0 %v1439
        %1746 = vmatpush2.msra.mxu0 %v1438
        %1747 = vmatprep.mubr.f32.mxu0 %v1341
        %1748 = vmatmul.mubr.f32.gmra.mxu0 %v1340
        %v1749 = vpop.f32.mrf.mxu0
        %v1750 = vadd.f32 %v1513, %v1749
        %v1751 = vpop.f32.mrf.mxu0
        %v1752 = vadd.f32 %v1517, %v1751
        %1753 = vmatprep.mubr.f32.mxu0 %v1343
        %1754 = vmatmul.mubr.f32.gmra.mxu0 %v1342
        %v1755 = vpop.f32.mrf.mxu0
        %v1756 = vadd.f32 %v1513, %v1755
        %v1757 = vpop.f32.mrf.mxu0
        %v1758 = vadd.f32 %v1517, %v1757
        %1759 = vmatprep.mubr.f32.mxu0 %v1345
        %1760 = vmatmul.mubr.f32.gmra.mxu0 %v1344
        %v1761 = vpop.f32.mrf.mxu0
        %v1762 = vadd.f32 %v1513, %v1761
        %v1763 = vpop.f32.mrf.mxu0
        %v1764 = vadd.f32 %v1517, %v1763
        %1765 = vmatprep.mubr.f32.mxu0 %v1347
        %1766 = vmatmul.mubr.f32.gmra.mxu0 %v1346
        %v1767 = vpop.f32.mrf.mxu0
        %v1768 = vadd.f32 %v1513, %v1767
        %v1769 = vpop.f32.mrf.mxu0
        %v1770 = vadd.f32 %v1517, %v1769
        %1771 = vmatprep.mubr.f32.mxu0 %v1349
        %1772 = vmatmul.mubr.f32.gmra.mxu0 %v1348
        %v1773 = vpop.f32.mrf.mxu0
        %v1774 = vadd.f32 %v1513, %v1773
        %v1775 = vpop.f32.mrf.mxu0
        %v1776 = vadd.f32 %v1517, %v1775
        %1777 = vmatprep.mubr.f32.mxu0 %v1351
        %1778 = vmatmul.mubr.f32.gmra.mxu0 %v1350
        %v1779 = vpop.f32.mrf.mxu0
        %v1780 = vadd.f32 %v1513, %v1779
        %v1781 = vpop.f32.mrf.mxu0
        %v1782 = vadd.f32 %v1517, %v1781
        %1783 = vmatprep.mubr.f32.mxu0 %v1353
        %1784 = vmatmul.mubr.f32.gmra.mxu0 %v1352
        %v1785 = vpop.f32.mrf.mxu0
        %v1786 = vadd.f32 %v1513, %v1785
        %v1787 = vpop.f32.mrf.mxu0
        %v1788 = vadd.f32 %v1517, %v1787
        %1789 = vmatprep.mubr.f32.mxu0 %v1355
        %1790 = vmatmul.mubr.f32.gmra.mxu0 %v1354
        %v1791 = vpop.f32.mrf.mxu0
        %v1792 = vadd.f32 %v1513, %v1791
        %v1793 = vpop.f32.mrf.mxu0
        %v1794 = vadd.f32 %v1517, %v1793
        %1795 = vmatprep.mubr.f32.mxu0 %v1357
        %1796 = vmatmul.mubr.f32.gmra.mxu0 %v1356
        %v1797 = vpop.f32.mrf.mxu0
        %v1798 = vadd.f32 %v1513, %v1797
        %v1799 = vpop.f32.mrf.mxu0
        %v1800 = vadd.f32 %v1517, %v1799
        %1801 = vmatprep.mubr.f32.mxu0 %v1359
        %1802 = vmatmul.mubr.f32.gmra.mxu0 %v1358
        %v1803 = vpop.f32.mrf.mxu0
        %v1804 = vadd.f32 %v1513, %v1803
        %v1805 = vpop.f32.mrf.mxu0
        %v1806 = vadd.f32 %v1517, %v1805
        %1807 = vmatprep.mubr.f32.mxu0 %v1361
        %1808 = vmatmul.mubr.f32.gmra.mxu0 %v1360
        %v1809 = vpop.f32.mrf.mxu0
        %v1810 = vadd.f32 %v1513, %v1809
        %v1811 = vpop.f32.mrf.mxu0
        %v1812 = vadd.f32 %v1517, %v1811
        %1813 = vmatprep.mubr.f32.mxu0 %v1363
        %1814 = vmatmul.mubr.f32.gmra.mxu0 %v1362
        %v1815 = vpop.f32.mrf.mxu0
        %v1816 = vadd.f32 %v1513, %v1815
        %v1817 = vpop.f32.mrf.mxu0
        %v1818 = vadd.f32 %v1517, %v1817
        %1819 = vmatprep.mubr.f32.mxu0 %v1365
        %1820 = vmatmul.mubr.f32.gmra.mxu0 %v1364
        %v1821 = vpop.f32.mrf.mxu0
        %v1822 = vadd.f32 %v1513, %v1821
        %v1823 = vpop.f32.mrf.mxu0
        %v1824 = vadd.f32 %v1517, %v1823
        %1825 = vmatprep.mubr.f32.mxu0 %v1367
        %1826 = vmatmul.mubr.f32.gmra.mxu0 %v1366
        %v1827 = vpop.f32.mrf.mxu0
        %v1828 = vadd.f32 %v1513, %v1827
        %v1829 = vpop.f32.mrf.mxu0
        %v1830 = vadd.f32 %v1517, %v1829
        %1831 = vmatprep.mubr.f32.mxu0 %v1369
        %1832 = vmatmul.mubr.f32.gmra.mxu0 %v1368
        %v1833 = vpop.f32.mrf.mxu0
        %v1834 = vadd.f32 %v1513, %v1833
        %v1835 = vpop.f32.mrf.mxu0
        %v1836 = vadd.f32 %v1517, %v1835
        %1837 = vmatprep.mubr.f32.mxu0 %v1371
        %1838 = vmatmul.mubr.f32.gmra.mxu0 %v1370
        %v1839 = vpop.f32.mrf.mxu0
        %v1840 = vadd.f32 %v1513, %v1839
        %v1841 = vpop.f32.mrf.mxu0
        %v1842 = vadd.f32 %v1517, %v1841
        %1843 = vdwg.mxu0
        %v1844 = vld [vmem:[%s916] sm:$0xff]
        %v1845 = vld [vmem:[%s916 + $0x8] sm:$0xff]
        %v1846 = vld [vmem:[%s916 + $0x10] sm:$0xff]
        %v1847 = vld [vmem:[%s916 + $0x18] sm:$0xff]
        %v1848 = vld [vmem:[%s916 + $0x20] sm:$0xff]
        %v1849 = vld [vmem:[%s916 + $0x28] sm:$0xff]
        %v1850 = vld [vmem:[%s916 + $0x30] sm:$0xff]
        %v1851 = vld [vmem:[%s916 + $0x38] sm:$0xff]
        %v1852 = vld [vmem:[%s916 + $0x40] sm:$0xff]
        %v1853 = vld [vmem:[%s916 + $0x48] sm:$0xff]
        %v1854 = vld [vmem:[%s916 + $0x50] sm:$0xff]
        %v1855 = vld [vmem:[%s916 + $0x58] sm:$0xff]
        %v1856 = vld [vmem:[%s916 + $0x60] sm:$0xff]
        %v1857 = vld [vmem:[%s916 + $0x68] sm:$0xff]
        %v1858 = vld [vmem:[%s916 + $0x70] sm:$0xff]
        %v1859 = vld [vmem:[%s916 + $0x78] sm:$0xff]
        %v1860 = vld [vmem:[%s916 + $0x80] sm:$0xff]
        %v1861 = vld [vmem:[%s916 + $0x88] sm:$0xff]
        %v1862 = vld [vmem:[%s916 + $0x90] sm:$0xff]
        %v1863 = vld [vmem:[%s916 + $0x98] sm:$0xff]
        %v1864 = vld [vmem:[%s916 + $0xa0] sm:$0xff]
        %v1865 = vld [vmem:[%s916 + $0xa8] sm:$0xff]
        %v1866 = vld [vmem:[%s916 + $0xb0] sm:$0xff]
        %v1867 = vld [vmem:[%s916 + $0xb8] sm:$0xff]
        %v1868 = vld [vmem:[%s916 + $0xc0] sm:$0xff]
        %v1869 = vld [vmem:[%s916 + $0xc8] sm:$0xff]
        %v1870 = vld [vmem:[%s916 + $0xd0] sm:$0xff]
        %v1871 = vld [vmem:[%s916 + $0xd8] sm:$0xff]
        %v1872 = vld [vmem:[%s916 + $0xe0] sm:$0xff]
        %v1873 = vld [vmem:[%s916 + $0xe8] sm:$0xff]
        %v1874 = vld [vmem:[%s916 + $0xf0] sm:$0xff]
        %v1875 = vld [vmem:[%s916 + $0xf8] sm:$0xff]
        %v1876 = vld [vmem:[%s916 + $0x100] sm:$0xff]
        %v1877 = vld [vmem:[%s916 + $0x108] sm:$0xff]
        %v1878 = vld [vmem:[%s916 + $0x110] sm:$0xff]
        %v1879 = vld [vmem:[%s916 + $0x118] sm:$0xff]
        %v1880 = vld [vmem:[%s916 + $0x120] sm:$0xff]
        %v1881 = vld [vmem:[%s916 + $0x128] sm:$0xff]
        %v1882 = vld [vmem:[%s916 + $0x130] sm:$0xff]
        %v1883 = vld [vmem:[%s916 + $0x138] sm:$0xff]
        %v1884 = vld [vmem:[%s916 + $0x140] sm:$0xff]
        %v1885 = vld [vmem:[%s916 + $0x148] sm:$0xff]
        %v1886 = vld [vmem:[%s916 + $0x150] sm:$0xff]
        %v1887 = vld [vmem:[%s916 + $0x158] sm:$0xff]
        %v1888 = vld [vmem:[%s916 + $0x160] sm:$0xff]
        %v1889 = vld [vmem:[%s916 + $0x168] sm:$0xff]
        %v1890 = vld [vmem:[%s916 + $0x170] sm:$0xff]
        %v1891 = vld [vmem:[%s916 + $0x178] sm:$0xff]
        %v1892 = vld [vmem:[%s916 + $0x180] sm:$0xff]
        %v1893 = vld [vmem:[%s916 + $0x188] sm:$0xff]
        %v1894 = vld [vmem:[%s916 + $0x190] sm:$0xff]
        %v1895 = vld [vmem:[%s916 + $0x198] sm:$0xff]
        %v1896 = vld [vmem:[%s916 + $0x1a0] sm:$0xff]
        %v1897 = vld [vmem:[%s916 + $0x1a8] sm:$0xff]
        %v1898 = vld [vmem:[%s916 + $0x1b0] sm:$0xff]
        %v1899 = vld [vmem:[%s916 + $0x1b8] sm:$0xff]
        %v1900 = vld [vmem:[%s916 + $0x1c0] sm:$0xff]
        %v1901 = vld [vmem:[%s916 + $0x1c8] sm:$0xff]
        %v1902 = vld [vmem:[%s916 + $0x1d0] sm:$0xff]
        %v1903 = vld [vmem:[%s916 + $0x1d8] sm:$0xff]
        %v1904 = vld [vmem:[%s916 + $0x1e0] sm:$0xff]
        %v1905 = vld [vmem:[%s916 + $0x1e8] sm:$0xff]
        %v1906 = vld [vmem:[%s916 + $0x1f0] sm:$0xff]
        %v1907 = vld [vmem:[%s916 + $0x1f8] sm:$0xff]
        %v1908 = vld [vmem:[%s916 + $0x200] sm:$0xff]
        %v1909 = vld [vmem:[%s916 + $0x208] sm:$0xff]
        %v1910 = vld [vmem:[%s916 + $0x210] sm:$0xff]
        %v1911 = vld [vmem:[%s916 + $0x218] sm:$0xff]
        %v1912 = vld [vmem:[%s916 + $0x220] sm:$0xff]
        %v1913 = vld [vmem:[%s916 + $0x228] sm:$0xff]
        %v1914 = vld [vmem:[%s916 + $0x230] sm:$0xff]
        %v1915 = vld [vmem:[%s916 + $0x238] sm:$0xff]
        %v1916 = vld [vmem:[%s916 + $0x240] sm:$0xff]
        %v1917 = vld [vmem:[%s916 + $0x248] sm:$0xff]
        %v1918 = vld [vmem:[%s916 + $0x250] sm:$0xff]
        %v1919 = vld [vmem:[%s916 + $0x258] sm:$0xff]
        %v1920 = vld [vmem:[%s916 + $0x260] sm:$0xff]
        %v1921 = vld [vmem:[%s916 + $0x268] sm:$0xff]
        %v1922 = vld [vmem:[%s916 + $0x270] sm:$0xff]
        %v1923 = vld [vmem:[%s916 + $0x278] sm:$0xff]
        %v1924 = vld [vmem:[%s916 + $0x280] sm:$0xff]
        %v1925 = vld [vmem:[%s916 + $0x288] sm:$0xff]
        %v1926 = vld [vmem:[%s916 + $0x290] sm:$0xff]
        %v1927 = vld [vmem:[%s916 + $0x298] sm:$0xff]
        %v1928 = vld [vmem:[%s916 + $0x2a0] sm:$0xff]
        %v1929 = vld [vmem:[%s916 + $0x2a8] sm:$0xff]
        %v1930 = vld [vmem:[%s916 + $0x2b0] sm:$0xff]
        %v1931 = vld [vmem:[%s916 + $0x2b8] sm:$0xff]
        %v1932 = vld [vmem:[%s916 + $0x2c0] sm:$0xff]
        %v1933 = vld [vmem:[%s916 + $0x2c8] sm:$0xff]
        %v1934 = vld [vmem:[%s916 + $0x2d0] sm:$0xff]
        %v1935 = vld [vmem:[%s916 + $0x2d8] sm:$0xff]
        %v1936 = vld [vmem:[%s916 + $0x2e0] sm:$0xff]
        %v1937 = vld [vmem:[%s916 + $0x2e8] sm:$0xff]
        %v1938 = vld [vmem:[%s916 + $0x2f0] sm:$0xff]
        %v1939 = vld [vmem:[%s916 + $0x2f8] sm:$0xff]
        %v1940 = vld [vmem:[%s916 + $0x300] sm:$0xff]
        %v1941 = vld [vmem:[%s916 + $0x308] sm:$0xff]
        %v1942 = vld [vmem:[%s916 + $0x310] sm:$0xff]
        %v1943 = vld [vmem:[%s916 + $0x318] sm:$0xff]
        %v1944 = vld [vmem:[%s916 + $0x320] sm:$0xff]
        %v1945 = vld [vmem:[%s916 + $0x328] sm:$0xff]
        %v1946 = vld [vmem:[%s916 + $0x330] sm:$0xff]
        %v1947 = vld [vmem:[%s916 + $0x338] sm:$0xff]
        %v1948 = vld [vmem:[%s916 + $0x340] sm:$0xff]
        %v1949 = vld [vmem:[%s916 + $0x348] sm:$0xff]
        %v1950 = vld [vmem:[%s916 + $0x350] sm:$0xff]
        %v1951 = vld [vmem:[%s916 + $0x358] sm:$0xff]
        %v1952 = vld [vmem:[%s916 + $0x360] sm:$0xff]
        %v1953 = vld [vmem:[%s916 + $0x368] sm:$0xff]
        %v1954 = vld [vmem:[%s916 + $0x370] sm:$0xff]
        %v1955 = vld [vmem:[%s916 + $0x378] sm:$0xff]
        %v1956 = vld [vmem:[%s916 + $0x380] sm:$0xff]
        %v1957 = vld [vmem:[%s916 + $0x388] sm:$0xff]
        %v1958 = vld [vmem:[%s916 + $0x390] sm:$0xff]
        %v1959 = vld [vmem:[%s916 + $0x398] sm:$0xff]
        %v1960 = vld [vmem:[%s916 + $0x3a0] sm:$0xff]
        %v1961 = vld [vmem:[%s916 + $0x3a8] sm:$0xff]
        %v1962 = vld [vmem:[%s916 + $0x3b0] sm:$0xff]
        %v1963 = vld [vmem:[%s916 + $0x3b8] sm:$0xff]
        %v1964 = vld [vmem:[%s916 + $0x3c0] sm:$0xff]
        %v1965 = vld [vmem:[%s916 + $0x3c8] sm:$0xff]
        %v1966 = vld [vmem:[%s916 + $0x3d0] sm:$0xff]
        %v1967 = vld [vmem:[%s916 + $0x3d8] sm:$0xff]
        %v1968 = vld [vmem:[%s916 + $0x3e0] sm:$0xff]
        %v1969 = vld [vmem:[%s916 + $0x3e8] sm:$0xff]
        %v1970 = vld [vmem:[%s916 + $0x3f0] sm:$0xff]
        %v1971 = vld [vmem:[%s916 + $0x3f8] sm:$0xff]
        %v1972 = vld [vmem:[%s985] sm:$0xf]
        %v1974 = vlaneseq
        %v1975 = vshrl.u32 %v1974, 7
        %v1976 = vsub.s32 0, %v1975
        %v1977 = vrot.slane %v1972, %v1976
        %v1978 = vlaneseq
        %v1979 = vshrl.u32 %v1978, 7
        %v1980 = vsub.s32 1, %v1979
        %v1981 = vrot.slane %v1972, %v1980
        %v1982 = vlaneseq
        %v1983 = vshrl.u32 %v1982, 7
        %v1984 = vsub.s32 2, %v1983
        %v1985 = vrot.slane %v1972, %v1984
        %v1986 = vlaneseq
        %v1987 = vshrl.u32 %v1986, 7
        %v1988 = vsub.s32 3, %v1987
        %v1989 = vrot.slane %v1972, %v1988
        %1994 = vmatprep.subr.mxu0 %v1905
        %1995 = vmatpush1.msra.mxu0 %v1904
        %1996 = vmatprep.subr.mxu0 %v1901
        %1997 = vmatpush1.msra.mxu0 %v1900
        %1998 = vmatprep.subr.mxu0 %v1897
        %1999 = vmatpush1.msra.mxu0 %v1896
        %2000 = vmatprep.subr.mxu0 %v1893
        %2001 = vmatpush1.msra.mxu0 %v1892
        %2002 = vmatprep.subr.mxu0 %v1889
        %2003 = vmatpush1.msra.mxu0 %v1888
        %2004 = vmatprep.subr.mxu0 %v1885
        %2005 = vmatpush1.msra.mxu0 %v1884
        %2006 = vmatprep.subr.mxu0 %v1881
        %2007 = vmatpush1.msra.mxu0 %v1880
        %2008 = vmatprep.subr.mxu0 %v1877
        %2009 = vmatpush1.msra.mxu0 %v1876
        %2010 = vmatprep.subr.mxu0 %v1873
        %2011 = vmatpush1.msra.mxu0 %v1872
        %2012 = vmatprep.subr.mxu0 %v1869
        %2013 = vmatpush1.msra.mxu0 %v1868
        %2014 = vmatprep.subr.mxu0 %v1865
        %2015 = vmatpush1.msra.mxu0 %v1864
        %2016 = vmatprep.subr.mxu0 %v1861
        %2017 = vmatpush1.msra.mxu0 %v1860
        %2018 = vmatprep.subr.mxu0 %v1857
        %2019 = vmatpush1.msra.mxu0 %v1856
        %2020 = vmatprep.subr.mxu0 %v1853
        %2021 = vmatpush1.msra.mxu0 %v1852
        %2022 = vmatprep.subr.mxu0 %v1849
        %2023 = vmatpush1.msra.mxu0 %v1848
        %2024 = vmatprep.subr.mxu0 %v1845
        %2025 = vmatpush1.msra.mxu0 %v1844
        %2026 = vmatprep.subr.mxu0 %v1969
        %2027 = vmatpush2.msra.mxu0 %v1968
        %2028 = vmatprep.subr.mxu0 %v1965
        %2029 = vmatpush2.msra.mxu0 %v1964
        %2030 = vmatprep.subr.mxu0 %v1961
        %2031 = vmatpush2.msra.mxu0 %v1960
        %2032 = vmatprep.subr.mxu0 %v1957
        %2033 = vmatpush2.msra.mxu0 %v1956
        %2034 = vmatprep.subr.mxu0 %v1953
        %2035 = vmatpush2.msra.mxu0 %v1952
        %2036 = vmatprep.subr.mxu0 %v1949
        %2037 = vmatpush2.msra.mxu0 %v1948
        %2038 = vmatprep.subr.mxu0 %v1945
        %2039 = vmatpush2.msra.mxu0 %v1944
        %2040 = vmatprep.subr.mxu0 %v1941
        %2041 = vmatpush2.msra.mxu0 %v1940
        %2042 = vmatprep.subr.mxu0 %v1937
        %2043 = vmatpush2.msra.mxu0 %v1936
        %2044 = vmatprep.subr.mxu0 %v1933
        %2045 = vmatpush2.msra.mxu0 %v1932
        %2046 = vmatprep.subr.mxu0 %v1929
        %2047 = vmatpush2.msra.mxu0 %v1928
        %2048 = vmatprep.subr.mxu0 %v1925
        %2049 = vmatpush2.msra.mxu0 %v1924
        %2050 = vmatprep.subr.mxu0 %v1921
        %2051 = vmatpush2.msra.mxu0 %v1920
        %2052 = vmatprep.subr.mxu0 %v1917
        %2053 = vmatpush2.msra.mxu0 %v1916
        %2054 = vmatprep.subr.mxu0 %v1913
        %2055 = vmatpush2.msra.mxu0 %v1912
        %2056 = vmatprep.subr.mxu0 %v1909
        %2057 = vmatpush2.msra.mxu0 %v1908
        %2058 = vmatprep.mubr.f32.mxu0 %v1341
        %2059 = vmatmul.mubr.f32.gmra.mxu0 %v1340
        %v2060 = vpop.f32.mrf.mxu0
        %v2061 = vadd.f32 %v1977, %v2060
        %v2062 = vpop.f32.mrf.mxu0
        %v2063 = vadd.f32 %v1981, %v2062
        %2064 = vmatprep.mubr.f32.mxu0 %v1343
        %2065 = vmatmul.mubr.f32.gmra.mxu0 %v1342
        %v2066 = vpop.f32.mrf.mxu0
        %v2067 = vadd.f32 %v1977, %v2066
        %v2068 = vpop.f32.mrf.mxu0
        %v2069 = vadd.f32 %v1981, %v2068
        %2070 = vmatprep.mubr.f32.mxu0 %v1345
        %2071 = vmatmul.mubr.f32.gmra.mxu0 %v1344
        %v2072 = vpop.f32.mrf.mxu0
        %v2073 = vadd.f32 %v1977, %v2072
        %v2074 = vpop.f32.mrf.mxu0
        %v2075 = vadd.f32 %v1981, %v2074
        %2076 = vmatprep.mubr.f32.mxu0 %v1347
        %2077 = vmatmul.mubr.f32.gmra.mxu0 %v1346
        %v2078 = vpop.f32.mrf.mxu0
        %v2079 = vadd.f32 %v1977, %v2078
        %v2080 = vpop.f32.mrf.mxu0
        %v2081 = vadd.f32 %v1981, %v2080
        %2082 = vmatprep.mubr.f32.mxu0 %v1349
        %2083 = vmatmul.mubr.f32.gmra.mxu0 %v1348
        %v2084 = vpop.f32.mrf.mxu0
        %v2085 = vadd.f32 %v1977, %v2084
        %v2086 = vpop.f32.mrf.mxu0
        %v2087 = vadd.f32 %v1981, %v2086
        %2088 = vmatprep.mubr.f32.mxu0 %v1351
        %2089 = vmatmul.mubr.f32.gmra.mxu0 %v1350
        %v2090 = vpop.f32.mrf.mxu0
        %v2091 = vadd.f32 %v1977, %v2090
        %v2092 = vpop.f32.mrf.mxu0
        %v2093 = vadd.f32 %v1981, %v2092
        %2094 = vmatprep.mubr.f32.mxu0 %v1353
        %2095 = vmatmul.mubr.f32.gmra.mxu0 %v1352
        %v2096 = vpop.f32.mrf.mxu0
        %v2097 = vadd.f32 %v1977, %v2096
        %v2098 = vpop.f32.mrf.mxu0
        %v2099 = vadd.f32 %v1981, %v2098
        %2100 = vmatprep.mubr.f32.mxu0 %v1355
        %2101 = vmatmul.mubr.f32.gmra.mxu0 %v1354
        %v2102 = vpop.f32.mrf.mxu0
        %v2103 = vadd.f32 %v1977, %v2102
        %v2104 = vpop.f32.mrf.mxu0
        %v2105 = vadd.f32 %v1981, %v2104
        %2106 = vmatprep.mubr.f32.mxu0 %v1357
        %2107 = vmatmul.mubr.f32.gmra.mxu0 %v1356
        %v2108 = vpop.f32.mrf.mxu0
        %v2109 = vadd.f32 %v1977, %v2108
        %v2110 = vpop.f32.mrf.mxu0
        %v2111 = vadd.f32 %v1981, %v2110
        %2112 = vmatprep.mubr.f32.mxu0 %v1359
        %2113 = vmatmul.mubr.f32.gmra.mxu0 %v1358
        %v2114 = vpop.f32.mrf.mxu0
        %v2115 = vadd.f32 %v1977, %v2114
        %v2116 = vpop.f32.mrf.mxu0
        %v2117 = vadd.f32 %v1981, %v2116
        %2118 = vmatprep.mubr.f32.mxu0 %v1361
        %2119 = vmatmul.mubr.f32.gmra.mxu0 %v1360
        %v2120 = vpop.f32.mrf.mxu0
        %v2121 = vadd.f32 %v1977, %v2120
        %v2122 = vpop.f32.mrf.mxu0
        %v2123 = vadd.f32 %v1981, %v2122
        %2124 = vmatprep.mubr.f32.mxu0 %v1363
        %2125 = vmatmul.mubr.f32.gmra.mxu0 %v1362
        %v2126 = vpop.f32.mrf.mxu0
        %v2127 = vadd.f32 %v1977, %v2126
        %v2128 = vpop.f32.mrf.mxu0
        %v2129 = vadd.f32 %v1981, %v2128
        %2130 = vmatprep.mubr.f32.mxu0 %v1365
        %2131 = vmatmul.mubr.f32.gmra.mxu0 %v1364
        %v2132 = vpop.f32.mrf.mxu0
        %v2133 = vadd.f32 %v1977, %v2132
        %v2134 = vpop.f32.mrf.mxu0
        %v2135 = vadd.f32 %v1981, %v2134
        %2136 = vmatprep.mubr.f32.mxu0 %v1367
        %2137 = vmatmul.mubr.f32.gmra.mxu0 %v1366
        %v2138 = vpop.f32.mrf.mxu0
        %v2139 = vadd.f32 %v1977, %v2138
        %v2140 = vpop.f32.mrf.mxu0
        %v2141 = vadd.f32 %v1981, %v2140
        %2142 = vmatprep.mubr.f32.mxu0 %v1369
        %2143 = vmatmul.mubr.f32.gmra.mxu0 %v1368
        %v2144 = vpop.f32.mrf.mxu0
        %v2145 = vadd.f32 %v1977, %v2144
        %v2146 = vpop.f32.mrf.mxu0
        %v2147 = vadd.f32 %v1981, %v2146
        %2148 = vmatprep.mubr.f32.mxu0 %v1371
        %2149 = vmatmul.mubr.f32.gmra.mxu0 %v1370
        %v2150 = vpop.f32.mrf.mxu0
        %v2151 = vadd.f32 %v1977, %v2150
        %v2152 = vpop.f32.mrf.mxu0
        %v2153 = vadd.f32 %v1981, %v2152
        %2154 = vdwg.mxu0
        %2155 = vmatprep.subr.mxu0 %v1907
        %2156 = vmatpush1.msra.mxu0 %v1906
        %2157 = vmatprep.subr.mxu0 %v1903
        %2158 = vmatpush1.msra.mxu0 %v1902
        %2159 = vmatprep.subr.mxu0 %v1899
        %2160 = vmatpush1.msra.mxu0 %v1898
        %2161 = vmatprep.subr.mxu0 %v1895
        %2162 = vmatpush1.msra.mxu0 %v1894
        %2163 = vmatprep.subr.mxu0 %v1891
        %2164 = vmatpush1.msra.mxu0 %v1890
        %2165 = vmatprep.subr.mxu0 %v1887
        %2166 = vmatpush1.msra.mxu0 %v1886
        %2167 = vmatprep.subr.mxu0 %v1883
        %2168 = vmatpush1.msra.mxu0 %v1882
        %2169 = vmatprep.subr.mxu0 %v1879
        %2170 = vmatpush1.msra.mxu0 %v1878
        %2171 = vmatprep.subr.mxu0 %v1875
        %2172 = vmatpush1.msra.mxu0 %v1874
        %2173 = vmatprep.subr.mxu0 %v1871
        %2174 = vmatpush1.msra.mxu0 %v1870
        %2175 = vmatprep.subr.mxu0 %v1867
        %2176 = vmatpush1.msra.mxu0 %v1866
        %2177 = vmatprep.subr.mxu0 %v1863
        %2178 = vmatpush1.msra.mxu0 %v1862
        %2179 = vmatprep.subr.mxu0 %v1859
        %2180 = vmatpush1.msra.mxu0 %v1858
        %2181 = vmatprep.subr.mxu0 %v1855
        %2182 = vmatpush1.msra.mxu0 %v1854
        %2183 = vmatprep.subr.mxu0 %v1851
        %2184 = vmatpush1.msra.mxu0 %v1850
        %2185 = vmatprep.subr.mxu0 %v1847
        %2186 = vmatpush1.msra.mxu0 %v1846
        %2187 = vmatprep.subr.mxu0 %v1971
        %2188 = vmatpush2.msra.mxu0 %v1970
        %2189 = vmatprep.subr.mxu0 %v1967
        %2190 = vmatpush2.msra.mxu0 %v1966
        %2191 = vmatprep.subr.mxu0 %v1963
        %2192 = vmatpush2.msra.mxu0 %v1962
        %2193 = vmatprep.subr.mxu0 %v1959
        %2194 = vmatpush2.msra.mxu0 %v1958
        %2195 = vmatprep.subr.mxu0 %v1955
        %2196 = vmatpush2.msra.mxu0 %v1954
        %2197 = vmatprep.subr.mxu0 %v1951
        %2198 = vmatpush2.msra.mxu0 %v1950
        %2199 = vmatprep.subr.mxu0 %v1947
        %2200 = vmatpush2.msra.mxu0 %v1946
        %2201 = vmatprep.subr.mxu0 %v1943
        %2202 = vmatpush2.msra.mxu0 %v1942
        %2203 = vmatprep.subr.mxu0 %v1939
        %2204 = vmatpush2.msra.mxu0 %v1938
        %2205 = vmatprep.subr.mxu0 %v1935
        %2206 = vmatpush2.msra.mxu0 %v1934
        %2207 = vmatprep.subr.mxu0 %v1931
        %2208 = vmatpush2.msra.mxu0 %v1930
        %2209 = vmatprep.subr.mxu0 %v1927
        %2210 = vmatpush2.msra.mxu0 %v1926
        %2211 = vmatprep.subr.mxu0 %v1923
        %2212 = vmatpush2.msra.mxu0 %v1922
        %2213 = vmatprep.subr.mxu0 %v1919
        %2214 = vmatpush2.msra.mxu0 %v1918
        %2215 = vmatprep.subr.mxu0 %v1915
        %2216 = vmatpush2.msra.mxu0 %v1914
        %2217 = vmatprep.subr.mxu0 %v1911
        %2218 = vmatpush2.msra.mxu0 %v1910
        %2219 = vmatprep.mubr.f32.mxu0 %v1341
        %2220 = vmatmul.mubr.f32.gmra.mxu0 %v1340
        %v2221 = vpop.f32.mrf.mxu0
        %v2222 = vadd.f32 %v1985, %v2221
        %v2223 = vpop.f32.mrf.mxu0
        %v2224 = vadd.f32 %v1989, %v2223
        %2225 = vmatprep.mubr.f32.mxu0 %v1343
        %2226 = vmatmul.mubr.f32.gmra.mxu0 %v1342
        %v2227 = vpop.f32.mrf.mxu0
        %v2228 = vadd.f32 %v1985, %v2227
        %v2229 = vpop.f32.mrf.mxu0
        %v2230 = vadd.f32 %v1989, %v2229
        %2231 = vmatprep.mubr.f32.mxu0 %v1345
        %2232 = vmatmul.mubr.f32.gmra.mxu0 %v1344
        %v2233 = vpop.f32.mrf.mxu0
        %v2234 = vadd.f32 %v1985, %v2233
        %v2235 = vpop.f32.mrf.mxu0
        %v2236 = vadd.f32 %v1989, %v2235
        %2237 = vmatprep.mubr.f32.mxu0 %v1347
        %2238 = vmatmul.mubr.f32.gmra.mxu0 %v1346
        %v2239 = vpop.f32.mrf.mxu0
        %v2240 = vadd.f32 %v1985, %v2239
        %v2241 = vpop.f32.mrf.mxu0
        %v2242 = vadd.f32 %v1989, %v2241
        %2243 = vmatprep.mubr.f32.mxu0 %v1349
        %2244 = vmatmul.mubr.f32.gmra.mxu0 %v1348
        %v2245 = vpop.f32.mrf.mxu0
        %v2246 = vadd.f32 %v1985, %v2245
        %v2247 = vpop.f32.mrf.mxu0
        %v2248 = vadd.f32 %v1989, %v2247
        %2249 = vmatprep.mubr.f32.mxu0 %v1351
        %2250 = vmatmul.mubr.f32.gmra.mxu0 %v1350
        %v2251 = vpop.f32.mrf.mxu0
        %v2252 = vadd.f32 %v1985, %v2251
        %v2253 = vpop.f32.mrf.mxu0
        %v2254 = vadd.f32 %v1989, %v2253
        %2255 = vmatprep.mubr.f32.mxu0 %v1353
        %2256 = vmatmul.mubr.f32.gmra.mxu0 %v1352
        %v2257 = vpop.f32.mrf.mxu0
        %v2258 = vadd.f32 %v1985, %v2257
        %v2259 = vpop.f32.mrf.mxu0
        %v2260 = vadd.f32 %v1989, %v2259
        %2261 = vmatprep.mubr.f32.mxu0 %v1355
        %2262 = vmatmul.mubr.f32.gmra.mxu0 %v1354
        %v2263 = vpop.f32.mrf.mxu0
        %v2264 = vadd.f32 %v1985, %v2263
        %v2265 = vpop.f32.mrf.mxu0
        %v2266 = vadd.f32 %v1989, %v2265
        %2267 = vmatprep.mubr.f32.mxu0 %v1357
        %2268 = vmatmul.mubr.f32.gmra.mxu0 %v1356
        %v2269 = vpop.f32.mrf.mxu0
        %v2270 = vadd.f32 %v1985, %v2269
        %v2271 = vpop.f32.mrf.mxu0
        %v2272 = vadd.f32 %v1989, %v2271
        %2273 = vmatprep.mubr.f32.mxu0 %v1359
        %2274 = vmatmul.mubr.f32.gmra.mxu0 %v1358
        %v2275 = vpop.f32.mrf.mxu0
        %v2276 = vadd.f32 %v1985, %v2275
        %v2277 = vpop.f32.mrf.mxu0
        %v2278 = vadd.f32 %v1989, %v2277
        %2279 = vmatprep.mubr.f32.mxu0 %v1361
        %2280 = vmatmul.mubr.f32.gmra.mxu0 %v1360
        %v2281 = vpop.f32.mrf.mxu0
        %v2282 = vadd.f32 %v1985, %v2281
        %v2283 = vpop.f32.mrf.mxu0
        %v2284 = vadd.f32 %v1989, %v2283
        %2285 = vmatprep.mubr.f32.mxu0 %v1363
        %2286 = vmatmul.mubr.f32.gmra.mxu0 %v1362
        %v2287 = vpop.f32.mrf.mxu0
        %v2288 = vadd.f32 %v1985, %v2287
        %v2289 = vpop.f32.mrf.mxu0
        %v2290 = vadd.f32 %v1989, %v2289
        %2291 = vmatprep.mubr.f32.mxu0 %v1365
        %2292 = vmatmul.mubr.f32.gmra.mxu0 %v1364
        %v2293 = vpop.f32.mrf.mxu0
        %v2294 = vadd.f32 %v1985, %v2293
        %v2295 = vpop.f32.mrf.mxu0
        %v2296 = vadd.f32 %v1989, %v2295
        %2297 = vmatprep.mubr.f32.mxu0 %v1367
        %2298 = vmatmul.mubr.f32.gmra.mxu0 %v1366
        %v2299 = vpop.f32.mrf.mxu0
        %v2300 = vadd.f32 %v1985, %v2299
        %v2301 = vpop.f32.mrf.mxu0
        %v2302 = vadd.f32 %v1989, %v2301
        %2303 = vmatprep.mubr.f32.mxu0 %v1369
        %2304 = vmatmul.mubr.f32.gmra.mxu0 %v1368
        %v2305 = vpop.f32.mrf.mxu0
        %v2306 = vadd.f32 %v1985, %v2305
        %v2307 = vpop.f32.mrf.mxu0
        %v2308 = vadd.f32 %v1989, %v2307
        %2309 = vmatprep.mubr.f32.mxu0 %v1371
        %2310 = vmatmul.mubr.f32.gmra.mxu0 %v1370
        %v2311 = vpop.f32.mrf.mxu0
        %v2312 = vadd.f32 %v1985, %v2311
        %v2313 = vpop.f32.mrf.mxu0
        %v2314 = vadd.f32 %v1989, %v2313
        %2315 = vdwg.mxu0
        %v2316 = vmul.f32 %v2061, 0.5
        %v2317 = vmul.f32 %v2063, 0.5
        %v2318 = vmul.f32 %v2222, 0.5
        %v2319 = vmul.f32 %v2224, 0.5
        %v2320 = vmul.f32 %v2067, 0.5
        %v2321 = vmul.f32 %v2069, 0.5
        %v2322 = vmul.f32 %v2228, 0.5
        %v2323 = vmul.f32 %v2230, 0.5
        %v2324 = vmul.f32 %v2073, 0.5
        %v2325 = vmul.f32 %v2075, 0.5
        %v2326 = vmul.f32 %v2234, 0.5
        %v2327 = vmul.f32 %v2236, 0.5
        %v2328 = vmul.f32 %v2079, 0.5
        %v2329 = vmul.f32 %v2081, 0.5
        %v2330 = vmul.f32 %v2240, 0.5
        %v2331 = vmul.f32 %v2242, 0.5
        %v2332 = vmul.f32 %v2085, 0.5
        %v2333 = vmul.f32 %v2087, 0.5
        %v2334 = vmul.f32 %v2246, 0.5
        %v2335 = vmul.f32 %v2248, 0.5
        %v2336 = vmul.f32 %v2091, 0.5
        %v2337 = vmul.f32 %v2093, 0.5
        %v2338 = vmul.f32 %v2252, 0.5
        %v2339 = vmul.f32 %v2254, 0.5
        %v2340 = vmul.f32 %v2097, 0.5
        %v2341 = vmul.f32 %v2099, 0.5
        %v2342 = vmul.f32 %v2258, 0.5
        %v2343 = vmul.f32 %v2260, 0.5
        %v2344 = vmul.f32 %v2103, 0.5
        %v2345 = vmul.f32 %v2105, 0.5
        %v2346 = vmul.f32 %v2264, 0.5
        %v2347 = vmul.f32 %v2266, 0.5
        %v2348 = vmul.f32 %v2109, 0.5
        %v2349 = vmul.f32 %v2111, 0.5
        %v2350 = vmul.f32 %v2270, 0.5
        %v2351 = vmul.f32 %v2272, 0.5
        %v2352 = vmul.f32 %v2115, 0.5
        %v2353 = vmul.f32 %v2117, 0.5
        %v2354 = vmul.f32 %v2276, 0.5
        %v2355 = vmul.f32 %v2278, 0.5
        %v2356 = vmul.f32 %v2121, 0.5
        %v2357 = vmul.f32 %v2123, 0.5
        %v2358 = vmul.f32 %v2282, 0.5
        %v2359 = vmul.f32 %v2284, 0.5
        %v2360 = vmul.f32 %v2127, 0.5
        %v2361 = vmul.f32 %v2129, 0.5
        %v2362 = vmul.f32 %v2288, 0.5
        %v2363 = vmul.f32 %v2290, 0.5
        %v2364 = vmul.f32 %v2133, 0.5
        %v2365 = vmul.f32 %v2135, 0.5
        %v2366 = vmul.f32 %v2294, 0.5
        %v2367 = vmul.f32 %v2296, 0.5
        %v2368 = vmul.f32 %v2139, 0.5
        %v2369 = vmul.f32 %v2141, 0.5
        %v2370 = vmul.f32 %v2300, 0.5
        %v2371 = vmul.f32 %v2302, 0.5
        %v2372 = vmul.f32 %v2145, 0.5
        %v2373 = vmul.f32 %v2147, 0.5
        %v2374 = vmul.f32 %v2306, 0.5
        %v2375 = vmul.f32 %v2308, 0.5
        %v2376 = vmul.f32 %v2151, 0.5
        %v2377 = vmul.f32 %v2153, 0.5
        %v2378 = vmul.f32 %v2312, 0.5
        %v2379 = vmul.f32 %v2314, 0.5
        %v2380 = vmul.f32 %v2061, 0.70710677
        %v2381 = vmul.f32 %v2063, 0.70710677
        %v2382 = vmul.f32 %v2222, 0.70710677
        %v2383 = vmul.f32 %v2224, 0.70710677
        %v2384 = vmul.f32 %v2067, 0.70710677
        %v2385 = vmul.f32 %v2069, 0.70710677
        %v2386 = vmul.f32 %v2228, 0.70710677
        %v2387 = vmul.f32 %v2230, 0.70710677
        %v2388 = vmul.f32 %v2073, 0.70710677
        %v2389 = vmul.f32 %v2075, 0.70710677
        %v2390 = vmul.f32 %v2234, 0.70710677
        %v2391 = vmul.f32 %v2236, 0.70710677
        %v2392 = vmul.f32 %v2079, 0.70710677
        %v2393 = vmul.f32 %v2081, 0.70710677
        %v2394 = vmul.f32 %v2240, 0.70710677
        %v2395 = vmul.f32 %v2242, 0.70710677
        %v2396 = vmul.f32 %v2085, 0.70710677
        %v2397 = vmul.f32 %v2087, 0.70710677
        %v2398 = vmul.f32 %v2246, 0.70710677
        %v2399 = vmul.f32 %v2248, 0.70710677
        %v2400 = vmul.f32 %v2091, 0.70710677
        %v2401 = vmul.f32 %v2093, 0.70710677
        %v2402 = vmul.f32 %v2252, 0.70710677
        %v2403 = vmul.f32 %v2254, 0.70710677
        %v2404 = vmul.f32 %v2097, 0.70710677
        %v2405 = vmul.f32 %v2099, 0.70710677
        %v2406 = vmul.f32 %v2258, 0.70710677
        %v2407 = vmul.f32 %v2260, 0.70710677
        %v2408 = vmul.f32 %v2103, 0.70710677
        %v2409 = vmul.f32 %v2105, 0.70710677
        %v2410 = vmul.f32 %v2264, 0.70710677
        %v2411 = vmul.f32 %v2266, 0.70710677
        %v2412 = vmul.f32 %v2109, 0.70710677
        %v2413 = vmul.f32 %v2111, 0.70710677
        %v2414 = vmul.f32 %v2270, 0.70710677
        %v2415 = vmul.f32 %v2272, 0.70710677
        %v2416 = vmul.f32 %v2115, 0.70710677
        %v2417 = vmul.f32 %v2117, 0.70710677
        %v2418 = vmul.f32 %v2276, 0.70710677
        %v2419 = vmul.f32 %v2278, 0.70710677
        %v2420 = vmul.f32 %v2121, 0.70710677
        %v2421 = vmul.f32 %v2123, 0.70710677
        %v2422 = vmul.f32 %v2282, 0.70710677
        %v2423 = vmul.f32 %v2284, 0.70710677
        %v2424 = vmul.f32 %v2127, 0.70710677
        %v2425 = vmul.f32 %v2129, 0.70710677
        %v2426 = vmul.f32 %v2288, 0.70710677
        %v2427 = vmul.f32 %v2290, 0.70710677
        %v2428 = vmul.f32 %v2133, 0.70710677
        %v2429 = vmul.f32 %v2135, 0.70710677
        %v2430 = vmul.f32 %v2294, 0.70710677
        %v2431 = vmul.f32 %v2296, 0.70710677
        %v2432 = vmul.f32 %v2139, 0.70710677
        %v2433 = vmul.f32 %v2141, 0.70710677
        %v2434 = vmul.f32 %v2300, 0.70710677
        %v2435 = vmul.f32 %v2302, 0.70710677
        %v2436 = vmul.f32 %v2145, 0.70710677
        %v2437 = vmul.f32 %v2147, 0.70710677
        %v2438 = vmul.f32 %v2306, 0.70710677
        %v2439 = vmul.f32 %v2308, 0.70710677
        %v2440 = vmul.f32 %v2151, 0.70710677
        %v2441 = vmul.f32 %v2153, 0.70710677
        %v2442 = vmul.f32 %v2312, 0.70710677
        %v2443 = vmul.f32 %v2314, 0.70710677
        %v2444 = verf.f32.pop %v2380
        %v2445 = verf.f32.pop %v2381
        %v2446 = verf.f32.pop %v2382
        %v2447 = verf.f32.pop %v2383
        %v2448 = verf.f32.pop %v2384
        %v2449 = verf.f32.pop %v2385
        %v2450 = verf.f32.pop %v2386
        %v2451 = verf.f32.pop %v2387
        %v2452 = verf.f32.pop %v2388
        %v2453 = verf.f32.pop %v2389
        %v2454 = verf.f32.pop %v2390
        %v2455 = verf.f32.pop %v2391
        %v2456 = verf.f32.pop %v2392
        %v2457 = verf.f32.pop %v2393
        %v2458 = verf.f32.pop %v2394
        %v2459 = verf.f32.pop %v2395
        %v2460 = verf.f32.pop %v2396
        %v2461 = verf.f32.pop %v2397
        %v2462 = verf.f32.pop %v2398
        %v2463 = verf.f32.pop %v2399
        %v2464 = verf.f32.pop %v2400
        %v2465 = verf.f32.pop %v2401
        %v2466 = verf.f32.pop %v2402
        %v2467 = verf.f32.pop %v2403
        %v2468 = verf.f32.pop %v2404
        %v2469 = verf.f32.pop %v2405
        %v2470 = verf.f32.pop %v2406
        %v2471 = verf.f32.pop %v2407
        %v2472 = verf.f32.pop %v2408
        %v2473 = verf.f32.pop %v2409
        %v2474 = verf.f32.pop %v2410
        %v2475 = verf.f32.pop %v2411
        %v2476 = verf.f32.pop %v2412
        %v2477 = verf.f32.pop %v2413
        %v2478 = verf.f32.pop %v2414
        %v2479 = verf.f32.pop %v2415
        %v2480 = verf.f32.pop %v2416
        %v2481 = verf.f32.pop %v2417
        %v2482 = verf.f32.pop %v2418
        %v2483 = verf.f32.pop %v2419
        %v2484 = verf.f32.pop %v2420
        %v2485 = verf.f32.pop %v2421
        %v2486 = verf.f32.pop %v2422
        %v2487 = verf.f32.pop %v2423
        %v2488 = verf.f32.pop %v2424
        %v2489 = verf.f32.pop %v2425
        %v2490 = verf.f32.pop %v2426
        %v2491 = verf.f32.pop %v2427
        %v2492 = verf.f32.pop %v2428
        %v2493 = verf.f32.pop %v2429
        %v2494 = verf.f32.pop %v2430
        %v2495 = verf.f32.pop %v2431
        %v2496 = verf.f32.pop %v2432
        %v2497 = verf.f32.pop %v2433
        %v2498 = verf.f32.pop %v2434
        %v2499 = verf.f32.pop %v2435
        %v2500 = verf.f32.pop %v2436
        %v2501 = verf.f32.pop %v2437
        %v2502 = verf.f32.pop %v2438
        %v2503 = verf.f32.pop %v2439
        %v2504 = verf.f32.pop %v2440
        %v2505 = verf.f32.pop %v2441
        %v2506 = verf.f32.pop %v2442
        %v2507 = verf.f32.pop %v2443
        %v2508 = vadd.f32 %v2444, 1.0
        %v2509 = vadd.f32 %v2445, 1.0
        %v2510 = vadd.f32 %v2446, 1.0
        %v2511 = vadd.f32 %v2447, 1.0
        %v2512 = vadd.f32 %v2448, 1.0
        %v2513 = vadd.f32 %v2449, 1.0
        %v2514 = vadd.f32 %v2450, 1.0
        %v2515 = vadd.f32 %v2451, 1.0
        %v2516 = vadd.f32 %v2452, 1.0
        %v2517 = vadd.f32 %v2453, 1.0
        %v2518 = vadd.f32 %v2454, 1.0
        %v2519 = vadd.f32 %v2455, 1.0
        %v2520 = vadd.f32 %v2456, 1.0
        %v2521 = vadd.f32 %v2457, 1.0
        %v2522 = vadd.f32 %v2458, 1.0
        %v2523 = vadd.f32 %v2459, 1.0
        %v2524 = vadd.f32 %v2460, 1.0
        %v2525 = vadd.f32 %v2461, 1.0
        %v2526 = vadd.f32 %v2462, 1.0
        %v2527 = vadd.f32 %v2463, 1.0
        %v2528 = vadd.f32 %v2464, 1.0
        %v2529 = vadd.f32 %v2465, 1.0
        %v2530 = vadd.f32 %v2466, 1.0
        %v2531 = vadd.f32 %v2467, 1.0
        %v2532 = vadd.f32 %v2468, 1.0
        %v2533 = vadd.f32 %v2469, 1.0
        %v2534 = vadd.f32 %v2470, 1.0
        %v2535 = vadd.f32 %v2471, 1.0
        %v2536 = vadd.f32 %v2472, 1.0
        %v2537 = vadd.f32 %v2473, 1.0
        %v2538 = vadd.f32 %v2474, 1.0
        %v2539 = vadd.f32 %v2475, 1.0
        %v2540 = vadd.f32 %v2476, 1.0
        %v2541 = vadd.f32 %v2477, 1.0
        %v2542 = vadd.f32 %v2478, 1.0
        %v2543 = vadd.f32 %v2479, 1.0
        %v2544 = vadd.f32 %v2480, 1.0
        %v2545 = vadd.f32 %v2481, 1.0
        %v2546 = vadd.f32 %v2482, 1.0
        %v2547 = vadd.f32 %v2483, 1.0
        %v2548 = vadd.f32 %v2484, 1.0
        %v2549 = vadd.f32 %v2485, 1.0
        %v2550 = vadd.f32 %v2486, 1.0
        %v2551 = vadd.f32 %v2487, 1.0
        %v2552 = vadd.f32 %v2488, 1.0
        %v2553 = vadd.f32 %v2489, 1.0
        %v2554 = vadd.f32 %v2490, 1.0
        %v2555 = vadd.f32 %v2491, 1.0
        %v2556 = vadd.f32 %v2492, 1.0
        %v2557 = vadd.f32 %v2493, 1.0
        %v2558 = vadd.f32 %v2494, 1.0
        %v2559 = vadd.f32 %v2495, 1.0
        %v2560 = vadd.f32 %v2496, 1.0
        %v2561 = vadd.f32 %v2497, 1.0
        %v2562 = vadd.f32 %v2498, 1.0
        %v2563 = vadd.f32 %v2499, 1.0
        %v2564 = vadd.f32 %v2500, 1.0
        %v2565 = vadd.f32 %v2501, 1.0
        %v2566 = vadd.f32 %v2502, 1.0
        %v2567 = vadd.f32 %v2503, 1.0
        %v2568 = vadd.f32 %v2504, 1.0
        %v2569 = vadd.f32 %v2505, 1.0
        %v2570 = vadd.f32 %v2506, 1.0
        %v2571 = vadd.f32 %v2507, 1.0
        %v2572 = vmul.f32 %v2316, %v2508
        %v2573 = vmul.f32 %v2317, %v2509
        %v2574 = vmul.f32 %v2318, %v2510
        %v2575 = vmul.f32 %v2319, %v2511
        %v2576 = vmul.f32 %v2320, %v2512
        %v2577 = vmul.f32 %v2321, %v2513
        %v2578 = vmul.f32 %v2322, %v2514
        %v2579 = vmul.f32 %v2323, %v2515
        %v2580 = vmul.f32 %v2324, %v2516
        %v2581 = vmul.f32 %v2325, %v2517
        %v2582 = vmul.f32 %v2326, %v2518
        %v2583 = vmul.f32 %v2327, %v2519
        %v2584 = vmul.f32 %v2328, %v2520
        %v2585 = vmul.f32 %v2329, %v2521
        %v2586 = vmul.f32 %v2330, %v2522
        %v2587 = vmul.f32 %v2331, %v2523
        %v2588 = vmul.f32 %v2332, %v2524
        %v2589 = vmul.f32 %v2333, %v2525
        %v2590 = vmul.f32 %v2334, %v2526
        %v2591 = vmul.f32 %v2335, %v2527
        %v2592 = vmul.f32 %v2336, %v2528
        %v2593 = vmul.f32 %v2337, %v2529
        %v2594 = vmul.f32 %v2338, %v2530
        %v2595 = vmul.f32 %v2339, %v2531
        %v2596 = vmul.f32 %v2340, %v2532
        %v2597 = vmul.f32 %v2341, %v2533
        %v2598 = vmul.f32 %v2342, %v2534
        %v2599 = vmul.f32 %v2343, %v2535
        %v2600 = vmul.f32 %v2344, %v2536
        %v2601 = vmul.f32 %v2345, %v2537
        %v2602 = vmul.f32 %v2346, %v2538
        %v2603 = vmul.f32 %v2347, %v2539
        %v2604 = vmul.f32 %v2348, %v2540
        %v2605 = vmul.f32 %v2349, %v2541
        %v2606 = vmul.f32 %v2350, %v2542
        %v2607 = vmul.f32 %v2351, %v2543
        %v2608 = vmul.f32 %v2352, %v2544
        %v2609 = vmul.f32 %v2353, %v2545
        %v2610 = vmul.f32 %v2354, %v2546
        %v2611 = vmul.f32 %v2355, %v2547
        %v2612 = vmul.f32 %v2356, %v2548
        %v2613 = vmul.f32 %v2357, %v2549
        %v2614 = vmul.f32 %v2358, %v2550
        %v2615 = vmul.f32 %v2359, %v2551
        %v2616 = vmul.f32 %v2360, %v2552
        %v2617 = vmul.f32 %v2361, %v2553
        %v2618 = vmul.f32 %v2362, %v2554
        %v2619 = vmul.f32 %v2363, %v2555
        %v2620 = vmul.f32 %v2364, %v2556
        %v2621 = vmul.f32 %v2365, %v2557
        %v2622 = vmul.f32 %v2366, %v2558
        %v2623 = vmul.f32 %v2367, %v2559
        %v2624 = vmul.f32 %v2368, %v2560
        %v2625 = vmul.f32 %v2369, %v2561
        %v2626 = vmul.f32 %v2370, %v2562
        %v2627 = vmul.f32 %v2371, %v2563
        %v2628 = vmul.f32 %v2372, %v2564
        %v2629 = vmul.f32 %v2373, %v2565
        %v2630 = vmul.f32 %v2374, %v2566
        %v2631 = vmul.f32 %v2375, %v2567
        %v2632 = vmul.f32 %v2376, %v2568
        %v2633 = vmul.f32 %v2377, %v2569
        %v2634 = vmul.f32 %v2378, %v2570
        %v2635 = vmul.f32 %v2379, %v2571
        %v2636 = vmul.f32 %v1589, %v2572
        %v2637 = vmul.f32 %v1591, %v2573
        %v2638 = vmul.f32 %v1750, %v2574
        %v2639 = vmul.f32 %v1752, %v2575
        %v2640 = vmul.f32 %v1595, %v2576
        %v2641 = vmul.f32 %v1597, %v2577
        %v2642 = vmul.f32 %v1756, %v2578
        %v2643 = vmul.f32 %v1758, %v2579
        %v2644 = vmul.f32 %v1601, %v2580
        %v2645 = vmul.f32 %v1603, %v2581
        %v2646 = vmul.f32 %v1762, %v2582
        %v2647 = vmul.f32 %v1764, %v2583
        %v2648 = vmul.f32 %v1607, %v2584
        %v2649 = vmul.f32 %v1609, %v2585
        %v2650 = vmul.f32 %v1768, %v2586
        %v2651 = vmul.f32 %v1770, %v2587
        %v2652 = vmul.f32 %v1613, %v2588
        %v2653 = vmul.f32 %v1615, %v2589
        %v2654 = vmul.f32 %v1774, %v2590
        %v2655 = vmul.f32 %v1776, %v2591
        %v2656 = vmul.f32 %v1619, %v2592
        %v2657 = vmul.f32 %v1621, %v2593
        %v2658 = vmul.f32 %v1780, %v2594
        %v2659 = vmul.f32 %v1782, %v2595
        %v2660 = vmul.f32 %v1625, %v2596
        %v2661 = vmul.f32 %v1627, %v2597
        %v2662 = vmul.f32 %v1786, %v2598
        %v2663 = vmul.f32 %v1788, %v2599
        %v2664 = vmul.f32 %v1631, %v2600
        %v2665 = vmul.f32 %v1633, %v2601
        %v2666 = vmul.f32 %v1792, %v2602
        %v2667 = vmul.f32 %v1794, %v2603
        %v2668 = vmul.f32 %v1637, %v2604
        %v2669 = vmul.f32 %v1639, %v2605
        %v2670 = vmul.f32 %v1798, %v2606
        %v2671 = vmul.f32 %v1800, %v2607
        %v2672 = vmul.f32 %v1643, %v2608
        %v2673 = vmul.f32 %v1645, %v2609
        %v2674 = vmul.f32 %v1804, %v2610
        %v2675 = vmul.f32 %v1806, %v2611
        %v2676 = vmul.f32 %v1649, %v2612
        %v2677 = vmul.f32 %v1651, %v2613
        %v2678 = vmul.f32 %v1810, %v2614
        %v2679 = vmul.f32 %v1812, %v2615
        %v2680 = vmul.f32 %v1655, %v2616
        %v2681 = vmul.f32 %v1657, %v2617
        %v2682 = vmul.f32 %v1816, %v2618
        %v2683 = vmul.f32 %v1818, %v2619
        %v2684 = vmul.f32 %v1661, %v2620
        %v2685 = vmul.f32 %v1663, %v2621
        %v2686 = vmul.f32 %v1822, %v2622
        %v2687 = vmul.f32 %v1824, %v2623
        %v2688 = vmul.f32 %v1667, %v2624
        %v2689 = vmul.f32 %v1669, %v2625
        %v2690 = vmul.f32 %v1828, %v2626
        %v2691 = vmul.f32 %v1830, %v2627
        %v2692 = vmul.f32 %v1673, %v2628
        %v2693 = vmul.f32 %v1675, %v2629
        %v2694 = vmul.f32 %v1834, %v2630
        %v2695 = vmul.f32 %v1836, %v2631
        %v2696 = vmul.f32 %v1679, %v2632
        %v2697 = vmul.f32 %v1681, %v2633
        %v2698 = vmul.f32 %v1840, %v2634
        %v2699 = vmul.f32 %v1842, %v2635
        %v2700 = vld [vmem:[%s992] sm:$0xff]
        %v2701 = vld [vmem:[%s992 + $0x8] sm:$0xff]
        %v2702 = vld [vmem:[%s992 + $0x10] sm:$0xff]
        %v2703 = vld [vmem:[%s992 + $0x18] sm:$0xff]
        %v2704 = vld [vmem:[%s992 + $0x20] sm:$0xff]
        %v2705 = vld [vmem:[%s992 + $0x28] sm:$0xff]
        %v2706 = vld [vmem:[%s992 + $0x30] sm:$0xff]
        %v2707 = vld [vmem:[%s992 + $0x38] sm:$0xff]
        %v2708 = vld [vmem:[%s992 + $0x40] sm:$0xff]
        %v2709 = vld [vmem:[%s992 + $0x48] sm:$0xff]
        %v2710 = vld [vmem:[%s992 + $0x50] sm:$0xff]
        %v2711 = vld [vmem:[%s992 + $0x58] sm:$0xff]
        %v2712 = vld [vmem:[%s992 + $0x60] sm:$0xff]
        %v2713 = vld [vmem:[%s992 + $0x68] sm:$0xff]
        %v2714 = vld [vmem:[%s992 + $0x70] sm:$0xff]
        %v2715 = vld [vmem:[%s992 + $0x78] sm:$0xff]
        %v2716 = vld [vmem:[%s992 + $0x80] sm:$0xff]
        %v2717 = vld [vmem:[%s992 + $0x88] sm:$0xff]
        %v2718 = vld [vmem:[%s992 + $0x90] sm:$0xff]
        %v2719 = vld [vmem:[%s992 + $0x98] sm:$0xff]
        %v2720 = vld [vmem:[%s992 + $0xa0] sm:$0xff]
        %v2721 = vld [vmem:[%s992 + $0xa8] sm:$0xff]
        %v2722 = vld [vmem:[%s992 + $0xb0] sm:$0xff]
        %v2723 = vld [vmem:[%s992 + $0xb8] sm:$0xff]
        %v2724 = vld [vmem:[%s992 + $0xc0] sm:$0xff]
        %v2725 = vld [vmem:[%s992 + $0xc8] sm:$0xff]
        %v2726 = vld [vmem:[%s992 + $0xd0] sm:$0xff]
        %v2727 = vld [vmem:[%s992 + $0xd8] sm:$0xff]
        %v2728 = vld [vmem:[%s992 + $0xe0] sm:$0xff]
        %v2729 = vld [vmem:[%s992 + $0xe8] sm:$0xff]
        %v2730 = vld [vmem:[%s992 + $0xf0] sm:$0xff]
        %v2731 = vld [vmem:[%s992 + $0xf8] sm:$0xff]
        %v2732 = vld [vmem:[%s992 + $0x100] sm:$0xff]
        %v2733 = vld [vmem:[%s992 + $0x108] sm:$0xff]
        %v2734 = vld [vmem:[%s992 + $0x110] sm:$0xff]
        %v2735 = vld [vmem:[%s992 + $0x118] sm:$0xff]
        %v2736 = vld [vmem:[%s992 + $0x120] sm:$0xff]
        %v2737 = vld [vmem:[%s992 + $0x128] sm:$0xff]
        %v2738 = vld [vmem:[%s992 + $0x130] sm:$0xff]
        %v2739 = vld [vmem:[%s992 + $0x138] sm:$0xff]
        %v2740 = vld [vmem:[%s992 + $0x140] sm:$0xff]
        %v2741 = vld [vmem:[%s992 + $0x148] sm:$0xff]
        %v2742 = vld [vmem:[%s992 + $0x150] sm:$0xff]
        %v2743 = vld [vmem:[%s992 + $0x158] sm:$0xff]
        %v2744 = vld [vmem:[%s992 + $0x160] sm:$0xff]
        %v2745 = vld [vmem:[%s992 + $0x168] sm:$0xff]
        %v2746 = vld [vmem:[%s992 + $0x170] sm:$0xff]
        %v2747 = vld [vmem:[%s992 + $0x178] sm:$0xff]
        %v2748 = vld [vmem:[%s992 + $0x180] sm:$0xff]
        %v2749 = vld [vmem:[%s992 + $0x188] sm:$0xff]
        %v2750 = vld [vmem:[%s992 + $0x190] sm:$0xff]
        %v2751 = vld [vmem:[%s992 + $0x198] sm:$0xff]
        %v2752 = vld [vmem:[%s992 + $0x1a0] sm:$0xff]
        %v2753 = vld [vmem:[%s992 + $0x1a8] sm:$0xff]
        %v2754 = vld [vmem:[%s992 + $0x1b0] sm:$0xff]
        %v2755 = vld [vmem:[%s992 + $0x1b8] sm:$0xff]
        %v2756 = vld [vmem:[%s992 + $0x1c0] sm:$0xff]
        %v2757 = vld [vmem:[%s992 + $0x1c8] sm:$0xff]
        %v2758 = vld [vmem:[%s992 + $0x1d0] sm:$0xff]
        %v2759 = vld [vmem:[%s992 + $0x1d8] sm:$0xff]
        %v2760 = vld [vmem:[%s992 + $0x1e0] sm:$0xff]
        %v2761 = vld [vmem:[%s992 + $0x1e8] sm:$0xff]
        %v2762 = vld [vmem:[%s992 + $0x1f0] sm:$0xff]
        %v2763 = vld [vmem:[%s992 + $0x1f8] sm:$0xff]
        %v2764 = vld [vmem:[%s992 + $0x200] sm:$0xff]
        %v2765 = vld [vmem:[%s992 + $0x208] sm:$0xff]
        %v2766 = vld [vmem:[%s992 + $0x210] sm:$0xff]
        %v2767 = vld [vmem:[%s992 + $0x218] sm:$0xff]
        %v2768 = vld [vmem:[%s992 + $0x220] sm:$0xff]
        %v2769 = vld [vmem:[%s992 + $0x228] sm:$0xff]
        %v2770 = vld [vmem:[%s992 + $0x230] sm:$0xff]
        %v2771 = vld [vmem:[%s992 + $0x238] sm:$0xff]
        %v2772 = vld [vmem:[%s992 + $0x240] sm:$0xff]
        %v2773 = vld [vmem:[%s992 + $0x248] sm:$0xff]
        %v2774 = vld [vmem:[%s992 + $0x250] sm:$0xff]
        %v2775 = vld [vmem:[%s992 + $0x258] sm:$0xff]
        %v2776 = vld [vmem:[%s992 + $0x260] sm:$0xff]
        %v2777 = vld [vmem:[%s992 + $0x268] sm:$0xff]
        %v2778 = vld [vmem:[%s992 + $0x270] sm:$0xff]
        %v2779 = vld [vmem:[%s992 + $0x278] sm:$0xff]
        %v2780 = vld [vmem:[%s992 + $0x280] sm:$0xff]
        %v2781 = vld [vmem:[%s992 + $0x288] sm:$0xff]
        %v2782 = vld [vmem:[%s992 + $0x290] sm:$0xff]
        %v2783 = vld [vmem:[%s992 + $0x298] sm:$0xff]
        %v2784 = vld [vmem:[%s992 + $0x2a0] sm:$0xff]
        %v2785 = vld [vmem:[%s992 + $0x2a8] sm:$0xff]
        %v2786 = vld [vmem:[%s992 + $0x2b0] sm:$0xff]
        %v2787 = vld [vmem:[%s992 + $0x2b8] sm:$0xff]
        %v2788 = vld [vmem:[%s992 + $0x2c0] sm:$0xff]
        %v2789 = vld [vmem:[%s992 + $0x2c8] sm:$0xff]
        %v2790 = vld [vmem:[%s992 + $0x2d0] sm:$0xff]
        %v2791 = vld [vmem:[%s992 + $0x2d8] sm:$0xff]
        %v2792 = vld [vmem:[%s992 + $0x2e0] sm:$0xff]
        %v2793 = vld [vmem:[%s992 + $0x2e8] sm:$0xff]
        %v2794 = vld [vmem:[%s992 + $0x2f0] sm:$0xff]
        %v2795 = vld [vmem:[%s992 + $0x2f8] sm:$0xff]
        %v2796 = vld [vmem:[%s992 + $0x300] sm:$0xff]
        %v2797 = vld [vmem:[%s992 + $0x308] sm:$0xff]
        %v2798 = vld [vmem:[%s992 + $0x310] sm:$0xff]
        %v2799 = vld [vmem:[%s992 + $0x318] sm:$0xff]
        %v2800 = vld [vmem:[%s992 + $0x320] sm:$0xff]
        %v2801 = vld [vmem:[%s992 + $0x328] sm:$0xff]
        %v2802 = vld [vmem:[%s992 + $0x330] sm:$0xff]
        %v2803 = vld [vmem:[%s992 + $0x338] sm:$0xff]
        %v2804 = vld [vmem:[%s992 + $0x340] sm:$0xff]
        %v2805 = vld [vmem:[%s992 + $0x348] sm:$0xff]
        %v2806 = vld [vmem:[%s992 + $0x350] sm:$0xff]
        %v2807 = vld [vmem:[%s992 + $0x358] sm:$0xff]
        %v2808 = vld [vmem:[%s992 + $0x360] sm:$0xff]
        %v2809 = vld [vmem:[%s992 + $0x368] sm:$0xff]
        %v2810 = vld [vmem:[%s992 + $0x370] sm:$0xff]
        %v2811 = vld [vmem:[%s992 + $0x378] sm:$0xff]
        %v2812 = vld [vmem:[%s992 + $0x380] sm:$0xff]
        %v2813 = vld [vmem:[%s992 + $0x388] sm:$0xff]
        %v2814 = vld [vmem:[%s992 + $0x390] sm:$0xff]
        %v2815 = vld [vmem:[%s992 + $0x398] sm:$0xff]
        %v2816 = vld [vmem:[%s992 + $0x3a0] sm:$0xff]
        %v2817 = vld [vmem:[%s992 + $0x3a8] sm:$0xff]
        %v2818 = vld [vmem:[%s992 + $0x3b0] sm:$0xff]
        %v2819 = vld [vmem:[%s992 + $0x3b8] sm:$0xff]
        %v2820 = vld [vmem:[%s992 + $0x3c0] sm:$0xff]
        %v2821 = vld [vmem:[%s992 + $0x3c8] sm:$0xff]
        %v2822 = vld [vmem:[%s992 + $0x3d0] sm:$0xff]
        %v2823 = vld [vmem:[%s992 + $0x3d8] sm:$0xff]
        %v2824 = vld [vmem:[%s992 + $0x3e0] sm:$0xff]
        %v2825 = vld [vmem:[%s992 + $0x3e8] sm:$0xff]
        %v2826 = vld [vmem:[%s992 + $0x3f0] sm:$0xff]
        %v2827 = vld [vmem:[%s992 + $0x3f8] sm:$0xff]
        %2828 = vmatprep.subr.mxu0 %v2731
        %2829 = vmatpush1.msra.mxu0 %v2730
        %2830 = vmatprep.subr.mxu0 %v2729
        %2831 = vmatpush1.msra.mxu0 %v2728
        %2832 = vmatprep.subr.mxu0 %v2727
        %2833 = vmatpush1.msra.mxu0 %v2726
        %2834 = vmatprep.subr.mxu0 %v2725
        %2835 = vmatpush1.msra.mxu0 %v2724
        %2836 = vmatprep.subr.mxu0 %v2723
        %2837 = vmatpush1.msra.mxu0 %v2722
        %2838 = vmatprep.subr.mxu0 %v2721
        %2839 = vmatpush1.msra.mxu0 %v2720
        %2840 = vmatprep.subr.mxu0 %v2719
        %2841 = vmatpush1.msra.mxu0 %v2718
        %2842 = vmatprep.subr.mxu0 %v2717
        %2843 = vmatpush1.msra.mxu0 %v2716
        %2844 = vmatprep.subr.mxu0 %v2715
        %2845 = vmatpush1.msra.mxu0 %v2714
        %2846 = vmatprep.subr.mxu0 %v2713
        %2847 = vmatpush1.msra.mxu0 %v2712
        %2848 = vmatprep.subr.mxu0 %v2711
        %2849 = vmatpush1.msra.mxu0 %v2710
        %2850 = vmatprep.subr.mxu0 %v2709
        %2851 = vmatpush1.msra.mxu0 %v2708
        %2852 = vmatprep.subr.mxu0 %v2707
        %2853 = vmatpush1.msra.mxu0 %v2706
        %2854 = vmatprep.subr.mxu0 %v2705
        %2855 = vmatpush1.msra.mxu0 %v2704
        %2856 = vmatprep.subr.mxu0 %v2703
        %2857 = vmatpush1.msra.mxu0 %v2702
        %2858 = vmatprep.subr.mxu0 %v2701
        %2859 = vmatpush1.msra.mxu0 %v2700
        %2860 = vmatprep.subr.mxu0 %v2763
        %2861 = vmatpush2.msra.mxu0 %v2762
        %2862 = vmatprep.subr.mxu0 %v2761
        %2863 = vmatpush2.msra.mxu0 %v2760
        %2864 = vmatprep.subr.mxu0 %v2759
        %2865 = vmatpush2.msra.mxu0 %v2758
        %2866 = vmatprep.subr.mxu0 %v2757
        %2867 = vmatpush2.msra.mxu0 %v2756
        %2868 = vmatprep.subr.mxu0 %v2755
        %2869 = vmatpush2.msra.mxu0 %v2754
        %2870 = vmatprep.subr.mxu0 %v2753
        %2871 = vmatpush2.msra.mxu0 %v2752
        %2872 = vmatprep.subr.mxu0 %v2751
        %2873 = vmatpush2.msra.mxu0 %v2750
        %2874 = vmatprep.subr.mxu0 %v2749
        %2875 = vmatpush2.msra.mxu0 %v2748
        %2876 = vmatprep.subr.mxu0 %v2747
        %2877 = vmatpush2.msra.mxu0 %v2746
        %2878 = vmatprep.subr.mxu0 %v2745
        %2879 = vmatpush2.msra.mxu0 %v2744
        %2880 = vmatprep.subr.mxu0 %v2743
        %2881 = vmatpush2.msra.mxu0 %v2742
        %2882 = vmatprep.subr.mxu0 %v2741
        %2883 = vmatpush2.msra.mxu0 %v2740
        %2884 = vmatprep.subr.mxu0 %v2739
        %2885 = vmatpush2.msra.mxu0 %v2738
        %2886 = vmatprep.subr.mxu0 %v2737
        %2887 = vmatpush2.msra.mxu0 %v2736
        %2888 = vmatprep.subr.mxu0 %v2735
        %2889 = vmatpush2.msra.mxu0 %v2734
        %2890 = vmatprep.subr.mxu0 %v2733
        %2891 = vmatpush2.msra.mxu0 %v2732
        %2892 = vmatprep.mubr.f32.mxu0 %v2637
        %2893 = vmatmul.mubr.f32.gmra.mxu0 %v2636
        %v2894 = vpop.f32.mrf.mxu0
        %v2895 = vadd.f32 0.0, %v2894
        %v2896 = vpop.f32.mrf.mxu0
        %v2897 = vadd.f32 0.0, %v2896
        %2898 = vmatprep.mubr.f32.mxu0 %v2641
        %2899 = vmatmul.mubr.f32.gmra.mxu0 %v2640
        %v2900 = vpop.f32.mrf.mxu0
        %v2901 = vadd.f32 0.0, %v2900
        %v2902 = vpop.f32.mrf.mxu0
        %v2903 = vadd.f32 0.0, %v2902
        %2904 = vmatprep.mubr.f32.mxu0 %v2645
        %2905 = vmatmul.mubr.f32.gmra.mxu0 %v2644
        %v2906 = vpop.f32.mrf.mxu0
        %v2907 = vadd.f32 0.0, %v2906
        %v2908 = vpop.f32.mrf.mxu0
        %v2909 = vadd.f32 0.0, %v2908
        %2910 = vmatprep.mubr.f32.mxu0 %v2649
        %2911 = vmatmul.mubr.f32.gmra.mxu0 %v2648
        %v2912 = vpop.f32.mrf.mxu0
        %v2913 = vadd.f32 0.0, %v2912
        %v2914 = vpop.f32.mrf.mxu0
        %v2915 = vadd.f32 0.0, %v2914
        %2916 = vmatprep.mubr.f32.mxu0 %v2653
        %2917 = vmatmul.mubr.f32.gmra.mxu0 %v2652
        %v2918 = vpop.f32.mrf.mxu0
        %v2919 = vadd.f32 0.0, %v2918
        %v2920 = vpop.f32.mrf.mxu0
        %v2921 = vadd.f32 0.0, %v2920
        %2922 = vmatprep.mubr.f32.mxu0 %v2657
        %2923 = vmatmul.mubr.f32.gmra.mxu0 %v2656
        %v2924 = vpop.f32.mrf.mxu0
        %v2925 = vadd.f32 0.0, %v2924
        %v2926 = vpop.f32.mrf.mxu0
        %v2927 = vadd.f32 0.0, %v2926
        %2928 = vmatprep.mubr.f32.mxu0 %v2661
        %2929 = vmatmul.mubr.f32.gmra.mxu0 %v2660
        %v2930 = vpop.f32.mrf.mxu0
        %v2931 = vadd.f32 0.0, %v2930
        %v2932 = vpop.f32.mrf.mxu0
        %v2933 = vadd.f32 0.0, %v2932
        %2934 = vmatprep.mubr.f32.mxu0 %v2665
        %2935 = vmatmul.mubr.f32.gmra.mxu0 %v2664
        %v2936 = vpop.f32.mrf.mxu0
        %v2937 = vadd.f32 0.0, %v2936
        %v2938 = vpop.f32.mrf.mxu0
        %v2939 = vadd.f32 0.0, %v2938
        %2940 = vmatprep.mubr.f32.mxu0 %v2669
        %2941 = vmatmul.mubr.f32.gmra.mxu0 %v2668
        %v2942 = vpop.f32.mrf.mxu0
        %v2943 = vadd.f32 0.0, %v2942
        %v2944 = vpop.f32.mrf.mxu0
        %v2945 = vadd.f32 0.0, %v2944
        %2946 = vmatprep.mubr.f32.mxu0 %v2673
        %2947 = vmatmul.mubr.f32.gmra.mxu0 %v2672
        %v2948 = vpop.f32.mrf.mxu0
        %v2949 = vadd.f32 0.0, %v2948
        %v2950 = vpop.f32.mrf.mxu0
        %v2951 = vadd.f32 0.0, %v2950
        %2952 = vmatprep.mubr.f32.mxu0 %v2677
        %2953 = vmatmul.mubr.f32.gmra.mxu0 %v2676
        %v2954 = vpop.f32.mrf.mxu0
        %v2955 = vadd.f32 0.0, %v2954
        %v2956 = vpop.f32.mrf.mxu0
        %v2957 = vadd.f32 0.0, %v2956
        %2958 = vmatprep.mubr.f32.mxu0 %v2681
        %2959 = vmatmul.mubr.f32.gmra.mxu0 %v2680
        %v2960 = vpop.f32.mrf.mxu0
        %v2961 = vadd.f32 0.0, %v2960
        %v2962 = vpop.f32.mrf.mxu0
        %v2963 = vadd.f32 0.0, %v2962
        %2964 = vmatprep.mubr.f32.mxu0 %v2685
        %2965 = vmatmul.mubr.f32.gmra.mxu0 %v2684
        %v2966 = vpop.f32.mrf.mxu0
        %v2967 = vadd.f32 0.0, %v2966
        %v2968 = vpop.f32.mrf.mxu0
        %v2969 = vadd.f32 0.0, %v2968
        %2970 = vmatprep.mubr.f32.mxu0 %v2689
        %2971 = vmatmul.mubr.f32.gmra.mxu0 %v2688
        %v2972 = vpop.f32.mrf.mxu0
        %v2973 = vadd.f32 0.0, %v2972
        %v2974 = vpop.f32.mrf.mxu0
        %v2975 = vadd.f32 0.0, %v2974
        %2976 = vmatprep.mubr.f32.mxu0 %v2693
        %2977 = vmatmul.mubr.f32.gmra.mxu0 %v2692
        %v2978 = vpop.f32.mrf.mxu0
        %v2979 = vadd.f32 0.0, %v2978
        %v2980 = vpop.f32.mrf.mxu0
        %v2981 = vadd.f32 0.0, %v2980
        %2982 = vmatprep.mubr.f32.mxu0 %v2697
        %2983 = vmatmul.mubr.f32.gmra.mxu0 %v2696
        %v2984 = vpop.f32.mrf.mxu0
        %v2985 = vadd.f32 0.0, %v2984
        %v2986 = vpop.f32.mrf.mxu0
        %v2987 = vadd.f32 0.0, %v2986
        %2988 = vdwg.mxu0
        %2989 = vmatprep.subr.mxu0 %v2795
        %2990 = vmatpush1.msra.mxu0 %v2794
        %2991 = vmatprep.subr.mxu0 %v2793
        %2992 = vmatpush1.msra.mxu0 %v2792
        %2993 = vmatprep.subr.mxu0 %v2791
        %2994 = vmatpush1.msra.mxu0 %v2790
        %2995 = vmatprep.subr.mxu0 %v2789
        %2996 = vmatpush1.msra.mxu0 %v2788
        %2997 = vmatprep.subr.mxu0 %v2787
        %2998 = vmatpush1.msra.mxu0 %v2786
        %2999 = vmatprep.subr.mxu0 %v2785
        %3000 = vmatpush1.msra.mxu0 %v2784
        %3001 = vmatprep.subr.mxu0 %v2783
        %3002 = vmatpush1.msra.mxu0 %v2782
        %3003 = vmatprep.subr.mxu0 %v2781
        %3004 = vmatpush1.msra.mxu0 %v2780
        %3005 = vmatprep.subr.mxu0 %v2779
        %3006 = vmatpush1.msra.mxu0 %v2778
        %3007 = vmatprep.subr.mxu0 %v2777
        %3008 = vmatpush1.msra.mxu0 %v2776
        %3009 = vmatprep.subr.mxu0 %v2775
        %3010 = vmatpush1.msra.mxu0 %v2774
        %3011 = vmatprep.subr.mxu0 %v2773
        %3012 = vmatpush1.msra.mxu0 %v2772
        %3013 = vmatprep.subr.mxu0 %v2771
        %3014 = vmatpush1.msra.mxu0 %v2770
        %3015 = vmatprep.subr.mxu0 %v2769
        %3016 = vmatpush1.msra.mxu0 %v2768
        %3017 = vmatprep.subr.mxu0 %v2767
        %3018 = vmatpush1.msra.mxu0 %v2766
        %3019 = vmatprep.subr.mxu0 %v2765
        %3020 = vmatpush1.msra.mxu0 %v2764
        %3021 = vmatprep.subr.mxu0 %v2827
        %3022 = vmatpush2.msra.mxu0 %v2826
        %3023 = vmatprep.subr.mxu0 %v2825
        %3024 = vmatpush2.msra.mxu0 %v2824
        %3025 = vmatprep.subr.mxu0 %v2823
        %3026 = vmatpush2.msra.mxu0 %v2822
        %3027 = vmatprep.subr.mxu0 %v2821
        %3028 = vmatpush2.msra.mxu0 %v2820
        %3029 = vmatprep.subr.mxu0 %v2819
        %3030 = vmatpush2.msra.mxu0 %v2818
        %3031 = vmatprep.subr.mxu0 %v2817
        %3032 = vmatpush2.msra.mxu0 %v2816
        %3033 = vmatprep.subr.mxu0 %v2815
        %3034 = vmatpush2.msra.mxu0 %v2814
        %3035 = vmatprep.subr.mxu0 %v2813
        %3036 = vmatpush2.msra.mxu0 %v2812
        %3037 = vmatprep.subr.mxu0 %v2811
        %3038 = vmatpush2.msra.mxu0 %v2810
        %3039 = vmatprep.subr.mxu0 %v2809
        %3040 = vmatpush2.msra.mxu0 %v2808
        %3041 = vmatprep.subr.mxu0 %v2807
        %3042 = vmatpush2.msra.mxu0 %v2806
        %3043 = vmatprep.subr.mxu0 %v2805
        %3044 = vmatpush2.msra.mxu0 %v2804
        %3045 = vmatprep.subr.mxu0 %v2803
        %3046 = vmatpush2.msra.mxu0 %v2802
        %3047 = vmatprep.subr.mxu0 %v2801
        %3048 = vmatpush2.msra.mxu0 %v2800
        %3049 = vmatprep.subr.mxu0 %v2799
        %3050 = vmatpush2.msra.mxu0 %v2798
        %3051 = vmatprep.subr.mxu0 %v2797
        %3052 = vmatpush2.msra.mxu0 %v2796
        %3053 = vmatprep.mubr.f32.mxu0 %v2639
        %3054 = vmatmul.mubr.f32.gmra.mxu0 %v2638
        %v3055 = vpop.f32.mrf.mxu0
        %v3056 = vadd.f32 %v2895, %v3055
        %v3057 = vpop.f32.mrf.mxu0
        %v3058 = vadd.f32 %v2897, %v3057
        %3059 = vmatprep.mubr.f32.mxu0 %v2643
        %3060 = vmatmul.mubr.f32.gmra.mxu0 %v2642
        %v3061 = vpop.f32.mrf.mxu0
        %v3062 = vadd.f32 %v2901, %v3061
        %v3063 = vpop.f32.mrf.mxu0
        %v3064 = vadd.f32 %v2903, %v3063
        %3065 = vmatprep.mubr.f32.mxu0 %v2647
        %3066 = vmatmul.mubr.f32.gmra.mxu0 %v2646
        %v3067 = vpop.f32.mrf.mxu0
        %v3068 = vadd.f32 %v2907, %v3067
        %v3069 = vpop.f32.mrf.mxu0
        %v3070 = vadd.f32 %v2909, %v3069
        %3071 = vmatprep.mubr.f32.mxu0 %v2651
        %3072 = vmatmul.mubr.f32.gmra.mxu0 %v2650
        %v3073 = vpop.f32.mrf.mxu0
        %v3074 = vadd.f32 %v2913, %v3073
        %v3075 = vpop.f32.mrf.mxu0
        %v3076 = vadd.f32 %v2915, %v3075
        %3077 = vmatprep.mubr.f32.mxu0 %v2655
        %3078 = vmatmul.mubr.f32.gmra.mxu0 %v2654
        %v3079 = vpop.f32.mrf.mxu0
        %v3080 = vadd.f32 %v2919, %v3079
        %v3081 = vpop.f32.mrf.mxu0
        %v3082 = vadd.f32 %v2921, %v3081
        %3083 = vmatprep.mubr.f32.mxu0 %v2659
        %3084 = vmatmul.mubr.f32.gmra.mxu0 %v2658
        %v3085 = vpop.f32.mrf.mxu0
        %v3086 = vadd.f32 %v2925, %v3085
        %v3087 = vpop.f32.mrf.mxu0
        %v3088 = vadd.f32 %v2927, %v3087
        %3089 = vmatprep.mubr.f32.mxu0 %v2663
        %3090 = vmatmul.mubr.f32.gmra.mxu0 %v2662
        %v3091 = vpop.f32.mrf.mxu0
        %v3092 = vadd.f32 %v2931, %v3091
        %v3093 = vpop.f32.mrf.mxu0
        %v3094 = vadd.f32 %v2933, %v3093
        %3095 = vmatprep.mubr.f32.mxu0 %v2667
        %3096 = vmatmul.mubr.f32.gmra.mxu0 %v2666
        %v3097 = vpop.f32.mrf.mxu0
        %v3098 = vadd.f32 %v2937, %v3097
        %v3099 = vpop.f32.mrf.mxu0
        %v3100 = vadd.f32 %v2939, %v3099
        %3101 = vmatprep.mubr.f32.mxu0 %v2671
        %3102 = vmatmul.mubr.f32.gmra.mxu0 %v2670
        %v3103 = vpop.f32.mrf.mxu0
        %v3104 = vadd.f32 %v2943, %v3103
        %v3105 = vpop.f32.mrf.mxu0
        %v3106 = vadd.f32 %v2945, %v3105
        %3107 = vmatprep.mubr.f32.mxu0 %v2675
        %3108 = vmatmul.mubr.f32.gmra.mxu0 %v2674
        %v3109 = vpop.f32.mrf.mxu0
        %v3110 = vadd.f32 %v2949, %v3109
        %v3111 = vpop.f32.mrf.mxu0
        %v3112 = vadd.f32 %v2951, %v3111
        %3113 = vmatprep.mubr.f32.mxu0 %v2679
        %3114 = vmatmul.mubr.f32.gmra.mxu0 %v2678
        %v3115 = vpop.f32.mrf.mxu0
        %v3116 = vadd.f32 %v2955, %v3115
        %v3117 = vpop.f32.mrf.mxu0
        %v3118 = vadd.f32 %v2957, %v3117
        %3119 = vmatprep.mubr.f32.mxu0 %v2683
        %3120 = vmatmul.mubr.f32.gmra.mxu0 %v2682
        %v3121 = vpop.f32.mrf.mxu0
        %v3122 = vadd.f32 %v2961, %v3121
        %v3123 = vpop.f32.mrf.mxu0
        %v3124 = vadd.f32 %v2963, %v3123
        %3125 = vmatprep.mubr.f32.mxu0 %v2687
        %3126 = vmatmul.mubr.f32.gmra.mxu0 %v2686
        %v3127 = vpop.f32.mrf.mxu0
        %v3128 = vadd.f32 %v2967, %v3127
        %v3129 = vpop.f32.mrf.mxu0
        %v3130 = vadd.f32 %v2969, %v3129
        %3131 = vmatprep.mubr.f32.mxu0 %v2691
        %3132 = vmatmul.mubr.f32.gmra.mxu0 %v2690
        %v3133 = vpop.f32.mrf.mxu0
        %v3134 = vadd.f32 %v2973, %v3133
        %v3135 = vpop.f32.mrf.mxu0
        %v3136 = vadd.f32 %v2975, %v3135
        %3137 = vmatprep.mubr.f32.mxu0 %v2695
        %3138 = vmatmul.mubr.f32.gmra.mxu0 %v2694
        %v3139 = vpop.f32.mrf.mxu0
        %v3140 = vadd.f32 %v2979, %v3139
        %v3141 = vpop.f32.mrf.mxu0
        %v3142 = vadd.f32 %v2981, %v3141
        %3143 = vmatprep.mubr.f32.mxu0 %v2699
        %3144 = vmatmul.mubr.f32.gmra.mxu0 %v2698
        %v3145 = vpop.f32.mrf.mxu0
        %v3146 = vadd.f32 %v2985, %v3145
        %v3147 = vpop.f32.mrf.mxu0
        %v3148 = vadd.f32 %v2987, %v3147
        %3149 = vdwg.mxu0
        %p3150 = scmp.eq.s32.totalorder %s26, 0
        // Predicated region
        $region103: #{basic_transformer_block.7} parent=93 // pred_check
          %p3151 = pneg %p3150
        $region104: #{basic_transformer_block.7} parent=93 // pred_check_branch
          %3153 = sbr.rel (%p3151) target = $region106
        $region105: #{basic_transformer_block.7} parent=93 // pred_region
          %3154 = vst [vmem:[#allocation2] sm:$0xff] 0.0
          %3155 = vst [vmem:[#allocation2 + $0x8] sm:$0xff] 0.0
          %3156 = vst [vmem:[#allocation2 + $0x10] sm:$0xff] 0.0
          %3157 = vst [vmem:[#allocation2 + $0x18] sm:$0xff] 0.0
          %3158 = vst [vmem:[#allocation2 + $0x20] sm:$0xff] 0.0
          %3159 = vst [vmem:[#allocation2 + $0x28] sm:$0xff] 0.0
          %3160 = vst [vmem:[#allocation2 + $0x30] sm:$0xff] 0.0
          %3161 = vst [vmem:[#allocation2 + $0x38] sm:$0xff] 0.0
          %3162 = vst [vmem:[#allocation2 + $0x40] sm:$0xff] 0.0
          %3163 = vst [vmem:[#allocation2 + $0x48] sm:$0xff] 0.0
          %3164 = vst [vmem:[#allocation2 + $0x50] sm:$0xff] 0.0
          %3165 = vst [vmem:[#allocation2 + $0x58] sm:$0xff] 0.0
          %3166 = vst [vmem:[#allocation2 + $0x60] sm:$0xff] 0.0
          %3167 = vst [vmem:[#allocation2 + $0x68] sm:$0xff] 0.0
          %3168 = vst [vmem:[#allocation2 + $0x70] sm:$0xff] 0.0
          %3169 = vst [vmem:[#allocation2 + $0x78] sm:$0xff] 0.0
          %3170 = vst [vmem:[#allocation2 + $0x80] sm:$0xff] 0.0
          %3171 = vst [vmem:[#allocation2 + $0x88] sm:$0xff] 0.0
          %3172 = vst [vmem:[#allocation2 + $0x90] sm:$0xff] 0.0
          %3173 = vst [vmem:[#allocation2 + $0x98] sm:$0xff] 0.0
          %3174 = vst [vmem:[#allocation2 + $0xa0] sm:$0xff] 0.0
          %3175 = vst [vmem:[#allocation2 + $0xa8] sm:$0xff] 0.0
          %3176 = vst [vmem:[#allocation2 + $0xb0] sm:$0xff] 0.0
          %3177 = vst [vmem:[#allocation2 + $0xb8] sm:$0xff] 0.0
          %3178 = vst [vmem:[#allocation2 + $0xc0] sm:$0xff] 0.0
          %3179 = vst [vmem:[#allocation2 + $0xc8] sm:$0xff] 0.0
          %3180 = vst [vmem:[#allocation2 + $0xd0] sm:$0xff] 0.0
          %3181 = vst [vmem:[#allocation2 + $0xd8] sm:$0xff] 0.0
          %3182 = vst [vmem:[#allocation2 + $0xe0] sm:$0xff] 0.0
          %3183 = vst [vmem:[#allocation2 + $0xe8] sm:$0xff] 0.0
          %3184 = vst [vmem:[#allocation2 + $0xf0] sm:$0xff] 0.0
          %3185 = vst [vmem:[#allocation2 + $0xf8] sm:$0xff] 0.0
        $region106: #{basic_transformer_block.7} parent=93 // pred_fallthru
          _
        %v3186 = vld [vmem:[#allocation2] sm:$0xff]
        %v3187 = vld [vmem:[#allocation2 + $0x8] sm:$0xff]
        %v3188 = vld [vmem:[#allocation2 + $0x10] sm:$0xff]
        %v3189 = vld [vmem:[#allocation2 + $0x18] sm:$0xff]
        %v3190 = vld [vmem:[#allocation2 + $0x20] sm:$0xff]
        %v3191 = vld [vmem:[#allocation2 + $0x28] sm:$0xff]
        %v3192 = vld [vmem:[#allocation2 + $0x30] sm:$0xff]
        %v3193 = vld [vmem:[#allocation2 + $0x38] sm:$0xff]
        %v3194 = vld [vmem:[#allocation2 + $0x40] sm:$0xff]
        %v3195 = vld [vmem:[#allocation2 + $0x48] sm:$0xff]
        %v3196 = vld [vmem:[#allocation2 + $0x50] sm:$0xff]
        %v3197 = vld [vmem:[#allocation2 + $0x58] sm:$0xff]
        %v3198 = vld [vmem:[#allocation2 + $0x60] sm:$0xff]
        %v3199 = vld [vmem:[#allocation2 + $0x68] sm:$0xff]
        %v3200 = vld [vmem:[#allocation2 + $0x70] sm:$0xff]
        %v3201 = vld [vmem:[#allocation2 + $0x78] sm:$0xff]
        %v3202 = vld [vmem:[#allocation2 + $0x80] sm:$0xff]
        %v3203 = vld [vmem:[#allocation2 + $0x88] sm:$0xff]
        %v3204 = vld [vmem:[#allocation2 + $0x90] sm:$0xff]
        %v3205 = vld [vmem:[#allocation2 + $0x98] sm:$0xff]
        %v3206 = vld [vmem:[#allocation2 + $0xa0] sm:$0xff]
        %v3207 = vld [vmem:[#allocation2 + $0xa8] sm:$0xff]
        %v3208 = vld [vmem:[#allocation2 + $0xb0] sm:$0xff]
        %v3209 = vld [vmem:[#allocation2 + $0xb8] sm:$0xff]
        %v3210 = vld [vmem:[#allocation2 + $0xc0] sm:$0xff]
        %v3211 = vld [vmem:[#allocation2 + $0xc8] sm:$0xff]
        %v3212 = vld [vmem:[#allocation2 + $0xd0] sm:$0xff]
        %v3213 = vld [vmem:[#allocation2 + $0xd8] sm:$0xff]
        %v3214 = vld [vmem:[#allocation2 + $0xe0] sm:$0xff]
        %v3215 = vld [vmem:[#allocation2 + $0xe8] sm:$0xff]
        %v3216 = vld [vmem:[#allocation2 + $0xf0] sm:$0xff]
        %v3217 = vld [vmem:[#allocation2 + $0xf8] sm:$0xff]
        %v3218 = vadd.f32 %v3186, %v3056
        %v3219 = vadd.f32 %v3187, %v3058
        %v3220 = vadd.f32 %v3188, %v3062
        %v3221 = vadd.f32 %v3189, %v3064
        %v3222 = vadd.f32 %v3190, %v3068
        %v3223 = vadd.f32 %v3191, %v3070
        %v3224 = vadd.f32 %v3192, %v3074
        %v3225 = vadd.f32 %v3193, %v3076
        %v3226 = vadd.f32 %v3194, %v3080
        %v3227 = vadd.f32 %v3195, %v3082
        %v3228 = vadd.f32 %v3196, %v3086
        %v3229 = vadd.f32 %v3197, %v3088
        %v3230 = vadd.f32 %v3198, %v3092
        %v3231 = vadd.f32 %v3199, %v3094
        %v3232 = vadd.f32 %v3200, %v3098
        %v3233 = vadd.f32 %v3201, %v3100
        %v3234 = vadd.f32 %v3202, %v3104
        %v3235 = vadd.f32 %v3203, %v3106
        %v3236 = vadd.f32 %v3204, %v3110
        %v3237 = vadd.f32 %v3205, %v3112
        %v3238 = vadd.f32 %v3206, %v3116
        %v3239 = vadd.f32 %v3207, %v3118
        %v3240 = vadd.f32 %v3208, %v3122
        %v3241 = vadd.f32 %v3209, %v3124
        %v3242 = vadd.f32 %v3210, %v3128
        %v3243 = vadd.f32 %v3211, %v3130
        %v3244 = vadd.f32 %v3212, %v3134
        %v3245 = vadd.f32 %v3213, %v3136
        %v3246 = vadd.f32 %v3214, %v3140
        %v3247 = vadd.f32 %v3215, %v3142
        %v3248 = vadd.f32 %v3216, %v3146
        %v3249 = vadd.f32 %v3217, %v3148
        %3250 = vst [vmem:[#allocation2] sm:$0xff] %v3218
        %3251 = vst [vmem:[#allocation2 + $0x8] sm:$0xff] %v3219
        %3252 = vst [vmem:[#allocation2 + $0x10] sm:$0xff] %v3220
        %3253 = vst [vmem:[#allocation2 + $0x18] sm:$0xff] %v3221
        %3254 = vst [vmem:[#allocation2 + $0x20] sm:$0xff] %v3222
        %3255 = vst [vmem:[#allocation2 + $0x28] sm:$0xff] %v3223
        %3256 = vst [vmem:[#allocation2 + $0x30] sm:$0xff] %v3224
        %3257 = vst [vmem:[#allocation2 + $0x38] sm:$0xff] %v3225
        %3258 = vst [vmem:[#allocation2 + $0x40] sm:$0xff] %v3226
        %3259 = vst [vmem:[#allocation2 + $0x48] sm:$0xff] %v3227
        %3260 = vst [vmem:[#allocation2 + $0x50] sm:$0xff] %v3228
        %3261 = vst [vmem:[#allocation2 + $0x58] sm:$0xff] %v3229
        %3262 = vst [vmem:[#allocation2 + $0x60] sm:$0xff] %v3230
        %3263 = vst [vmem:[#allocation2 + $0x68] sm:$0xff] %v3231
        %3264 = vst [vmem:[#allocation2 + $0x70] sm:$0xff] %v3232
        %3265 = vst [vmem:[#allocation2 + $0x78] sm:$0xff] %v3233
        %3266 = vst [vmem:[#allocation2 + $0x80] sm:$0xff] %v3234
        %3267 = vst [vmem:[#allocation2 + $0x88] sm:$0xff] %v3235
        %3268 = vst [vmem:[#allocation2 + $0x90] sm:$0xff] %v3236
        %3269 = vst [vmem:[#allocation2 + $0x98] sm:$0xff] %v3237
        %3270 = vst [vmem:[#allocation2 + $0xa0] sm:$0xff] %v3238
        %3271 = vst [vmem:[#allocation2 + $0xa8] sm:$0xff] %v3239
        %3272 = vst [vmem:[#allocation2 + $0xb0] sm:$0xff] %v3240
        %3273 = vst [vmem:[#allocation2 + $0xb8] sm:$0xff] %v3241
        %3274 = vst [vmem:[#allocation2 + $0xc0] sm:$0xff] %v3242
        %3275 = vst [vmem:[#allocation2 + $0xc8] sm:$0xff] %v3243
        %3276 = vst [vmem:[#allocation2 + $0xd0] sm:$0xff] %v3244
        %3277 = vst [vmem:[#allocation2 + $0xd8] sm:$0xff] %v3245
        %3278 = vst [vmem:[#allocation2 + $0xe0] sm:$0xff] %v3246
        %3279 = vst [vmem:[#allocation2 + $0xe8] sm:$0xff] %v3247
        %3280 = vst [vmem:[#allocation2 + $0xf0] sm:$0xff] %v3248
        %3281 = vst [vmem:[#allocation2 + $0xf8] sm:$0xff] %v3249
        %p3282 = scmp.eq.s32.totalorder %s26, 1
        // Predicated region
        $region107: #{basic_transformer_block.7} parent=93 // pred_check
          %p3283 = pneg %p3282
        $region108: #{basic_transformer_block.7} parent=93 // pred_check_branch
          %3285 = sbr.rel (%p3283) target = $region110
        $region109: #{basic_transformer_block.7} parent=93 // pred_region
          %v3286 = vld [vmem:[#allocation2] sm:$0xff]
          %v3287 = vld [vmem:[#allocation2 + $0x8] sm:$0xff]
          %v3288 = vld [vmem:[#allocation2 + $0x10] sm:$0xff]
          %v3289 = vld [vmem:[#allocation2 + $0x18] sm:$0xff]
          %v3290 = vld [vmem:[#allocation2 + $0x20] sm:$0xff]
          %v3291 = vld [vmem:[#allocation2 + $0x28] sm:$0xff]
          %v3292 = vld [vmem:[#allocation2 + $0x30] sm:$0xff]
          %v3293 = vld [vmem:[#allocation2 + $0x38] sm:$0xff]
          %v3294 = vld [vmem:[#allocation2 + $0x40] sm:$0xff]
          %v3295 = vld [vmem:[#allocation2 + $0x48] sm:$0xff]
          %v3296 = vld [vmem:[#allocation2 + $0x50] sm:$0xff]
          %v3297 = vld [vmem:[#allocation2 + $0x58] sm:$0xff]
          %v3298 = vld [vmem:[#allocation2 + $0x60] sm:$0xff]
          %v3299 = vld [vmem:[#allocation2 + $0x68] sm:$0xff]
          %v3300 = vld [vmem:[#allocation2 + $0x70] sm:$0xff]
          %v3301 = vld [vmem:[#allocation2 + $0x78] sm:$0xff]
          %v3302 = vld [vmem:[#allocation2 + $0x80] sm:$0xff]
          %v3303 = vld [vmem:[#allocation2 + $0x88] sm:$0xff]
          %v3304 = vld [vmem:[#allocation2 + $0x90] sm:$0xff]
          %v3305 = vld [vmem:[#allocation2 + $0x98] sm:$0xff]
          %v3306 = vld [vmem:[#allocation2 + $0xa0] sm:$0xff]
          %v3307 = vld [vmem:[#allocation2 + $0xa8] sm:$0xff]
          %v3308 = vld [vmem:[#allocation2 + $0xb0] sm:$0xff]
          %v3309 = vld [vmem:[#allocation2 + $0xb8] sm:$0xff]
          %v3310 = vld [vmem:[#allocation2 + $0xc0] sm:$0xff]
          %v3311 = vld [vmem:[#allocation2 + $0xc8] sm:$0xff]
          %v3312 = vld [vmem:[#allocation2 + $0xd0] sm:$0xff]
          %v3313 = vld [vmem:[#allocation2 + $0xd8] sm:$0xff]
          %v3314 = vld [vmem:[#allocation2 + $0xe0] sm:$0xff]
          %v3315 = vld [vmem:[#allocation2 + $0xe8] sm:$0xff]
          %v3316 = vld [vmem:[#allocation2 + $0xf0] sm:$0xff]
          %v3317 = vld [vmem:[#allocation2 + $0xf8] sm:$0xff]
          %v3318 = vadd.f32 %v995, %v3286
          %v3319 = vadd.f32 %v996, %v3287
          %v3320 = vadd.f32 %v997, %v3288
          %v3321 = vadd.f32 %v998, %v3289
          %v3322 = vadd.f32 %v999, %v3290
          %v3323 = vadd.f32 %v1000, %v3291
          %v3324 = vadd.f32 %v1001, %v3292
          %v3325 = vadd.f32 %v1002, %v3293
          %v3326 = vadd.f32 %v1003, %v3294
          %v3327 = vadd.f32 %v1004, %v3295
          %v3328 = vadd.f32 %v1005, %v3296
          %v3329 = vadd.f32 %v1006, %v3297
          %v3330 = vadd.f32 %v1007, %v3298
          %v3331 = vadd.f32 %v1008, %v3299
          %v3332 = vadd.f32 %v1009, %v3300
          %v3333 = vadd.f32 %v1010, %v3301
          %v3334 = vadd.f32 %v1011, %v3302
          %v3335 = vadd.f32 %v1012, %v3303
          %v3336 = vadd.f32 %v1013, %v3304
          %v3337 = vadd.f32 %v1014, %v3305
          %v3338 = vadd.f32 %v1015, %v3306
          %v3339 = vadd.f32 %v1016, %v3307
          %v3340 = vadd.f32 %v1017, %v3308
          %v3341 = vadd.f32 %v1018, %v3309
          %v3342 = vadd.f32 %v1019, %v3310
          %v3343 = vadd.f32 %v1020, %v3311
          %v3344 = vadd.f32 %v1021, %v3312
          %v3345 = vadd.f32 %v1022, %v3313
          %v3346 = vadd.f32 %v1023, %v3314
          %v3347 = vadd.f32 %v1024, %v3315
          %v3348 = vadd.f32 %v1025, %v3316
          %v3349 = vadd.f32 %v1026, %v3317
          %v3350 = vld [vmem:[%s8] sm:$0x3]
          %v3352 = vlaneseq
          %v3353 = vshrl.u32 %v3352, 7
          %v3354 = vsub.s32 0, %v3353
          %v3355 = vrot.slane %v3350, %v3354
          %v3356 = vlaneseq
          %v3357 = vshrl.u32 %v3356, 7
          %v3358 = vsub.s32 1, %v3357
          %v3359 = vrot.slane %v3350, %v3358
          %v3362 = vadd.f32 %v3318, %v3355
          %v3363 = vadd.f32 %v3319, %v3359
          %v3364 = vadd.f32 %v3320, %v3355
          %v3365 = vadd.f32 %v3321, %v3359
          %v3366 = vadd.f32 %v3322, %v3355
          %v3367 = vadd.f32 %v3323, %v3359
          %v3368 = vadd.f32 %v3324, %v3355
          %v3369 = vadd.f32 %v3325, %v3359
          %v3370 = vadd.f32 %v3326, %v3355
          %v3371 = vadd.f32 %v3327, %v3359
          %v3372 = vadd.f32 %v3328, %v3355
          %v3373 = vadd.f32 %v3329, %v3359
          %v3374 = vadd.f32 %v3330, %v3355
          %v3375 = vadd.f32 %v3331, %v3359
          %v3376 = vadd.f32 %v3332, %v3355
          %v3377 = vadd.f32 %v3333, %v3359
          %v3378 = vadd.f32 %v3334, %v3355
          %v3379 = vadd.f32 %v3335, %v3359
          %v3380 = vadd.f32 %v3336, %v3355
          %v3381 = vadd.f32 %v3337, %v3359
          %v3382 = vadd.f32 %v3338, %v3355
          %v3383 = vadd.f32 %v3339, %v3359
          %v3384 = vadd.f32 %v3340, %v3355
          %v3385 = vadd.f32 %v3341, %v3359
          %v3386 = vadd.f32 %v3342, %v3355
          %v3387 = vadd.f32 %v3343, %v3359
          %v3388 = vadd.f32 %v3344, %v3355
          %v3389 = vadd.f32 %v3345, %v3359
          %v3390 = vadd.f32 %v3346, %v3355
          %v3391 = vadd.f32 %v3347, %v3359
          %v3392 = vadd.f32 %v3348, %v3355
          %v3393 = vadd.f32 %v3349, %v3359
          %3394 = vst [vmem:[#allocation5] sm:$0xff] %v3362
          %3395 = vst [vmem:[#allocation5 + $0x8] sm:$0xff] %v3363
          %3396 = vst [vmem:[#allocation5 + $0x10] sm:$0xff] %v3364
          %3397 = vst [vmem:[#allocation5 + $0x18] sm:$0xff] %v3365
          %3398 = vst [vmem:[#allocation5 + $0x20] sm:$0xff] %v3366
          %3399 = vst [vmem:[#allocation5 + $0x28] sm:$0xff] %v3367
          %3400 = vst [vmem:[#allocation5 + $0x30] sm:$0xff] %v3368
          %3401 = vst [vmem:[#allocation5 + $0x38] sm:$0xff] %v3369
          %3402 = vst [vmem:[#allocation5 + $0x40] sm:$0xff] %v3370
          %3403 = vst [vmem:[#allocation5 + $0x48] sm:$0xff] %v3371
          %3404 = vst [vmem:[#allocation5 + $0x50] sm:$0xff] %v3372
          %3405 = vst [vmem:[#allocation5 + $0x58] sm:$0xff] %v3373
          %3406 = vst [vmem:[#allocation5 + $0x60] sm:$0xff] %v3374
          %3407 = vst [vmem:[#allocation5 + $0x68] sm:$0xff] %v3375
          %3408 = vst [vmem:[#allocation5 + $0x70] sm:$0xff] %v3376
          %3409 = vst [vmem:[#allocation5 + $0x78] sm:$0xff] %v3377
          %3410 = vst [vmem:[#allocation5 + $0x80] sm:$0xff] %v3378
          %3411 = vst [vmem:[#allocation5 + $0x88] sm:$0xff] %v3379
          %3412 = vst [vmem:[#allocation5 + $0x90] sm:$0xff] %v3380
          %3413 = vst [vmem:[#allocation5 + $0x98] sm:$0xff] %v3381
          %3414 = vst [vmem:[#allocation5 + $0xa0] sm:$0xff] %v3382
          %3415 = vst [vmem:[#allocation5 + $0xa8] sm:$0xff] %v3383
          %3416 = vst [vmem:[#allocation5 + $0xb0] sm:$0xff] %v3384
          %3417 = vst [vmem:[#allocation5 + $0xb8] sm:$0xff] %v3385
          %3418 = vst [vmem:[#allocation5 + $0xc0] sm:$0xff] %v3386
          %3419 = vst [vmem:[#allocation5 + $0xc8] sm:$0xff] %v3387
          %3420 = vst [vmem:[#allocation5 + $0xd0] sm:$0xff] %v3388
          %3421 = vst [vmem:[#allocation5 + $0xd8] sm:$0xff] %v3389
          %3422 = vst [vmem:[#allocation5 + $0xe0] sm:$0xff] %v3390
          %3423 = vst [vmem:[#allocation5 + $0xe8] sm:$0xff] %v3391
          %3424 = vst [vmem:[#allocation5 + $0xf0] sm:$0xff] %v3392
          %3425 = vst [vmem:[#allocation5 + $0xf8] sm:$0xff] %v3393
        $region110: #{basic_transformer_block.7} parent=93 // pred_fallthru
          _
        // Predicated region
        $region111: #{basic_transformer_block.7} parent=93 // pred_check
          %p3426 = pneg %p270
        $region112: #{basic_transformer_block.7} parent=93 // pred_check_branch
          %3428 = sbr.rel (%p3426) target = $region114
        $region113: #{basic_transformer_block.7} parent=93 // pred_region
          %s3429 = smul.u32 16, %s25
          %s3431 = ssub.s32 4096, 4096
          %3432 = vsyncadd [#allocation6], %s3431
          %s3433 = smul.addr %s3429, 2
          %s3434 = smul.addr %s3433, 128
          %s3435 = scalar_lea.hbm %s9, %s3434
          %s3436 = sshll.u32 [#allocation5], 4
          %s3437 = int_to_ptr.vmem [resolvable:$true] %s3436
          %3442 = dma.vmem_to_hbm [thread:$0]  %s3437, 4096, %s3435, [#allocation6], 256, 256, 16
        $region114: #{basic_transformer_block.7} parent=93 // pred_fallthru
          _
        // Predicated region
        $region115: #{basic_transformer_block.7} parent=93 // pred_check
          %p3443 = pneg %p270
        $region116: #{basic_transformer_block.7} parent=93 // pred_check_branch
          %3445 = sbr.rel (%p3443) target = $region118
        $region117: #{basic_transformer_block.7} parent=93 // pred_region
          %3446 = dma.done [#allocation6], 4096
        $region118: #{basic_transformer_block.7} parent=93 // pred_fallthru
          _
      $region94: #{basic_transformer_block.7} parent=5 // pred_fallthru
        _
      %p3447 = scmp.le.s32.totalorder 2, %s16
      // Predicated region
      $region119: #{basic_transformer_block.7} parent=5 // pred_check
        %p3448 = pneg %p3447
      $region120: #{basic_transformer_block.7} parent=5 // pred_check_branch
        %3450 = sbr.rel (%p3448) target = $region122
      $region121: #{basic_transformer_block.7} parent=5 // pred_region
        %s3451 = ssub.s32 %s16, 2
      $region122: #{basic_transformer_block.7} parent=5 // pred_fallthru
        _
    $region6: #{basic_transformer_block.7} parent=1 // loop_footer
      %s20 = sadd.s32 1, %s16
    $region7: #{basic_transformer_block.7} parent=1 // loop_footer_branch
      %15 = sbr.rel target = $region3
    $region8: #{basic_transformer_block.7} parent=1 // loop_exit
      _
    %3452 = vsyncpa [#allocation6], 1
    %s3453 = scalar_lea.sflag [#allocation6], 1
    %3454 = vsyncpa %s3453, 1

</llo_original>
